<compile_context>
chip_gen: v7x
topology: tpu7x:2x2x1
jax: 0.10.0
libtpu: 0.0.40
codegen_flags: <defaults>
</compile_context>

<pallas_src>
import jax
import jax.numpy as jnp
from jax import lax
from jax.experimental import pallas as pl
from jax.experimental.pallas import tpu as pltpu


def _vmem_spec():
    return pl.BlockSpec(memory_space=pltpu.MemorySpace.VMEM)


# ------------------------------ fused kernel -------------------------------
#
# Layouts inside the kernel:
#   p1   : (162, 512) bf16   conv1 im2col; column = plane*128 + a*10 + b where
#                            the conv1 output position is (2a+py, 2b+px),
#                            plane = 2*py + px.  Columns >= 100 per plane and
#                            the per-parity pad row/col are zero in p1.
#   h1   : (64, 128)  bf16   relu(conv1), row = plane*16 + channel.
#   h2   : (32, 64)   f32->bf16  conv2 output; lane j = oy*10 + ox (oy,ox<6
#                            valid, rest junk killed by zero fc1 weight rows).
#   flat : (1, 2048)  bf16   fc1 input; index g*128 + h*64 + j <-> channel
#                            16h+g, spatial j.

def _fused_agent_kernel(p1_ref, w1_ref, w2t_ref, wav_ref, bcol_ref, brow_ref,
                        wfc_hbm, out_ref, wfc_vmem, h1_sc, h2w_sc, flat_sc,
                        wfc_sem):
    # Kick off the ~1 MB fc1 weight DMA now; it overlaps conv1+conv2 and is
    # waited on immediately before the fc1 GEMM.
    wfc_cp = pltpu.make_async_copy(wfc_hbm, wfc_vmem, wfc_sem)
    wfc_cp.start()

    # ---- conv1: one GEMM over the parity-grouped im2col patches -------------
    h1w = jnp.dot(w1_ref[...], p1_ref[...], preferred_element_type=jnp.float32)
    h1w = jnp.maximum(h1w + bcol_ref[0:16, :], 0.0).astype(jnp.bfloat16)   # (16, 512)
    # Regroup to (64, 128) = [plane*16 + ci, plane position] with four
    # lane-aligned slices + sublane-aligned stores (no masked stores/rotates).
    for p in range(4):
        h1_sc[p * 16:(p + 1) * 16, :] = h1w[:, p * 128:(p + 1) * 128]
    h1 = h1_sc[...]                                                        # (64, 128)
    # NOTE: padded plane positions hold relu(b1) (non-zero junk).  They are only
    # read by conv2 taps whose repacked weight is exactly zero, or feed h2 junk
    # lanes that are killed by zero rows of the repacked fc1 weight.

    # ---- conv2: 25 accumulating MXU taps over the 64 parity channels --------
    # (stride-2 9x9 conv over the 19x19 conv1 output == 5x5 conv over the four
    #  10x10 parity planes).  Each tap is a 64-lane window of h1 (lane
    #  rotate+select on the XLU) fed straight to the MXU, accumulated in f32.
    acc = jnp.zeros((32, 64), jnp.float32)
    for dy in range(5):
        for dx in range(5):
            r = dy * 10 + dx
            acc = acc + jnp.dot(w2t_ref[dy * 5 + dx], h1[:, r:r + 64],
                                preferred_element_type=jnp.float32)
    h2 = jnp.maximum(acc + bcol_ref[16:48, :], 0.0).astype(jnp.bfloat16)   # (32, 64)

    # ---- flatten for fc1 using only lane-aligned 128-wide pieces ------------
    # Pair the channel halves side by side -> (16, 128): row g holds channels g
    # (lanes 0..63) and 16+g (lanes 64..127); then 16 aligned stores build the
    # (1, 2048) fc1 input row.  fc1 weight rows are permuted to match at init.
    h2w_sc[:, 0:64] = h2[0:16, :]
    h2w_sc[:, 64:128] = h2[16:32, :]
    h2w = h2w_sc[...]                                                      # (16, 128)
    for g in range(16):
        flat_sc[:, g * 128:(g + 1) * 128] = h2w[g:g + 1, :]

    # ---- fc1 + ReLU (wait for the overlapped weight DMA first) --------------
    wfc_cp.wait()
    h3 = jnp.dot(flat_sc[...], wfc_vmem[...], preferred_element_type=jnp.float32)
    h3 = jnp.maximum(h3 + brow_ref[:, 0:256], 0.0)                         # (1, 256) f32

    # ---- fused actor+value head (kept f32) + stable log-softmax -------------
    av = jnp.dot(h3, wav_ref[...], preferred_element_type=jnp.float32)
    av = av + brow_ref[:, 256:264]                                         # (1, 8)
    logits = av[:, 0:6]
    m = jnp.max(logits, axis=-1, keepdims=True)
    lse = m + jnp.log(jnp.sum(jnp.exp(logits - m), axis=-1, keepdims=True))
    lane = lax.broadcasted_iota(jnp.int32, (1, 8), 1)
    # single (1, 8) store: lanes 0..5 = log-probs, lane 6 = value, lane 7 = 0
    out_ref[...] = jnp.where(lane < 6, av - lse, av)


# ------------------------------- JAX glue ----------------------------------

def preprocess(frame):
    # frame: (84, 84, 3) HWC raw pixels in [0, 255]
    x = jnp.transpose(frame, (2, 0, 1))                       # permute(2, 0, 1)
    gray = 0.2989 * x[0] + 0.5870 * x[1] + 0.1140 * x[2]      # torchvision Grayscale
    # TODO(synk): torchvision Resize((84, 84)) is an identity here (input is 84x84).
    gray = gray / 255.0
    # last_input is None after reset() -> torch.cat([x, x], dim=0)
    return jnp.stack([gray, gray], axis=0)                    # (2, 84, 84)


def build_conv1_patches(x):
    """conv1 im2col in parity-grouped layout: (162, 512) bf16.

    Column plane*128 + a*10 + b holds the im2col column of conv1 output
    position (2a+py, 2b+px), plane = 2*py+px; unused columns are zero.
    Row index = ci*81 + qy*9 + qx, matching w1.reshape(16, 162) (OIHW).
    """
    cols = jnp.stack([lax.slice(x, (0, 0, qx), (2, 84, qx + 73), (1, 1, 4))
                      for qx in range(9)], axis=0)            # (9qx, 2, 84, 19)
    taps = jnp.stack([lax.slice(cols, (0, 0, qy, 0), (9, 2, qy + 73, 19),
                                (1, 1, 4, 1))
                      for qy in range(9)], axis=0)            # (9qy, 9qx, 2, 19, 19)
    p = jnp.transpose(taps, (2, 0, 1, 3, 4)).reshape(162, 19, 19)
    p = jnp.pad(p, ((0, 0), (0, 1), (0, 1)))                  # (162, 20, 20), zero pad
    p = p.reshape(162, 10, 2, 10, 2).transpose(0, 2, 4, 1, 3)  # (162, py, px, a, b)
    p = jnp.pad(p.reshape(162, 4, 100), ((0, 0), (0, 0), (0, 28)))
    return p.reshape(162, 512).astype(jnp.bfloat16)


@jax.jit
def breakout_a2c_forward(frame, prep):
    x = preprocess(frame)                                     # (2, 84, 84)
    p1 = build_conv1_patches(x)                               # (162, 512) bf16

    out = pl.pallas_call(
        _fused_agent_kernel,
        out_shape=jax.ShapeDtypeStruct((1, 8), jnp.float32),
        in_specs=[_vmem_spec(), _vmem_spec(), _vmem_spec(), _vmem_spec(),
                  _vmem_spec(), _vmem_spec(),
                  pl.BlockSpec(memory_space=pl.ANY)],          # wfc stays in HBM
        out_specs=_vmem_spec(),
        scratch_shapes=[pltpu.VMEM((2048, 256), jnp.bfloat16),  # fc1 weight landing buf
                        pltpu.VMEM((64, 128), jnp.bfloat16),    # parity-channel h1
                        pltpu.VMEM((16, 128), jnp.bfloat16),    # h2 channel pairs
                        pltpu.VMEM((1, 2048), jnp.bfloat16),    # fc1 input row
                        pltpu.SemaphoreType.DMA],               # wfc copy semaphore
    )(p1, prep["w1f"], prep["w2t"], prep["wav"], prep["bcol"], prep["brow"],
      prep["wfc"])
    return out[:, 0:6], out[:, 6:7]


# --------------------- one-time parameter preparation ----------------------

def prepare_params(params):
    """Pre-transpose / repack / cast weights once (outside the jitted forward)."""
    # conv1 weight as a GEMM LHS: (16, 162), columns = ci*81 + qy*9 + qx (OIHW).
    w1f = params["w1"].reshape(16, 2 * 9 * 9).astype(jnp.bfloat16)

    # conv2 re-expressed as a 5x5 conv over the 4 parity planes (64 channels):
    # w2t[dy*5+dx, co, p*16+ci] = w2[co, ci, 2*dy+py, 2*dx+px], p = 2*py+px.
    # Taps falling outside the 9x9 kernel stay exactly zero — this is what keeps
    # the junk (padded) h1 lanes harmless.
    w2 = params["w2"]
    w2t = jnp.zeros((25, 32, 64), jnp.float32)
    for dy in range(5):
        for dx in range(5):
            for py in range(2):
                for px in range(2):
                    ky, kx = 2 * dy + py, 2 * dx + px
                    if ky < 9 and kx < 9:
                        p = 2 * py + px
                        w2t = w2t.at[dy * 5 + dx, :, p * 16:(p + 1) * 16].set(
                            w2[:, :, ky, kx])
    w2t = w2t.astype(jnp.bfloat16)

    # fc1 weight remapped to the kernel's flatten layout:
    # flat index g*128 + h*64 + j  <->  channel co = 16h+g, j = oy*10+ox
    # (valid for oy,ox < 6); all junk positions get zero rows.
    wf = params["wfc1"].reshape(256, 32, 6, 6)
    wf = jnp.pad(wf, ((0, 0), (0, 0), (0, 1), (0, 4)))        # oy -> 7, ox -> 10
    wf = wf.reshape(256, 32, 70)[:, :, :64]                   # j = oy*10 + ox
    wf = wf.reshape(256, 2, 16, 64)                           # co = 16*h + g
    wfc = jnp.transpose(wf, (2, 1, 3, 0)).reshape(2048, 256).astype(jnp.bfloat16)

    # fused actor (6) + value (1) head, kept in f32, padded to 8 output lanes.
    wav = jnp.concatenate([params["wa"], params["wv"],
                           jnp.zeros((1, 256), jnp.float32)], axis=0).T
    wav = wav.astype(jnp.float32)                             # (256, 8)

    # packed biases: conv biases as a column vector, fc/head biases as a row.
    bcol = jnp.concatenate([params["b1"], params["b2"]]).reshape(48, 1)
    brow = jnp.concatenate([params["bfc1"], params["ba"], params["bv"],
                            jnp.zeros((1,), jnp.float32)]).reshape(1, 264)
    return dict(w1f=w1f, w2t=w2t, wfc=wfc, wav=wav,
                bcol=bcol.astype(jnp.float32), brow=brow.astype(jnp.float32))


# ------------------------- deterministic parameters -------------------------

def init_params(key):
    def uniform(k, shape, fan_in):
        bound = 1.0 / float(fan_in) ** 0.5
        return jax.random.uniform(k, shape, jnp.float32, -bound, bound)

    ks = jax.random.split(key, 10)
    return dict(
        w1=uniform(ks[0], (16, 2, 9, 9), 2 * 9 * 9),
        b1=uniform(ks[1], (16,), 2 * 9 * 9),
        w2=uniform(ks[2], (32, 16, 9, 9), 16 * 9 * 9),
        b2=uniform(ks[3], (32,), 16 * 9 * 9),
        wfc1=uniform(ks[4], (256, 1152), 1152),
        bfc1=uniform(ks[5], (256,), 1152),
        wa=uniform(ks[6], (6, 256), 256),
        ba=uniform(ks[7], (6,), 256),
        wv=uniform(ks[8], (1, 256), 256),
        bv=uniform(ks[9], (1,), 256),
    )


# ----------------------------- pure-JAX reference ---------------------------

def reference_forward(frame, params):
    x = preprocess(frame)[None]                               # (1, 2, 84, 84)
    dn = ("NCHW", "OIHW", "NCHW")
    h1 = jax.nn.relu(lax.conv_general_dilated(x, params["w1"], (4, 4), "VALID",
                                              dimension_numbers=dn)
                     + params["b1"][None, :, None, None])
    h2 = jax.nn.relu(lax.conv_general_dilated(h1, params["w2"], (2, 2), "VALID",
                                              dimension_numbers=dn)
                     + params["b2"][None, :, None, None])
    flat = h2.reshape(1, -1)
    h3 = jax.nn.relu(flat @ params["wfc1"].T + params["bfc1"])
    logits = h3 @ params["wa"].T + params["ba"]
    lp = jax.nn.log_softmax(logits, axis=-1)
    v = h3 @ params["wv"].T + params["bv"]
    return lp, v


if __name__ == "__main__":
    key = jax.random.PRNGKey(0)
    pkey, fkey = jax.random.split(key)
    params = init_params(pkey)
    prep = prepare_params(params)          # one-time weight repack (not per call)
    # raw HWC frame, already 84x84 so Resize((84,84)) is identity
    frame = jax.random.uniform(fkey, (84, 84, 3), jnp.float32, 0.0, 255.0)

    log_probs, value = breakout_a2c_forward(frame, prep)
    jax.block_until_ready((log_probs, value))

    ref_lp, ref_v = reference_forward(frame, params)
    assert log_probs.shape == (1, 6) and value.shape == (1, 1)
    assert bool(jnp.allclose(log_probs, ref_lp, atol=1e-2, rtol=1e-2))
    assert bool(jnp.allclose(value, ref_v, atol=1e-2, rtol=1e-2))
    print("KERNEL_OK")
</pallas_src>

<mosaic_0001>
module attributes {stable_mosaic.version = 11 : i64} {
  func.func @_fused_agent_kernel(%arg0: memref<162x512xbf16, #tpu.memory_space<vmem>>, %arg1: memref<16x162xbf16, #tpu.memory_space<vmem>>, %arg2: memref<25x32x64xbf16, #tpu.memory_space<vmem>>, %arg3: memref<256x8xf32, #tpu.memory_space<vmem>>, %arg4: memref<48x1xf32, #tpu.memory_space<vmem>>, %arg5: memref<1x264xf32, #tpu.memory_space<vmem>>, %arg6: memref<2048x256xbf16, #tpu.memory_space<any>>, %arg7: memref<1x8xf32, #tpu.memory_space<vmem>>, %arg8: memref<2048x256xbf16, #tpu.memory_space<vmem>>, %arg9: memref<64x128xbf16, #tpu.memory_space<vmem>>, %arg10: memref<16x128xbf16, #tpu.memory_space<vmem>>, %arg11: memref<1x2048xbf16, #tpu.memory_space<vmem>>, %arg12: memref<!tpu.dma_semaphore, #tpu.memory_space<semaphore_mem>>) attributes {dimension_semantics = [], scalar_prefetch = 0 : i64, scratch_operands = 5 : i64, tpu.core_type = #tpu.core_type<tc>} {
    tpu.enqueue_dma source(%arg6 : memref<2048x256xbf16, #tpu.memory_space<any>>) target(%arg8 : memref<2048x256xbf16, #tpu.memory_space<vmem>>) target_semaphore(%arg12 : memref<!tpu.dma_semaphore, #tpu.memory_space<semaphore_mem>>)
    %c0 = arith.constant 0 : index
    %c0_0 = arith.constant 0 : index
    %0 = vector.load %arg1[%c0, %c0_0] : memref<16x162xbf16, #tpu.memory_space<vmem>>, vector<16x162xbf16>
    %c0_1 = arith.constant 0 : index
    %c0_2 = arith.constant 0 : index
    %1 = vector.load %arg0[%c0_1, %c0_2] : memref<162x512xbf16, #tpu.memory_space<vmem>>, vector<162x512xbf16>
    %cst = arith.constant dense<0.000000e+00> : vector<16x512xf32>
    %2 = tpu.matmul %0, %1, %cst {dimension_numbers = #tpu.dot_dimension_numbers<[1], [0], [0], [1], [0, 0, 1, 1], [], []>} : vector<16x162xbf16>, vector<162x512xbf16>, vector<16x512xf32> -> vector<16x512xf32>
    %c0_3 = arith.constant 0 : index
    %c0_4 = arith.constant 0 : index
    %3 = vector.load %arg4[%c0_3, %c0_4] : memref<48x1xf32, #tpu.memory_space<vmem>>, vector<16x1xf32>
    %4 = vector.broadcast %3 : vector<16x1xf32> to vector<16x512xf32>
    %5 = arith.addf %2, %4 : vector<16x512xf32>
    %cst_5 = arith.constant 0.000000e+00 : f32
    %6 = vector.broadcast %cst_5 : f32 to vector<16x512xf32>
    %7 = arith.maximumf %5, %6 : vector<16x512xf32>
    %8 = arith.truncf %7 : vector<16x512xf32> to vector<16x512xbf16>
    %9 = vector.extract_strided_slice %8 {offsets = [0, 0], sizes = [16, 128], strides = [1, 1]} : vector<16x512xbf16> to vector<16x128xbf16>
    %c0_6 = arith.constant 0 : index
    %c0_7 = arith.constant 0 : index
    %10 = vector.load %arg9[%c0_6, %c0_7] : memref<64x128xbf16, #tpu.memory_space<vmem>>, vector<16x128xbf16>
    tpu.vector_store %arg9[%c0_6, %c0_7], %9 {strides = array<i32>} : memref<64x128xbf16, #tpu.memory_space<vmem>>, vector<16x128xbf16>,
    %11 = vector.extract_strided_slice %8 {offsets = [0, 128], sizes = [16, 128], strides = [1, 1]} : vector<16x512xbf16> to vector<16x128xbf16>
    %c16 = arith.constant 16 : index
    %c0_8 = arith.constant 0 : index
    %12 = vector.load %arg9[%c16, %c0_8] : memref<64x128xbf16, #tpu.memory_space<vmem>>, vector<16x128xbf16>
    tpu.vector_store %arg9[%c16, %c0_8], %11 {strides = array<i32>} : memref<64x128xbf16, #tpu.memory_space<vmem>>, vector<16x128xbf16>,
    %13 = vector.extract_strided_slice %8 {offsets = [0, 256], sizes = [16, 128], strides = [1, 1]} : vector<16x512xbf16> to vector<16x128xbf16>
    %c32 = arith.constant 32 : index
    %c0_9 = arith.constant 0 : index
    %14 = vector.load %arg9[%c32, %c0_9] : memref<64x128xbf16, #tpu.memory_space<vmem>>, vector<16x128xbf16>
    tpu.vector_store %arg9[%c32, %c0_9], %13 {strides = array<i32>} : memref<64x128xbf16, #tpu.memory_space<vmem>>, vector<16x128xbf16>,
    %15 = vector.extract_strided_slice %8 {offsets = [0, 384], sizes = [16, 128], strides = [1, 1]} : vector<16x512xbf16> to vector<16x128xbf16>
    %c48 = arith.constant 48 : index
    %c0_10 = arith.constant 0 : index
    %16 = vector.load %arg9[%c48, %c0_10] : memref<64x128xbf16, #tpu.memory_space<vmem>>, vector<16x128xbf16>
    tpu.vector_store %arg9[%c48, %c0_10], %15 {strides = array<i32>} : memref<64x128xbf16, #tpu.memory_space<vmem>>, vector<16x128xbf16>,
    %c0_11 = arith.constant 0 : index
    %c0_12 = arith.constant 0 : index
    %17 = vector.load %arg9[%c0_11, %c0_12] : memref<64x128xbf16, #tpu.memory_space<vmem>>, vector<64x128xbf16>
    %cst_13 = arith.constant 0.000000e+00 : f32
    %18 = vector.broadcast %cst_13 : f32 to vector<32x64xf32>
    %c0_14 = arith.constant 0 : index
    %c0_15 = arith.constant 0 : index
    %c0_16 = arith.constant 0 : index
    %19 = vector.load %arg2[%c0_14, %c0_15, %c0_16] : memref<25x32x64xbf16, #tpu.memory_space<vmem>>, vector<1x32x64xbf16>
    %20 = vector.shape_cast %19 : vector<1x32x64xbf16> to vector<32x64xbf16>
    %21 = vector.extract_strided_slice %17 {offsets = [0, 0], sizes = [64, 64], strides = [1, 1]} : vector<64x128xbf16> to vector<64x64xbf16>
    %cst_17 = arith.constant dense<0.000000e+00> : vector<32x64xf32>
    %22 = tpu.matmul %20, %21, %cst_17 {dimension_numbers = #tpu.dot_dimension_numbers<[1], [0], [0], [1], [0, 0, 1, 1], [], []>} : vector<32x64xbf16>, vector<64x64xbf16>, vector<32x64xf32> -> vector<32x64xf32>
    %23 = arith.addf %18, %22 : vector<32x64xf32>
    %c1 = arith.constant 1 : index
    %c0_18 = arith.constant 0 : index
    %c0_19 = arith.constant 0 : index
    %24 = vector.load %arg2[%c1, %c0_18, %c0_19] : memref<25x32x64xbf16, #tpu.memory_space<vmem>>, vector<1x32x64xbf16>
    %25 = vector.shape_cast %24 : vector<1x32x64xbf16> to vector<32x64xbf16>
    %26 = vector.extract_strided_slice %17 {offsets = [0, 1], sizes = [64, 64], strides = [1, 1]} : vector<64x128xbf16> to vector<64x64xbf16>
    %cst_20 = arith.constant dense<0.000000e+00> : vector<32x64xf32>
    %27 = tpu.matmul %25, %26, %cst_20 {dimension_numbers = #tpu.dot_dimension_numbers<[1], [0], [0], [1], [0, 0, 1, 1], [], []>} : vector<32x64xbf16>, vector<64x64xbf16>, vector<32x64xf32> -> vector<32x64xf32>
    %28 = arith.addf %23, %27 : vector<32x64xf32>
    %c2 = arith.constant 2 : index
    %c0_21 = arith.constant 0 : index
    %c0_22 = arith.constant 0 : index
    %29 = vector.load %arg2[%c2, %c0_21, %c0_22] : memref<25x32x64xbf16, #tpu.memory_space<vmem>>, vector<1x32x64xbf16>
    %30 = vector.shape_cast %29 : vector<1x32x64xbf16> to vector<32x64xbf16>
    %31 = vector.extract_strided_slice %17 {offsets = [0, 2], sizes = [64, 64], strides = [1, 1]} : vector<64x128xbf16> to vector<64x64xbf16>
    %cst_23 = arith.constant dense<0.000000e+00> : vector<32x64xf32>
    %32 = tpu.matmul %30, %31, %cst_23 {dimension_numbers = #tpu.dot_dimension_numbers<[1], [0], [0], [1], [0, 0, 1, 1], [], []>} : vector<32x64xbf16>, vector<64x64xbf16>, vector<32x64xf32> -> vector<32x64xf32>
    %33 = arith.addf %28, %32 : vector<32x64xf32>
    %c3 = arith.constant 3 : index
    %c0_24 = arith.constant 0 : index
    %c0_25 = arith.constant 0 : index
    %34 = vector.load %arg2[%c3, %c0_24, %c0_25] : memref<25x32x64xbf16, #tpu.memory_space<vmem>>, vector<1x32x64xbf16>
    %35 = vector.shape_cast %34 : vector<1x32x64xbf16> to vector<32x64xbf16>
    %36 = vector.extract_strided_slice %17 {offsets = [0, 3], sizes = [64, 64], strides = [1, 1]} : vector<64x128xbf16> to vector<64x64xbf16>
    %cst_26 = arith.constant dense<0.000000e+00> : vector<32x64xf32>
    %37 = tpu.matmul %35, %36, %cst_26 {dimension_numbers = #tpu.dot_dimension_numbers<[1], [0], [0], [1], [0, 0, 1, 1], [], []>} : vector<32x64xbf16>, vector<64x64xbf16>, vector<32x64xf32> -> vector<32x64xf32>
    %38 = arith.addf %33, %37 : vector<32x64xf32>
    %c4 = arith.constant 4 : index
    %c0_27 = arith.constant 0 : index
    %c0_28 = arith.constant 0 : index
    %39 = vector.load %arg2[%c4, %c0_27, %c0_28] : memref<25x32x64xbf16, #tpu.memory_space<vmem>>, vector<1x32x64xbf16>
    %40 = vector.shape_cast %39 : vector<1x32x64xbf16> to vector<32x64xbf16>
    %41 = vector.extract_strided_slice %17 {offsets = [0, 4], sizes = [64, 64], strides = [1, 1]} : vector<64x128xbf16> to vector<64x64xbf16>
    %cst_29 = arith.constant dense<0.000000e+00> : vector<32x64xf32>
    %42 = tpu.matmul %40, %41, %cst_29 {dimension_numbers = #tpu.dot_dimension_numbers<[1], [0], [0], [1], [0, 0, 1, 1], [], []>} : vector<32x64xbf16>, vector<64x64xbf16>, vector<32x64xf32> -> vector<32x64xf32>
    %43 = arith.addf %38, %42 : vector<32x64xf32>
    %c5 = arith.constant 5 : index
    %c0_30 = arith.constant 0 : index
    %c0_31 = arith.constant 0 : index
    %44 = vector.load %arg2[%c5, %c0_30, %c0_31] : memref<25x32x64xbf16, #tpu.memory_space<vmem>>, vector<1x32x64xbf16>
    %45 = vector.shape_cast %44 : vector<1x32x64xbf16> to vector<32x64xbf16>
    %46 = vector.extract_strided_slice %17 {offsets = [0, 10], sizes = [64, 64], strides = [1, 1]} : vector<64x128xbf16> to vector<64x64xbf16>
    %cst_32 = arith.constant dense<0.000000e+00> : vector<32x64xf32>
    %47 = tpu.matmul %45, %46, %cst_32 {dimension_numbers = #tpu.dot_dimension_numbers<[1], [0], [0], [1], [0, 0, 1, 1], [], []>} : vector<32x64xbf16>, vector<64x64xbf16>, vector<32x64xf32> -> vector<32x64xf32>
    %48 = arith.addf %43, %47 : vector<32x64xf32>
    %c6 = arith.constant 6 : index
    %c0_33 = arith.constant 0 : index
    %c0_34 = arith.constant 0 : index
    %49 = vector.load %arg2[%c6, %c0_33, %c0_34] : memref<25x32x64xbf16, #tpu.memory_space<vmem>>, vector<1x32x64xbf16>
    %50 = vector.shape_cast %49 : vector<1x32x64xbf16> to vector<32x64xbf16>
    %51 = vector.extract_strided_slice %17 {offsets = [0, 11], sizes = [64, 64], strides = [1, 1]} : vector<64x128xbf16> to vector<64x64xbf16>
    %cst_35 = arith.constant dense<0.000000e+00> : vector<32x64xf32>
    %52 = tpu.matmul %50, %51, %cst_35 {dimension_numbers = #tpu.dot_dimension_numbers<[1], [0], [0], [1], [0, 0, 1, 1], [], []>} : vector<32x64xbf16>, vector<64x64xbf16>, vector<32x64xf32> -> vector<32x64xf32>
    %53 = arith.addf %48, %52 : vector<32x64xf32>
    %c7 = arith.constant 7 : index
    %c0_36 = arith.constant 0 : index
    %c0_37 = arith.constant 0 : index
    %54 = vector.load %arg2[%c7, %c0_36, %c0_37] : memref<25x32x64xbf16, #tpu.memory_space<vmem>>, vector<1x32x64xbf16>
    %55 = vector.shape_cast %54 : vector<1x32x64xbf16> to vector<32x64xbf16>
    %56 = vector.extract_strided_slice %17 {offsets = [0, 12], sizes = [64, 64], strides = [1, 1]} : vector<64x128xbf16> to vector<64x64xbf16>
    %cst_38 = arith.constant dense<0.000000e+00> : vector<32x64xf32>
    %57 = tpu.matmul %55, %56, %cst_38 {dimension_numbers = #tpu.dot_dimension_numbers<[1], [0], [0], [1], [0, 0, 1, 1], [], []>} : vector<32x64xbf16>, vector<64x64xbf16>, vector<32x64xf32> -> vector<32x64xf32>
    %58 = arith.addf %53, %57 : vector<32x64xf32>
    %c8 = arith.constant 8 : index
    %c0_39 = arith.constant 0 : index
    %c0_40 = arith.constant 0 : index
    %59 = vector.load %arg2[%c8, %c0_39, %c0_40] : memref<25x32x64xbf16, #tpu.memory_space<vmem>>, vector<1x32x64xbf16>
    %60 = vector.shape_cast %59 : vector<1x32x64xbf16> to vector<32x64xbf16>
    %61 = vector.extract_strided_slice %17 {offsets = [0, 13], sizes = [64, 64], strides = [1, 1]} : vector<64x128xbf16> to vector<64x64xbf16>
    %cst_41 = arith.constant dense<0.000000e+00> : vector<32x64xf32>
    %62 = tpu.matmul %60, %61, %cst_41 {dimension_numbers = #tpu.dot_dimension_numbers<[1], [0], [0], [1], [0, 0, 1, 1], [], []>} : vector<32x64xbf16>, vector<64x64xbf16>, vector<32x64xf32> -> vector<32x64xf32>
    %63 = arith.addf %58, %62 : vector<32x64xf32>
    %c9 = arith.constant 9 : index
    %c0_42 = arith.constant 0 : index
    %c0_43 = arith.constant 0 : index
    %64 = vector.load %arg2[%c9, %c0_42, %c0_43] : memref<25x32x64xbf16, #tpu.memory_space<vmem>>, vector<1x32x64xbf16>
    %65 = vector.shape_cast %64 : vector<1x32x64xbf16> to vector<32x64xbf16>
    %66 = vector.extract_strided_slice %17 {offsets = [0, 14], sizes = [64, 64], strides = [1, 1]} : vector<64x128xbf16> to vector<64x64xbf16>
    %cst_44 = arith.constant dense<0.000000e+00> : vector<32x64xf32>
    %67 = tpu.matmul %65, %66, %cst_44 {dimension_numbers = #tpu.dot_dimension_numbers<[1], [0], [0], [1], [0, 0, 1, 1], [], []>} : vector<32x64xbf16>, vector<64x64xbf16>, vector<32x64xf32> -> vector<32x64xf32>
    %68 = arith.addf %63, %67 : vector<32x64xf32>
    %c10 = arith.constant 10 : index
    %c0_45 = arith.constant 0 : index
    %c0_46 = arith.constant 0 : index
    %69 = vector.load %arg2[%c10, %c0_45, %c0_46] : memref<25x32x64xbf16, #tpu.memory_space<vmem>>, vector<1x32x64xbf16>
    %70 = vector.shape_cast %69 : vector<1x32x64xbf16> to vector<32x64xbf16>
    %71 = vector.extract_strided_slice %17 {offsets = [0, 20], sizes = [64, 64], strides = [1, 1]} : vector<64x128xbf16> to vector<64x64xbf16>
    %cst_47 = arith.constant dense<0.000000e+00> : vector<32x64xf32>
    %72 = tpu.matmul %70, %71, %cst_47 {dimension_numbers = #tpu.dot_dimension_numbers<[1], [0], [0], [1], [0, 0, 1, 1], [], []>} : vector<32x64xbf16>, vector<64x64xbf16>, vector<32x64xf32> -> vector<32x64xf32>
    %73 = arith.addf %68, %72 : vector<32x64xf32>
    %c11 = arith.constant 11 : index
    %c0_48 = arith.constant 0 : index
    %c0_49 = arith.constant 0 : index
    %74 = vector.load %arg2[%c11, %c0_48, %c0_49] : memref<25x32x64xbf16, #tpu.memory_space<vmem>>, vector<1x32x64xbf16>
    %75 = vector.shape_cast %74 : vector<1x32x64xbf16> to vector<32x64xbf16>
    %76 = vector.extract_strided_slice %17 {offsets = [0, 21], sizes = [64, 64], strides = [1, 1]} : vector<64x128xbf16> to vector<64x64xbf16>
    %cst_50 = arith.constant dense<0.000000e+00> : vector<32x64xf32>
    %77 = tpu.matmul %75, %76, %cst_50 {dimension_numbers = #tpu.dot_dimension_numbers<[1], [0], [0], [1], [0, 0, 1, 1], [], []>} : vector<32x64xbf16>, vector<64x64xbf16>, vector<32x64xf32> -> vector<32x64xf32>
    %78 = arith.addf %73, %77 : vector<32x64xf32>
    %c12 = arith.constant 12 : index
    %c0_51 = arith.constant 0 : index
    %c0_52 = arith.constant 0 : index
    %79 = vector.load %arg2[%c12, %c0_51, %c0_52] : memref<25x32x64xbf16, #tpu.memory_space<vmem>>, vector<1x32x64xbf16>
    %80 = vector.shape_cast %79 : vector<1x32x64xbf16> to vector<32x64xbf16>
    %81 = vector.extract_strided_slice %17 {offsets = [0, 22], sizes = [64, 64], strides = [1, 1]} : vector<64x128xbf16> to vector<64x64xbf16>
    %cst_53 = arith.constant dense<0.000000e+00> : vector<32x64xf32>
    %82 = tpu.matmul %80, %81, %cst_53 {dimension_numbers = #tpu.dot_dimension_numbers<[1], [0], [0], [1], [0, 0, 1, 1], [], []>} : vector<32x64xbf16>, vector<64x64xbf16>, vector<32x64xf32> -> vector<32x64xf32>
    %83 = arith.addf %78, %82 : vector<32x64xf32>
    %c13 = arith.constant 13 : index
    %c0_54 = arith.constant 0 : index
    %c0_55 = arith.constant 0 : index
    %84 = vector.load %arg2[%c13, %c0_54, %c0_55] : memref<25x32x64xbf16, #tpu.memory_space<vmem>>, vector<1x32x64xbf16>
    %85 = vector.shape_cast %84 : vector<1x32x64xbf16> to vector<32x64xbf16>
    %86 = vector.extract_strided_slice %17 {offsets = [0, 23], sizes = [64, 64], strides = [1, 1]} : vector<64x128xbf16> to vector<64x64xbf16>
    %cst_56 = arith.constant dense<0.000000e+00> : vector<32x64xf32>
    %87 = tpu.matmul %85, %86, %cst_56 {dimension_numbers = #tpu.dot_dimension_numbers<[1], [0], [0], [1], [0, 0, 1, 1], [], []>} : vector<32x64xbf16>, vector<64x64xbf16>, vector<32x64xf32> -> vector<32x64xf32>
    %88 = arith.addf %83, %87 : vector<32x64xf32>
    %c14 = arith.constant 14 : index
    %c0_57 = arith.constant 0 : index
    %c0_58 = arith.constant 0 : index
    %89 = vector.load %arg2[%c14, %c0_57, %c0_58] : memref<25x32x64xbf16, #tpu.memory_space<vmem>>, vector<1x32x64xbf16>
    %90 = vector.shape_cast %89 : vector<1x32x64xbf16> to vector<32x64xbf16>
    %91 = vector.extract_strided_slice %17 {offsets = [0, 24], sizes = [64, 64], strides = [1, 1]} : vector<64x128xbf16> to vector<64x64xbf16>
    %cst_59 = arith.constant dense<0.000000e+00> : vector<32x64xf32>
    %92 = tpu.matmul %90, %91, %cst_59 {dimension_numbers = #tpu.dot_dimension_numbers<[1], [0], [0], [1], [0, 0, 1, 1], [], []>} : vector<32x64xbf16>, vector<64x64xbf16>, vector<32x64xf32> -> vector<32x64xf32>
    %93 = arith.addf %88, %92 : vector<32x64xf32>
    %c15 = arith.constant 15 : index
    %c0_60 = arith.constant 0 : index
    %c0_61 = arith.constant 0 : index
    %94 = vector.load %arg2[%c15, %c0_60, %c0_61] : memref<25x32x64xbf16, #tpu.memory_space<vmem>>, vector<1x32x64xbf16>
    %95 = vector.shape_cast %94 : vector<1x32x64xbf16> to vector<32x64xbf16>
    %96 = vector.extract_strided_slice %17 {offsets = [0, 30], sizes = [64, 64], strides = [1, 1]} : vector<64x128xbf16> to vector<64x64xbf16>
    %cst_62 = arith.constant dense<0.000000e+00> : vector<32x64xf32>
    %97 = tpu.matmul %95, %96, %cst_62 {dimension_numbers = #tpu.dot_dimension_numbers<[1], [0], [0], [1], [0, 0, 1, 1], [], []>} : vector<32x64xbf16>, vector<64x64xbf16>, vector<32x64xf32> -> vector<32x64xf32>
    %98 = arith.addf %93, %97 : vector<32x64xf32>
    %c16_63 = arith.constant 16 : index
    %c0_64 = arith.constant 0 : index
    %c0_65 = arith.constant 0 : index
    %99 = vector.load %arg2[%c16_63, %c0_64, %c0_65] : memref<25x32x64xbf16, #tpu.memory_space<vmem>>, vector<1x32x64xbf16>
    %100 = vector.shape_cast %99 : vector<1x32x64xbf16> to vector<32x64xbf16>
    %101 = vector.extract_strided_slice %17 {offsets = [0, 31], sizes = [64, 64], strides = [1, 1]} : vector<64x128xbf16> to vector<64x64xbf16>
    %cst_66 = arith.constant dense<0.000000e+00> : vector<32x64xf32>
    %102 = tpu.matmul %100, %101, %cst_66 {dimension_numbers = #tpu.dot_dimension_numbers<[1], [0], [0], [1], [0, 0, 1, 1], [], []>} : vector<32x64xbf16>, vector<64x64xbf16>, vector<32x64xf32> -> vector<32x64xf32>
    %103 = arith.addf %98, %102 : vector<32x64xf32>
    %c17 = arith.constant 17 : index
    %c0_67 = arith.constant 0 : index
    %c0_68 = arith.constant 0 : index
    %104 = vector.load %arg2[%c17, %c0_67, %c0_68] : memref<25x32x64xbf16, #tpu.memory_space<vmem>>, vector<1x32x64xbf16>
    %105 = vector.shape_cast %104 : vector<1x32x64xbf16> to vector<32x64xbf16>
    %106 = vector.extract_strided_slice %17 {offsets = [0, 32], sizes = [64, 64], strides = [1, 1]} : vector<64x128xbf16> to vector<64x64xbf16>
    %cst_69 = arith.constant dense<0.000000e+00> : vector<32x64xf32>
    %107 = tpu.matmul %105, %106, %cst_69 {dimension_numbers = #tpu.dot_dimension_numbers<[1], [0], [0], [1], [0, 0, 1, 1], [], []>} : vector<32x64xbf16>, vector<64x64xbf16>, vector<32x64xf32> -> vector<32x64xf32>
    %108 = arith.addf %103, %107 : vector<32x64xf32>
    %c18 = arith.constant 18 : index
    %c0_70 = arith.constant 0 : index
    %c0_71 = arith.constant 0 : index
    %109 = vector.load %arg2[%c18, %c0_70, %c0_71] : memref<25x32x64xbf16, #tpu.memory_space<vmem>>, vector<1x32x64xbf16>
    %110 = vector.shape_cast %109 : vector<1x32x64xbf16> to vector<32x64xbf16>
    %111 = vector.extract_strided_slice %17 {offsets = [0, 33], sizes = [64, 64], strides = [1, 1]} : vector<64x128xbf16> to vector<64x64xbf16>
    %cst_72 = arith.constant dense<0.000000e+00> : vector<32x64xf32>
    %112 = tpu.matmul %110, %111, %cst_72 {dimension_numbers = #tpu.dot_dimension_numbers<[1], [0], [0], [1], [0, 0, 1, 1], [], []>} : vector<32x64xbf16>, vector<64x64xbf16>, vector<32x64xf32> -> vector<32x64xf32>
    %113 = arith.addf %108, %112 : vector<32x64xf32>
    %c19 = arith.constant 19 : index
    %c0_73 = arith.constant 0 : index
    %c0_74 = arith.constant 0 : index
    %114 = vector.load %arg2[%c19, %c0_73, %c0_74] : memref<25x32x64xbf16, #tpu.memory_space<vmem>>, vector<1x32x64xbf16>
    %115 = vector.shape_cast %114 : vector<1x32x64xbf16> to vector<32x64xbf16>
    %116 = vector.extract_strided_slice %17 {offsets = [0, 34], sizes = [64, 64], strides = [1, 1]} : vector<64x128xbf16> to vector<64x64xbf16>
    %cst_75 = arith.constant dense<0.000000e+00> : vector<32x64xf32>
    %117 = tpu.matmul %115, %116, %cst_75 {dimension_numbers = #tpu.dot_dimension_numbers<[1], [0], [0], [1], [0, 0, 1, 1], [], []>} : vector<32x64xbf16>, vector<64x64xbf16>, vector<32x64xf32> -> vector<32x64xf32>
    %118 = arith.addf %113, %117 : vector<32x64xf32>
    %c20 = arith.constant 20 : index
    %c0_76 = arith.constant 0 : index
    %c0_77 = arith.constant 0 : index
    %119 = vector.load %arg2[%c20, %c0_76, %c0_77] : memref<25x32x64xbf16, #tpu.memory_space<vmem>>, vector<1x32x64xbf16>
    %120 = vector.shape_cast %119 : vector<1x32x64xbf16> to vector<32x64xbf16>
    %121 = vector.extract_strided_slice %17 {offsets = [0, 40], sizes = [64, 64], strides = [1, 1]} : vector<64x128xbf16> to vector<64x64xbf16>
    %cst_78 = arith.constant dense<0.000000e+00> : vector<32x64xf32>
    %122 = tpu.matmul %120, %121, %cst_78 {dimension_numbers = #tpu.dot_dimension_numbers<[1], [0], [0], [1], [0, 0, 1, 1], [], []>} : vector<32x64xbf16>, vector<64x64xbf16>, vector<32x64xf32> -> vector<32x64xf32>
    %123 = arith.addf %118, %122 : vector<32x64xf32>
    %c21 = arith.constant 21 : index
    %c0_79 = arith.constant 0 : index
    %c0_80 = arith.constant 0 : index
    %124 = vector.load %arg2[%c21, %c0_79, %c0_80] : memref<25x32x64xbf16, #tpu.memory_space<vmem>>, vector<1x32x64xbf16>
    %125 = vector.shape_cast %124 : vector<1x32x64xbf16> to vector<32x64xbf16>
    %126 = vector.extract_strided_slice %17 {offsets = [0, 41], sizes = [64, 64], strides = [1, 1]} : vector<64x128xbf16> to vector<64x64xbf16>
    %cst_81 = arith.constant dense<0.000000e+00> : vector<32x64xf32>
    %127 = tpu.matmul %125, %126, %cst_81 {dimension_numbers = #tpu.dot_dimension_numbers<[1], [0], [0], [1], [0, 0, 1, 1], [], []>} : vector<32x64xbf16>, vector<64x64xbf16>, vector<32x64xf32> -> vector<32x64xf32>
    %128 = arith.addf %123, %127 : vector<32x64xf32>
    %c22 = arith.constant 22 : index
    %c0_82 = arith.constant 0 : index
    %c0_83 = arith.constant 0 : index
    %129 = vector.load %arg2[%c22, %c0_82, %c0_83] : memref<25x32x64xbf16, #tpu.memory_space<vmem>>, vector<1x32x64xbf16>
    %130 = vector.shape_cast %129 : vector<1x32x64xbf16> to vector<32x64xbf16>
    %131 = vector.extract_strided_slice %17 {offsets = [0, 42], sizes = [64, 64], strides = [1, 1]} : vector<64x128xbf16> to vector<64x64xbf16>
    %cst_84 = arith.constant dense<0.000000e+00> : vector<32x64xf32>
    %132 = tpu.matmul %130, %131, %cst_84 {dimension_numbers = #tpu.dot_dimension_numbers<[1], [0], [0], [1], [0, 0, 1, 1], [], []>} : vector<32x64xbf16>, vector<64x64xbf16>, vector<32x64xf32> -> vector<32x64xf32>
    %133 = arith.addf %128, %132 : vector<32x64xf32>
    %c23 = arith.constant 23 : index
    %c0_85 = arith.constant 0 : index
    %c0_86 = arith.constant 0 : index
    %134 = vector.load %arg2[%c23, %c0_85, %c0_86] : memref<25x32x64xbf16, #tpu.memory_space<vmem>>, vector<1x32x64xbf16>
    %135 = vector.shape_cast %134 : vector<1x32x64xbf16> to vector<32x64xbf16>
    %136 = vector.extract_strided_slice %17 {offsets = [0, 43], sizes = [64, 64], strides = [1, 1]} : vector<64x128xbf16> to vector<64x64xbf16>
    %cst_87 = arith.constant dense<0.000000e+00> : vector<32x64xf32>
    %137 = tpu.matmul %135, %136, %cst_87 {dimension_numbers = #tpu.dot_dimension_numbers<[1], [0], [0], [1], [0, 0, 1, 1], [], []>} : vector<32x64xbf16>, vector<64x64xbf16>, vector<32x64xf32> -> vector<32x64xf32>
    %138 = arith.addf %133, %137 : vector<32x64xf32>
    %c24 = arith.constant 24 : index
    %c0_88 = arith.constant 0 : index
    %c0_89 = arith.constant 0 : index
    %139 = vector.load %arg2[%c24, %c0_88, %c0_89] : memref<25x32x64xbf16, #tpu.memory_space<vmem>>, vector<1x32x64xbf16>
    %140 = vector.shape_cast %139 : vector<1x32x64xbf16> to vector<32x64xbf16>
    %141 = vector.extract_strided_slice %17 {offsets = [0, 44], sizes = [64, 64], strides = [1, 1]} : vector<64x128xbf16> to vector<64x64xbf16>
    %cst_90 = arith.constant dense<0.000000e+00> : vector<32x64xf32>
    %142 = tpu.matmul %140, %141, %cst_90 {dimension_numbers = #tpu.dot_dimension_numbers<[1], [0], [0], [1], [0, 0, 1, 1], [], []>} : vector<32x64xbf16>, vector<64x64xbf16>, vector<32x64xf32> -> vector<32x64xf32>
    %143 = arith.addf %138, %142 : vector<32x64xf32>
    %c16_91 = arith.constant 16 : index
    %c0_92 = arith.constant 0 : index
    %144 = vector.load %arg4[%c16_91, %c0_92] : memref<48x1xf32, #tpu.memory_space<vmem>>, vector<32x1xf32>
    %145 = vector.broadcast %144 : vector<32x1xf32> to vector<32x64xf32>
    %146 = arith.addf %143, %145 : vector<32x64xf32>
    %cst_93 = arith.constant 0.000000e+00 : f32
    %147 = vector.broadcast %cst_93 : f32 to vector<32x64xf32>
    %148 = arith.maximumf %146, %147 : vector<32x64xf32>
    %149 = arith.truncf %148 : vector<32x64xf32> to vector<32x64xbf16>
    %150 = vector.extract_strided_slice %149 {offsets = [0, 0], sizes = [16, 64], strides = [1, 1]} : vector<32x64xbf16> to vector<16x64xbf16>
    %c0_94 = arith.constant 0 : index
    %c0_95 = arith.constant 0 : index
    %151 = vector.load %arg10[%c0_94, %c0_95] : memref<16x128xbf16, #tpu.memory_space<vmem>>, vector<16x64xbf16>
    tpu.vector_store %arg10[%c0_94, %c0_95], %150 {strides = array<i32>} : memref<16x128xbf16, #tpu.memory_space<vmem>>, vector<16x64xbf16>,
    %152 = vector.extract_strided_slice %149 {offsets = [16, 0], sizes = [16, 64], strides = [1, 1]} : vector<32x64xbf16> to vector<16x64xbf16>
    %c0_96 = arith.constant 0 : index
    %c64 = arith.constant 64 : index
    %153 = vector.load %arg10[%c0_96, %c64] : memref<16x128xbf16, #tpu.memory_space<vmem>>, vector<16x64xbf16>
    tpu.vector_store %arg10[%c0_96, %c64], %152 {strides = array<i32>} : memref<16x128xbf16, #tpu.memory_space<vmem>>, vector<16x64xbf16>,
    %c0_97 = arith.constant 0 : index
    %c0_98 = arith.constant 0 : index
    %154 = vector.load %arg10[%c0_97, %c0_98] : memref<16x128xbf16, #tpu.memory_space<vmem>>, vector<16x128xbf16>
    %155 = vector.extract_strided_slice %154 {offsets = [0, 0], sizes = [1, 128], strides = [1, 1]} : vector<16x128xbf16> to vector<1x128xbf16>
    %c0_99 = arith.constant 0 : index
    %c0_100 = arith.constant 0 : index
    %156 = vector.load %arg11[%c0_99, %c0_100] : memref<1x2048xbf16, #tpu.memory_space<vmem>>, vector<1x128xbf16>
    tpu.vector_store %arg11[%c0_99, %c0_100], %155 {strides = array<i32>} : memref<1x2048xbf16, #tpu.memory_space<vmem>>, vector<1x128xbf16>,
    %157 = vector.extract_strided_slice %154 {offsets = [1, 0], sizes = [1, 128], strides = [1, 1]} : vector<16x128xbf16> to vector<1x128xbf16>
    %c0_101 = arith.constant 0 : index
    %c128 = arith.constant 128 : index
    %158 = vector.load %arg11[%c0_101, %c128] : memref<1x2048xbf16, #tpu.memory_space<vmem>>, vector<1x128xbf16>
    tpu.vector_store %arg11[%c0_101, %c128], %157 {strides = array<i32>} : memref<1x2048xbf16, #tpu.memory_space<vmem>>, vector<1x128xbf16>,
    %159 = vector.extract_strided_slice %154 {offsets = [2, 0], sizes = [1, 128], strides = [1, 1]} : vector<16x128xbf16> to vector<1x128xbf16>
    %c0_102 = arith.constant 0 : index
    %c256 = arith.constant 256 : index
    %160 = vector.load %arg11[%c0_102, %c256] : memref<1x2048xbf16, #tpu.memory_space<vmem>>, vector<1x128xbf16>
    tpu.vector_store %arg11[%c0_102, %c256], %159 {strides = array<i32>} : memref<1x2048xbf16, #tpu.memory_space<vmem>>, vector<1x128xbf16>,
    %161 = vector.extract_strided_slice %154 {offsets = [3, 0], sizes = [1, 128], strides = [1, 1]} : vector<16x128xbf16> to vector<1x128xbf16>
    %c0_103 = arith.constant 0 : index
    %c384 = arith.constant 384 : index
    %162 = vector.load %arg11[%c0_103, %c384] : memref<1x2048xbf16, #tpu.memory_space<vmem>>, vector<1x128xbf16>
    tpu.vector_store %arg11[%c0_103, %c384], %161 {strides = array<i32>} : memref<1x2048xbf16, #tpu.memory_space<vmem>>, vector<1x128xbf16>,
    %163 = vector.extract_strided_slice %154 {offsets = [4, 0], sizes = [1, 128], strides = [1, 1]} : vector<16x128xbf16> to vector<1x128xbf16>
    %c0_104 = arith.constant 0 : index
    %c512 = arith.constant 512 : index
    %164 = vector.load %arg11[%c0_104, %c512] : memref<1x2048xbf16, #tpu.memory_space<vmem>>, vector<1x128xbf16>
    tpu.vector_store %arg11[%c0_104, %c512], %163 {strides = array<i32>} : memref<1x2048xbf16, #tpu.memory_space<vmem>>, vector<1x128xbf16>,
    %165 = vector.extract_strided_slice %154 {offsets = [5, 0], sizes = [1, 128], strides = [1, 1]} : vector<16x128xbf16> to vector<1x128xbf16>
    %c0_105 = arith.constant 0 : index
    %c640 = arith.constant 640 : index
    %166 = vector.load %arg11[%c0_105, %c640] : memref<1x2048xbf16, #tpu.memory_space<vmem>>, vector<1x128xbf16>
    tpu.vector_store %arg11[%c0_105, %c640], %165 {strides = array<i32>} : memref<1x2048xbf16, #tpu.memory_space<vmem>>, vector<1x128xbf16>,
    %167 = vector.extract_strided_slice %154 {offsets = [6, 0], sizes = [1, 128], strides = [1, 1]} : vector<16x128xbf16> to vector<1x128xbf16>
    %c0_106 = arith.constant 0 : index
    %c768 = arith.constant 768 : index
    %168 = vector.load %arg11[%c0_106, %c768] : memref<1x2048xbf16, #tpu.memory_space<vmem>>, vector<1x128xbf16>
    tpu.vector_store %arg11[%c0_106, %c768], %167 {strides = array<i32>} : memref<1x2048xbf16, #tpu.memory_space<vmem>>, vector<1x128xbf16>,
    %169 = vector.extract_strided_slice %154 {offsets = [7, 0], sizes = [1, 128], strides = [1, 1]} : vector<16x128xbf16> to vector<1x128xbf16>
    %c0_107 = arith.constant 0 : index
    %c896 = arith.constant 896 : index
    %170 = vector.load %arg11[%c0_107, %c896] : memref<1x2048xbf16, #tpu.memory_space<vmem>>, vector<1x128xbf16>
    tpu.vector_store %arg11[%c0_107, %c896], %169 {strides = array<i32>} : memref<1x2048xbf16, #tpu.memory_space<vmem>>, vector<1x128xbf16>,
    %171 = vector.extract_strided_slice %154 {offsets = [8, 0], sizes = [1, 128], strides = [1, 1]} : vector<16x128xbf16> to vector<1x128xbf16>
    %c0_108 = arith.constant 0 : index
    %c1024 = arith.constant 1024 : index
    %172 = vector.load %arg11[%c0_108, %c1024] : memref<1x2048xbf16, #tpu.memory_space<vmem>>, vector<1x128xbf16>
    tpu.vector_store %arg11[%c0_108, %c1024], %171 {strides = array<i32>} : memref<1x2048xbf16, #tpu.memory_space<vmem>>, vector<1x128xbf16>,
    %173 = vector.extract_strided_slice %154 {offsets = [9, 0], sizes = [1, 128], strides = [1, 1]} : vector<16x128xbf16> to vector<1x128xbf16>
    %c0_109 = arith.constant 0 : index
    %c1152 = arith.constant 1152 : index
    %174 = vector.load %arg11[%c0_109, %c1152] : memref<1x2048xbf16, #tpu.memory_space<vmem>>, vector<1x128xbf16>
    tpu.vector_store %arg11[%c0_109, %c1152], %173 {strides = array<i32>} : memref<1x2048xbf16, #tpu.memory_space<vmem>>, vector<1x128xbf16>,
    %175 = vector.extract_strided_slice %154 {offsets = [10, 0], sizes = [1, 128], strides = [1, 1]} : vector<16x128xbf16> to vector<1x128xbf16>
    %c0_110 = arith.constant 0 : index
    %c1280 = arith.constant 1280 : index
    %176 = vector.load %arg11[%c0_110, %c1280] : memref<1x2048xbf16, #tpu.memory_space<vmem>>, vector<1x128xbf16>
    tpu.vector_store %arg11[%c0_110, %c1280], %175 {strides = array<i32>} : memref<1x2048xbf16, #tpu.memory_space<vmem>>, vector<1x128xbf16>,
    %177 = vector.extract_strided_slice %154 {offsets = [11, 0], sizes = [1, 128], strides = [1, 1]} : vector<16x128xbf16> to vector<1x128xbf16>
    %c0_111 = arith.constant 0 : index
    %c1408 = arith.constant 1408 : index
    %178 = vector.load %arg11[%c0_111, %c1408] : memref<1x2048xbf16, #tpu.memory_space<vmem>>, vector<1x128xbf16>
    tpu.vector_store %arg11[%c0_111, %c1408], %177 {strides = array<i32>} : memref<1x2048xbf16, #tpu.memory_space<vmem>>, vector<1x128xbf16>,
    %179 = vector.extract_strided_slice %154 {offsets = [12, 0], sizes = [1, 128], strides = [1, 1]} : vector<16x128xbf16> to vector<1x128xbf16>
    %c0_112 = arith.constant 0 : index
    %c1536 = arith.constant 1536 : index
    %180 = vector.load %arg11[%c0_112, %c1536] : memref<1x2048xbf16, #tpu.memory_space<vmem>>, vector<1x128xbf16>
    tpu.vector_store %arg11[%c0_112, %c1536], %179 {strides = array<i32>} : memref<1x2048xbf16, #tpu.memory_space<vmem>>, vector<1x128xbf16>,
    %181 = vector.extract_strided_slice %154 {offsets = [13, 0], sizes = [1, 128], strides = [1, 1]} : vector<16x128xbf16> to vector<1x128xbf16>
    %c0_113 = arith.constant 0 : index
    %c1664 = arith.constant 1664 : index
    %182 = vector.load %arg11[%c0_113, %c1664] : memref<1x2048xbf16, #tpu.memory_space<vmem>>, vector<1x128xbf16>
    tpu.vector_store %arg11[%c0_113, %c1664], %181 {strides = array<i32>} : memref<1x2048xbf16, #tpu.memory_space<vmem>>, vector<1x128xbf16>,
    %183 = vector.extract_strided_slice %154 {offsets = [14, 0], sizes = [1, 128], strides = [1, 1]} : vector<16x128xbf16> to vector<1x128xbf16>
    %c0_114 = arith.constant 0 : index
    %c1792 = arith.constant 1792 : index
    %184 = vector.load %arg11[%c0_114, %c1792] : memref<1x2048xbf16, #tpu.memory_space<vmem>>, vector<1x128xbf16>
    tpu.vector_store %arg11[%c0_114, %c1792], %183 {strides = array<i32>} : memref<1x2048xbf16, #tpu.memory_space<vmem>>, vector<1x128xbf16>,
    %185 = vector.extract_strided_slice %154 {offsets = [15, 0], sizes = [1, 128], strides = [1, 1]} : vector<16x128xbf16> to vector<1x128xbf16>
    %c0_115 = arith.constant 0 : index
    %c1920 = arith.constant 1920 : index
    %186 = vector.load %arg11[%c0_115, %c1920] : memref<1x2048xbf16, #tpu.memory_space<vmem>>, vector<1x128xbf16>
    tpu.vector_store %arg11[%c0_115, %c1920], %185 {strides = array<i32>} : memref<1x2048xbf16, #tpu.memory_space<vmem>>, vector<1x128xbf16>,
    tpu.wait_dma2 semaphore(%arg12 : memref<!tpu.dma_semaphore, #tpu.memory_space<semaphore_mem>>) src(%arg6 : memref<2048x256xbf16, #tpu.memory_space<any>>) dst(%arg8 : memref<2048x256xbf16, #tpu.memory_space<vmem>>)
    %c0_116 = arith.constant 0 : index
    %c0_117 = arith.constant 0 : index
    %187 = vector.load %arg11[%c0_116, %c0_117] : memref<1x2048xbf16, #tpu.memory_space<vmem>>, vector<1x2048xbf16>
    %c0_118 = arith.constant 0 : index
    %c0_119 = arith.constant 0 : index
    %188 = vector.load %arg8[%c0_118, %c0_119] : memref<2048x256xbf16, #tpu.memory_space<vmem>>, vector<2048x256xbf16>
    %cst_120 = arith.constant dense<0.000000e+00> : vector<1x256xf32>
    %189 = tpu.matmul %187, %188, %cst_120 {dimension_numbers = #tpu.dot_dimension_numbers<[1], [0], [0], [1], [0, 0, 1, 1], [], []>} : vector<1x2048xbf16>, vector<2048x256xbf16>, vector<1x256xf32> -> vector<1x256xf32>
    %c0_121 = arith.constant 0 : index
    %c0_122 = arith.constant 0 : index
    %190 = vector.load %arg5[%c0_121, %c0_122] : memref<1x264xf32, #tpu.memory_space<vmem>>, vector<1x256xf32>
    %191 = arith.addf %189, %190 : vector<1x256xf32>
    %cst_123 = arith.constant 0.000000e+00 : f32
    %192 = vector.broadcast %cst_123 : f32 to vector<1x256xf32>
    %193 = arith.maximumf %191, %192 : vector<1x256xf32>
    %c0_124 = arith.constant 0 : index
    %c0_125 = arith.constant 0 : index
    %194 = vector.load %arg3[%c0_124, %c0_125] : memref<256x8xf32, #tpu.memory_space<vmem>>, vector<256x8xf32>
    %cst_126 = arith.constant dense<0.000000e+00> : vector<1x8xf32>
    %195 = tpu.matmul %193, %194, %cst_126 {dimension_numbers = #tpu.dot_dimension_numbers<[1], [0], [0], [1], [0, 0, 1, 1], [], []>} : vector<1x256xf32>, vector<256x8xf32>, vector<1x8xf32> -> vector<1x8xf32>
    %c0_127 = arith.constant 0 : index
    %c256_128 = arith.constant 256 : index
    %196 = vector.load %arg5[%c0_127, %c256_128] : memref<1x264xf32, #tpu.memory_space<vmem>>, vector<1x8xf32>
    %197 = arith.addf %195, %196 : vector<1x8xf32>
    %198 = vector.extract_strided_slice %197 {offsets = [0, 0], sizes = [1, 6], strides = [1, 1]} : vector<1x8xf32> to vector<1x6xf32>
    %cst_129 = arith.constant dense<0xFF800000> : vector<1xf32>
    %199 = vector.multi_reduction <maximumf>, %198, %cst_129 [1] : vector<1x6xf32> to vector<1xf32>
    %200 = vector.shape_cast %199 : vector<1xf32> to vector<1x1xf32>
    %201 = vector.broadcast %200 : vector<1x1xf32> to vector<1x6xf32>
    %202 = arith.subf %198, %201 : vector<1x6xf32>
    %203 = math.exp %202 : vector<1x6xf32>
    %cst_130 = arith.constant dense<0.000000e+00> : vector<1xf32>
    %204 = vector.multi_reduction <add>, %203, %cst_130 [1] : vector<1x6xf32> to vector<1xf32>
    %205 = vector.shape_cast %204 : vector<1xf32> to vector<1x1xf32>
    %206 = math.log %205 : vector<1x1xf32>
    %207 = arith.addf %200, %206 : vector<1x1xf32>
    %208 = tpu.iota {dimensions = array<i32: 1>} : vector<1x8xi32>
    %c6_i32 = arith.constant 6 : i32
    %209 = vector.broadcast %c6_i32 : i32 to vector<1x8xi32>
    %210 = arith.cmpi slt, %208, %209 : vector<1x8xi32>
    %211 = vector.broadcast %207 : vector<1x1xf32> to vector<1x8xf32>
    %212 = arith.subf %197, %211 : vector<1x8xf32>
    %213 = arith.select %210, %212, %197 : vector<1x8xi1>, vector<1x8xf32>
    %c0_131 = arith.constant 0 : index
    %c0_132 = arith.constant 0 : index
    %214 = vector.load %arg7[%c0_131, %c0_132] : memref<1x8xf32, #tpu.memory_space<vmem>>, vector<1x8xf32>
    tpu.vector_store %arg7[%c0_131, %c0_132], %213 {strides = array<i32>} : memref<1x8xf32, #tpu.memory_space<vmem>>, vector<1x8xf32>,
    return
  }
}

</mosaic_0001>

<llo_original>
// kernel: breakout_a2c_forward.1
$region0: #{breakout_a2c_forward.1}
  #allocation0 [shape = 'u32[]', space=smem, size = 0x4, offset = 0x4, fixed_abs, tag = 'smem constant byte address 0x4 - core index']
  #allocation1 [shape = 'u32[144,128]{1,0:T(1,128)}', space=vmem, size = 0x12000, scoped, tag = 'internal scratch']
  #allocation2 [shape = 'bf16[2048,256]{1,0:T(16,128)(2,1)}', space=vmem, size = 0x100000, scoped, tag = 'scratch operand']
  #allocation3 [shape = 'bf16[64,128]{1,0:T(16,128)(2,1)}', space=vmem, size = 0x4000, scoped, tag = 'scratch operand']
  #allocation4 [shape = 'bf16[16,128]{1,0:T(16,128)(2,1)}', space=vmem, size = 0x1000, scoped, tag = 'scratch operand']
  #allocation5 [shape = 'bf16[1,2048]{1,0:T(2,128)(2,1)}', space=vmem, size = 0x2000, scoped, tag = 'scratch operand']
  #allocation6 [shape = 's32[1]{0}', space=sflag, size = 0x4, scoped, tag = 'scratch operand']
  #allocation7 [shape = 's32[]', space=sflag, size = 0x4, offset = 0, fixed_abs, tag = 'sflag constant byte address 0x0 - dummy sync flag']
  %s0 = inlined_call_operand.vmem [shape: bf16[162,512], index: 0, kind: input, shape index: {}]
  %s1 = inlined_call_operand.vmem [shape: bf16[16,162], index: 1, kind: input, shape index: {}]
  %s2 = inlined_call_operand.vmem [shape: bf16[25,32,64], index: 2, kind: input, shape index: {}]
  %s3 = inlined_call_operand.vmem [shape: f32[256,8], index: 3, kind: input, shape index: {}]
  %s4 = inlined_call_operand.vmem [shape: f32[48,1], index: 4, kind: input, shape index: {}]
  %s5 = inlined_call_operand.vmem [shape: f32[1,264], index: 5, kind: input, shape index: {}]
  %s6 = inlined_call_operand.vmem [shape: bf16[2048,256], index: 6, kind: input, shape index: {}]
  %s7 = inlined_call_operand.vmem [shape: f32[1,8], index: 7, kind: output, shape index: {}]
  %s8 = sld [smem:[#allocation0]]
  $region82: #{breakout_a2c_forward.1} parent=0
    _
  %s10 = ssub.s32 1, %s8
  %s11 = scalar_select 0, %s10, %s8
  // Predicated region
  $region2: #{breakout_a2c_forward.1} parent=0 // pred_check
    _
  $region3: #{breakout_a2c_forward.1} parent=0 // pred_check_branch
    %13 = sbr.rel (0) target = $region5
  $region4: #{breakout_a2c_forward.1} parent=0 // pred_region
    _
  $region5: #{breakout_a2c_forward.1} parent=0 // pred_fallthru
    _
  // Predicated region
  $region6: #{breakout_a2c_forward.1} parent=0 // pred_check
    _
  $region7: #{breakout_a2c_forward.1} parent=0 // pred_check_branch
    %15 = sbr.rel (0) target = $region9
  $region8: #{breakout_a2c_forward.1} parent=0 // pred_region
    _
  $region9: #{breakout_a2c_forward.1} parent=0 // pred_fallthru
    _
  // Predicated region
  $region10: #{breakout_a2c_forward.1} parent=0 // pred_check
    _
  $region11: #{breakout_a2c_forward.1} parent=0 // pred_check_branch
    %17 = sbr.rel (0) target = $region13
  $region12: #{breakout_a2c_forward.1} parent=0 // pred_region
    _
  $region13: #{breakout_a2c_forward.1} parent=0 // pred_fallthru
    _
  // Predicated region
  $region14: #{breakout_a2c_forward.1} parent=0 // pred_check
    _
  $region15: #{breakout_a2c_forward.1} parent=0 // pred_check_branch
    %19 = sbr.rel (0) target = $region17
  $region16: #{breakout_a2c_forward.1} parent=0 // pred_region
    _
  $region17: #{breakout_a2c_forward.1} parent=0 // pred_fallthru
    _
  // Predicated region
  $region18: #{breakout_a2c_forward.1} parent=0 // pred_check
    _
  $region19: #{breakout_a2c_forward.1} parent=0 // pred_check_branch
    %21 = sbr.rel (0) target = $region21
  $region20: #{breakout_a2c_forward.1} parent=0 // pred_region
    _
  $region21: #{breakout_a2c_forward.1} parent=0 // pred_fallthru
    _
  // Predicated region
  $region22: #{breakout_a2c_forward.1} parent=0 // pred_check
    _
  $region23: #{breakout_a2c_forward.1} parent=0 // pred_check_branch
    %23 = sbr.rel (0) target = $region25
  $region24: #{breakout_a2c_forward.1} parent=0 // pred_region
    _
  $region25: #{breakout_a2c_forward.1} parent=0 // pred_fallthru
    _
  %p26 = scmp.lt.u32.totalorder 4, 8
  %p27 = pneg %p26
  // Predicated region
  $region26: #{breakout_a2c_forward.1} parent=0 // pred_check
    _
  $region27: #{breakout_a2c_forward.1} parent=0 // pred_check_branch
    %29 = sbr.rel (%p26) target = $region29
  $region28: #{breakout_a2c_forward.1} parent=0 // pred_region
    %s1066 = sand.u32 4, 7
    %p1067 = scmp.eq.s32.totalorder %s1066, 0
    // Predicated region
    $region41: #{breakout_a2c_forward.1} parent=28 // pred_check
      %p1068 = pneg %p1067
    $region42: #{breakout_a2c_forward.1} parent=28 // pred_check_branch
      %1070 = sbr.rel (%p1068) target = $region44
    $region43: #{breakout_a2c_forward.1} parent=28 // pred_region
      %s1071 = sshrl.u32 4, 3
      // While loop
      $region45: #{breakout_a2c_forward.1} parent=43 // loop_pre_header
        _
      $region46: #{breakout_a2c_forward.1} parent=43 // loop_header
        %s1075 = sphi 0, %s1077
        %p1076 = scmp.ge.s32.totalorder %s1075, %s1071
        %s1080 = sphi 0, %s2109
        %s1081 = sphi %s6, %s2112
        %s1082 = sphi [#allocation2], %s2113
      $region47: #{breakout_a2c_forward.1} parent=43 // loop_header_branch
        %1079 = sbr.rel (%p1076) target = $region51
      $region48: #{breakout_a2c_forward.1} parent=43 // loop_body
        %v1083 = vld [vmem:[%s1081] sm:$0xff]
        %1084 = vst [vmem:[%s1082] sm:$0xff] %v1083
        %v1085 = vld [vmem:[%s1081 + $0x8] sm:$0xff]
        %1086 = vst [vmem:[%s1082 + $0x4] sm:$0xff] %v1085
        %v1087 = vld [vmem:[%s1081 + $0x4] sm:$0xff]
        %1088 = vst [vmem:[%s1082 + $0x8] sm:$0xff] %v1087
        %v1089 = vld [vmem:[%s1081 + $0xc] sm:$0xff]
        %1090 = vst [vmem:[%s1082 + $0xc] sm:$0xff] %v1089
        %v1091 = vld [vmem:[%s1081 + $0x10] sm:$0xff]
        %1092 = vst [vmem:[%s1082 + $0x10] sm:$0xff] %v1091
        %v1093 = vld [vmem:[%s1081 + $0x18] sm:$0xff]
        %1094 = vst [vmem:[%s1082 + $0x14] sm:$0xff] %v1093
        %v1095 = vld [vmem:[%s1081 + $0x14] sm:$0xff]
        %1096 = vst [vmem:[%s1082 + $0x18] sm:$0xff] %v1095
        %v1097 = vld [vmem:[%s1081 + $0x1c] sm:$0xff]
        %1098 = vst [vmem:[%s1082 + $0x1c] sm:$0xff] %v1097
        %v1099 = vld [vmem:[%s1081 + $0x20] sm:$0xff]
        %1100 = vst [vmem:[%s1082 + $0x20] sm:$0xff] %v1099
        %v1101 = vld [vmem:[%s1081 + $0x28] sm:$0xff]
        %1102 = vst [vmem:[%s1082 + $0x24] sm:$0xff] %v1101
        %v1103 = vld [vmem:[%s1081 + $0x24] sm:$0xff]
        %1104 = vst [vmem:[%s1082 + $0x28] sm:$0xff] %v1103
        %v1105 = vld [vmem:[%s1081 + $0x2c] sm:$0xff]
        %1106 = vst [vmem:[%s1082 + $0x2c] sm:$0xff] %v1105
        %v1107 = vld [vmem:[%s1081 + $0x30] sm:$0xff]
        %1108 = vst [vmem:[%s1082 + $0x30] sm:$0xff] %v1107
        %v1109 = vld [vmem:[%s1081 + $0x38] sm:$0xff]
        %1110 = vst [vmem:[%s1082 + $0x34] sm:$0xff] %v1109
        %v1111 = vld [vmem:[%s1081 + $0x34] sm:$0xff]
        %1112 = vst [vmem:[%s1082 + $0x38] sm:$0xff] %v1111
        %v1113 = vld [vmem:[%s1081 + $0x3c] sm:$0xff]
        %1114 = vst [vmem:[%s1082 + $0x3c] sm:$0xff] %v1113
        %v1115 = vld [vmem:[%s1081 + $0x40] sm:$0xff]
        %1116 = vst [vmem:[%s1082 + $0x40] sm:$0xff] %v1115
        %v1117 = vld [vmem:[%s1081 + $0x48] sm:$0xff]
        %1118 = vst [vmem:[%s1082 + $0x44] sm:$0xff] %v1117
        %v1119 = vld [vmem:[%s1081 + $0x44] sm:$0xff]
        %1120 = vst [vmem:[%s1082 + $0x48] sm:$0xff] %v1119
        %v1121 = vld [vmem:[%s1081 + $0x4c] sm:$0xff]
        %1122 = vst [vmem:[%s1082 + $0x4c] sm:$0xff] %v1121
        %v1123 = vld [vmem:[%s1081 + $0x50] sm:$0xff]
        %1124 = vst [vmem:[%s1082 + $0x50] sm:$0xff] %v1123
        %v1125 = vld [vmem:[%s1081 + $0x58] sm:$0xff]
        %1126 = vst [vmem:[%s1082 + $0x54] sm:$0xff] %v1125
        %v1127 = vld [vmem:[%s1081 + $0x54] sm:$0xff]
        %1128 = vst [vmem:[%s1082 + $0x58] sm:$0xff] %v1127
        %v1129 = vld [vmem:[%s1081 + $0x5c] sm:$0xff]
        %1130 = vst [vmem:[%s1082 + $0x5c] sm:$0xff] %v1129
        %v1131 = vld [vmem:[%s1081 + $0x60] sm:$0xff]
        %1132 = vst [vmem:[%s1082 + $0x60] sm:$0xff] %v1131
        %v1133 = vld [vmem:[%s1081 + $0x68] sm:$0xff]
        %1134 = vst [vmem:[%s1082 + $0x64] sm:$0xff] %v1133
        %v1135 = vld [vmem:[%s1081 + $0x64] sm:$0xff]
        %1136 = vst [vmem:[%s1082 + $0x68] sm:$0xff] %v1135
        %v1137 = vld [vmem:[%s1081 + $0x6c] sm:$0xff]
        %1138 = vst [vmem:[%s1082 + $0x6c] sm:$0xff] %v1137
        %v1139 = vld [vmem:[%s1081 + $0x70] sm:$0xff]
        %1140 = vst [vmem:[%s1082 + $0x70] sm:$0xff] %v1139
        %v1141 = vld [vmem:[%s1081 + $0x78] sm:$0xff]
        %1142 = vst [vmem:[%s1082 + $0x74] sm:$0xff] %v1141
        %v1143 = vld [vmem:[%s1081 + $0x74] sm:$0xff]
        %1144 = vst [vmem:[%s1082 + $0x78] sm:$0xff] %v1143
        %v1145 = vld [vmem:[%s1081 + $0x7c] sm:$0xff]
        %1146 = vst [vmem:[%s1082 + $0x7c] sm:$0xff] %v1145
        %v1147 = vld [vmem:[%s1081 + $0x80] sm:$0xff]
        %1148 = vst [vmem:[%s1082 + $0x80] sm:$0xff] %v1147
        %v1149 = vld [vmem:[%s1081 + $0x88] sm:$0xff]
        %1150 = vst [vmem:[%s1082 + $0x84] sm:$0xff] %v1149
        %v1151 = vld [vmem:[%s1081 + $0x84] sm:$0xff]
        %1152 = vst [vmem:[%s1082 + $0x88] sm:$0xff] %v1151
        %v1153 = vld [vmem:[%s1081 + $0x8c] sm:$0xff]
        %1154 = vst [vmem:[%s1082 + $0x8c] sm:$0xff] %v1153
        %v1155 = vld [vmem:[%s1081 + $0x90] sm:$0xff]
        %1156 = vst [vmem:[%s1082 + $0x90] sm:$0xff] %v1155
        %v1157 = vld [vmem:[%s1081 + $0x98] sm:$0xff]
        %1158 = vst [vmem:[%s1082 + $0x94] sm:$0xff] %v1157
        %v1159 = vld [vmem:[%s1081 + $0x94] sm:$0xff]
        %1160 = vst [vmem:[%s1082 + $0x98] sm:$0xff] %v1159
        %v1161 = vld [vmem:[%s1081 + $0x9c] sm:$0xff]
        %1162 = vst [vmem:[%s1082 + $0x9c] sm:$0xff] %v1161
        %v1163 = vld [vmem:[%s1081 + $0xa0] sm:$0xff]
        %1164 = vst [vmem:[%s1082 + $0xa0] sm:$0xff] %v1163
        %v1165 = vld [vmem:[%s1081 + $0xa8] sm:$0xff]
        %1166 = vst [vmem:[%s1082 + $0xa4] sm:$0xff] %v1165
        %v1167 = vld [vmem:[%s1081 + $0xa4] sm:$0xff]
        %1168 = vst [vmem:[%s1082 + $0xa8] sm:$0xff] %v1167
        %v1169 = vld [vmem:[%s1081 + $0xac] sm:$0xff]
        %1170 = vst [vmem:[%s1082 + $0xac] sm:$0xff] %v1169
        %v1171 = vld [vmem:[%s1081 + $0xb0] sm:$0xff]
        %1172 = vst [vmem:[%s1082 + $0xb0] sm:$0xff] %v1171
        %v1173 = vld [vmem:[%s1081 + $0xb8] sm:$0xff]
        %1174 = vst [vmem:[%s1082 + $0xb4] sm:$0xff] %v1173
        %v1175 = vld [vmem:[%s1081 + $0xb4] sm:$0xff]
        %1176 = vst [vmem:[%s1082 + $0xb8] sm:$0xff] %v1175
        %v1177 = vld [vmem:[%s1081 + $0xbc] sm:$0xff]
        %1178 = vst [vmem:[%s1082 + $0xbc] sm:$0xff] %v1177
        %v1179 = vld [vmem:[%s1081 + $0xc0] sm:$0xff]
        %1180 = vst [vmem:[%s1082 + $0xc0] sm:$0xff] %v1179
        %v1181 = vld [vmem:[%s1081 + $0xc8] sm:$0xff]
        %1182 = vst [vmem:[%s1082 + $0xc4] sm:$0xff] %v1181
        %v1183 = vld [vmem:[%s1081 + $0xc4] sm:$0xff]
        %1184 = vst [vmem:[%s1082 + $0xc8] sm:$0xff] %v1183
        %v1185 = vld [vmem:[%s1081 + $0xcc] sm:$0xff]
        %1186 = vst [vmem:[%s1082 + $0xcc] sm:$0xff] %v1185
        %v1187 = vld [vmem:[%s1081 + $0xd0] sm:$0xff]
        %1188 = vst [vmem:[%s1082 + $0xd0] sm:$0xff] %v1187
        %v1189 = vld [vmem:[%s1081 + $0xd8] sm:$0xff]
        %1190 = vst [vmem:[%s1082 + $0xd4] sm:$0xff] %v1189
        %v1191 = vld [vmem:[%s1081 + $0xd4] sm:$0xff]
        %1192 = vst [vmem:[%s1082 + $0xd8] sm:$0xff] %v1191
        %v1193 = vld [vmem:[%s1081 + $0xdc] sm:$0xff]
        %1194 = vst [vmem:[%s1082 + $0xdc] sm:$0xff] %v1193
        %v1195 = vld [vmem:[%s1081 + $0xe0] sm:$0xff]
        %1196 = vst [vmem:[%s1082 + $0xe0] sm:$0xff] %v1195
        %v1197 = vld [vmem:[%s1081 + $0xe8] sm:$0xff]
        %1198 = vst [vmem:[%s1082 + $0xe4] sm:$0xff] %v1197
        %v1199 = vld [vmem:[%s1081 + $0xe4] sm:$0xff]
        %1200 = vst [vmem:[%s1082 + $0xe8] sm:$0xff] %v1199
        %v1201 = vld [vmem:[%s1081 + $0xec] sm:$0xff]
        %1202 = vst [vmem:[%s1082 + $0xec] sm:$0xff] %v1201
        %v1203 = vld [vmem:[%s1081 + $0xf0] sm:$0xff]
        %1204 = vst [vmem:[%s1082 + $0xf0] sm:$0xff] %v1203
        %v1205 = vld [vmem:[%s1081 + $0xf8] sm:$0xff]
        %1206 = vst [vmem:[%s1082 + $0xf4] sm:$0xff] %v1205
        %v1207 = vld [vmem:[%s1081 + $0xf4] sm:$0xff]
        %1208 = vst [vmem:[%s1082 + $0xf8] sm:$0xff] %v1207
        %v1209 = vld [vmem:[%s1081 + $0xfc] sm:$0xff]
        %1210 = vst [vmem:[%s1082 + $0xfc] sm:$0xff] %v1209
        %v1211 = vld [vmem:[%s1081 + $0x100] sm:$0xff]
        %1212 = vst [vmem:[%s1082 + $0x100] sm:$0xff] %v1211
        %v1213 = vld [vmem:[%s1081 + $0x108] sm:$0xff]
        %1214 = vst [vmem:[%s1082 + $0x104] sm:$0xff] %v1213
        %v1215 = vld [vmem:[%s1081 + $0x104] sm:$0xff]
        %1216 = vst [vmem:[%s1082 + $0x108] sm:$0xff] %v1215
        %v1217 = vld [vmem:[%s1081 + $0x10c] sm:$0xff]
        %1218 = vst [vmem:[%s1082 + $0x10c] sm:$0xff] %v1217
        %v1219 = vld [vmem:[%s1081 + $0x110] sm:$0xff]
        %1220 = vst [vmem:[%s1082 + $0x110] sm:$0xff] %v1219
        %v1221 = vld [vmem:[%s1081 + $0x118] sm:$0xff]
        %1222 = vst [vmem:[%s1082 + $0x114] sm:$0xff] %v1221
        %v1223 = vld [vmem:[%s1081 + $0x114] sm:$0xff]
        %1224 = vst [vmem:[%s1082 + $0x118] sm:$0xff] %v1223
        %v1225 = vld [vmem:[%s1081 + $0x11c] sm:$0xff]
        %1226 = vst [vmem:[%s1082 + $0x11c] sm:$0xff] %v1225
        %v1227 = vld [vmem:[%s1081 + $0x120] sm:$0xff]
        %1228 = vst [vmem:[%s1082 + $0x120] sm:$0xff] %v1227
        %v1229 = vld [vmem:[%s1081 + $0x128] sm:$0xff]
        %1230 = vst [vmem:[%s1082 + $0x124] sm:$0xff] %v1229
        %v1231 = vld [vmem:[%s1081 + $0x124] sm:$0xff]
        %1232 = vst [vmem:[%s1082 + $0x128] sm:$0xff] %v1231
        %v1233 = vld [vmem:[%s1081 + $0x12c] sm:$0xff]
        %1234 = vst [vmem:[%s1082 + $0x12c] sm:$0xff] %v1233
        %v1235 = vld [vmem:[%s1081 + $0x130] sm:$0xff]
        %1236 = vst [vmem:[%s1082 + $0x130] sm:$0xff] %v1235
        %v1237 = vld [vmem:[%s1081 + $0x138] sm:$0xff]
        %1238 = vst [vmem:[%s1082 + $0x134] sm:$0xff] %v1237
        %v1239 = vld [vmem:[%s1081 + $0x134] sm:$0xff]
        %1240 = vst [vmem:[%s1082 + $0x138] sm:$0xff] %v1239
        %v1241 = vld [vmem:[%s1081 + $0x13c] sm:$0xff]
        %1242 = vst [vmem:[%s1082 + $0x13c] sm:$0xff] %v1241
        %v1243 = vld [vmem:[%s1081 + $0x140] sm:$0xff]
        %1244 = vst [vmem:[%s1082 + $0x140] sm:$0xff] %v1243
        %v1245 = vld [vmem:[%s1081 + $0x148] sm:$0xff]
        %1246 = vst [vmem:[%s1082 + $0x144] sm:$0xff] %v1245
        %v1247 = vld [vmem:[%s1081 + $0x144] sm:$0xff]
        %1248 = vst [vmem:[%s1082 + $0x148] sm:$0xff] %v1247
        %v1249 = vld [vmem:[%s1081 + $0x14c] sm:$0xff]
        %1250 = vst [vmem:[%s1082 + $0x14c] sm:$0xff] %v1249
        %v1251 = vld [vmem:[%s1081 + $0x150] sm:$0xff]
        %1252 = vst [vmem:[%s1082 + $0x150] sm:$0xff] %v1251
        %v1253 = vld [vmem:[%s1081 + $0x158] sm:$0xff]
        %1254 = vst [vmem:[%s1082 + $0x154] sm:$0xff] %v1253
        %v1255 = vld [vmem:[%s1081 + $0x154] sm:$0xff]
        %1256 = vst [vmem:[%s1082 + $0x158] sm:$0xff] %v1255
        %v1257 = vld [vmem:[%s1081 + $0x15c] sm:$0xff]
        %1258 = vst [vmem:[%s1082 + $0x15c] sm:$0xff] %v1257
        %v1259 = vld [vmem:[%s1081 + $0x160] sm:$0xff]
        %1260 = vst [vmem:[%s1082 + $0x160] sm:$0xff] %v1259
        %v1261 = vld [vmem:[%s1081 + $0x168] sm:$0xff]
        %1262 = vst [vmem:[%s1082 + $0x164] sm:$0xff] %v1261
        %v1263 = vld [vmem:[%s1081 + $0x164] sm:$0xff]
        %1264 = vst [vmem:[%s1082 + $0x168] sm:$0xff] %v1263
        %v1265 = vld [vmem:[%s1081 + $0x16c] sm:$0xff]
        %1266 = vst [vmem:[%s1082 + $0x16c] sm:$0xff] %v1265
        %v1267 = vld [vmem:[%s1081 + $0x170] sm:$0xff]
        %1268 = vst [vmem:[%s1082 + $0x170] sm:$0xff] %v1267
        %v1269 = vld [vmem:[%s1081 + $0x178] sm:$0xff]
        %1270 = vst [vmem:[%s1082 + $0x174] sm:$0xff] %v1269
        %v1271 = vld [vmem:[%s1081 + $0x174] sm:$0xff]
        %1272 = vst [vmem:[%s1082 + $0x178] sm:$0xff] %v1271
        %v1273 = vld [vmem:[%s1081 + $0x17c] sm:$0xff]
        %1274 = vst [vmem:[%s1082 + $0x17c] sm:$0xff] %v1273
        %v1275 = vld [vmem:[%s1081 + $0x180] sm:$0xff]
        %1276 = vst [vmem:[%s1082 + $0x180] sm:$0xff] %v1275
        %v1277 = vld [vmem:[%s1081 + $0x188] sm:$0xff]
        %1278 = vst [vmem:[%s1082 + $0x184] sm:$0xff] %v1277
        %v1279 = vld [vmem:[%s1081 + $0x184] sm:$0xff]
        %1280 = vst [vmem:[%s1082 + $0x188] sm:$0xff] %v1279
        %v1281 = vld [vmem:[%s1081 + $0x18c] sm:$0xff]
        %1282 = vst [vmem:[%s1082 + $0x18c] sm:$0xff] %v1281
        %v1283 = vld [vmem:[%s1081 + $0x190] sm:$0xff]
        %1284 = vst [vmem:[%s1082 + $0x190] sm:$0xff] %v1283
        %v1285 = vld [vmem:[%s1081 + $0x198] sm:$0xff]
        %1286 = vst [vmem:[%s1082 + $0x194] sm:$0xff] %v1285
        %v1287 = vld [vmem:[%s1081 + $0x194] sm:$0xff]
        %1288 = vst [vmem:[%s1082 + $0x198] sm:$0xff] %v1287
        %v1289 = vld [vmem:[%s1081 + $0x19c] sm:$0xff]
        %1290 = vst [vmem:[%s1082 + $0x19c] sm:$0xff] %v1289
        %v1291 = vld [vmem:[%s1081 + $0x1a0] sm:$0xff]
        %1292 = vst [vmem:[%s1082 + $0x1a0] sm:$0xff] %v1291
        %v1293 = vld [vmem:[%s1081 + $0x1a8] sm:$0xff]
        %1294 = vst [vmem:[%s1082 + $0x1a4] sm:$0xff] %v1293
        %v1295 = vld [vmem:[%s1081 + $0x1a4] sm:$0xff]
        %1296 = vst [vmem:[%s1082 + $0x1a8] sm:$0xff] %v1295
        %v1297 = vld [vmem:[%s1081 + $0x1ac] sm:$0xff]
        %1298 = vst [vmem:[%s1082 + $0x1ac] sm:$0xff] %v1297
        %v1299 = vld [vmem:[%s1081 + $0x1b0] sm:$0xff]
        %1300 = vst [vmem:[%s1082 + $0x1b0] sm:$0xff] %v1299
        %v1301 = vld [vmem:[%s1081 + $0x1b8] sm:$0xff]
        %1302 = vst [vmem:[%s1082 + $0x1b4] sm:$0xff] %v1301
        %v1303 = vld [vmem:[%s1081 + $0x1b4] sm:$0xff]
        %1304 = vst [vmem:[%s1082 + $0x1b8] sm:$0xff] %v1303
        %v1305 = vld [vmem:[%s1081 + $0x1bc] sm:$0xff]
        %1306 = vst [vmem:[%s1082 + $0x1bc] sm:$0xff] %v1305
        %v1307 = vld [vmem:[%s1081 + $0x1c0] sm:$0xff]
        %1308 = vst [vmem:[%s1082 + $0x1c0] sm:$0xff] %v1307
        %v1309 = vld [vmem:[%s1081 + $0x1c8] sm:$0xff]
        %1310 = vst [vmem:[%s1082 + $0x1c4] sm:$0xff] %v1309
        %v1311 = vld [vmem:[%s1081 + $0x1c4] sm:$0xff]
        %1312 = vst [vmem:[%s1082 + $0x1c8] sm:$0xff] %v1311
        %v1313 = vld [vmem:[%s1081 + $0x1cc] sm:$0xff]
        %1314 = vst [vmem:[%s1082 + $0x1cc] sm:$0xff] %v1313
        %v1315 = vld [vmem:[%s1081 + $0x1d0] sm:$0xff]
        %1316 = vst [vmem:[%s1082 + $0x1d0] sm:$0xff] %v1315
        %v1317 = vld [vmem:[%s1081 + $0x1d8] sm:$0xff]
        %1318 = vst [vmem:[%s1082 + $0x1d4] sm:$0xff] %v1317
        %v1319 = vld [vmem:[%s1081 + $0x1d4] sm:$0xff]
        %1320 = vst [vmem:[%s1082 + $0x1d8] sm:$0xff] %v1319
        %v1321 = vld [vmem:[%s1081 + $0x1dc] sm:$0xff]
        %1322 = vst [vmem:[%s1082 + $0x1dc] sm:$0xff] %v1321
        %v1323 = vld [vmem:[%s1081 + $0x1e0] sm:$0xff]
        %1324 = vst [vmem:[%s1082 + $0x1e0] sm:$0xff] %v1323
        %v1325 = vld [vmem:[%s1081 + $0x1e8] sm:$0xff]
        %1326 = vst [vmem:[%s1082 + $0x1e4] sm:$0xff] %v1325
        %v1327 = vld [vmem:[%s1081 + $0x1e4] sm:$0xff]
        %1328 = vst [vmem:[%s1082 + $0x1e8] sm:$0xff] %v1327
        %v1329 = vld [vmem:[%s1081 + $0x1ec] sm:$0xff]
        %1330 = vst [vmem:[%s1082 + $0x1ec] sm:$0xff] %v1329
        %v1331 = vld [vmem:[%s1081 + $0x1f0] sm:$0xff]
        %1332 = vst [vmem:[%s1082 + $0x1f0] sm:$0xff] %v1331
        %v1333 = vld [vmem:[%s1081 + $0x1f8] sm:$0xff]
        %1334 = vst [vmem:[%s1082 + $0x1f4] sm:$0xff] %v1333
        %v1335 = vld [vmem:[%s1081 + $0x1f4] sm:$0xff]
        %1336 = vst [vmem:[%s1082 + $0x1f8] sm:$0xff] %v1335
        %v1337 = vld [vmem:[%s1081 + $0x1fc] sm:$0xff]
        %1338 = vst [vmem:[%s1082 + $0x1fc] sm:$0xff] %v1337
        %v1339 = vld [vmem:[%s1081 + $0x200] sm:$0xff]
        %1340 = vst [vmem:[%s1082 + $0x200] sm:$0xff] %v1339
        %v1341 = vld [vmem:[%s1081 + $0x208] sm:$0xff]
        %1342 = vst [vmem:[%s1082 + $0x204] sm:$0xff] %v1341
        %v1343 = vld [vmem:[%s1081 + $0x204] sm:$0xff]
        %1344 = vst [vmem:[%s1082 + $0x208] sm:$0xff] %v1343
        %v1345 = vld [vmem:[%s1081 + $0x20c] sm:$0xff]
        %1346 = vst [vmem:[%s1082 + $0x20c] sm:$0xff] %v1345
        %v1347 = vld [vmem:[%s1081 + $0x210] sm:$0xff]
        %1348 = vst [vmem:[%s1082 + $0x210] sm:$0xff] %v1347
        %v1349 = vld [vmem:[%s1081 + $0x218] sm:$0xff]
        %1350 = vst [vmem:[%s1082 + $0x214] sm:$0xff] %v1349
        %v1351 = vld [vmem:[%s1081 + $0x214] sm:$0xff]
        %1352 = vst [vmem:[%s1082 + $0x218] sm:$0xff] %v1351
        %v1353 = vld [vmem:[%s1081 + $0x21c] sm:$0xff]
        %1354 = vst [vmem:[%s1082 + $0x21c] sm:$0xff] %v1353
        %v1355 = vld [vmem:[%s1081 + $0x220] sm:$0xff]
        %1356 = vst [vmem:[%s1082 + $0x220] sm:$0xff] %v1355
        %v1357 = vld [vmem:[%s1081 + $0x228] sm:$0xff]
        %1358 = vst [vmem:[%s1082 + $0x224] sm:$0xff] %v1357
        %v1359 = vld [vmem:[%s1081 + $0x224] sm:$0xff]
        %1360 = vst [vmem:[%s1082 + $0x228] sm:$0xff] %v1359
        %v1361 = vld [vmem:[%s1081 + $0x22c] sm:$0xff]
        %1362 = vst [vmem:[%s1082 + $0x22c] sm:$0xff] %v1361
        %v1363 = vld [vmem:[%s1081 + $0x230] sm:$0xff]
        %1364 = vst [vmem:[%s1082 + $0x230] sm:$0xff] %v1363
        %v1365 = vld [vmem:[%s1081 + $0x238] sm:$0xff]
        %1366 = vst [vmem:[%s1082 + $0x234] sm:$0xff] %v1365
        %v1367 = vld [vmem:[%s1081 + $0x234] sm:$0xff]
        %1368 = vst [vmem:[%s1082 + $0x238] sm:$0xff] %v1367
        %v1369 = vld [vmem:[%s1081 + $0x23c] sm:$0xff]
        %1370 = vst [vmem:[%s1082 + $0x23c] sm:$0xff] %v1369
        %v1371 = vld [vmem:[%s1081 + $0x240] sm:$0xff]
        %1372 = vst [vmem:[%s1082 + $0x240] sm:$0xff] %v1371
        %v1373 = vld [vmem:[%s1081 + $0x248] sm:$0xff]
        %1374 = vst [vmem:[%s1082 + $0x244] sm:$0xff] %v1373
        %v1375 = vld [vmem:[%s1081 + $0x244] sm:$0xff]
        %1376 = vst [vmem:[%s1082 + $0x248] sm:$0xff] %v1375
        %v1377 = vld [vmem:[%s1081 + $0x24c] sm:$0xff]
        %1378 = vst [vmem:[%s1082 + $0x24c] sm:$0xff] %v1377
        %v1379 = vld [vmem:[%s1081 + $0x250] sm:$0xff]
        %1380 = vst [vmem:[%s1082 + $0x250] sm:$0xff] %v1379
        %v1381 = vld [vmem:[%s1081 + $0x258] sm:$0xff]
        %1382 = vst [vmem:[%s1082 + $0x254] sm:$0xff] %v1381
        %v1383 = vld [vmem:[%s1081 + $0x254] sm:$0xff]
        %1384 = vst [vmem:[%s1082 + $0x258] sm:$0xff] %v1383
        %v1385 = vld [vmem:[%s1081 + $0x25c] sm:$0xff]
        %1386 = vst [vmem:[%s1082 + $0x25c] sm:$0xff] %v1385
        %v1387 = vld [vmem:[%s1081 + $0x260] sm:$0xff]
        %1388 = vst [vmem:[%s1082 + $0x260] sm:$0xff] %v1387
        %v1389 = vld [vmem:[%s1081 + $0x268] sm:$0xff]
        %1390 = vst [vmem:[%s1082 + $0x264] sm:$0xff] %v1389
        %v1391 = vld [vmem:[%s1081 + $0x264] sm:$0xff]
        %1392 = vst [vmem:[%s1082 + $0x268] sm:$0xff] %v1391
        %v1393 = vld [vmem:[%s1081 + $0x26c] sm:$0xff]
        %1394 = vst [vmem:[%s1082 + $0x26c] sm:$0xff] %v1393
        %v1395 = vld [vmem:[%s1081 + $0x270] sm:$0xff]
        %1396 = vst [vmem:[%s1082 + $0x270] sm:$0xff] %v1395
        %v1397 = vld [vmem:[%s1081 + $0x278] sm:$0xff]
        %1398 = vst [vmem:[%s1082 + $0x274] sm:$0xff] %v1397
        %v1399 = vld [vmem:[%s1081 + $0x274] sm:$0xff]
        %1400 = vst [vmem:[%s1082 + $0x278] sm:$0xff] %v1399
        %v1401 = vld [vmem:[%s1081 + $0x27c] sm:$0xff]
        %1402 = vst [vmem:[%s1082 + $0x27c] sm:$0xff] %v1401
        %v1403 = vld [vmem:[%s1081 + $0x280] sm:$0xff]
        %1404 = vst [vmem:[%s1082 + $0x280] sm:$0xff] %v1403
        %v1405 = vld [vmem:[%s1081 + $0x288] sm:$0xff]
        %1406 = vst [vmem:[%s1082 + $0x284] sm:$0xff] %v1405
        %v1407 = vld [vmem:[%s1081 + $0x284] sm:$0xff]
        %1408 = vst [vmem:[%s1082 + $0x288] sm:$0xff] %v1407
        %v1409 = vld [vmem:[%s1081 + $0x28c] sm:$0xff]
        %1410 = vst [vmem:[%s1082 + $0x28c] sm:$0xff] %v1409
        %v1411 = vld [vmem:[%s1081 + $0x290] sm:$0xff]
        %1412 = vst [vmem:[%s1082 + $0x290] sm:$0xff] %v1411
        %v1413 = vld [vmem:[%s1081 + $0x298] sm:$0xff]
        %1414 = vst [vmem:[%s1082 + $0x294] sm:$0xff] %v1413
        %v1415 = vld [vmem:[%s1081 + $0x294] sm:$0xff]
        %1416 = vst [vmem:[%s1082 + $0x298] sm:$0xff] %v1415
        %v1417 = vld [vmem:[%s1081 + $0x29c] sm:$0xff]
        %1418 = vst [vmem:[%s1082 + $0x29c] sm:$0xff] %v1417
        %v1419 = vld [vmem:[%s1081 + $0x2a0] sm:$0xff]
        %1420 = vst [vmem:[%s1082 + $0x2a0] sm:$0xff] %v1419
        %v1421 = vld [vmem:[%s1081 + $0x2a8] sm:$0xff]
        %1422 = vst [vmem:[%s1082 + $0x2a4] sm:$0xff] %v1421
        %v1423 = vld [vmem:[%s1081 + $0x2a4] sm:$0xff]
        %1424 = vst [vmem:[%s1082 + $0x2a8] sm:$0xff] %v1423
        %v1425 = vld [vmem:[%s1081 + $0x2ac] sm:$0xff]
        %1426 = vst [vmem:[%s1082 + $0x2ac] sm:$0xff] %v1425
        %v1427 = vld [vmem:[%s1081 + $0x2b0] sm:$0xff]
        %1428 = vst [vmem:[%s1082 + $0x2b0] sm:$0xff] %v1427
        %v1429 = vld [vmem:[%s1081 + $0x2b8] sm:$0xff]
        %1430 = vst [vmem:[%s1082 + $0x2b4] sm:$0xff] %v1429
        %v1431 = vld [vmem:[%s1081 + $0x2b4] sm:$0xff]
        %1432 = vst [vmem:[%s1082 + $0x2b8] sm:$0xff] %v1431
        %v1433 = vld [vmem:[%s1081 + $0x2bc] sm:$0xff]
        %1434 = vst [vmem:[%s1082 + $0x2bc] sm:$0xff] %v1433
        %v1435 = vld [vmem:[%s1081 + $0x2c0] sm:$0xff]
        %1436 = vst [vmem:[%s1082 + $0x2c0] sm:$0xff] %v1435
        %v1437 = vld [vmem:[%s1081 + $0x2c8] sm:$0xff]
        %1438 = vst [vmem:[%s1082 + $0x2c4] sm:$0xff] %v1437
        %v1439 = vld [vmem:[%s1081 + $0x2c4] sm:$0xff]
        %1440 = vst [vmem:[%s1082 + $0x2c8] sm:$0xff] %v1439
        %v1441 = vld [vmem:[%s1081 + $0x2cc] sm:$0xff]
        %1442 = vst [vmem:[%s1082 + $0x2cc] sm:$0xff] %v1441
        %v1443 = vld [vmem:[%s1081 + $0x2d0] sm:$0xff]
        %1444 = vst [vmem:[%s1082 + $0x2d0] sm:$0xff] %v1443
        %v1445 = vld [vmem:[%s1081 + $0x2d8] sm:$0xff]
        %1446 = vst [vmem:[%s1082 + $0x2d4] sm:$0xff] %v1445
        %v1447 = vld [vmem:[%s1081 + $0x2d4] sm:$0xff]
        %1448 = vst [vmem:[%s1082 + $0x2d8] sm:$0xff] %v1447
        %v1449 = vld [vmem:[%s1081 + $0x2dc] sm:$0xff]
        %1450 = vst [vmem:[%s1082 + $0x2dc] sm:$0xff] %v1449
        %v1451 = vld [vmem:[%s1081 + $0x2e0] sm:$0xff]
        %1452 = vst [vmem:[%s1082 + $0x2e0] sm:$0xff] %v1451
        %v1453 = vld [vmem:[%s1081 + $0x2e8] sm:$0xff]
        %1454 = vst [vmem:[%s1082 + $0x2e4] sm:$0xff] %v1453
        %v1455 = vld [vmem:[%s1081 + $0x2e4] sm:$0xff]
        %1456 = vst [vmem:[%s1082 + $0x2e8] sm:$0xff] %v1455
        %v1457 = vld [vmem:[%s1081 + $0x2ec] sm:$0xff]
        %1458 = vst [vmem:[%s1082 + $0x2ec] sm:$0xff] %v1457
        %v1459 = vld [vmem:[%s1081 + $0x2f0] sm:$0xff]
        %1460 = vst [vmem:[%s1082 + $0x2f0] sm:$0xff] %v1459
        %v1461 = vld [vmem:[%s1081 + $0x2f8] sm:$0xff]
        %1462 = vst [vmem:[%s1082 + $0x2f4] sm:$0xff] %v1461
        %v1463 = vld [vmem:[%s1081 + $0x2f4] sm:$0xff]
        %1464 = vst [vmem:[%s1082 + $0x2f8] sm:$0xff] %v1463
        %v1465 = vld [vmem:[%s1081 + $0x2fc] sm:$0xff]
        %1466 = vst [vmem:[%s1082 + $0x2fc] sm:$0xff] %v1465
        %v1467 = vld [vmem:[%s1081 + $0x300] sm:$0xff]
        %1468 = vst [vmem:[%s1082 + $0x300] sm:$0xff] %v1467
        %v1469 = vld [vmem:[%s1081 + $0x308] sm:$0xff]
        %1470 = vst [vmem:[%s1082 + $0x304] sm:$0xff] %v1469
        %v1471 = vld [vmem:[%s1081 + $0x304] sm:$0xff]
        %1472 = vst [vmem:[%s1082 + $0x308] sm:$0xff] %v1471
        %v1473 = vld [vmem:[%s1081 + $0x30c] sm:$0xff]
        %1474 = vst [vmem:[%s1082 + $0x30c] sm:$0xff] %v1473
        %v1475 = vld [vmem:[%s1081 + $0x310] sm:$0xff]
        %1476 = vst [vmem:[%s1082 + $0x310] sm:$0xff] %v1475
        %v1477 = vld [vmem:[%s1081 + $0x318] sm:$0xff]
        %1478 = vst [vmem:[%s1082 + $0x314] sm:$0xff] %v1477
        %v1479 = vld [vmem:[%s1081 + $0x314] sm:$0xff]
        %1480 = vst [vmem:[%s1082 + $0x318] sm:$0xff] %v1479
        %v1481 = vld [vmem:[%s1081 + $0x31c] sm:$0xff]
        %1482 = vst [vmem:[%s1082 + $0x31c] sm:$0xff] %v1481
        %v1483 = vld [vmem:[%s1081 + $0x320] sm:$0xff]
        %1484 = vst [vmem:[%s1082 + $0x320] sm:$0xff] %v1483
        %v1485 = vld [vmem:[%s1081 + $0x328] sm:$0xff]
        %1486 = vst [vmem:[%s1082 + $0x324] sm:$0xff] %v1485
        %v1487 = vld [vmem:[%s1081 + $0x324] sm:$0xff]
        %1488 = vst [vmem:[%s1082 + $0x328] sm:$0xff] %v1487
        %v1489 = vld [vmem:[%s1081 + $0x32c] sm:$0xff]
        %1490 = vst [vmem:[%s1082 + $0x32c] sm:$0xff] %v1489
        %v1491 = vld [vmem:[%s1081 + $0x330] sm:$0xff]
        %1492 = vst [vmem:[%s1082 + $0x330] sm:$0xff] %v1491
        %v1493 = vld [vmem:[%s1081 + $0x338] sm:$0xff]
        %1494 = vst [vmem:[%s1082 + $0x334] sm:$0xff] %v1493
        %v1495 = vld [vmem:[%s1081 + $0x334] sm:$0xff]
        %1496 = vst [vmem:[%s1082 + $0x338] sm:$0xff] %v1495
        %v1497 = vld [vmem:[%s1081 + $0x33c] sm:$0xff]
        %1498 = vst [vmem:[%s1082 + $0x33c] sm:$0xff] %v1497
        %v1499 = vld [vmem:[%s1081 + $0x340] sm:$0xff]
        %1500 = vst [vmem:[%s1082 + $0x340] sm:$0xff] %v1499
        %v1501 = vld [vmem:[%s1081 + $0x348] sm:$0xff]
        %1502 = vst [vmem:[%s1082 + $0x344] sm:$0xff] %v1501
        %v1503 = vld [vmem:[%s1081 + $0x344] sm:$0xff]
        %1504 = vst [vmem:[%s1082 + $0x348] sm:$0xff] %v1503
        %v1505 = vld [vmem:[%s1081 + $0x34c] sm:$0xff]
        %1506 = vst [vmem:[%s1082 + $0x34c] sm:$0xff] %v1505
        %v1507 = vld [vmem:[%s1081 + $0x350] sm:$0xff]
        %1508 = vst [vmem:[%s1082 + $0x350] sm:$0xff] %v1507
        %v1509 = vld [vmem:[%s1081 + $0x358] sm:$0xff]
        %1510 = vst [vmem:[%s1082 + $0x354] sm:$0xff] %v1509
        %v1511 = vld [vmem:[%s1081 + $0x354] sm:$0xff]
        %1512 = vst [vmem:[%s1082 + $0x358] sm:$0xff] %v1511
        %v1513 = vld [vmem:[%s1081 + $0x35c] sm:$0xff]
        %1514 = vst [vmem:[%s1082 + $0x35c] sm:$0xff] %v1513
        %v1515 = vld [vmem:[%s1081 + $0x360] sm:$0xff]
        %1516 = vst [vmem:[%s1082 + $0x360] sm:$0xff] %v1515
        %v1517 = vld [vmem:[%s1081 + $0x368] sm:$0xff]
        %1518 = vst [vmem:[%s1082 + $0x364] sm:$0xff] %v1517
        %v1519 = vld [vmem:[%s1081 + $0x364] sm:$0xff]
        %1520 = vst [vmem:[%s1082 + $0x368] sm:$0xff] %v1519
        %v1521 = vld [vmem:[%s1081 + $0x36c] sm:$0xff]
        %1522 = vst [vmem:[%s1082 + $0x36c] sm:$0xff] %v1521
        %v1523 = vld [vmem:[%s1081 + $0x370] sm:$0xff]
        %1524 = vst [vmem:[%s1082 + $0x370] sm:$0xff] %v1523
        %v1525 = vld [vmem:[%s1081 + $0x378] sm:$0xff]
        %1526 = vst [vmem:[%s1082 + $0x374] sm:$0xff] %v1525
        %v1527 = vld [vmem:[%s1081 + $0x374] sm:$0xff]
        %1528 = vst [vmem:[%s1082 + $0x378] sm:$0xff] %v1527
        %v1529 = vld [vmem:[%s1081 + $0x37c] sm:$0xff]
        %1530 = vst [vmem:[%s1082 + $0x37c] sm:$0xff] %v1529
        %v1531 = vld [vmem:[%s1081 + $0x380] sm:$0xff]
        %1532 = vst [vmem:[%s1082 + $0x380] sm:$0xff] %v1531
        %v1533 = vld [vmem:[%s1081 + $0x388] sm:$0xff]
        %1534 = vst [vmem:[%s1082 + $0x384] sm:$0xff] %v1533
        %v1535 = vld [vmem:[%s1081 + $0x384] sm:$0xff]
        %1536 = vst [vmem:[%s1082 + $0x388] sm:$0xff] %v1535
        %v1537 = vld [vmem:[%s1081 + $0x38c] sm:$0xff]
        %1538 = vst [vmem:[%s1082 + $0x38c] sm:$0xff] %v1537
        %v1539 = vld [vmem:[%s1081 + $0x390] sm:$0xff]
        %1540 = vst [vmem:[%s1082 + $0x390] sm:$0xff] %v1539
        %v1541 = vld [vmem:[%s1081 + $0x398] sm:$0xff]
        %1542 = vst [vmem:[%s1082 + $0x394] sm:$0xff] %v1541
        %v1543 = vld [vmem:[%s1081 + $0x394] sm:$0xff]
        %1544 = vst [vmem:[%s1082 + $0x398] sm:$0xff] %v1543
        %v1545 = vld [vmem:[%s1081 + $0x39c] sm:$0xff]
        %1546 = vst [vmem:[%s1082 + $0x39c] sm:$0xff] %v1545
        %v1547 = vld [vmem:[%s1081 + $0x3a0] sm:$0xff]
        %1548 = vst [vmem:[%s1082 + $0x3a0] sm:$0xff] %v1547
        %v1549 = vld [vmem:[%s1081 + $0x3a8] sm:$0xff]
        %1550 = vst [vmem:[%s1082 + $0x3a4] sm:$0xff] %v1549
        %v1551 = vld [vmem:[%s1081 + $0x3a4] sm:$0xff]
        %1552 = vst [vmem:[%s1082 + $0x3a8] sm:$0xff] %v1551
        %v1553 = vld [vmem:[%s1081 + $0x3ac] sm:$0xff]
        %1554 = vst [vmem:[%s1082 + $0x3ac] sm:$0xff] %v1553
        %v1555 = vld [vmem:[%s1081 + $0x3b0] sm:$0xff]
        %1556 = vst [vmem:[%s1082 + $0x3b0] sm:$0xff] %v1555
        %v1557 = vld [vmem:[%s1081 + $0x3b8] sm:$0xff]
        %1558 = vst [vmem:[%s1082 + $0x3b4] sm:$0xff] %v1557
        %v1559 = vld [vmem:[%s1081 + $0x3b4] sm:$0xff]
        %1560 = vst [vmem:[%s1082 + $0x3b8] sm:$0xff] %v1559
        %v1561 = vld [vmem:[%s1081 + $0x3bc] sm:$0xff]
        %1562 = vst [vmem:[%s1082 + $0x3bc] sm:$0xff] %v1561
        %v1563 = vld [vmem:[%s1081 + $0x3c0] sm:$0xff]
        %1564 = vst [vmem:[%s1082 + $0x3c0] sm:$0xff] %v1563
        %v1565 = vld [vmem:[%s1081 + $0x3c8] sm:$0xff]
        %1566 = vst [vmem:[%s1082 + $0x3c4] sm:$0xff] %v1565
        %v1567 = vld [vmem:[%s1081 + $0x3c4] sm:$0xff]
        %1568 = vst [vmem:[%s1082 + $0x3c8] sm:$0xff] %v1567
        %v1569 = vld [vmem:[%s1081 + $0x3cc] sm:$0xff]
        %1570 = vst [vmem:[%s1082 + $0x3cc] sm:$0xff] %v1569
        %v1571 = vld [vmem:[%s1081 + $0x3d0] sm:$0xff]
        %1572 = vst [vmem:[%s1082 + $0x3d0] sm:$0xff] %v1571
        %v1573 = vld [vmem:[%s1081 + $0x3d8] sm:$0xff]
        %1574 = vst [vmem:[%s1082 + $0x3d4] sm:$0xff] %v1573
        %v1575 = vld [vmem:[%s1081 + $0x3d4] sm:$0xff]
        %1576 = vst [vmem:[%s1082 + $0x3d8] sm:$0xff] %v1575
        %v1577 = vld [vmem:[%s1081 + $0x3dc] sm:$0xff]
        %1578 = vst [vmem:[%s1082 + $0x3dc] sm:$0xff] %v1577
        %v1579 = vld [vmem:[%s1081 + $0x3e0] sm:$0xff]
        %1580 = vst [vmem:[%s1082 + $0x3e0] sm:$0xff] %v1579
        %v1581 = vld [vmem:[%s1081 + $0x3e8] sm:$0xff]
        %1582 = vst [vmem:[%s1082 + $0x3e4] sm:$0xff] %v1581
        %v1583 = vld [vmem:[%s1081 + $0x3e4] sm:$0xff]
        %1584 = vst [vmem:[%s1082 + $0x3e8] sm:$0xff] %v1583
        %v1585 = vld [vmem:[%s1081 + $0x3ec] sm:$0xff]
        %1586 = vst [vmem:[%s1082 + $0x3ec] sm:$0xff] %v1585
        %v1587 = vld [vmem:[%s1081 + $0x3f0] sm:$0xff]
        %1588 = vst [vmem:[%s1082 + $0x3f0] sm:$0xff] %v1587
        %v1589 = vld [vmem:[%s1081 + $0x3f8] sm:$0xff]
        %1590 = vst [vmem:[%s1082 + $0x3f4] sm:$0xff] %v1589
        %v1591 = vld [vmem:[%s1081 + $0x3f4] sm:$0xff]
        %1592 = vst [vmem:[%s1082 + $0x3f8] sm:$0xff] %v1591
        %v1593 = vld [vmem:[%s1081 + $0x3fc] sm:$0xff]
        %1594 = vst [vmem:[%s1082 + $0x3fc] sm:$0xff] %v1593
        %v1595 = vld [vmem:[%s1081 + $0x400] sm:$0xff]
        %1596 = vst [vmem:[%s1082 + $0x400] sm:$0xff] %v1595
        %v1597 = vld [vmem:[%s1081 + $0x408] sm:$0xff]
        %1598 = vst [vmem:[%s1082 + $0x404] sm:$0xff] %v1597
        %v1599 = vld [vmem:[%s1081 + $0x404] sm:$0xff]
        %1600 = vst [vmem:[%s1082 + $0x408] sm:$0xff] %v1599
        %v1601 = vld [vmem:[%s1081 + $0x40c] sm:$0xff]
        %1602 = vst [vmem:[%s1082 + $0x40c] sm:$0xff] %v1601
        %v1603 = vld [vmem:[%s1081 + $0x410] sm:$0xff]
        %1604 = vst [vmem:[%s1082 + $0x410] sm:$0xff] %v1603
        %v1605 = vld [vmem:[%s1081 + $0x418] sm:$0xff]
        %1606 = vst [vmem:[%s1082 + $0x414] sm:$0xff] %v1605
        %v1607 = vld [vmem:[%s1081 + $0x414] sm:$0xff]
        %1608 = vst [vmem:[%s1082 + $0x418] sm:$0xff] %v1607
        %v1609 = vld [vmem:[%s1081 + $0x41c] sm:$0xff]
        %1610 = vst [vmem:[%s1082 + $0x41c] sm:$0xff] %v1609
        %v1611 = vld [vmem:[%s1081 + $0x420] sm:$0xff]
        %1612 = vst [vmem:[%s1082 + $0x420] sm:$0xff] %v1611
        %v1613 = vld [vmem:[%s1081 + $0x428] sm:$0xff]
        %1614 = vst [vmem:[%s1082 + $0x424] sm:$0xff] %v1613
        %v1615 = vld [vmem:[%s1081 + $0x424] sm:$0xff]
        %1616 = vst [vmem:[%s1082 + $0x428] sm:$0xff] %v1615
        %v1617 = vld [vmem:[%s1081 + $0x42c] sm:$0xff]
        %1618 = vst [vmem:[%s1082 + $0x42c] sm:$0xff] %v1617
        %v1619 = vld [vmem:[%s1081 + $0x430] sm:$0xff]
        %1620 = vst [vmem:[%s1082 + $0x430] sm:$0xff] %v1619
        %v1621 = vld [vmem:[%s1081 + $0x438] sm:$0xff]
        %1622 = vst [vmem:[%s1082 + $0x434] sm:$0xff] %v1621
        %v1623 = vld [vmem:[%s1081 + $0x434] sm:$0xff]
        %1624 = vst [vmem:[%s1082 + $0x438] sm:$0xff] %v1623
        %v1625 = vld [vmem:[%s1081 + $0x43c] sm:$0xff]
        %1626 = vst [vmem:[%s1082 + $0x43c] sm:$0xff] %v1625
        %v1627 = vld [vmem:[%s1081 + $0x440] sm:$0xff]
        %1628 = vst [vmem:[%s1082 + $0x440] sm:$0xff] %v1627
        %v1629 = vld [vmem:[%s1081 + $0x448] sm:$0xff]
        %1630 = vst [vmem:[%s1082 + $0x444] sm:$0xff] %v1629
        %v1631 = vld [vmem:[%s1081 + $0x444] sm:$0xff]
        %1632 = vst [vmem:[%s1082 + $0x448] sm:$0xff] %v1631
        %v1633 = vld [vmem:[%s1081 + $0x44c] sm:$0xff]
        %1634 = vst [vmem:[%s1082 + $0x44c] sm:$0xff] %v1633
        %v1635 = vld [vmem:[%s1081 + $0x450] sm:$0xff]
        %1636 = vst [vmem:[%s1082 + $0x450] sm:$0xff] %v1635
        %v1637 = vld [vmem:[%s1081 + $0x458] sm:$0xff]
        %1638 = vst [vmem:[%s1082 + $0x454] sm:$0xff] %v1637
        %v1639 = vld [vmem:[%s1081 + $0x454] sm:$0xff]
        %1640 = vst [vmem:[%s1082 + $0x458] sm:$0xff] %v1639
        %v1641 = vld [vmem:[%s1081 + $0x45c] sm:$0xff]
        %1642 = vst [vmem:[%s1082 + $0x45c] sm:$0xff] %v1641
        %v1643 = vld [vmem:[%s1081 + $0x460] sm:$0xff]
        %1644 = vst [vmem:[%s1082 + $0x460] sm:$0xff] %v1643
        %v1645 = vld [vmem:[%s1081 + $0x468] sm:$0xff]
        %1646 = vst [vmem:[%s1082 + $0x464] sm:$0xff] %v1645
        %v1647 = vld [vmem:[%s1081 + $0x464] sm:$0xff]
        %1648 = vst [vmem:[%s1082 + $0x468] sm:$0xff] %v1647
        %v1649 = vld [vmem:[%s1081 + $0x46c] sm:$0xff]
        %1650 = vst [vmem:[%s1082 + $0x46c] sm:$0xff] %v1649
        %v1651 = vld [vmem:[%s1081 + $0x470] sm:$0xff]
        %1652 = vst [vmem:[%s1082 + $0x470] sm:$0xff] %v1651
        %v1653 = vld [vmem:[%s1081 + $0x478] sm:$0xff]
        %1654 = vst [vmem:[%s1082 + $0x474] sm:$0xff] %v1653
        %v1655 = vld [vmem:[%s1081 + $0x474] sm:$0xff]
        %1656 = vst [vmem:[%s1082 + $0x478] sm:$0xff] %v1655
        %v1657 = vld [vmem:[%s1081 + $0x47c] sm:$0xff]
        %1658 = vst [vmem:[%s1082 + $0x47c] sm:$0xff] %v1657
        %v1659 = vld [vmem:[%s1081 + $0x480] sm:$0xff]
        %1660 = vst [vmem:[%s1082 + $0x480] sm:$0xff] %v1659
        %v1661 = vld [vmem:[%s1081 + $0x488] sm:$0xff]
        %1662 = vst [vmem:[%s1082 + $0x484] sm:$0xff] %v1661
        %v1663 = vld [vmem:[%s1081 + $0x484] sm:$0xff]
        %1664 = vst [vmem:[%s1082 + $0x488] sm:$0xff] %v1663
        %v1665 = vld [vmem:[%s1081 + $0x48c] sm:$0xff]
        %1666 = vst [vmem:[%s1082 + $0x48c] sm:$0xff] %v1665
        %v1667 = vld [vmem:[%s1081 + $0x490] sm:$0xff]
        %1668 = vst [vmem:[%s1082 + $0x490] sm:$0xff] %v1667
        %v1669 = vld [vmem:[%s1081 + $0x498] sm:$0xff]
        %1670 = vst [vmem:[%s1082 + $0x494] sm:$0xff] %v1669
        %v1671 = vld [vmem:[%s1081 + $0x494] sm:$0xff]
        %1672 = vst [vmem:[%s1082 + $0x498] sm:$0xff] %v1671
        %v1673 = vld [vmem:[%s1081 + $0x49c] sm:$0xff]
        %1674 = vst [vmem:[%s1082 + $0x49c] sm:$0xff] %v1673
        %v1675 = vld [vmem:[%s1081 + $0x4a0] sm:$0xff]
        %1676 = vst [vmem:[%s1082 + $0x4a0] sm:$0xff] %v1675
        %v1677 = vld [vmem:[%s1081 + $0x4a8] sm:$0xff]
        %1678 = vst [vmem:[%s1082 + $0x4a4] sm:$0xff] %v1677
        %v1679 = vld [vmem:[%s1081 + $0x4a4] sm:$0xff]
        %1680 = vst [vmem:[%s1082 + $0x4a8] sm:$0xff] %v1679
        %v1681 = vld [vmem:[%s1081 + $0x4ac] sm:$0xff]
        %1682 = vst [vmem:[%s1082 + $0x4ac] sm:$0xff] %v1681
        %v1683 = vld [vmem:[%s1081 + $0x4b0] sm:$0xff]
        %1684 = vst [vmem:[%s1082 + $0x4b0] sm:$0xff] %v1683
        %v1685 = vld [vmem:[%s1081 + $0x4b8] sm:$0xff]
        %1686 = vst [vmem:[%s1082 + $0x4b4] sm:$0xff] %v1685
        %v1687 = vld [vmem:[%s1081 + $0x4b4] sm:$0xff]
        %1688 = vst [vmem:[%s1082 + $0x4b8] sm:$0xff] %v1687
        %v1689 = vld [vmem:[%s1081 + $0x4bc] sm:$0xff]
        %1690 = vst [vmem:[%s1082 + $0x4bc] sm:$0xff] %v1689
        %v1691 = vld [vmem:[%s1081 + $0x4c0] sm:$0xff]
        %1692 = vst [vmem:[%s1082 + $0x4c0] sm:$0xff] %v1691
        %v1693 = vld [vmem:[%s1081 + $0x4c8] sm:$0xff]
        %1694 = vst [vmem:[%s1082 + $0x4c4] sm:$0xff] %v1693
        %v1695 = vld [vmem:[%s1081 + $0x4c4] sm:$0xff]
        %1696 = vst [vmem:[%s1082 + $0x4c8] sm:$0xff] %v1695
        %v1697 = vld [vmem:[%s1081 + $0x4cc] sm:$0xff]
        %1698 = vst [vmem:[%s1082 + $0x4cc] sm:$0xff] %v1697
        %v1699 = vld [vmem:[%s1081 + $0x4d0] sm:$0xff]
        %1700 = vst [vmem:[%s1082 + $0x4d0] sm:$0xff] %v1699
        %v1701 = vld [vmem:[%s1081 + $0x4d8] sm:$0xff]
        %1702 = vst [vmem:[%s1082 + $0x4d4] sm:$0xff] %v1701
        %v1703 = vld [vmem:[%s1081 + $0x4d4] sm:$0xff]
        %1704 = vst [vmem:[%s1082 + $0x4d8] sm:$0xff] %v1703
        %v1705 = vld [vmem:[%s1081 + $0x4dc] sm:$0xff]
        %1706 = vst [vmem:[%s1082 + $0x4dc] sm:$0xff] %v1705
        %v1707 = vld [vmem:[%s1081 + $0x4e0] sm:$0xff]
        %1708 = vst [vmem:[%s1082 + $0x4e0] sm:$0xff] %v1707
        %v1709 = vld [vmem:[%s1081 + $0x4e8] sm:$0xff]
        %1710 = vst [vmem:[%s1082 + $0x4e4] sm:$0xff] %v1709
        %v1711 = vld [vmem:[%s1081 + $0x4e4] sm:$0xff]
        %1712 = vst [vmem:[%s1082 + $0x4e8] sm:$0xff] %v1711
        %v1713 = vld [vmem:[%s1081 + $0x4ec] sm:$0xff]
        %1714 = vst [vmem:[%s1082 + $0x4ec] sm:$0xff] %v1713
        %v1715 = vld [vmem:[%s1081 + $0x4f0] sm:$0xff]
        %1716 = vst [vmem:[%s1082 + $0x4f0] sm:$0xff] %v1715
        %v1717 = vld [vmem:[%s1081 + $0x4f8] sm:$0xff]
        %1718 = vst [vmem:[%s1082 + $0x4f4] sm:$0xff] %v1717
        %v1719 = vld [vmem:[%s1081 + $0x4f4] sm:$0xff]
        %1720 = vst [vmem:[%s1082 + $0x4f8] sm:$0xff] %v1719
        %v1721 = vld [vmem:[%s1081 + $0x4fc] sm:$0xff]
        %1722 = vst [vmem:[%s1082 + $0x4fc] sm:$0xff] %v1721
        %v1723 = vld [vmem:[%s1081 + $0x500] sm:$0xff]
        %1724 = vst [vmem:[%s1082 + $0x500] sm:$0xff] %v1723
        %v1725 = vld [vmem:[%s1081 + $0x508] sm:$0xff]
        %1726 = vst [vmem:[%s1082 + $0x504] sm:$0xff] %v1725
        %v1727 = vld [vmem:[%s1081 + $0x504] sm:$0xff]
        %1728 = vst [vmem:[%s1082 + $0x508] sm:$0xff] %v1727
        %v1729 = vld [vmem:[%s1081 + $0x50c] sm:$0xff]
        %1730 = vst [vmem:[%s1082 + $0x50c] sm:$0xff] %v1729
        %v1731 = vld [vmem:[%s1081 + $0x510] sm:$0xff]
        %1732 = vst [vmem:[%s1082 + $0x510] sm:$0xff] %v1731
        %v1733 = vld [vmem:[%s1081 + $0x518] sm:$0xff]
        %1734 = vst [vmem:[%s1082 + $0x514] sm:$0xff] %v1733
        %v1735 = vld [vmem:[%s1081 + $0x514] sm:$0xff]
        %1736 = vst [vmem:[%s1082 + $0x518] sm:$0xff] %v1735
        %v1737 = vld [vmem:[%s1081 + $0x51c] sm:$0xff]
        %1738 = vst [vmem:[%s1082 + $0x51c] sm:$0xff] %v1737
        %v1739 = vld [vmem:[%s1081 + $0x520] sm:$0xff]
        %1740 = vst [vmem:[%s1082 + $0x520] sm:$0xff] %v1739
        %v1741 = vld [vmem:[%s1081 + $0x528] sm:$0xff]
        %1742 = vst [vmem:[%s1082 + $0x524] sm:$0xff] %v1741
        %v1743 = vld [vmem:[%s1081 + $0x524] sm:$0xff]
        %1744 = vst [vmem:[%s1082 + $0x528] sm:$0xff] %v1743
        %v1745 = vld [vmem:[%s1081 + $0x52c] sm:$0xff]
        %1746 = vst [vmem:[%s1082 + $0x52c] sm:$0xff] %v1745
        %v1747 = vld [vmem:[%s1081 + $0x530] sm:$0xff]
        %1748 = vst [vmem:[%s1082 + $0x530] sm:$0xff] %v1747
        %v1749 = vld [vmem:[%s1081 + $0x538] sm:$0xff]
        %1750 = vst [vmem:[%s1082 + $0x534] sm:$0xff] %v1749
        %v1751 = vld [vmem:[%s1081 + $0x534] sm:$0xff]
        %1752 = vst [vmem:[%s1082 + $0x538] sm:$0xff] %v1751
        %v1753 = vld [vmem:[%s1081 + $0x53c] sm:$0xff]
        %1754 = vst [vmem:[%s1082 + $0x53c] sm:$0xff] %v1753
        %v1755 = vld [vmem:[%s1081 + $0x540] sm:$0xff]
        %1756 = vst [vmem:[%s1082 + $0x540] sm:$0xff] %v1755
        %v1757 = vld [vmem:[%s1081 + $0x548] sm:$0xff]
        %1758 = vst [vmem:[%s1082 + $0x544] sm:$0xff] %v1757
        %v1759 = vld [vmem:[%s1081 + $0x544] sm:$0xff]
        %1760 = vst [vmem:[%s1082 + $0x548] sm:$0xff] %v1759
        %v1761 = vld [vmem:[%s1081 + $0x54c] sm:$0xff]
        %1762 = vst [vmem:[%s1082 + $0x54c] sm:$0xff] %v1761
        %v1763 = vld [vmem:[%s1081 + $0x550] sm:$0xff]
        %1764 = vst [vmem:[%s1082 + $0x550] sm:$0xff] %v1763
        %v1765 = vld [vmem:[%s1081 + $0x558] sm:$0xff]
        %1766 = vst [vmem:[%s1082 + $0x554] sm:$0xff] %v1765
        %v1767 = vld [vmem:[%s1081 + $0x554] sm:$0xff]
        %1768 = vst [vmem:[%s1082 + $0x558] sm:$0xff] %v1767
        %v1769 = vld [vmem:[%s1081 + $0x55c] sm:$0xff]
        %1770 = vst [vmem:[%s1082 + $0x55c] sm:$0xff] %v1769
        %v1771 = vld [vmem:[%s1081 + $0x560] sm:$0xff]
        %1772 = vst [vmem:[%s1082 + $0x560] sm:$0xff] %v1771
        %v1773 = vld [vmem:[%s1081 + $0x568] sm:$0xff]
        %1774 = vst [vmem:[%s1082 + $0x564] sm:$0xff] %v1773
        %v1775 = vld [vmem:[%s1081 + $0x564] sm:$0xff]
        %1776 = vst [vmem:[%s1082 + $0x568] sm:$0xff] %v1775
        %v1777 = vld [vmem:[%s1081 + $0x56c] sm:$0xff]
        %1778 = vst [vmem:[%s1082 + $0x56c] sm:$0xff] %v1777
        %v1779 = vld [vmem:[%s1081 + $0x570] sm:$0xff]
        %1780 = vst [vmem:[%s1082 + $0x570] sm:$0xff] %v1779
        %v1781 = vld [vmem:[%s1081 + $0x578] sm:$0xff]
        %1782 = vst [vmem:[%s1082 + $0x574] sm:$0xff] %v1781
        %v1783 = vld [vmem:[%s1081 + $0x574] sm:$0xff]
        %1784 = vst [vmem:[%s1082 + $0x578] sm:$0xff] %v1783
        %v1785 = vld [vmem:[%s1081 + $0x57c] sm:$0xff]
        %1786 = vst [vmem:[%s1082 + $0x57c] sm:$0xff] %v1785
        %v1787 = vld [vmem:[%s1081 + $0x580] sm:$0xff]
        %1788 = vst [vmem:[%s1082 + $0x580] sm:$0xff] %v1787
        %v1789 = vld [vmem:[%s1081 + $0x588] sm:$0xff]
        %1790 = vst [vmem:[%s1082 + $0x584] sm:$0xff] %v1789
        %v1791 = vld [vmem:[%s1081 + $0x584] sm:$0xff]
        %1792 = vst [vmem:[%s1082 + $0x588] sm:$0xff] %v1791
        %v1793 = vld [vmem:[%s1081 + $0x58c] sm:$0xff]
        %1794 = vst [vmem:[%s1082 + $0x58c] sm:$0xff] %v1793
        %v1795 = vld [vmem:[%s1081 + $0x590] sm:$0xff]
        %1796 = vst [vmem:[%s1082 + $0x590] sm:$0xff] %v1795
        %v1797 = vld [vmem:[%s1081 + $0x598] sm:$0xff]
        %1798 = vst [vmem:[%s1082 + $0x594] sm:$0xff] %v1797
        %v1799 = vld [vmem:[%s1081 + $0x594] sm:$0xff]
        %1800 = vst [vmem:[%s1082 + $0x598] sm:$0xff] %v1799
        %v1801 = vld [vmem:[%s1081 + $0x59c] sm:$0xff]
        %1802 = vst [vmem:[%s1082 + $0x59c] sm:$0xff] %v1801
        %v1803 = vld [vmem:[%s1081 + $0x5a0] sm:$0xff]
        %1804 = vst [vmem:[%s1082 + $0x5a0] sm:$0xff] %v1803
        %v1805 = vld [vmem:[%s1081 + $0x5a8] sm:$0xff]
        %1806 = vst [vmem:[%s1082 + $0x5a4] sm:$0xff] %v1805
        %v1807 = vld [vmem:[%s1081 + $0x5a4] sm:$0xff]
        %1808 = vst [vmem:[%s1082 + $0x5a8] sm:$0xff] %v1807
        %v1809 = vld [vmem:[%s1081 + $0x5ac] sm:$0xff]
        %1810 = vst [vmem:[%s1082 + $0x5ac] sm:$0xff] %v1809
        %v1811 = vld [vmem:[%s1081 + $0x5b0] sm:$0xff]
        %1812 = vst [vmem:[%s1082 + $0x5b0] sm:$0xff] %v1811
        %v1813 = vld [vmem:[%s1081 + $0x5b8] sm:$0xff]
        %1814 = vst [vmem:[%s1082 + $0x5b4] sm:$0xff] %v1813
        %v1815 = vld [vmem:[%s1081 + $0x5b4] sm:$0xff]
        %1816 = vst [vmem:[%s1082 + $0x5b8] sm:$0xff] %v1815
        %v1817 = vld [vmem:[%s1081 + $0x5bc] sm:$0xff]
        %1818 = vst [vmem:[%s1082 + $0x5bc] sm:$0xff] %v1817
        %v1819 = vld [vmem:[%s1081 + $0x5c0] sm:$0xff]
        %1820 = vst [vmem:[%s1082 + $0x5c0] sm:$0xff] %v1819
        %v1821 = vld [vmem:[%s1081 + $0x5c8] sm:$0xff]
        %1822 = vst [vmem:[%s1082 + $0x5c4] sm:$0xff] %v1821
        %v1823 = vld [vmem:[%s1081 + $0x5c4] sm:$0xff]
        %1824 = vst [vmem:[%s1082 + $0x5c8] sm:$0xff] %v1823
        %v1825 = vld [vmem:[%s1081 + $0x5cc] sm:$0xff]
        %1826 = vst [vmem:[%s1082 + $0x5cc] sm:$0xff] %v1825
        %v1827 = vld [vmem:[%s1081 + $0x5d0] sm:$0xff]
        %1828 = vst [vmem:[%s1082 + $0x5d0] sm:$0xff] %v1827
        %v1829 = vld [vmem:[%s1081 + $0x5d8] sm:$0xff]
        %1830 = vst [vmem:[%s1082 + $0x5d4] sm:$0xff] %v1829
        %v1831 = vld [vmem:[%s1081 + $0x5d4] sm:$0xff]
        %1832 = vst [vmem:[%s1082 + $0x5d8] sm:$0xff] %v1831
        %v1833 = vld [vmem:[%s1081 + $0x5dc] sm:$0xff]
        %1834 = vst [vmem:[%s1082 + $0x5dc] sm:$0xff] %v1833
        %v1835 = vld [vmem:[%s1081 + $0x5e0] sm:$0xff]
        %1836 = vst [vmem:[%s1082 + $0x5e0] sm:$0xff] %v1835
        %v1837 = vld [vmem:[%s1081 + $0x5e8] sm:$0xff]
        %1838 = vst [vmem:[%s1082 + $0x5e4] sm:$0xff] %v1837
        %v1839 = vld [vmem:[%s1081 + $0x5e4] sm:$0xff]
        %1840 = vst [vmem:[%s1082 + $0x5e8] sm:$0xff] %v1839
        %v1841 = vld [vmem:[%s1081 + $0x5ec] sm:$0xff]
        %1842 = vst [vmem:[%s1082 + $0x5ec] sm:$0xff] %v1841
        %v1843 = vld [vmem:[%s1081 + $0x5f0] sm:$0xff]
        %1844 = vst [vmem:[%s1082 + $0x5f0] sm:$0xff] %v1843
        %v1845 = vld [vmem:[%s1081 + $0x5f8] sm:$0xff]
        %1846 = vst [vmem:[%s1082 + $0x5f4] sm:$0xff] %v1845
        %v1847 = vld [vmem:[%s1081 + $0x5f4] sm:$0xff]
        %1848 = vst [vmem:[%s1082 + $0x5f8] sm:$0xff] %v1847
        %v1849 = vld [vmem:[%s1081 + $0x5fc] sm:$0xff]
        %1850 = vst [vmem:[%s1082 + $0x5fc] sm:$0xff] %v1849
        %v1851 = vld [vmem:[%s1081 + $0x600] sm:$0xff]
        %1852 = vst [vmem:[%s1082 + $0x600] sm:$0xff] %v1851
        %v1853 = vld [vmem:[%s1081 + $0x608] sm:$0xff]
        %1854 = vst [vmem:[%s1082 + $0x604] sm:$0xff] %v1853
        %v1855 = vld [vmem:[%s1081 + $0x604] sm:$0xff]
        %1856 = vst [vmem:[%s1082 + $0x608] sm:$0xff] %v1855
        %v1857 = vld [vmem:[%s1081 + $0x60c] sm:$0xff]
        %1858 = vst [vmem:[%s1082 + $0x60c] sm:$0xff] %v1857
        %v1859 = vld [vmem:[%s1081 + $0x610] sm:$0xff]
        %1860 = vst [vmem:[%s1082 + $0x610] sm:$0xff] %v1859
        %v1861 = vld [vmem:[%s1081 + $0x618] sm:$0xff]
        %1862 = vst [vmem:[%s1082 + $0x614] sm:$0xff] %v1861
        %v1863 = vld [vmem:[%s1081 + $0x614] sm:$0xff]
        %1864 = vst [vmem:[%s1082 + $0x618] sm:$0xff] %v1863
        %v1865 = vld [vmem:[%s1081 + $0x61c] sm:$0xff]
        %1866 = vst [vmem:[%s1082 + $0x61c] sm:$0xff] %v1865
        %v1867 = vld [vmem:[%s1081 + $0x620] sm:$0xff]
        %1868 = vst [vmem:[%s1082 + $0x620] sm:$0xff] %v1867
        %v1869 = vld [vmem:[%s1081 + $0x628] sm:$0xff]
        %1870 = vst [vmem:[%s1082 + $0x624] sm:$0xff] %v1869
        %v1871 = vld [vmem:[%s1081 + $0x624] sm:$0xff]
        %1872 = vst [vmem:[%s1082 + $0x628] sm:$0xff] %v1871
        %v1873 = vld [vmem:[%s1081 + $0x62c] sm:$0xff]
        %1874 = vst [vmem:[%s1082 + $0x62c] sm:$0xff] %v1873
        %v1875 = vld [vmem:[%s1081 + $0x630] sm:$0xff]
        %1876 = vst [vmem:[%s1082 + $0x630] sm:$0xff] %v1875
        %v1877 = vld [vmem:[%s1081 + $0x638] sm:$0xff]
        %1878 = vst [vmem:[%s1082 + $0x634] sm:$0xff] %v1877
        %v1879 = vld [vmem:[%s1081 + $0x634] sm:$0xff]
        %1880 = vst [vmem:[%s1082 + $0x638] sm:$0xff] %v1879
        %v1881 = vld [vmem:[%s1081 + $0x63c] sm:$0xff]
        %1882 = vst [vmem:[%s1082 + $0x63c] sm:$0xff] %v1881
        %v1883 = vld [vmem:[%s1081 + $0x640] sm:$0xff]
        %1884 = vst [vmem:[%s1082 + $0x640] sm:$0xff] %v1883
        %v1885 = vld [vmem:[%s1081 + $0x648] sm:$0xff]
        %1886 = vst [vmem:[%s1082 + $0x644] sm:$0xff] %v1885
        %v1887 = vld [vmem:[%s1081 + $0x644] sm:$0xff]
        %1888 = vst [vmem:[%s1082 + $0x648] sm:$0xff] %v1887
        %v1889 = vld [vmem:[%s1081 + $0x64c] sm:$0xff]
        %1890 = vst [vmem:[%s1082 + $0x64c] sm:$0xff] %v1889
        %v1891 = vld [vmem:[%s1081 + $0x650] sm:$0xff]
        %1892 = vst [vmem:[%s1082 + $0x650] sm:$0xff] %v1891
        %v1893 = vld [vmem:[%s1081 + $0x658] sm:$0xff]
        %1894 = vst [vmem:[%s1082 + $0x654] sm:$0xff] %v1893
        %v1895 = vld [vmem:[%s1081 + $0x654] sm:$0xff]
        %1896 = vst [vmem:[%s1082 + $0x658] sm:$0xff] %v1895
        %v1897 = vld [vmem:[%s1081 + $0x65c] sm:$0xff]
        %1898 = vst [vmem:[%s1082 + $0x65c] sm:$0xff] %v1897
        %v1899 = vld [vmem:[%s1081 + $0x660] sm:$0xff]
        %1900 = vst [vmem:[%s1082 + $0x660] sm:$0xff] %v1899
        %v1901 = vld [vmem:[%s1081 + $0x668] sm:$0xff]
        %1902 = vst [vmem:[%s1082 + $0x664] sm:$0xff] %v1901
        %v1903 = vld [vmem:[%s1081 + $0x664] sm:$0xff]
        %1904 = vst [vmem:[%s1082 + $0x668] sm:$0xff] %v1903
        %v1905 = vld [vmem:[%s1081 + $0x66c] sm:$0xff]
        %1906 = vst [vmem:[%s1082 + $0x66c] sm:$0xff] %v1905
        %v1907 = vld [vmem:[%s1081 + $0x670] sm:$0xff]
        %1908 = vst [vmem:[%s1082 + $0x670] sm:$0xff] %v1907
        %v1909 = vld [vmem:[%s1081 + $0x678] sm:$0xff]
        %1910 = vst [vmem:[%s1082 + $0x674] sm:$0xff] %v1909
        %v1911 = vld [vmem:[%s1081 + $0x674] sm:$0xff]
        %1912 = vst [vmem:[%s1082 + $0x678] sm:$0xff] %v1911
        %v1913 = vld [vmem:[%s1081 + $0x67c] sm:$0xff]
        %1914 = vst [vmem:[%s1082 + $0x67c] sm:$0xff] %v1913
        %v1915 = vld [vmem:[%s1081 + $0x680] sm:$0xff]
        %1916 = vst [vmem:[%s1082 + $0x680] sm:$0xff] %v1915
        %v1917 = vld [vmem:[%s1081 + $0x688] sm:$0xff]
        %1918 = vst [vmem:[%s1082 + $0x684] sm:$0xff] %v1917
        %v1919 = vld [vmem:[%s1081 + $0x684] sm:$0xff]
        %1920 = vst [vmem:[%s1082 + $0x688] sm:$0xff] %v1919
        %v1921 = vld [vmem:[%s1081 + $0x68c] sm:$0xff]
        %1922 = vst [vmem:[%s1082 + $0x68c] sm:$0xff] %v1921
        %v1923 = vld [vmem:[%s1081 + $0x690] sm:$0xff]
        %1924 = vst [vmem:[%s1082 + $0x690] sm:$0xff] %v1923
        %v1925 = vld [vmem:[%s1081 + $0x698] sm:$0xff]
        %1926 = vst [vmem:[%s1082 + $0x694] sm:$0xff] %v1925
        %v1927 = vld [vmem:[%s1081 + $0x694] sm:$0xff]
        %1928 = vst [vmem:[%s1082 + $0x698] sm:$0xff] %v1927
        %v1929 = vld [vmem:[%s1081 + $0x69c] sm:$0xff]
        %1930 = vst [vmem:[%s1082 + $0x69c] sm:$0xff] %v1929
        %v1931 = vld [vmem:[%s1081 + $0x6a0] sm:$0xff]
        %1932 = vst [vmem:[%s1082 + $0x6a0] sm:$0xff] %v1931
        %v1933 = vld [vmem:[%s1081 + $0x6a8] sm:$0xff]
        %1934 = vst [vmem:[%s1082 + $0x6a4] sm:$0xff] %v1933
        %v1935 = vld [vmem:[%s1081 + $0x6a4] sm:$0xff]
        %1936 = vst [vmem:[%s1082 + $0x6a8] sm:$0xff] %v1935
        %v1937 = vld [vmem:[%s1081 + $0x6ac] sm:$0xff]
        %1938 = vst [vmem:[%s1082 + $0x6ac] sm:$0xff] %v1937
        %v1939 = vld [vmem:[%s1081 + $0x6b0] sm:$0xff]
        %1940 = vst [vmem:[%s1082 + $0x6b0] sm:$0xff] %v1939
        %v1941 = vld [vmem:[%s1081 + $0x6b8] sm:$0xff]
        %1942 = vst [vmem:[%s1082 + $0x6b4] sm:$0xff] %v1941
        %v1943 = vld [vmem:[%s1081 + $0x6b4] sm:$0xff]
        %1944 = vst [vmem:[%s1082 + $0x6b8] sm:$0xff] %v1943
        %v1945 = vld [vmem:[%s1081 + $0x6bc] sm:$0xff]
        %1946 = vst [vmem:[%s1082 + $0x6bc] sm:$0xff] %v1945
        %v1947 = vld [vmem:[%s1081 + $0x6c0] sm:$0xff]
        %1948 = vst [vmem:[%s1082 + $0x6c0] sm:$0xff] %v1947
        %v1949 = vld [vmem:[%s1081 + $0x6c8] sm:$0xff]
        %1950 = vst [vmem:[%s1082 + $0x6c4] sm:$0xff] %v1949
        %v1951 = vld [vmem:[%s1081 + $0x6c4] sm:$0xff]
        %1952 = vst [vmem:[%s1082 + $0x6c8] sm:$0xff] %v1951
        %v1953 = vld [vmem:[%s1081 + $0x6cc] sm:$0xff]
        %1954 = vst [vmem:[%s1082 + $0x6cc] sm:$0xff] %v1953
        %v1955 = vld [vmem:[%s1081 + $0x6d0] sm:$0xff]
        %1956 = vst [vmem:[%s1082 + $0x6d0] sm:$0xff] %v1955
        %v1957 = vld [vmem:[%s1081 + $0x6d8] sm:$0xff]
        %1958 = vst [vmem:[%s1082 + $0x6d4] sm:$0xff] %v1957
        %v1959 = vld [vmem:[%s1081 + $0x6d4] sm:$0xff]
        %1960 = vst [vmem:[%s1082 + $0x6d8] sm:$0xff] %v1959
        %v1961 = vld [vmem:[%s1081 + $0x6dc] sm:$0xff]
        %1962 = vst [vmem:[%s1082 + $0x6dc] sm:$0xff] %v1961
        %v1963 = vld [vmem:[%s1081 + $0x6e0] sm:$0xff]
        %1964 = vst [vmem:[%s1082 + $0x6e0] sm:$0xff] %v1963
        %v1965 = vld [vmem:[%s1081 + $0x6e8] sm:$0xff]
        %1966 = vst [vmem:[%s1082 + $0x6e4] sm:$0xff] %v1965
        %v1967 = vld [vmem:[%s1081 + $0x6e4] sm:$0xff]
        %1968 = vst [vmem:[%s1082 + $0x6e8] sm:$0xff] %v1967
        %v1969 = vld [vmem:[%s1081 + $0x6ec] sm:$0xff]
        %1970 = vst [vmem:[%s1082 + $0x6ec] sm:$0xff] %v1969
        %v1971 = vld [vmem:[%s1081 + $0x6f0] sm:$0xff]
        %1972 = vst [vmem:[%s1082 + $0x6f0] sm:$0xff] %v1971
        %v1973 = vld [vmem:[%s1081 + $0x6f8] sm:$0xff]
        %1974 = vst [vmem:[%s1082 + $0x6f4] sm:$0xff] %v1973
        %v1975 = vld [vmem:[%s1081 + $0x6f4] sm:$0xff]
        %1976 = vst [vmem:[%s1082 + $0x6f8] sm:$0xff] %v1975
        %v1977 = vld [vmem:[%s1081 + $0x6fc] sm:$0xff]
        %1978 = vst [vmem:[%s1082 + $0x6fc] sm:$0xff] %v1977
        %v1979 = vld [vmem:[%s1081 + $0x700] sm:$0xff]
        %1980 = vst [vmem:[%s1082 + $0x700] sm:$0xff] %v1979
        %v1981 = vld [vmem:[%s1081 + $0x708] sm:$0xff]
        %1982 = vst [vmem:[%s1082 + $0x704] sm:$0xff] %v1981
        %v1983 = vld [vmem:[%s1081 + $0x704] sm:$0xff]
        %1984 = vst [vmem:[%s1082 + $0x708] sm:$0xff] %v1983
        %v1985 = vld [vmem:[%s1081 + $0x70c] sm:$0xff]
        %1986 = vst [vmem:[%s1082 + $0x70c] sm:$0xff] %v1985
        %v1987 = vld [vmem:[%s1081 + $0x710] sm:$0xff]
        %1988 = vst [vmem:[%s1082 + $0x710] sm:$0xff] %v1987
        %v1989 = vld [vmem:[%s1081 + $0x718] sm:$0xff]
        %1990 = vst [vmem:[%s1082 + $0x714] sm:$0xff] %v1989
        %v1991 = vld [vmem:[%s1081 + $0x714] sm:$0xff]
        %1992 = vst [vmem:[%s1082 + $0x718] sm:$0xff] %v1991
        %v1993 = vld [vmem:[%s1081 + $0x71c] sm:$0xff]
        %1994 = vst [vmem:[%s1082 + $0x71c] sm:$0xff] %v1993
        %v1995 = vld [vmem:[%s1081 + $0x720] sm:$0xff]
        %1996 = vst [vmem:[%s1082 + $0x720] sm:$0xff] %v1995
        %v1997 = vld [vmem:[%s1081 + $0x728] sm:$0xff]
        %1998 = vst [vmem:[%s1082 + $0x724] sm:$0xff] %v1997
        %v1999 = vld [vmem:[%s1081 + $0x724] sm:$0xff]
        %2000 = vst [vmem:[%s1082 + $0x728] sm:$0xff] %v1999
        %v2001 = vld [vmem:[%s1081 + $0x72c] sm:$0xff]
        %2002 = vst [vmem:[%s1082 + $0x72c] sm:$0xff] %v2001
        %v2003 = vld [vmem:[%s1081 + $0x730] sm:$0xff]
        %2004 = vst [vmem:[%s1082 + $0x730] sm:$0xff] %v2003
        %v2005 = vld [vmem:[%s1081 + $0x738] sm:$0xff]
        %2006 = vst [vmem:[%s1082 + $0x734] sm:$0xff] %v2005
        %v2007 = vld [vmem:[%s1081 + $0x734] sm:$0xff]
        %2008 = vst [vmem:[%s1082 + $0x738] sm:$0xff] %v2007
        %v2009 = vld [vmem:[%s1081 + $0x73c] sm:$0xff]
        %2010 = vst [vmem:[%s1082 + $0x73c] sm:$0xff] %v2009
        %v2011 = vld [vmem:[%s1081 + $0x740] sm:$0xff]
        %2012 = vst [vmem:[%s1082 + $0x740] sm:$0xff] %v2011
        %v2013 = vld [vmem:[%s1081 + $0x748] sm:$0xff]
        %2014 = vst [vmem:[%s1082 + $0x744] sm:$0xff] %v2013
        %v2015 = vld [vmem:[%s1081 + $0x744] sm:$0xff]
        %2016 = vst [vmem:[%s1082 + $0x748] sm:$0xff] %v2015
        %v2017 = vld [vmem:[%s1081 + $0x74c] sm:$0xff]
        %2018 = vst [vmem:[%s1082 + $0x74c] sm:$0xff] %v2017
        %v2019 = vld [vmem:[%s1081 + $0x750] sm:$0xff]
        %2020 = vst [vmem:[%s1082 + $0x750] sm:$0xff] %v2019
        %v2021 = vld [vmem:[%s1081 + $0x758] sm:$0xff]
        %2022 = vst [vmem:[%s1082 + $0x754] sm:$0xff] %v2021
        %v2023 = vld [vmem:[%s1081 + $0x754] sm:$0xff]
        %2024 = vst [vmem:[%s1082 + $0x758] sm:$0xff] %v2023
        %v2025 = vld [vmem:[%s1081 + $0x75c] sm:$0xff]
        %2026 = vst [vmem:[%s1082 + $0x75c] sm:$0xff] %v2025
        %v2027 = vld [vmem:[%s1081 + $0x760] sm:$0xff]
        %2028 = vst [vmem:[%s1082 + $0x760] sm:$0xff] %v2027
        %v2029 = vld [vmem:[%s1081 + $0x768] sm:$0xff]
        %2030 = vst [vmem:[%s1082 + $0x764] sm:$0xff] %v2029
        %v2031 = vld [vmem:[%s1081 + $0x764] sm:$0xff]
        %2032 = vst [vmem:[%s1082 + $0x768] sm:$0xff] %v2031
        %v2033 = vld [vmem:[%s1081 + $0x76c] sm:$0xff]
        %2034 = vst [vmem:[%s1082 + $0x76c] sm:$0xff] %v2033
        %v2035 = vld [vmem:[%s1081 + $0x770] sm:$0xff]
        %2036 = vst [vmem:[%s1082 + $0x770] sm:$0xff] %v2035
        %v2037 = vld [vmem:[%s1081 + $0x778] sm:$0xff]
        %2038 = vst [vmem:[%s1082 + $0x774] sm:$0xff] %v2037
        %v2039 = vld [vmem:[%s1081 + $0x774] sm:$0xff]
        %2040 = vst [vmem:[%s1082 + $0x778] sm:$0xff] %v2039
        %v2041 = vld [vmem:[%s1081 + $0x77c] sm:$0xff]
        %2042 = vst [vmem:[%s1082 + $0x77c] sm:$0xff] %v2041
        %v2043 = vld [vmem:[%s1081 + $0x780] sm:$0xff]
        %2044 = vst [vmem:[%s1082 + $0x780] sm:$0xff] %v2043
        %v2045 = vld [vmem:[%s1081 + $0x788] sm:$0xff]
        %2046 = vst [vmem:[%s1082 + $0x784] sm:$0xff] %v2045
        %v2047 = vld [vmem:[%s1081 + $0x784] sm:$0xff]
        %2048 = vst [vmem:[%s1082 + $0x788] sm:$0xff] %v2047
        %v2049 = vld [vmem:[%s1081 + $0x78c] sm:$0xff]
        %2050 = vst [vmem:[%s1082 + $0x78c] sm:$0xff] %v2049
        %v2051 = vld [vmem:[%s1081 + $0x790] sm:$0xff]
        %2052 = vst [vmem:[%s1082 + $0x790] sm:$0xff] %v2051
        %v2053 = vld [vmem:[%s1081 + $0x798] sm:$0xff]
        %2054 = vst [vmem:[%s1082 + $0x794] sm:$0xff] %v2053
        %v2055 = vld [vmem:[%s1081 + $0x794] sm:$0xff]
        %2056 = vst [vmem:[%s1082 + $0x798] sm:$0xff] %v2055
        %v2057 = vld [vmem:[%s1081 + $0x79c] sm:$0xff]
        %2058 = vst [vmem:[%s1082 + $0x79c] sm:$0xff] %v2057
        %v2059 = vld [vmem:[%s1081 + $0x7a0] sm:$0xff]
        %2060 = vst [vmem:[%s1082 + $0x7a0] sm:$0xff] %v2059
        %v2061 = vld [vmem:[%s1081 + $0x7a8] sm:$0xff]
        %2062 = vst [vmem:[%s1082 + $0x7a4] sm:$0xff] %v2061
        %v2063 = vld [vmem:[%s1081 + $0x7a4] sm:$0xff]
        %2064 = vst [vmem:[%s1082 + $0x7a8] sm:$0xff] %v2063
        %v2065 = vld [vmem:[%s1081 + $0x7ac] sm:$0xff]
        %2066 = vst [vmem:[%s1082 + $0x7ac] sm:$0xff] %v2065
        %v2067 = vld [vmem:[%s1081 + $0x7b0] sm:$0xff]
        %2068 = vst [vmem:[%s1082 + $0x7b0] sm:$0xff] %v2067
        %v2069 = vld [vmem:[%s1081 + $0x7b8] sm:$0xff]
        %2070 = vst [vmem:[%s1082 + $0x7b4] sm:$0xff] %v2069
        %v2071 = vld [vmem:[%s1081 + $0x7b4] sm:$0xff]
        %2072 = vst [vmem:[%s1082 + $0x7b8] sm:$0xff] %v2071
        %v2073 = vld [vmem:[%s1081 + $0x7bc] sm:$0xff]
        %2074 = vst [vmem:[%s1082 + $0x7bc] sm:$0xff] %v2073
        %v2075 = vld [vmem:[%s1081 + $0x7c0] sm:$0xff]
        %2076 = vst [vmem:[%s1082 + $0x7c0] sm:$0xff] %v2075
        %v2077 = vld [vmem:[%s1081 + $0x7c8] sm:$0xff]
        %2078 = vst [vmem:[%s1082 + $0x7c4] sm:$0xff] %v2077
        %v2079 = vld [vmem:[%s1081 + $0x7c4] sm:$0xff]
        %2080 = vst [vmem:[%s1082 + $0x7c8] sm:$0xff] %v2079
        %v2081 = vld [vmem:[%s1081 + $0x7cc] sm:$0xff]
        %2082 = vst [vmem:[%s1082 + $0x7cc] sm:$0xff] %v2081
        %v2083 = vld [vmem:[%s1081 + $0x7d0] sm:$0xff]
        %2084 = vst [vmem:[%s1082 + $0x7d0] sm:$0xff] %v2083
        %v2085 = vld [vmem:[%s1081 + $0x7d8] sm:$0xff]
        %2086 = vst [vmem:[%s1082 + $0x7d4] sm:$0xff] %v2085
        %v2087 = vld [vmem:[%s1081 + $0x7d4] sm:$0xff]
        %2088 = vst [vmem:[%s1082 + $0x7d8] sm:$0xff] %v2087
        %v2089 = vld [vmem:[%s1081 + $0x7dc] sm:$0xff]
        %2090 = vst [vmem:[%s1082 + $0x7dc] sm:$0xff] %v2089
        %v2091 = vld [vmem:[%s1081 + $0x7e0] sm:$0xff]
        %2092 = vst [vmem:[%s1082 + $0x7e0] sm:$0xff] %v2091
        %v2093 = vld [vmem:[%s1081 + $0x7e8] sm:$0xff]
        %2094 = vst [vmem:[%s1082 + $0x7e4] sm:$0xff] %v2093
        %v2095 = vld [vmem:[%s1081 + $0x7e4] sm:$0xff]
        %2096 = vst [vmem:[%s1082 + $0x7e8] sm:$0xff] %v2095
        %v2097 = vld [vmem:[%s1081 + $0x7ec] sm:$0xff]
        %2098 = vst [vmem:[%s1082 + $0x7ec] sm:$0xff] %v2097
        %v2099 = vld [vmem:[%s1081 + $0x7f0] sm:$0xff]
        %2100 = vst [vmem:[%s1082 + $0x7f0] sm:$0xff] %v2099
        %v2101 = vld [vmem:[%s1081 + $0x7f8] sm:$0xff]
        %2102 = vst [vmem:[%s1082 + $0x7f4] sm:$0xff] %v2101
        %v2103 = vld [vmem:[%s1081 + $0x7f4] sm:$0xff]
        %2104 = vst [vmem:[%s1082 + $0x7f8] sm:$0xff] %v2103
        %v2105 = vld [vmem:[%s1081 + $0x7fc] sm:$0xff]
        %2106 = vst [vmem:[%s1082 + $0x7fc] sm:$0xff] %v2105
        %s2107 = sadd.s32 1, %s1080
        %p2108 = scmp.ge.s32.totalorder %s2107, %s1071
        %s2109 = scalar_select %p2108, 0, %s2107
        %s2110 = smul.u32 %s2109, 8
        %s2111 = smul.u32 %s2109, 8
        %s2112 = scalar_lea.vmem %s6, %s2110
        %s2113 = scalar_lea.vmem [#allocation2], %s2111
      $region49: #{breakout_a2c_forward.1} parent=43 // loop_footer
        %s1077 = sadd.s32 %s1075, 1
      $region50: #{breakout_a2c_forward.1} parent=43 // loop_footer_branch
        %1074 = sbr.rel target = $region46
      $region51: #{breakout_a2c_forward.1} parent=43 // loop_exit
        _
    $region44: #{breakout_a2c_forward.1} parent=28 // pred_fallthru
      _
    %p2114 = pneg %p1067
    // Predicated region
    $region52: #{breakout_a2c_forward.1} parent=28 // pred_check
      _
    $region53: #{breakout_a2c_forward.1} parent=28 // pred_check_branch
      %2116 = sbr.rel (%p1067) target = $region55
    $region54: #{breakout_a2c_forward.1} parent=28 // pred_region
      %s2117 = sand.u32 4, 7
      %s2118 = ssub.s32 4, %s2117
      %s2119 = scalar_lea.vmem %s6, %s2118
      %s2120 = ssub.s32 4, %s2117
      %s2121 = scalar_lea.vmem [#allocation2], %s2120
      %s2122 = sshrl.u32 4, 3
      // While loop
      $region56: #{breakout_a2c_forward.1} parent=54 // loop_pre_header
        _
      $region57: #{breakout_a2c_forward.1} parent=54 // loop_header
        %s2126 = sphi 0, %s2128
        %p2127 = scmp.ge.s32.totalorder %s2126, %s2122
        %s2131 = sphi 0, %s3160
        %s2132 = sphi %s6, %s3163
        %s2133 = sphi [#allocation2], %s3164
      $region58: #{breakout_a2c_forward.1} parent=54 // loop_header_branch
        %2130 = sbr.rel (%p2127) target = $region62
      $region59: #{breakout_a2c_forward.1} parent=54 // loop_body
        %v2134 = vld [vmem:[%s2132] sm:$0xff]
        %2135 = vst [vmem:[%s2133] sm:$0xff] %v2134
        %v2136 = vld [vmem:[%s2132 + $0x8] sm:$0xff]
        %2137 = vst [vmem:[%s2133 + $0x4] sm:$0xff] %v2136
        %v2138 = vld [vmem:[%s2132 + $0x4] sm:$0xff]
        %2139 = vst [vmem:[%s2133 + $0x8] sm:$0xff] %v2138
        %v2140 = vld [vmem:[%s2132 + $0xc] sm:$0xff]
        %2141 = vst [vmem:[%s2133 + $0xc] sm:$0xff] %v2140
        %v2142 = vld [vmem:[%s2132 + $0x10] sm:$0xff]
        %2143 = vst [vmem:[%s2133 + $0x10] sm:$0xff] %v2142
        %v2144 = vld [vmem:[%s2132 + $0x18] sm:$0xff]
        %2145 = vst [vmem:[%s2133 + $0x14] sm:$0xff] %v2144
        %v2146 = vld [vmem:[%s2132 + $0x14] sm:$0xff]
        %2147 = vst [vmem:[%s2133 + $0x18] sm:$0xff] %v2146
        %v2148 = vld [vmem:[%s2132 + $0x1c] sm:$0xff]
        %2149 = vst [vmem:[%s2133 + $0x1c] sm:$0xff] %v2148
        %v2150 = vld [vmem:[%s2132 + $0x20] sm:$0xff]
        %2151 = vst [vmem:[%s2133 + $0x20] sm:$0xff] %v2150
        %v2152 = vld [vmem:[%s2132 + $0x28] sm:$0xff]
        %2153 = vst [vmem:[%s2133 + $0x24] sm:$0xff] %v2152
        %v2154 = vld [vmem:[%s2132 + $0x24] sm:$0xff]
        %2155 = vst [vmem:[%s2133 + $0x28] sm:$0xff] %v2154
        %v2156 = vld [vmem:[%s2132 + $0x2c] sm:$0xff]
        %2157 = vst [vmem:[%s2133 + $0x2c] sm:$0xff] %v2156
        %v2158 = vld [vmem:[%s2132 + $0x30] sm:$0xff]
        %2159 = vst [vmem:[%s2133 + $0x30] sm:$0xff] %v2158
        %v2160 = vld [vmem:[%s2132 + $0x38] sm:$0xff]
        %2161 = vst [vmem:[%s2133 + $0x34] sm:$0xff] %v2160
        %v2162 = vld [vmem:[%s2132 + $0x34] sm:$0xff]
        %2163 = vst [vmem:[%s2133 + $0x38] sm:$0xff] %v2162
        %v2164 = vld [vmem:[%s2132 + $0x3c] sm:$0xff]
        %2165 = vst [vmem:[%s2133 + $0x3c] sm:$0xff] %v2164
        %v2166 = vld [vmem:[%s2132 + $0x40] sm:$0xff]
        %2167 = vst [vmem:[%s2133 + $0x40] sm:$0xff] %v2166
        %v2168 = vld [vmem:[%s2132 + $0x48] sm:$0xff]
        %2169 = vst [vmem:[%s2133 + $0x44] sm:$0xff] %v2168
        %v2170 = vld [vmem:[%s2132 + $0x44] sm:$0xff]
        %2171 = vst [vmem:[%s2133 + $0x48] sm:$0xff] %v2170
        %v2172 = vld [vmem:[%s2132 + $0x4c] sm:$0xff]
        %2173 = vst [vmem:[%s2133 + $0x4c] sm:$0xff] %v2172
        %v2174 = vld [vmem:[%s2132 + $0x50] sm:$0xff]
        %2175 = vst [vmem:[%s2133 + $0x50] sm:$0xff] %v2174
        %v2176 = vld [vmem:[%s2132 + $0x58] sm:$0xff]
        %2177 = vst [vmem:[%s2133 + $0x54] sm:$0xff] %v2176
        %v2178 = vld [vmem:[%s2132 + $0x54] sm:$0xff]
        %2179 = vst [vmem:[%s2133 + $0x58] sm:$0xff] %v2178
        %v2180 = vld [vmem:[%s2132 + $0x5c] sm:$0xff]
        %2181 = vst [vmem:[%s2133 + $0x5c] sm:$0xff] %v2180
        %v2182 = vld [vmem:[%s2132 + $0x60] sm:$0xff]
        %2183 = vst [vmem:[%s2133 + $0x60] sm:$0xff] %v2182
        %v2184 = vld [vmem:[%s2132 + $0x68] sm:$0xff]
        %2185 = vst [vmem:[%s2133 + $0x64] sm:$0xff] %v2184
        %v2186 = vld [vmem:[%s2132 + $0x64] sm:$0xff]
        %2187 = vst [vmem:[%s2133 + $0x68] sm:$0xff] %v2186
        %v2188 = vld [vmem:[%s2132 + $0x6c] sm:$0xff]
        %2189 = vst [vmem:[%s2133 + $0x6c] sm:$0xff] %v2188
        %v2190 = vld [vmem:[%s2132 + $0x70] sm:$0xff]
        %2191 = vst [vmem:[%s2133 + $0x70] sm:$0xff] %v2190
        %v2192 = vld [vmem:[%s2132 + $0x78] sm:$0xff]
        %2193 = vst [vmem:[%s2133 + $0x74] sm:$0xff] %v2192
        %v2194 = vld [vmem:[%s2132 + $0x74] sm:$0xff]
        %2195 = vst [vmem:[%s2133 + $0x78] sm:$0xff] %v2194
        %v2196 = vld [vmem:[%s2132 + $0x7c] sm:$0xff]
        %2197 = vst [vmem:[%s2133 + $0x7c] sm:$0xff] %v2196
        %v2198 = vld [vmem:[%s2132 + $0x80] sm:$0xff]
        %2199 = vst [vmem:[%s2133 + $0x80] sm:$0xff] %v2198
        %v2200 = vld [vmem:[%s2132 + $0x88] sm:$0xff]
        %2201 = vst [vmem:[%s2133 + $0x84] sm:$0xff] %v2200
        %v2202 = vld [vmem:[%s2132 + $0x84] sm:$0xff]
        %2203 = vst [vmem:[%s2133 + $0x88] sm:$0xff] %v2202
        %v2204 = vld [vmem:[%s2132 + $0x8c] sm:$0xff]
        %2205 = vst [vmem:[%s2133 + $0x8c] sm:$0xff] %v2204
        %v2206 = vld [vmem:[%s2132 + $0x90] sm:$0xff]
        %2207 = vst [vmem:[%s2133 + $0x90] sm:$0xff] %v2206
        %v2208 = vld [vmem:[%s2132 + $0x98] sm:$0xff]
        %2209 = vst [vmem:[%s2133 + $0x94] sm:$0xff] %v2208
        %v2210 = vld [vmem:[%s2132 + $0x94] sm:$0xff]
        %2211 = vst [vmem:[%s2133 + $0x98] sm:$0xff] %v2210
        %v2212 = vld [vmem:[%s2132 + $0x9c] sm:$0xff]
        %2213 = vst [vmem:[%s2133 + $0x9c] sm:$0xff] %v2212
        %v2214 = vld [vmem:[%s2132 + $0xa0] sm:$0xff]
        %2215 = vst [vmem:[%s2133 + $0xa0] sm:$0xff] %v2214
        %v2216 = vld [vmem:[%s2132 + $0xa8] sm:$0xff]
        %2217 = vst [vmem:[%s2133 + $0xa4] sm:$0xff] %v2216
        %v2218 = vld [vmem:[%s2132 + $0xa4] sm:$0xff]
        %2219 = vst [vmem:[%s2133 + $0xa8] sm:$0xff] %v2218
        %v2220 = vld [vmem:[%s2132 + $0xac] sm:$0xff]
        %2221 = vst [vmem:[%s2133 + $0xac] sm:$0xff] %v2220
        %v2222 = vld [vmem:[%s2132 + $0xb0] sm:$0xff]
        %2223 = vst [vmem:[%s2133 + $0xb0] sm:$0xff] %v2222
        %v2224 = vld [vmem:[%s2132 + $0xb8] sm:$0xff]
        %2225 = vst [vmem:[%s2133 + $0xb4] sm:$0xff] %v2224
        %v2226 = vld [vmem:[%s2132 + $0xb4] sm:$0xff]
        %2227 = vst [vmem:[%s2133 + $0xb8] sm:$0xff] %v2226
        %v2228 = vld [vmem:[%s2132 + $0xbc] sm:$0xff]
        %2229 = vst [vmem:[%s2133 + $0xbc] sm:$0xff] %v2228
        %v2230 = vld [vmem:[%s2132 + $0xc0] sm:$0xff]
        %2231 = vst [vmem:[%s2133 + $0xc0] sm:$0xff] %v2230
        %v2232 = vld [vmem:[%s2132 + $0xc8] sm:$0xff]
        %2233 = vst [vmem:[%s2133 + $0xc4] sm:$0xff] %v2232
        %v2234 = vld [vmem:[%s2132 + $0xc4] sm:$0xff]
        %2235 = vst [vmem:[%s2133 + $0xc8] sm:$0xff] %v2234
        %v2236 = vld [vmem:[%s2132 + $0xcc] sm:$0xff]
        %2237 = vst [vmem:[%s2133 + $0xcc] sm:$0xff] %v2236
        %v2238 = vld [vmem:[%s2132 + $0xd0] sm:$0xff]
        %2239 = vst [vmem:[%s2133 + $0xd0] sm:$0xff] %v2238
        %v2240 = vld [vmem:[%s2132 + $0xd8] sm:$0xff]
        %2241 = vst [vmem:[%s2133 + $0xd4] sm:$0xff] %v2240
        %v2242 = vld [vmem:[%s2132 + $0xd4] sm:$0xff]
        %2243 = vst [vmem:[%s2133 + $0xd8] sm:$0xff] %v2242
        %v2244 = vld [vmem:[%s2132 + $0xdc] sm:$0xff]
        %2245 = vst [vmem:[%s2133 + $0xdc] sm:$0xff] %v2244
        %v2246 = vld [vmem:[%s2132 + $0xe0] sm:$0xff]
        %2247 = vst [vmem:[%s2133 + $0xe0] sm:$0xff] %v2246
        %v2248 = vld [vmem:[%s2132 + $0xe8] sm:$0xff]
        %2249 = vst [vmem:[%s2133 + $0xe4] sm:$0xff] %v2248
        %v2250 = vld [vmem:[%s2132 + $0xe4] sm:$0xff]
        %2251 = vst [vmem:[%s2133 + $0xe8] sm:$0xff] %v2250
        %v2252 = vld [vmem:[%s2132 + $0xec] sm:$0xff]
        %2253 = vst [vmem:[%s2133 + $0xec] sm:$0xff] %v2252
        %v2254 = vld [vmem:[%s2132 + $0xf0] sm:$0xff]
        %2255 = vst [vmem:[%s2133 + $0xf0] sm:$0xff] %v2254
        %v2256 = vld [vmem:[%s2132 + $0xf8] sm:$0xff]
        %2257 = vst [vmem:[%s2133 + $0xf4] sm:$0xff] %v2256
        %v2258 = vld [vmem:[%s2132 + $0xf4] sm:$0xff]
        %2259 = vst [vmem:[%s2133 + $0xf8] sm:$0xff] %v2258
        %v2260 = vld [vmem:[%s2132 + $0xfc] sm:$0xff]
        %2261 = vst [vmem:[%s2133 + $0xfc] sm:$0xff] %v2260
        %v2262 = vld [vmem:[%s2132 + $0x100] sm:$0xff]
        %2263 = vst [vmem:[%s2133 + $0x100] sm:$0xff] %v2262
        %v2264 = vld [vmem:[%s2132 + $0x108] sm:$0xff]
        %2265 = vst [vmem:[%s2133 + $0x104] sm:$0xff] %v2264
        %v2266 = vld [vmem:[%s2132 + $0x104] sm:$0xff]
        %2267 = vst [vmem:[%s2133 + $0x108] sm:$0xff] %v2266
        %v2268 = vld [vmem:[%s2132 + $0x10c] sm:$0xff]
        %2269 = vst [vmem:[%s2133 + $0x10c] sm:$0xff] %v2268
        %v2270 = vld [vmem:[%s2132 + $0x110] sm:$0xff]
        %2271 = vst [vmem:[%s2133 + $0x110] sm:$0xff] %v2270
        %v2272 = vld [vmem:[%s2132 + $0x118] sm:$0xff]
        %2273 = vst [vmem:[%s2133 + $0x114] sm:$0xff] %v2272
        %v2274 = vld [vmem:[%s2132 + $0x114] sm:$0xff]
        %2275 = vst [vmem:[%s2133 + $0x118] sm:$0xff] %v2274
        %v2276 = vld [vmem:[%s2132 + $0x11c] sm:$0xff]
        %2277 = vst [vmem:[%s2133 + $0x11c] sm:$0xff] %v2276
        %v2278 = vld [vmem:[%s2132 + $0x120] sm:$0xff]
        %2279 = vst [vmem:[%s2133 + $0x120] sm:$0xff] %v2278
        %v2280 = vld [vmem:[%s2132 + $0x128] sm:$0xff]
        %2281 = vst [vmem:[%s2133 + $0x124] sm:$0xff] %v2280
        %v2282 = vld [vmem:[%s2132 + $0x124] sm:$0xff]
        %2283 = vst [vmem:[%s2133 + $0x128] sm:$0xff] %v2282
        %v2284 = vld [vmem:[%s2132 + $0x12c] sm:$0xff]
        %2285 = vst [vmem:[%s2133 + $0x12c] sm:$0xff] %v2284
        %v2286 = vld [vmem:[%s2132 + $0x130] sm:$0xff]
        %2287 = vst [vmem:[%s2133 + $0x130] sm:$0xff] %v2286
        %v2288 = vld [vmem:[%s2132 + $0x138] sm:$0xff]
        %2289 = vst [vmem:[%s2133 + $0x134] sm:$0xff] %v2288
        %v2290 = vld [vmem:[%s2132 + $0x134] sm:$0xff]
        %2291 = vst [vmem:[%s2133 + $0x138] sm:$0xff] %v2290
        %v2292 = vld [vmem:[%s2132 + $0x13c] sm:$0xff]
        %2293 = vst [vmem:[%s2133 + $0x13c] sm:$0xff] %v2292
        %v2294 = vld [vmem:[%s2132 + $0x140] sm:$0xff]
        %2295 = vst [vmem:[%s2133 + $0x140] sm:$0xff] %v2294
        %v2296 = vld [vmem:[%s2132 + $0x148] sm:$0xff]
        %2297 = vst [vmem:[%s2133 + $0x144] sm:$0xff] %v2296
        %v2298 = vld [vmem:[%s2132 + $0x144] sm:$0xff]
        %2299 = vst [vmem:[%s2133 + $0x148] sm:$0xff] %v2298
        %v2300 = vld [vmem:[%s2132 + $0x14c] sm:$0xff]
        %2301 = vst [vmem:[%s2133 + $0x14c] sm:$0xff] %v2300
        %v2302 = vld [vmem:[%s2132 + $0x150] sm:$0xff]
        %2303 = vst [vmem:[%s2133 + $0x150] sm:$0xff] %v2302
        %v2304 = vld [vmem:[%s2132 + $0x158] sm:$0xff]
        %2305 = vst [vmem:[%s2133 + $0x154] sm:$0xff] %v2304
        %v2306 = vld [vmem:[%s2132 + $0x154] sm:$0xff]
        %2307 = vst [vmem:[%s2133 + $0x158] sm:$0xff] %v2306
        %v2308 = vld [vmem:[%s2132 + $0x15c] sm:$0xff]
        %2309 = vst [vmem:[%s2133 + $0x15c] sm:$0xff] %v2308
        %v2310 = vld [vmem:[%s2132 + $0x160] sm:$0xff]
        %2311 = vst [vmem:[%s2133 + $0x160] sm:$0xff] %v2310
        %v2312 = vld [vmem:[%s2132 + $0x168] sm:$0xff]
        %2313 = vst [vmem:[%s2133 + $0x164] sm:$0xff] %v2312
        %v2314 = vld [vmem:[%s2132 + $0x164] sm:$0xff]
        %2315 = vst [vmem:[%s2133 + $0x168] sm:$0xff] %v2314
        %v2316 = vld [vmem:[%s2132 + $0x16c] sm:$0xff]
        %2317 = vst [vmem:[%s2133 + $0x16c] sm:$0xff] %v2316
        %v2318 = vld [vmem:[%s2132 + $0x170] sm:$0xff]
        %2319 = vst [vmem:[%s2133 + $0x170] sm:$0xff] %v2318
        %v2320 = vld [vmem:[%s2132 + $0x178] sm:$0xff]
        %2321 = vst [vmem:[%s2133 + $0x174] sm:$0xff] %v2320
        %v2322 = vld [vmem:[%s2132 + $0x174] sm:$0xff]
        %2323 = vst [vmem:[%s2133 + $0x178] sm:$0xff] %v2322
        %v2324 = vld [vmem:[%s2132 + $0x17c] sm:$0xff]
        %2325 = vst [vmem:[%s2133 + $0x17c] sm:$0xff] %v2324
        %v2326 = vld [vmem:[%s2132 + $0x180] sm:$0xff]
        %2327 = vst [vmem:[%s2133 + $0x180] sm:$0xff] %v2326
        %v2328 = vld [vmem:[%s2132 + $0x188] sm:$0xff]
        %2329 = vst [vmem:[%s2133 + $0x184] sm:$0xff] %v2328
        %v2330 = vld [vmem:[%s2132 + $0x184] sm:$0xff]
        %2331 = vst [vmem:[%s2133 + $0x188] sm:$0xff] %v2330
        %v2332 = vld [vmem:[%s2132 + $0x18c] sm:$0xff]
        %2333 = vst [vmem:[%s2133 + $0x18c] sm:$0xff] %v2332
        %v2334 = vld [vmem:[%s2132 + $0x190] sm:$0xff]
        %2335 = vst [vmem:[%s2133 + $0x190] sm:$0xff] %v2334
        %v2336 = vld [vmem:[%s2132 + $0x198] sm:$0xff]
        %2337 = vst [vmem:[%s2133 + $0x194] sm:$0xff] %v2336
        %v2338 = vld [vmem:[%s2132 + $0x194] sm:$0xff]
        %2339 = vst [vmem:[%s2133 + $0x198] sm:$0xff] %v2338
        %v2340 = vld [vmem:[%s2132 + $0x19c] sm:$0xff]
        %2341 = vst [vmem:[%s2133 + $0x19c] sm:$0xff] %v2340
        %v2342 = vld [vmem:[%s2132 + $0x1a0] sm:$0xff]
        %2343 = vst [vmem:[%s2133 + $0x1a0] sm:$0xff] %v2342
        %v2344 = vld [vmem:[%s2132 + $0x1a8] sm:$0xff]
        %2345 = vst [vmem:[%s2133 + $0x1a4] sm:$0xff] %v2344
        %v2346 = vld [vmem:[%s2132 + $0x1a4] sm:$0xff]
        %2347 = vst [vmem:[%s2133 + $0x1a8] sm:$0xff] %v2346
        %v2348 = vld [vmem:[%s2132 + $0x1ac] sm:$0xff]
        %2349 = vst [vmem:[%s2133 + $0x1ac] sm:$0xff] %v2348
        %v2350 = vld [vmem:[%s2132 + $0x1b0] sm:$0xff]
        %2351 = vst [vmem:[%s2133 + $0x1b0] sm:$0xff] %v2350
        %v2352 = vld [vmem:[%s2132 + $0x1b8] sm:$0xff]
        %2353 = vst [vmem:[%s2133 + $0x1b4] sm:$0xff] %v2352
        %v2354 = vld [vmem:[%s2132 + $0x1b4] sm:$0xff]
        %2355 = vst [vmem:[%s2133 + $0x1b8] sm:$0xff] %v2354
        %v2356 = vld [vmem:[%s2132 + $0x1bc] sm:$0xff]
        %2357 = vst [vmem:[%s2133 + $0x1bc] sm:$0xff] %v2356
        %v2358 = vld [vmem:[%s2132 + $0x1c0] sm:$0xff]
        %2359 = vst [vmem:[%s2133 + $0x1c0] sm:$0xff] %v2358
        %v2360 = vld [vmem:[%s2132 + $0x1c8] sm:$0xff]
        %2361 = vst [vmem:[%s2133 + $0x1c4] sm:$0xff] %v2360
        %v2362 = vld [vmem:[%s2132 + $0x1c4] sm:$0xff]
        %2363 = vst [vmem:[%s2133 + $0x1c8] sm:$0xff] %v2362
        %v2364 = vld [vmem:[%s2132 + $0x1cc] sm:$0xff]
        %2365 = vst [vmem:[%s2133 + $0x1cc] sm:$0xff] %v2364
        %v2366 = vld [vmem:[%s2132 + $0x1d0] sm:$0xff]
        %2367 = vst [vmem:[%s2133 + $0x1d0] sm:$0xff] %v2366
        %v2368 = vld [vmem:[%s2132 + $0x1d8] sm:$0xff]
        %2369 = vst [vmem:[%s2133 + $0x1d4] sm:$0xff] %v2368
        %v2370 = vld [vmem:[%s2132 + $0x1d4] sm:$0xff]
        %2371 = vst [vmem:[%s2133 + $0x1d8] sm:$0xff] %v2370
        %v2372 = vld [vmem:[%s2132 + $0x1dc] sm:$0xff]
        %2373 = vst [vmem:[%s2133 + $0x1dc] sm:$0xff] %v2372
        %v2374 = vld [vmem:[%s2132 + $0x1e0] sm:$0xff]
        %2375 = vst [vmem:[%s2133 + $0x1e0] sm:$0xff] %v2374
        %v2376 = vld [vmem:[%s2132 + $0x1e8] sm:$0xff]
        %2377 = vst [vmem:[%s2133 + $0x1e4] sm:$0xff] %v2376
        %v2378 = vld [vmem:[%s2132 + $0x1e4] sm:$0xff]
        %2379 = vst [vmem:[%s2133 + $0x1e8] sm:$0xff] %v2378
        %v2380 = vld [vmem:[%s2132 + $0x1ec] sm:$0xff]
        %2381 = vst [vmem:[%s2133 + $0x1ec] sm:$0xff] %v2380
        %v2382 = vld [vmem:[%s2132 + $0x1f0] sm:$0xff]
        %2383 = vst [vmem:[%s2133 + $0x1f0] sm:$0xff] %v2382
        %v2384 = vld [vmem:[%s2132 + $0x1f8] sm:$0xff]
        %2385 = vst [vmem:[%s2133 + $0x1f4] sm:$0xff] %v2384
        %v2386 = vld [vmem:[%s2132 + $0x1f4] sm:$0xff]
        %2387 = vst [vmem:[%s2133 + $0x1f8] sm:$0xff] %v2386
        %v2388 = vld [vmem:[%s2132 + $0x1fc] sm:$0xff]
        %2389 = vst [vmem:[%s2133 + $0x1fc] sm:$0xff] %v2388
        %v2390 = vld [vmem:[%s2132 + $0x200] sm:$0xff]
        %2391 = vst [vmem:[%s2133 + $0x200] sm:$0xff] %v2390
        %v2392 = vld [vmem:[%s2132 + $0x208] sm:$0xff]
        %2393 = vst [vmem:[%s2133 + $0x204] sm:$0xff] %v2392
        %v2394 = vld [vmem:[%s2132 + $0x204] sm:$0xff]
        %2395 = vst [vmem:[%s2133 + $0x208] sm:$0xff] %v2394
        %v2396 = vld [vmem:[%s2132 + $0x20c] sm:$0xff]
        %2397 = vst [vmem:[%s2133 + $0x20c] sm:$0xff] %v2396
        %v2398 = vld [vmem:[%s2132 + $0x210] sm:$0xff]
        %2399 = vst [vmem:[%s2133 + $0x210] sm:$0xff] %v2398
        %v2400 = vld [vmem:[%s2132 + $0x218] sm:$0xff]
        %2401 = vst [vmem:[%s2133 + $0x214] sm:$0xff] %v2400
        %v2402 = vld [vmem:[%s2132 + $0x214] sm:$0xff]
        %2403 = vst [vmem:[%s2133 + $0x218] sm:$0xff] %v2402
        %v2404 = vld [vmem:[%s2132 + $0x21c] sm:$0xff]
        %2405 = vst [vmem:[%s2133 + $0x21c] sm:$0xff] %v2404
        %v2406 = vld [vmem:[%s2132 + $0x220] sm:$0xff]
        %2407 = vst [vmem:[%s2133 + $0x220] sm:$0xff] %v2406
        %v2408 = vld [vmem:[%s2132 + $0x228] sm:$0xff]
        %2409 = vst [vmem:[%s2133 + $0x224] sm:$0xff] %v2408
        %v2410 = vld [vmem:[%s2132 + $0x224] sm:$0xff]
        %2411 = vst [vmem:[%s2133 + $0x228] sm:$0xff] %v2410
        %v2412 = vld [vmem:[%s2132 + $0x22c] sm:$0xff]
        %2413 = vst [vmem:[%s2133 + $0x22c] sm:$0xff] %v2412
        %v2414 = vld [vmem:[%s2132 + $0x230] sm:$0xff]
        %2415 = vst [vmem:[%s2133 + $0x230] sm:$0xff] %v2414
        %v2416 = vld [vmem:[%s2132 + $0x238] sm:$0xff]
        %2417 = vst [vmem:[%s2133 + $0x234] sm:$0xff] %v2416
        %v2418 = vld [vmem:[%s2132 + $0x234] sm:$0xff]
        %2419 = vst [vmem:[%s2133 + $0x238] sm:$0xff] %v2418
        %v2420 = vld [vmem:[%s2132 + $0x23c] sm:$0xff]
        %2421 = vst [vmem:[%s2133 + $0x23c] sm:$0xff] %v2420
        %v2422 = vld [vmem:[%s2132 + $0x240] sm:$0xff]
        %2423 = vst [vmem:[%s2133 + $0x240] sm:$0xff] %v2422
        %v2424 = vld [vmem:[%s2132 + $0x248] sm:$0xff]
        %2425 = vst [vmem:[%s2133 + $0x244] sm:$0xff] %v2424
        %v2426 = vld [vmem:[%s2132 + $0x244] sm:$0xff]
        %2427 = vst [vmem:[%s2133 + $0x248] sm:$0xff] %v2426
        %v2428 = vld [vmem:[%s2132 + $0x24c] sm:$0xff]
        %2429 = vst [vmem:[%s2133 + $0x24c] sm:$0xff] %v2428
        %v2430 = vld [vmem:[%s2132 + $0x250] sm:$0xff]
        %2431 = vst [vmem:[%s2133 + $0x250] sm:$0xff] %v2430
        %v2432 = vld [vmem:[%s2132 + $0x258] sm:$0xff]
        %2433 = vst [vmem:[%s2133 + $0x254] sm:$0xff] %v2432
        %v2434 = vld [vmem:[%s2132 + $0x254] sm:$0xff]
        %2435 = vst [vmem:[%s2133 + $0x258] sm:$0xff] %v2434
        %v2436 = vld [vmem:[%s2132 + $0x25c] sm:$0xff]
        %2437 = vst [vmem:[%s2133 + $0x25c] sm:$0xff] %v2436
        %v2438 = vld [vmem:[%s2132 + $0x260] sm:$0xff]
        %2439 = vst [vmem:[%s2133 + $0x260] sm:$0xff] %v2438
        %v2440 = vld [vmem:[%s2132 + $0x268] sm:$0xff]
        %2441 = vst [vmem:[%s2133 + $0x264] sm:$0xff] %v2440
        %v2442 = vld [vmem:[%s2132 + $0x264] sm:$0xff]
        %2443 = vst [vmem:[%s2133 + $0x268] sm:$0xff] %v2442
        %v2444 = vld [vmem:[%s2132 + $0x26c] sm:$0xff]
        %2445 = vst [vmem:[%s2133 + $0x26c] sm:$0xff] %v2444
        %v2446 = vld [vmem:[%s2132 + $0x270] sm:$0xff]
        %2447 = vst [vmem:[%s2133 + $0x270] sm:$0xff] %v2446
        %v2448 = vld [vmem:[%s2132 + $0x278] sm:$0xff]
        %2449 = vst [vmem:[%s2133 + $0x274] sm:$0xff] %v2448
        %v2450 = vld [vmem:[%s2132 + $0x274] sm:$0xff]
        %2451 = vst [vmem:[%s2133 + $0x278] sm:$0xff] %v2450
        %v2452 = vld [vmem:[%s2132 + $0x27c] sm:$0xff]
        %2453 = vst [vmem:[%s2133 + $0x27c] sm:$0xff] %v2452
        %v2454 = vld [vmem:[%s2132 + $0x280] sm:$0xff]
        %2455 = vst [vmem:[%s2133 + $0x280] sm:$0xff] %v2454
        %v2456 = vld [vmem:[%s2132 + $0x288] sm:$0xff]
        %2457 = vst [vmem:[%s2133 + $0x284] sm:$0xff] %v2456
        %v2458 = vld [vmem:[%s2132 + $0x284] sm:$0xff]
        %2459 = vst [vmem:[%s2133 + $0x288] sm:$0xff] %v2458
        %v2460 = vld [vmem:[%s2132 + $0x28c] sm:$0xff]
        %2461 = vst [vmem:[%s2133 + $0x28c] sm:$0xff] %v2460
        %v2462 = vld [vmem:[%s2132 + $0x290] sm:$0xff]
        %2463 = vst [vmem:[%s2133 + $0x290] sm:$0xff] %v2462
        %v2464 = vld [vmem:[%s2132 + $0x298] sm:$0xff]
        %2465 = vst [vmem:[%s2133 + $0x294] sm:$0xff] %v2464
        %v2466 = vld [vmem:[%s2132 + $0x294] sm:$0xff]
        %2467 = vst [vmem:[%s2133 + $0x298] sm:$0xff] %v2466
        %v2468 = vld [vmem:[%s2132 + $0x29c] sm:$0xff]
        %2469 = vst [vmem:[%s2133 + $0x29c] sm:$0xff] %v2468
        %v2470 = vld [vmem:[%s2132 + $0x2a0] sm:$0xff]
        %2471 = vst [vmem:[%s2133 + $0x2a0] sm:$0xff] %v2470
        %v2472 = vld [vmem:[%s2132 + $0x2a8] sm:$0xff]
        %2473 = vst [vmem:[%s2133 + $0x2a4] sm:$0xff] %v2472
        %v2474 = vld [vmem:[%s2132 + $0x2a4] sm:$0xff]
        %2475 = vst [vmem:[%s2133 + $0x2a8] sm:$0xff] %v2474
        %v2476 = vld [vmem:[%s2132 + $0x2ac] sm:$0xff]
        %2477 = vst [vmem:[%s2133 + $0x2ac] sm:$0xff] %v2476
        %v2478 = vld [vmem:[%s2132 + $0x2b0] sm:$0xff]
        %2479 = vst [vmem:[%s2133 + $0x2b0] sm:$0xff] %v2478
        %v2480 = vld [vmem:[%s2132 + $0x2b8] sm:$0xff]
        %2481 = vst [vmem:[%s2133 + $0x2b4] sm:$0xff] %v2480
        %v2482 = vld [vmem:[%s2132 + $0x2b4] sm:$0xff]
        %2483 = vst [vmem:[%s2133 + $0x2b8] sm:$0xff] %v2482
        %v2484 = vld [vmem:[%s2132 + $0x2bc] sm:$0xff]
        %2485 = vst [vmem:[%s2133 + $0x2bc] sm:$0xff] %v2484
        %v2486 = vld [vmem:[%s2132 + $0x2c0] sm:$0xff]
        %2487 = vst [vmem:[%s2133 + $0x2c0] sm:$0xff] %v2486
        %v2488 = vld [vmem:[%s2132 + $0x2c8] sm:$0xff]
        %2489 = vst [vmem:[%s2133 + $0x2c4] sm:$0xff] %v2488
        %v2490 = vld [vmem:[%s2132 + $0x2c4] sm:$0xff]
        %2491 = vst [vmem:[%s2133 + $0x2c8] sm:$0xff] %v2490
        %v2492 = vld [vmem:[%s2132 + $0x2cc] sm:$0xff]
        %2493 = vst [vmem:[%s2133 + $0x2cc] sm:$0xff] %v2492
        %v2494 = vld [vmem:[%s2132 + $0x2d0] sm:$0xff]
        %2495 = vst [vmem:[%s2133 + $0x2d0] sm:$0xff] %v2494
        %v2496 = vld [vmem:[%s2132 + $0x2d8] sm:$0xff]
        %2497 = vst [vmem:[%s2133 + $0x2d4] sm:$0xff] %v2496
        %v2498 = vld [vmem:[%s2132 + $0x2d4] sm:$0xff]
        %2499 = vst [vmem:[%s2133 + $0x2d8] sm:$0xff] %v2498
        %v2500 = vld [vmem:[%s2132 + $0x2dc] sm:$0xff]
        %2501 = vst [vmem:[%s2133 + $0x2dc] sm:$0xff] %v2500
        %v2502 = vld [vmem:[%s2132 + $0x2e0] sm:$0xff]
        %2503 = vst [vmem:[%s2133 + $0x2e0] sm:$0xff] %v2502
        %v2504 = vld [vmem:[%s2132 + $0x2e8] sm:$0xff]
        %2505 = vst [vmem:[%s2133 + $0x2e4] sm:$0xff] %v2504
        %v2506 = vld [vmem:[%s2132 + $0x2e4] sm:$0xff]
        %2507 = vst [vmem:[%s2133 + $0x2e8] sm:$0xff] %v2506
        %v2508 = vld [vmem:[%s2132 + $0x2ec] sm:$0xff]
        %2509 = vst [vmem:[%s2133 + $0x2ec] sm:$0xff] %v2508
        %v2510 = vld [vmem:[%s2132 + $0x2f0] sm:$0xff]
        %2511 = vst [vmem:[%s2133 + $0x2f0] sm:$0xff] %v2510
        %v2512 = vld [vmem:[%s2132 + $0x2f8] sm:$0xff]
        %2513 = vst [vmem:[%s2133 + $0x2f4] sm:$0xff] %v2512
        %v2514 = vld [vmem:[%s2132 + $0x2f4] sm:$0xff]
        %2515 = vst [vmem:[%s2133 + $0x2f8] sm:$0xff] %v2514
        %v2516 = vld [vmem:[%s2132 + $0x2fc] sm:$0xff]
        %2517 = vst [vmem:[%s2133 + $0x2fc] sm:$0xff] %v2516
        %v2518 = vld [vmem:[%s2132 + $0x300] sm:$0xff]
        %2519 = vst [vmem:[%s2133 + $0x300] sm:$0xff] %v2518
        %v2520 = vld [vmem:[%s2132 + $0x308] sm:$0xff]
        %2521 = vst [vmem:[%s2133 + $0x304] sm:$0xff] %v2520
        %v2522 = vld [vmem:[%s2132 + $0x304] sm:$0xff]
        %2523 = vst [vmem:[%s2133 + $0x308] sm:$0xff] %v2522
        %v2524 = vld [vmem:[%s2132 + $0x30c] sm:$0xff]
        %2525 = vst [vmem:[%s2133 + $0x30c] sm:$0xff] %v2524
        %v2526 = vld [vmem:[%s2132 + $0x310] sm:$0xff]
        %2527 = vst [vmem:[%s2133 + $0x310] sm:$0xff] %v2526
        %v2528 = vld [vmem:[%s2132 + $0x318] sm:$0xff]
        %2529 = vst [vmem:[%s2133 + $0x314] sm:$0xff] %v2528
        %v2530 = vld [vmem:[%s2132 + $0x314] sm:$0xff]
        %2531 = vst [vmem:[%s2133 + $0x318] sm:$0xff] %v2530
        %v2532 = vld [vmem:[%s2132 + $0x31c] sm:$0xff]
        %2533 = vst [vmem:[%s2133 + $0x31c] sm:$0xff] %v2532
        %v2534 = vld [vmem:[%s2132 + $0x320] sm:$0xff]
        %2535 = vst [vmem:[%s2133 + $0x320] sm:$0xff] %v2534
        %v2536 = vld [vmem:[%s2132 + $0x328] sm:$0xff]
        %2537 = vst [vmem:[%s2133 + $0x324] sm:$0xff] %v2536
        %v2538 = vld [vmem:[%s2132 + $0x324] sm:$0xff]
        %2539 = vst [vmem:[%s2133 + $0x328] sm:$0xff] %v2538
        %v2540 = vld [vmem:[%s2132 + $0x32c] sm:$0xff]
        %2541 = vst [vmem:[%s2133 + $0x32c] sm:$0xff] %v2540
        %v2542 = vld [vmem:[%s2132 + $0x330] sm:$0xff]
        %2543 = vst [vmem:[%s2133 + $0x330] sm:$0xff] %v2542
        %v2544 = vld [vmem:[%s2132 + $0x338] sm:$0xff]
        %2545 = vst [vmem:[%s2133 + $0x334] sm:$0xff] %v2544
        %v2546 = vld [vmem:[%s2132 + $0x334] sm:$0xff]
        %2547 = vst [vmem:[%s2133 + $0x338] sm:$0xff] %v2546
        %v2548 = vld [vmem:[%s2132 + $0x33c] sm:$0xff]
        %2549 = vst [vmem:[%s2133 + $0x33c] sm:$0xff] %v2548
        %v2550 = vld [vmem:[%s2132 + $0x340] sm:$0xff]
        %2551 = vst [vmem:[%s2133 + $0x340] sm:$0xff] %v2550
        %v2552 = vld [vmem:[%s2132 + $0x348] sm:$0xff]
        %2553 = vst [vmem:[%s2133 + $0x344] sm:$0xff] %v2552
        %v2554 = vld [vmem:[%s2132 + $0x344] sm:$0xff]
        %2555 = vst [vmem:[%s2133 + $0x348] sm:$0xff] %v2554
        %v2556 = vld [vmem:[%s2132 + $0x34c] sm:$0xff]
        %2557 = vst [vmem:[%s2133 + $0x34c] sm:$0xff] %v2556
        %v2558 = vld [vmem:[%s2132 + $0x350] sm:$0xff]
        %2559 = vst [vmem:[%s2133 + $0x350] sm:$0xff] %v2558
        %v2560 = vld [vmem:[%s2132 + $0x358] sm:$0xff]
        %2561 = vst [vmem:[%s2133 + $0x354] sm:$0xff] %v2560
        %v2562 = vld [vmem:[%s2132 + $0x354] sm:$0xff]
        %2563 = vst [vmem:[%s2133 + $0x358] sm:$0xff] %v2562
        %v2564 = vld [vmem:[%s2132 + $0x35c] sm:$0xff]
        %2565 = vst [vmem:[%s2133 + $0x35c] sm:$0xff] %v2564
        %v2566 = vld [vmem:[%s2132 + $0x360] sm:$0xff]
        %2567 = vst [vmem:[%s2133 + $0x360] sm:$0xff] %v2566
        %v2568 = vld [vmem:[%s2132 + $0x368] sm:$0xff]
        %2569 = vst [vmem:[%s2133 + $0x364] sm:$0xff] %v2568
        %v2570 = vld [vmem:[%s2132 + $0x364] sm:$0xff]
        %2571 = vst [vmem:[%s2133 + $0x368] sm:$0xff] %v2570
        %v2572 = vld [vmem:[%s2132 + $0x36c] sm:$0xff]
        %2573 = vst [vmem:[%s2133 + $0x36c] sm:$0xff] %v2572
        %v2574 = vld [vmem:[%s2132 + $0x370] sm:$0xff]
        %2575 = vst [vmem:[%s2133 + $0x370] sm:$0xff] %v2574
        %v2576 = vld [vmem:[%s2132 + $0x378] sm:$0xff]
        %2577 = vst [vmem:[%s2133 + $0x374] sm:$0xff] %v2576
        %v2578 = vld [vmem:[%s2132 + $0x374] sm:$0xff]
        %2579 = vst [vmem:[%s2133 + $0x378] sm:$0xff] %v2578
        %v2580 = vld [vmem:[%s2132 + $0x37c] sm:$0xff]
        %2581 = vst [vmem:[%s2133 + $0x37c] sm:$0xff] %v2580
        %v2582 = vld [vmem:[%s2132 + $0x380] sm:$0xff]
        %2583 = vst [vmem:[%s2133 + $0x380] sm:$0xff] %v2582
        %v2584 = vld [vmem:[%s2132 + $0x388] sm:$0xff]
        %2585 = vst [vmem:[%s2133 + $0x384] sm:$0xff] %v2584
        %v2586 = vld [vmem:[%s2132 + $0x384] sm:$0xff]
        %2587 = vst [vmem:[%s2133 + $0x388] sm:$0xff] %v2586
        %v2588 = vld [vmem:[%s2132 + $0x38c] sm:$0xff]
        %2589 = vst [vmem:[%s2133 + $0x38c] sm:$0xff] %v2588
        %v2590 = vld [vmem:[%s2132 + $0x390] sm:$0xff]
        %2591 = vst [vmem:[%s2133 + $0x390] sm:$0xff] %v2590
        %v2592 = vld [vmem:[%s2132 + $0x398] sm:$0xff]
        %2593 = vst [vmem:[%s2133 + $0x394] sm:$0xff] %v2592
        %v2594 = vld [vmem:[%s2132 + $0x394] sm:$0xff]
        %2595 = vst [vmem:[%s2133 + $0x398] sm:$0xff] %v2594
        %v2596 = vld [vmem:[%s2132 + $0x39c] sm:$0xff]
        %2597 = vst [vmem:[%s2133 + $0x39c] sm:$0xff] %v2596
        %v2598 = vld [vmem:[%s2132 + $0x3a0] sm:$0xff]
        %2599 = vst [vmem:[%s2133 + $0x3a0] sm:$0xff] %v2598
        %v2600 = vld [vmem:[%s2132 + $0x3a8] sm:$0xff]
        %2601 = vst [vmem:[%s2133 + $0x3a4] sm:$0xff] %v2600
        %v2602 = vld [vmem:[%s2132 + $0x3a4] sm:$0xff]
        %2603 = vst [vmem:[%s2133 + $0x3a8] sm:$0xff] %v2602
        %v2604 = vld [vmem:[%s2132 + $0x3ac] sm:$0xff]
        %2605 = vst [vmem:[%s2133 + $0x3ac] sm:$0xff] %v2604
        %v2606 = vld [vmem:[%s2132 + $0x3b0] sm:$0xff]
        %2607 = vst [vmem:[%s2133 + $0x3b0] sm:$0xff] %v2606
        %v2608 = vld [vmem:[%s2132 + $0x3b8] sm:$0xff]
        %2609 = vst [vmem:[%s2133 + $0x3b4] sm:$0xff] %v2608
        %v2610 = vld [vmem:[%s2132 + $0x3b4] sm:$0xff]
        %2611 = vst [vmem:[%s2133 + $0x3b8] sm:$0xff] %v2610
        %v2612 = vld [vmem:[%s2132 + $0x3bc] sm:$0xff]
        %2613 = vst [vmem:[%s2133 + $0x3bc] sm:$0xff] %v2612
        %v2614 = vld [vmem:[%s2132 + $0x3c0] sm:$0xff]
        %2615 = vst [vmem:[%s2133 + $0x3c0] sm:$0xff] %v2614
        %v2616 = vld [vmem:[%s2132 + $0x3c8] sm:$0xff]
        %2617 = vst [vmem:[%s2133 + $0x3c4] sm:$0xff] %v2616
        %v2618 = vld [vmem:[%s2132 + $0x3c4] sm:$0xff]
        %2619 = vst [vmem:[%s2133 + $0x3c8] sm:$0xff] %v2618
        %v2620 = vld [vmem:[%s2132 + $0x3cc] sm:$0xff]
        %2621 = vst [vmem:[%s2133 + $0x3cc] sm:$0xff] %v2620
        %v2622 = vld [vmem:[%s2132 + $0x3d0] sm:$0xff]
        %2623 = vst [vmem:[%s2133 + $0x3d0] sm:$0xff] %v2622
        %v2624 = vld [vmem:[%s2132 + $0x3d8] sm:$0xff]
        %2625 = vst [vmem:[%s2133 + $0x3d4] sm:$0xff] %v2624
        %v2626 = vld [vmem:[%s2132 + $0x3d4] sm:$0xff]
        %2627 = vst [vmem:[%s2133 + $0x3d8] sm:$0xff] %v2626
        %v2628 = vld [vmem:[%s2132 + $0x3dc] sm:$0xff]
        %2629 = vst [vmem:[%s2133 + $0x3dc] sm:$0xff] %v2628
        %v2630 = vld [vmem:[%s2132 + $0x3e0] sm:$0xff]
        %2631 = vst [vmem:[%s2133 + $0x3e0] sm:$0xff] %v2630
        %v2632 = vld [vmem:[%s2132 + $0x3e8] sm:$0xff]
        %2633 = vst [vmem:[%s2133 + $0x3e4] sm:$0xff] %v2632
        %v2634 = vld [vmem:[%s2132 + $0x3e4] sm:$0xff]
        %2635 = vst [vmem:[%s2133 + $0x3e8] sm:$0xff] %v2634
        %v2636 = vld [vmem:[%s2132 + $0x3ec] sm:$0xff]
        %2637 = vst [vmem:[%s2133 + $0x3ec] sm:$0xff] %v2636
        %v2638 = vld [vmem:[%s2132 + $0x3f0] sm:$0xff]
        %2639 = vst [vmem:[%s2133 + $0x3f0] sm:$0xff] %v2638
        %v2640 = vld [vmem:[%s2132 + $0x3f8] sm:$0xff]
        %2641 = vst [vmem:[%s2133 + $0x3f4] sm:$0xff] %v2640
        %v2642 = vld [vmem:[%s2132 + $0x3f4] sm:$0xff]
        %2643 = vst [vmem:[%s2133 + $0x3f8] sm:$0xff] %v2642
        %v2644 = vld [vmem:[%s2132 + $0x3fc] sm:$0xff]
        %2645 = vst [vmem:[%s2133 + $0x3fc] sm:$0xff] %v2644
        %v2646 = vld [vmem:[%s2132 + $0x400] sm:$0xff]
        %2647 = vst [vmem:[%s2133 + $0x400] sm:$0xff] %v2646
        %v2648 = vld [vmem:[%s2132 + $0x408] sm:$0xff]
        %2649 = vst [vmem:[%s2133 + $0x404] sm:$0xff] %v2648
        %v2650 = vld [vmem:[%s2132 + $0x404] sm:$0xff]
        %2651 = vst [vmem:[%s2133 + $0x408] sm:$0xff] %v2650
        %v2652 = vld [vmem:[%s2132 + $0x40c] sm:$0xff]
        %2653 = vst [vmem:[%s2133 + $0x40c] sm:$0xff] %v2652
        %v2654 = vld [vmem:[%s2132 + $0x410] sm:$0xff]
        %2655 = vst [vmem:[%s2133 + $0x410] sm:$0xff] %v2654
        %v2656 = vld [vmem:[%s2132 + $0x418] sm:$0xff]
        %2657 = vst [vmem:[%s2133 + $0x414] sm:$0xff] %v2656
        %v2658 = vld [vmem:[%s2132 + $0x414] sm:$0xff]
        %2659 = vst [vmem:[%s2133 + $0x418] sm:$0xff] %v2658
        %v2660 = vld [vmem:[%s2132 + $0x41c] sm:$0xff]
        %2661 = vst [vmem:[%s2133 + $0x41c] sm:$0xff] %v2660
        %v2662 = vld [vmem:[%s2132 + $0x420] sm:$0xff]
        %2663 = vst [vmem:[%s2133 + $0x420] sm:$0xff] %v2662
        %v2664 = vld [vmem:[%s2132 + $0x428] sm:$0xff]
        %2665 = vst [vmem:[%s2133 + $0x424] sm:$0xff] %v2664
        %v2666 = vld [vmem:[%s2132 + $0x424] sm:$0xff]
        %2667 = vst [vmem:[%s2133 + $0x428] sm:$0xff] %v2666
        %v2668 = vld [vmem:[%s2132 + $0x42c] sm:$0xff]
        %2669 = vst [vmem:[%s2133 + $0x42c] sm:$0xff] %v2668
        %v2670 = vld [vmem:[%s2132 + $0x430] sm:$0xff]
        %2671 = vst [vmem:[%s2133 + $0x430] sm:$0xff] %v2670
        %v2672 = vld [vmem:[%s2132 + $0x438] sm:$0xff]
        %2673 = vst [vmem:[%s2133 + $0x434] sm:$0xff] %v2672
        %v2674 = vld [vmem:[%s2132 + $0x434] sm:$0xff]
        %2675 = vst [vmem:[%s2133 + $0x438] sm:$0xff] %v2674
        %v2676 = vld [vmem:[%s2132 + $0x43c] sm:$0xff]
        %2677 = vst [vmem:[%s2133 + $0x43c] sm:$0xff] %v2676
        %v2678 = vld [vmem:[%s2132 + $0x440] sm:$0xff]
        %2679 = vst [vmem:[%s2133 + $0x440] sm:$0xff] %v2678
        %v2680 = vld [vmem:[%s2132 + $0x448] sm:$0xff]
        %2681 = vst [vmem:[%s2133 + $0x444] sm:$0xff] %v2680
        %v2682 = vld [vmem:[%s2132 + $0x444] sm:$0xff]
        %2683 = vst [vmem:[%s2133 + $0x448] sm:$0xff] %v2682
        %v2684 = vld [vmem:[%s2132 + $0x44c] sm:$0xff]
        %2685 = vst [vmem:[%s2133 + $0x44c] sm:$0xff] %v2684
        %v2686 = vld [vmem:[%s2132 + $0x450] sm:$0xff]
        %2687 = vst [vmem:[%s2133 + $0x450] sm:$0xff] %v2686
        %v2688 = vld [vmem:[%s2132 + $0x458] sm:$0xff]
        %2689 = vst [vmem:[%s2133 + $0x454] sm:$0xff] %v2688
        %v2690 = vld [vmem:[%s2132 + $0x454] sm:$0xff]
        %2691 = vst [vmem:[%s2133 + $0x458] sm:$0xff] %v2690
        %v2692 = vld [vmem:[%s2132 + $0x45c] sm:$0xff]
        %2693 = vst [vmem:[%s2133 + $0x45c] sm:$0xff] %v2692
        %v2694 = vld [vmem:[%s2132 + $0x460] sm:$0xff]
        %2695 = vst [vmem:[%s2133 + $0x460] sm:$0xff] %v2694
        %v2696 = vld [vmem:[%s2132 + $0x468] sm:$0xff]
        %2697 = vst [vmem:[%s2133 + $0x464] sm:$0xff] %v2696
        %v2698 = vld [vmem:[%s2132 + $0x464] sm:$0xff]
        %2699 = vst [vmem:[%s2133 + $0x468] sm:$0xff] %v2698
        %v2700 = vld [vmem:[%s2132 + $0x46c] sm:$0xff]
        %2701 = vst [vmem:[%s2133 + $0x46c] sm:$0xff] %v2700
        %v2702 = vld [vmem:[%s2132 + $0x470] sm:$0xff]
        %2703 = vst [vmem:[%s2133 + $0x470] sm:$0xff] %v2702
        %v2704 = vld [vmem:[%s2132 + $0x478] sm:$0xff]
        %2705 = vst [vmem:[%s2133 + $0x474] sm:$0xff] %v2704
        %v2706 = vld [vmem:[%s2132 + $0x474] sm:$0xff]
        %2707 = vst [vmem:[%s2133 + $0x478] sm:$0xff] %v2706
        %v2708 = vld [vmem:[%s2132 + $0x47c] sm:$0xff]
        %2709 = vst [vmem:[%s2133 + $0x47c] sm:$0xff] %v2708
        %v2710 = vld [vmem:[%s2132 + $0x480] sm:$0xff]
        %2711 = vst [vmem:[%s2133 + $0x480] sm:$0xff] %v2710
        %v2712 = vld [vmem:[%s2132 + $0x488] sm:$0xff]
        %2713 = vst [vmem:[%s2133 + $0x484] sm:$0xff] %v2712
        %v2714 = vld [vmem:[%s2132 + $0x484] sm:$0xff]
        %2715 = vst [vmem:[%s2133 + $0x488] sm:$0xff] %v2714
        %v2716 = vld [vmem:[%s2132 + $0x48c] sm:$0xff]
        %2717 = vst [vmem:[%s2133 + $0x48c] sm:$0xff] %v2716
        %v2718 = vld [vmem:[%s2132 + $0x490] sm:$0xff]
        %2719 = vst [vmem:[%s2133 + $0x490] sm:$0xff] %v2718
        %v2720 = vld [vmem:[%s2132 + $0x498] sm:$0xff]
        %2721 = vst [vmem:[%s2133 + $0x494] sm:$0xff] %v2720
        %v2722 = vld [vmem:[%s2132 + $0x494] sm:$0xff]
        %2723 = vst [vmem:[%s2133 + $0x498] sm:$0xff] %v2722
        %v2724 = vld [vmem:[%s2132 + $0x49c] sm:$0xff]
        %2725 = vst [vmem:[%s2133 + $0x49c] sm:$0xff] %v2724
        %v2726 = vld [vmem:[%s2132 + $0x4a0] sm:$0xff]
        %2727 = vst [vmem:[%s2133 + $0x4a0] sm:$0xff] %v2726
        %v2728 = vld [vmem:[%s2132 + $0x4a8] sm:$0xff]
        %2729 = vst [vmem:[%s2133 + $0x4a4] sm:$0xff] %v2728
        %v2730 = vld [vmem:[%s2132 + $0x4a4] sm:$0xff]
        %2731 = vst [vmem:[%s2133 + $0x4a8] sm:$0xff] %v2730
        %v2732 = vld [vmem:[%s2132 + $0x4ac] sm:$0xff]
        %2733 = vst [vmem:[%s2133 + $0x4ac] sm:$0xff] %v2732
        %v2734 = vld [vmem:[%s2132 + $0x4b0] sm:$0xff]
        %2735 = vst [vmem:[%s2133 + $0x4b0] sm:$0xff] %v2734
        %v2736 = vld [vmem:[%s2132 + $0x4b8] sm:$0xff]
        %2737 = vst [vmem:[%s2133 + $0x4b4] sm:$0xff] %v2736
        %v2738 = vld [vmem:[%s2132 + $0x4b4] sm:$0xff]
        %2739 = vst [vmem:[%s2133 + $0x4b8] sm:$0xff] %v2738
        %v2740 = vld [vmem:[%s2132 + $0x4bc] sm:$0xff]
        %2741 = vst [vmem:[%s2133 + $0x4bc] sm:$0xff] %v2740
        %v2742 = vld [vmem:[%s2132 + $0x4c0] sm:$0xff]
        %2743 = vst [vmem:[%s2133 + $0x4c0] sm:$0xff] %v2742
        %v2744 = vld [vmem:[%s2132 + $0x4c8] sm:$0xff]
        %2745 = vst [vmem:[%s2133 + $0x4c4] sm:$0xff] %v2744
        %v2746 = vld [vmem:[%s2132 + $0x4c4] sm:$0xff]
        %2747 = vst [vmem:[%s2133 + $0x4c8] sm:$0xff] %v2746
        %v2748 = vld [vmem:[%s2132 + $0x4cc] sm:$0xff]
        %2749 = vst [vmem:[%s2133 + $0x4cc] sm:$0xff] %v2748
        %v2750 = vld [vmem:[%s2132 + $0x4d0] sm:$0xff]
        %2751 = vst [vmem:[%s2133 + $0x4d0] sm:$0xff] %v2750
        %v2752 = vld [vmem:[%s2132 + $0x4d8] sm:$0xff]
        %2753 = vst [vmem:[%s2133 + $0x4d4] sm:$0xff] %v2752
        %v2754 = vld [vmem:[%s2132 + $0x4d4] sm:$0xff]
        %2755 = vst [vmem:[%s2133 + $0x4d8] sm:$0xff] %v2754
        %v2756 = vld [vmem:[%s2132 + $0x4dc] sm:$0xff]
        %2757 = vst [vmem:[%s2133 + $0x4dc] sm:$0xff] %v2756
        %v2758 = vld [vmem:[%s2132 + $0x4e0] sm:$0xff]
        %2759 = vst [vmem:[%s2133 + $0x4e0] sm:$0xff] %v2758
        %v2760 = vld [vmem:[%s2132 + $0x4e8] sm:$0xff]
        %2761 = vst [vmem:[%s2133 + $0x4e4] sm:$0xff] %v2760
        %v2762 = vld [vmem:[%s2132 + $0x4e4] sm:$0xff]
        %2763 = vst [vmem:[%s2133 + $0x4e8] sm:$0xff] %v2762
        %v2764 = vld [vmem:[%s2132 + $0x4ec] sm:$0xff]
        %2765 = vst [vmem:[%s2133 + $0x4ec] sm:$0xff] %v2764
        %v2766 = vld [vmem:[%s2132 + $0x4f0] sm:$0xff]
        %2767 = vst [vmem:[%s2133 + $0x4f0] sm:$0xff] %v2766
        %v2768 = vld [vmem:[%s2132 + $0x4f8] sm:$0xff]
        %2769 = vst [vmem:[%s2133 + $0x4f4] sm:$0xff] %v2768
        %v2770 = vld [vmem:[%s2132 + $0x4f4] sm:$0xff]
        %2771 = vst [vmem:[%s2133 + $0x4f8] sm:$0xff] %v2770
        %v2772 = vld [vmem:[%s2132 + $0x4fc] sm:$0xff]
        %2773 = vst [vmem:[%s2133 + $0x4fc] sm:$0xff] %v2772
        %v2774 = vld [vmem:[%s2132 + $0x500] sm:$0xff]
        %2775 = vst [vmem:[%s2133 + $0x500] sm:$0xff] %v2774
        %v2776 = vld [vmem:[%s2132 + $0x508] sm:$0xff]
        %2777 = vst [vmem:[%s2133 + $0x504] sm:$0xff] %v2776
        %v2778 = vld [vmem:[%s2132 + $0x504] sm:$0xff]
        %2779 = vst [vmem:[%s2133 + $0x508] sm:$0xff] %v2778
        %v2780 = vld [vmem:[%s2132 + $0x50c] sm:$0xff]
        %2781 = vst [vmem:[%s2133 + $0x50c] sm:$0xff] %v2780
        %v2782 = vld [vmem:[%s2132 + $0x510] sm:$0xff]
        %2783 = vst [vmem:[%s2133 + $0x510] sm:$0xff] %v2782
        %v2784 = vld [vmem:[%s2132 + $0x518] sm:$0xff]
        %2785 = vst [vmem:[%s2133 + $0x514] sm:$0xff] %v2784
        %v2786 = vld [vmem:[%s2132 + $0x514] sm:$0xff]
        %2787 = vst [vmem:[%s2133 + $0x518] sm:$0xff] %v2786
        %v2788 = vld [vmem:[%s2132 + $0x51c] sm:$0xff]
        %2789 = vst [vmem:[%s2133 + $0x51c] sm:$0xff] %v2788
        %v2790 = vld [vmem:[%s2132 + $0x520] sm:$0xff]
        %2791 = vst [vmem:[%s2133 + $0x520] sm:$0xff] %v2790
        %v2792 = vld [vmem:[%s2132 + $0x528] sm:$0xff]
        %2793 = vst [vmem:[%s2133 + $0x524] sm:$0xff] %v2792
        %v2794 = vld [vmem:[%s2132 + $0x524] sm:$0xff]
        %2795 = vst [vmem:[%s2133 + $0x528] sm:$0xff] %v2794
        %v2796 = vld [vmem:[%s2132 + $0x52c] sm:$0xff]
        %2797 = vst [vmem:[%s2133 + $0x52c] sm:$0xff] %v2796
        %v2798 = vld [vmem:[%s2132 + $0x530] sm:$0xff]
        %2799 = vst [vmem:[%s2133 + $0x530] sm:$0xff] %v2798
        %v2800 = vld [vmem:[%s2132 + $0x538] sm:$0xff]
        %2801 = vst [vmem:[%s2133 + $0x534] sm:$0xff] %v2800
        %v2802 = vld [vmem:[%s2132 + $0x534] sm:$0xff]
        %2803 = vst [vmem:[%s2133 + $0x538] sm:$0xff] %v2802
        %v2804 = vld [vmem:[%s2132 + $0x53c] sm:$0xff]
        %2805 = vst [vmem:[%s2133 + $0x53c] sm:$0xff] %v2804
        %v2806 = vld [vmem:[%s2132 + $0x540] sm:$0xff]
        %2807 = vst [vmem:[%s2133 + $0x540] sm:$0xff] %v2806
        %v2808 = vld [vmem:[%s2132 + $0x548] sm:$0xff]
        %2809 = vst [vmem:[%s2133 + $0x544] sm:$0xff] %v2808
        %v2810 = vld [vmem:[%s2132 + $0x544] sm:$0xff]
        %2811 = vst [vmem:[%s2133 + $0x548] sm:$0xff] %v2810
        %v2812 = vld [vmem:[%s2132 + $0x54c] sm:$0xff]
        %2813 = vst [vmem:[%s2133 + $0x54c] sm:$0xff] %v2812
        %v2814 = vld [vmem:[%s2132 + $0x550] sm:$0xff]
        %2815 = vst [vmem:[%s2133 + $0x550] sm:$0xff] %v2814
        %v2816 = vld [vmem:[%s2132 + $0x558] sm:$0xff]
        %2817 = vst [vmem:[%s2133 + $0x554] sm:$0xff] %v2816
        %v2818 = vld [vmem:[%s2132 + $0x554] sm:$0xff]
        %2819 = vst [vmem:[%s2133 + $0x558] sm:$0xff] %v2818
        %v2820 = vld [vmem:[%s2132 + $0x55c] sm:$0xff]
        %2821 = vst [vmem:[%s2133 + $0x55c] sm:$0xff] %v2820
        %v2822 = vld [vmem:[%s2132 + $0x560] sm:$0xff]
        %2823 = vst [vmem:[%s2133 + $0x560] sm:$0xff] %v2822
        %v2824 = vld [vmem:[%s2132 + $0x568] sm:$0xff]
        %2825 = vst [vmem:[%s2133 + $0x564] sm:$0xff] %v2824
        %v2826 = vld [vmem:[%s2132 + $0x564] sm:$0xff]
        %2827 = vst [vmem:[%s2133 + $0x568] sm:$0xff] %v2826
        %v2828 = vld [vmem:[%s2132 + $0x56c] sm:$0xff]
        %2829 = vst [vmem:[%s2133 + $0x56c] sm:$0xff] %v2828
        %v2830 = vld [vmem:[%s2132 + $0x570] sm:$0xff]
        %2831 = vst [vmem:[%s2133 + $0x570] sm:$0xff] %v2830
        %v2832 = vld [vmem:[%s2132 + $0x578] sm:$0xff]
        %2833 = vst [vmem:[%s2133 + $0x574] sm:$0xff] %v2832
        %v2834 = vld [vmem:[%s2132 + $0x574] sm:$0xff]
        %2835 = vst [vmem:[%s2133 + $0x578] sm:$0xff] %v2834
        %v2836 = vld [vmem:[%s2132 + $0x57c] sm:$0xff]
        %2837 = vst [vmem:[%s2133 + $0x57c] sm:$0xff] %v2836
        %v2838 = vld [vmem:[%s2132 + $0x580] sm:$0xff]
        %2839 = vst [vmem:[%s2133 + $0x580] sm:$0xff] %v2838
        %v2840 = vld [vmem:[%s2132 + $0x588] sm:$0xff]
        %2841 = vst [vmem:[%s2133 + $0x584] sm:$0xff] %v2840
        %v2842 = vld [vmem:[%s2132 + $0x584] sm:$0xff]
        %2843 = vst [vmem:[%s2133 + $0x588] sm:$0xff] %v2842
        %v2844 = vld [vmem:[%s2132 + $0x58c] sm:$0xff]
        %2845 = vst [vmem:[%s2133 + $0x58c] sm:$0xff] %v2844
        %v2846 = vld [vmem:[%s2132 + $0x590] sm:$0xff]
        %2847 = vst [vmem:[%s2133 + $0x590] sm:$0xff] %v2846
        %v2848 = vld [vmem:[%s2132 + $0x598] sm:$0xff]
        %2849 = vst [vmem:[%s2133 + $0x594] sm:$0xff] %v2848
        %v2850 = vld [vmem:[%s2132 + $0x594] sm:$0xff]
        %2851 = vst [vmem:[%s2133 + $0x598] sm:$0xff] %v2850
        %v2852 = vld [vmem:[%s2132 + $0x59c] sm:$0xff]
        %2853 = vst [vmem:[%s2133 + $0x59c] sm:$0xff] %v2852
        %v2854 = vld [vmem:[%s2132 + $0x5a0] sm:$0xff]
        %2855 = vst [vmem:[%s2133 + $0x5a0] sm:$0xff] %v2854
        %v2856 = vld [vmem:[%s2132 + $0x5a8] sm:$0xff]
        %2857 = vst [vmem:[%s2133 + $0x5a4] sm:$0xff] %v2856
        %v2858 = vld [vmem:[%s2132 + $0x5a4] sm:$0xff]
        %2859 = vst [vmem:[%s2133 + $0x5a8] sm:$0xff] %v2858
        %v2860 = vld [vmem:[%s2132 + $0x5ac] sm:$0xff]
        %2861 = vst [vmem:[%s2133 + $0x5ac] sm:$0xff] %v2860
        %v2862 = vld [vmem:[%s2132 + $0x5b0] sm:$0xff]
        %2863 = vst [vmem:[%s2133 + $0x5b0] sm:$0xff] %v2862
        %v2864 = vld [vmem:[%s2132 + $0x5b8] sm:$0xff]
        %2865 = vst [vmem:[%s2133 + $0x5b4] sm:$0xff] %v2864
        %v2866 = vld [vmem:[%s2132 + $0x5b4] sm:$0xff]
        %2867 = vst [vmem:[%s2133 + $0x5b8] sm:$0xff] %v2866
        %v2868 = vld [vmem:[%s2132 + $0x5bc] sm:$0xff]
        %2869 = vst [vmem:[%s2133 + $0x5bc] sm:$0xff] %v2868
        %v2870 = vld [vmem:[%s2132 + $0x5c0] sm:$0xff]
        %2871 = vst [vmem:[%s2133 + $0x5c0] sm:$0xff] %v2870
        %v2872 = vld [vmem:[%s2132 + $0x5c8] sm:$0xff]
        %2873 = vst [vmem:[%s2133 + $0x5c4] sm:$0xff] %v2872
        %v2874 = vld [vmem:[%s2132 + $0x5c4] sm:$0xff]
        %2875 = vst [vmem:[%s2133 + $0x5c8] sm:$0xff] %v2874
        %v2876 = vld [vmem:[%s2132 + $0x5cc] sm:$0xff]
        %2877 = vst [vmem:[%s2133 + $0x5cc] sm:$0xff] %v2876
        %v2878 = vld [vmem:[%s2132 + $0x5d0] sm:$0xff]
        %2879 = vst [vmem:[%s2133 + $0x5d0] sm:$0xff] %v2878
        %v2880 = vld [vmem:[%s2132 + $0x5d8] sm:$0xff]
        %2881 = vst [vmem:[%s2133 + $0x5d4] sm:$0xff] %v2880
        %v2882 = vld [vmem:[%s2132 + $0x5d4] sm:$0xff]
        %2883 = vst [vmem:[%s2133 + $0x5d8] sm:$0xff] %v2882
        %v2884 = vld [vmem:[%s2132 + $0x5dc] sm:$0xff]
        %2885 = vst [vmem:[%s2133 + $0x5dc] sm:$0xff] %v2884
        %v2886 = vld [vmem:[%s2132 + $0x5e0] sm:$0xff]
        %2887 = vst [vmem:[%s2133 + $0x5e0] sm:$0xff] %v2886
        %v2888 = vld [vmem:[%s2132 + $0x5e8] sm:$0xff]
        %2889 = vst [vmem:[%s2133 + $0x5e4] sm:$0xff] %v2888
        %v2890 = vld [vmem:[%s2132 + $0x5e4] sm:$0xff]
        %2891 = vst [vmem:[%s2133 + $0x5e8] sm:$0xff] %v2890
        %v2892 = vld [vmem:[%s2132 + $0x5ec] sm:$0xff]
        %2893 = vst [vmem:[%s2133 + $0x5ec] sm:$0xff] %v2892
        %v2894 = vld [vmem:[%s2132 + $0x5f0] sm:$0xff]
        %2895 = vst [vmem:[%s2133 + $0x5f0] sm:$0xff] %v2894
        %v2896 = vld [vmem:[%s2132 + $0x5f8] sm:$0xff]
        %2897 = vst [vmem:[%s2133 + $0x5f4] sm:$0xff] %v2896
        %v2898 = vld [vmem:[%s2132 + $0x5f4] sm:$0xff]
        %2899 = vst [vmem:[%s2133 + $0x5f8] sm:$0xff] %v2898
        %v2900 = vld [vmem:[%s2132 + $0x5fc] sm:$0xff]
        %2901 = vst [vmem:[%s2133 + $0x5fc] sm:$0xff] %v2900
        %v2902 = vld [vmem:[%s2132 + $0x600] sm:$0xff]
        %2903 = vst [vmem:[%s2133 + $0x600] sm:$0xff] %v2902
        %v2904 = vld [vmem:[%s2132 + $0x608] sm:$0xff]
        %2905 = vst [vmem:[%s2133 + $0x604] sm:$0xff] %v2904
        %v2906 = vld [vmem:[%s2132 + $0x604] sm:$0xff]
        %2907 = vst [vmem:[%s2133 + $0x608] sm:$0xff] %v2906
        %v2908 = vld [vmem:[%s2132 + $0x60c] sm:$0xff]
        %2909 = vst [vmem:[%s2133 + $0x60c] sm:$0xff] %v2908
        %v2910 = vld [vmem:[%s2132 + $0x610] sm:$0xff]
        %2911 = vst [vmem:[%s2133 + $0x610] sm:$0xff] %v2910
        %v2912 = vld [vmem:[%s2132 + $0x618] sm:$0xff]
        %2913 = vst [vmem:[%s2133 + $0x614] sm:$0xff] %v2912
        %v2914 = vld [vmem:[%s2132 + $0x614] sm:$0xff]
        %2915 = vst [vmem:[%s2133 + $0x618] sm:$0xff] %v2914
        %v2916 = vld [vmem:[%s2132 + $0x61c] sm:$0xff]
        %2917 = vst [vmem:[%s2133 + $0x61c] sm:$0xff] %v2916
        %v2918 = vld [vmem:[%s2132 + $0x620] sm:$0xff]
        %2919 = vst [vmem:[%s2133 + $0x620] sm:$0xff] %v2918
        %v2920 = vld [vmem:[%s2132 + $0x628] sm:$0xff]
        %2921 = vst [vmem:[%s2133 + $0x624] sm:$0xff] %v2920
        %v2922 = vld [vmem:[%s2132 + $0x624] sm:$0xff]
        %2923 = vst [vmem:[%s2133 + $0x628] sm:$0xff] %v2922
        %v2924 = vld [vmem:[%s2132 + $0x62c] sm:$0xff]
        %2925 = vst [vmem:[%s2133 + $0x62c] sm:$0xff] %v2924
        %v2926 = vld [vmem:[%s2132 + $0x630] sm:$0xff]
        %2927 = vst [vmem:[%s2133 + $0x630] sm:$0xff] %v2926
        %v2928 = vld [vmem:[%s2132 + $0x638] sm:$0xff]
        %2929 = vst [vmem:[%s2133 + $0x634] sm:$0xff] %v2928
        %v2930 = vld [vmem:[%s2132 + $0x634] sm:$0xff]
        %2931 = vst [vmem:[%s2133 + $0x638] sm:$0xff] %v2930
        %v2932 = vld [vmem:[%s2132 + $0x63c] sm:$0xff]
        %2933 = vst [vmem:[%s2133 + $0x63c] sm:$0xff] %v2932
        %v2934 = vld [vmem:[%s2132 + $0x640] sm:$0xff]
        %2935 = vst [vmem:[%s2133 + $0x640] sm:$0xff] %v2934
        %v2936 = vld [vmem:[%s2132 + $0x648] sm:$0xff]
        %2937 = vst [vmem:[%s2133 + $0x644] sm:$0xff] %v2936
        %v2938 = vld [vmem:[%s2132 + $0x644] sm:$0xff]
        %2939 = vst [vmem:[%s2133 + $0x648] sm:$0xff] %v2938
        %v2940 = vld [vmem:[%s2132 + $0x64c] sm:$0xff]
        %2941 = vst [vmem:[%s2133 + $0x64c] sm:$0xff] %v2940
        %v2942 = vld [vmem:[%s2132 + $0x650] sm:$0xff]
        %2943 = vst [vmem:[%s2133 + $0x650] sm:$0xff] %v2942
        %v2944 = vld [vmem:[%s2132 + $0x658] sm:$0xff]
        %2945 = vst [vmem:[%s2133 + $0x654] sm:$0xff] %v2944
        %v2946 = vld [vmem:[%s2132 + $0x654] sm:$0xff]
        %2947 = vst [vmem:[%s2133 + $0x658] sm:$0xff] %v2946
        %v2948 = vld [vmem:[%s2132 + $0x65c] sm:$0xff]
        %2949 = vst [vmem:[%s2133 + $0x65c] sm:$0xff] %v2948
        %v2950 = vld [vmem:[%s2132 + $0x660] sm:$0xff]
        %2951 = vst [vmem:[%s2133 + $0x660] sm:$0xff] %v2950
        %v2952 = vld [vmem:[%s2132 + $0x668] sm:$0xff]
        %2953 = vst [vmem:[%s2133 + $0x664] sm:$0xff] %v2952
        %v2954 = vld [vmem:[%s2132 + $0x664] sm:$0xff]
        %2955 = vst [vmem:[%s2133 + $0x668] sm:$0xff] %v2954
        %v2956 = vld [vmem:[%s2132 + $0x66c] sm:$0xff]
        %2957 = vst [vmem:[%s2133 + $0x66c] sm:$0xff] %v2956
        %v2958 = vld [vmem:[%s2132 + $0x670] sm:$0xff]
        %2959 = vst [vmem:[%s2133 + $0x670] sm:$0xff] %v2958
        %v2960 = vld [vmem:[%s2132 + $0x678] sm:$0xff]
        %2961 = vst [vmem:[%s2133 + $0x674] sm:$0xff] %v2960
        %v2962 = vld [vmem:[%s2132 + $0x674] sm:$0xff]
        %2963 = vst [vmem:[%s2133 + $0x678] sm:$0xff] %v2962
        %v2964 = vld [vmem:[%s2132 + $0x67c] sm:$0xff]
        %2965 = vst [vmem:[%s2133 + $0x67c] sm:$0xff] %v2964
        %v2966 = vld [vmem:[%s2132 + $0x680] sm:$0xff]
        %2967 = vst [vmem:[%s2133 + $0x680] sm:$0xff] %v2966
        %v2968 = vld [vmem:[%s2132 + $0x688] sm:$0xff]
        %2969 = vst [vmem:[%s2133 + $0x684] sm:$0xff] %v2968
        %v2970 = vld [vmem:[%s2132 + $0x684] sm:$0xff]
        %2971 = vst [vmem:[%s2133 + $0x688] sm:$0xff] %v2970
        %v2972 = vld [vmem:[%s2132 + $0x68c] sm:$0xff]
        %2973 = vst [vmem:[%s2133 + $0x68c] sm:$0xff] %v2972
        %v2974 = vld [vmem:[%s2132 + $0x690] sm:$0xff]
        %2975 = vst [vmem:[%s2133 + $0x690] sm:$0xff] %v2974
        %v2976 = vld [vmem:[%s2132 + $0x698] sm:$0xff]
        %2977 = vst [vmem:[%s2133 + $0x694] sm:$0xff] %v2976
        %v2978 = vld [vmem:[%s2132 + $0x694] sm:$0xff]
        %2979 = vst [vmem:[%s2133 + $0x698] sm:$0xff] %v2978
        %v2980 = vld [vmem:[%s2132 + $0x69c] sm:$0xff]
        %2981 = vst [vmem:[%s2133 + $0x69c] sm:$0xff] %v2980
        %v2982 = vld [vmem:[%s2132 + $0x6a0] sm:$0xff]
        %2983 = vst [vmem:[%s2133 + $0x6a0] sm:$0xff] %v2982
        %v2984 = vld [vmem:[%s2132 + $0x6a8] sm:$0xff]
        %2985 = vst [vmem:[%s2133 + $0x6a4] sm:$0xff] %v2984
        %v2986 = vld [vmem:[%s2132 + $0x6a4] sm:$0xff]
        %2987 = vst [vmem:[%s2133 + $0x6a8] sm:$0xff] %v2986
        %v2988 = vld [vmem:[%s2132 + $0x6ac] sm:$0xff]
        %2989 = vst [vmem:[%s2133 + $0x6ac] sm:$0xff] %v2988
        %v2990 = vld [vmem:[%s2132 + $0x6b0] sm:$0xff]
        %2991 = vst [vmem:[%s2133 + $0x6b0] sm:$0xff] %v2990
        %v2992 = vld [vmem:[%s2132 + $0x6b8] sm:$0xff]
        %2993 = vst [vmem:[%s2133 + $0x6b4] sm:$0xff] %v2992
        %v2994 = vld [vmem:[%s2132 + $0x6b4] sm:$0xff]
        %2995 = vst [vmem:[%s2133 + $0x6b8] sm:$0xff] %v2994
        %v2996 = vld [vmem:[%s2132 + $0x6bc] sm:$0xff]
        %2997 = vst [vmem:[%s2133 + $0x6bc] sm:$0xff] %v2996
        %v2998 = vld [vmem:[%s2132 + $0x6c0] sm:$0xff]
        %2999 = vst [vmem:[%s2133 + $0x6c0] sm:$0xff] %v2998
        %v3000 = vld [vmem:[%s2132 + $0x6c8] sm:$0xff]
        %3001 = vst [vmem:[%s2133 + $0x6c4] sm:$0xff] %v3000
        %v3002 = vld [vmem:[%s2132 + $0x6c4] sm:$0xff]
        %3003 = vst [vmem:[%s2133 + $0x6c8] sm:$0xff] %v3002
        %v3004 = vld [vmem:[%s2132 + $0x6cc] sm:$0xff]
        %3005 = vst [vmem:[%s2133 + $0x6cc] sm:$0xff] %v3004
        %v3006 = vld [vmem:[%s2132 + $0x6d0] sm:$0xff]
        %3007 = vst [vmem:[%s2133 + $0x6d0] sm:$0xff] %v3006
        %v3008 = vld [vmem:[%s2132 + $0x6d8] sm:$0xff]
        %3009 = vst [vmem:[%s2133 + $0x6d4] sm:$0xff] %v3008
        %v3010 = vld [vmem:[%s2132 + $0x6d4] sm:$0xff]
        %3011 = vst [vmem:[%s2133 + $0x6d8] sm:$0xff] %v3010
        %v3012 = vld [vmem:[%s2132 + $0x6dc] sm:$0xff]
        %3013 = vst [vmem:[%s2133 + $0x6dc] sm:$0xff] %v3012
        %v3014 = vld [vmem:[%s2132 + $0x6e0] sm:$0xff]
        %3015 = vst [vmem:[%s2133 + $0x6e0] sm:$0xff] %v3014
        %v3016 = vld [vmem:[%s2132 + $0x6e8] sm:$0xff]
        %3017 = vst [vmem:[%s2133 + $0x6e4] sm:$0xff] %v3016
        %v3018 = vld [vmem:[%s2132 + $0x6e4] sm:$0xff]
        %3019 = vst [vmem:[%s2133 + $0x6e8] sm:$0xff] %v3018
        %v3020 = vld [vmem:[%s2132 + $0x6ec] sm:$0xff]
        %3021 = vst [vmem:[%s2133 + $0x6ec] sm:$0xff] %v3020
        %v3022 = vld [vmem:[%s2132 + $0x6f0] sm:$0xff]
        %3023 = vst [vmem:[%s2133 + $0x6f0] sm:$0xff] %v3022
        %v3024 = vld [vmem:[%s2132 + $0x6f8] sm:$0xff]
        %3025 = vst [vmem:[%s2133 + $0x6f4] sm:$0xff] %v3024
        %v3026 = vld [vmem:[%s2132 + $0x6f4] sm:$0xff]
        %3027 = vst [vmem:[%s2133 + $0x6f8] sm:$0xff] %v3026
        %v3028 = vld [vmem:[%s2132 + $0x6fc] sm:$0xff]
        %3029 = vst [vmem:[%s2133 + $0x6fc] sm:$0xff] %v3028
        %v3030 = vld [vmem:[%s2132 + $0x700] sm:$0xff]
        %3031 = vst [vmem:[%s2133 + $0x700] sm:$0xff] %v3030
        %v3032 = vld [vmem:[%s2132 + $0x708] sm:$0xff]
        %3033 = vst [vmem:[%s2133 + $0x704] sm:$0xff] %v3032
        %v3034 = vld [vmem:[%s2132 + $0x704] sm:$0xff]
        %3035 = vst [vmem:[%s2133 + $0x708] sm:$0xff] %v3034
        %v3036 = vld [vmem:[%s2132 + $0x70c] sm:$0xff]
        %3037 = vst [vmem:[%s2133 + $0x70c] sm:$0xff] %v3036
        %v3038 = vld [vmem:[%s2132 + $0x710] sm:$0xff]
        %3039 = vst [vmem:[%s2133 + $0x710] sm:$0xff] %v3038
        %v3040 = vld [vmem:[%s2132 + $0x718] sm:$0xff]
        %3041 = vst [vmem:[%s2133 + $0x714] sm:$0xff] %v3040
        %v3042 = vld [vmem:[%s2132 + $0x714] sm:$0xff]
        %3043 = vst [vmem:[%s2133 + $0x718] sm:$0xff] %v3042
        %v3044 = vld [vmem:[%s2132 + $0x71c] sm:$0xff]
        %3045 = vst [vmem:[%s2133 + $0x71c] sm:$0xff] %v3044
        %v3046 = vld [vmem:[%s2132 + $0x720] sm:$0xff]
        %3047 = vst [vmem:[%s2133 + $0x720] sm:$0xff] %v3046
        %v3048 = vld [vmem:[%s2132 + $0x728] sm:$0xff]
        %3049 = vst [vmem:[%s2133 + $0x724] sm:$0xff] %v3048
        %v3050 = vld [vmem:[%s2132 + $0x724] sm:$0xff]
        %3051 = vst [vmem:[%s2133 + $0x728] sm:$0xff] %v3050
        %v3052 = vld [vmem:[%s2132 + $0x72c] sm:$0xff]
        %3053 = vst [vmem:[%s2133 + $0x72c] sm:$0xff] %v3052
        %v3054 = vld [vmem:[%s2132 + $0x730] sm:$0xff]
        %3055 = vst [vmem:[%s2133 + $0x730] sm:$0xff] %v3054
        %v3056 = vld [vmem:[%s2132 + $0x738] sm:$0xff]
        %3057 = vst [vmem:[%s2133 + $0x734] sm:$0xff] %v3056
        %v3058 = vld [vmem:[%s2132 + $0x734] sm:$0xff]
        %3059 = vst [vmem:[%s2133 + $0x738] sm:$0xff] %v3058
        %v3060 = vld [vmem:[%s2132 + $0x73c] sm:$0xff]
        %3061 = vst [vmem:[%s2133 + $0x73c] sm:$0xff] %v3060
        %v3062 = vld [vmem:[%s2132 + $0x740] sm:$0xff]
        %3063 = vst [vmem:[%s2133 + $0x740] sm:$0xff] %v3062
        %v3064 = vld [vmem:[%s2132 + $0x748] sm:$0xff]
        %3065 = vst [vmem:[%s2133 + $0x744] sm:$0xff] %v3064
        %v3066 = vld [vmem:[%s2132 + $0x744] sm:$0xff]
        %3067 = vst [vmem:[%s2133 + $0x748] sm:$0xff] %v3066
        %v3068 = vld [vmem:[%s2132 + $0x74c] sm:$0xff]
        %3069 = vst [vmem:[%s2133 + $0x74c] sm:$0xff] %v3068
        %v3070 = vld [vmem:[%s2132 + $0x750] sm:$0xff]
        %3071 = vst [vmem:[%s2133 + $0x750] sm:$0xff] %v3070
        %v3072 = vld [vmem:[%s2132 + $0x758] sm:$0xff]
        %3073 = vst [vmem:[%s2133 + $0x754] sm:$0xff] %v3072
        %v3074 = vld [vmem:[%s2132 + $0x754] sm:$0xff]
        %3075 = vst [vmem:[%s2133 + $0x758] sm:$0xff] %v3074
        %v3076 = vld [vmem:[%s2132 + $0x75c] sm:$0xff]
        %3077 = vst [vmem:[%s2133 + $0x75c] sm:$0xff] %v3076
        %v3078 = vld [vmem:[%s2132 + $0x760] sm:$0xff]
        %3079 = vst [vmem:[%s2133 + $0x760] sm:$0xff] %v3078
        %v3080 = vld [vmem:[%s2132 + $0x768] sm:$0xff]
        %3081 = vst [vmem:[%s2133 + $0x764] sm:$0xff] %v3080
        %v3082 = vld [vmem:[%s2132 + $0x764] sm:$0xff]
        %3083 = vst [vmem:[%s2133 + $0x768] sm:$0xff] %v3082
        %v3084 = vld [vmem:[%s2132 + $0x76c] sm:$0xff]
        %3085 = vst [vmem:[%s2133 + $0x76c] sm:$0xff] %v3084
        %v3086 = vld [vmem:[%s2132 + $0x770] sm:$0xff]
        %3087 = vst [vmem:[%s2133 + $0x770] sm:$0xff] %v3086
        %v3088 = vld [vmem:[%s2132 + $0x778] sm:$0xff]
        %3089 = vst [vmem:[%s2133 + $0x774] sm:$0xff] %v3088
        %v3090 = vld [vmem:[%s2132 + $0x774] sm:$0xff]
        %3091 = vst [vmem:[%s2133 + $0x778] sm:$0xff] %v3090
        %v3092 = vld [vmem:[%s2132 + $0x77c] sm:$0xff]
        %3093 = vst [vmem:[%s2133 + $0x77c] sm:$0xff] %v3092
        %v3094 = vld [vmem:[%s2132 + $0x780] sm:$0xff]
        %3095 = vst [vmem:[%s2133 + $0x780] sm:$0xff] %v3094
        %v3096 = vld [vmem:[%s2132 + $0x788] sm:$0xff]
        %3097 = vst [vmem:[%s2133 + $0x784] sm:$0xff] %v3096
        %v3098 = vld [vmem:[%s2132 + $0x784] sm:$0xff]
        %3099 = vst [vmem:[%s2133 + $0x788] sm:$0xff] %v3098
        %v3100 = vld [vmem:[%s2132 + $0x78c] sm:$0xff]
        %3101 = vst [vmem:[%s2133 + $0x78c] sm:$0xff] %v3100
        %v3102 = vld [vmem:[%s2132 + $0x790] sm:$0xff]
        %3103 = vst [vmem:[%s2133 + $0x790] sm:$0xff] %v3102
        %v3104 = vld [vmem:[%s2132 + $0x798] sm:$0xff]
        %3105 = vst [vmem:[%s2133 + $0x794] sm:$0xff] %v3104
        %v3106 = vld [vmem:[%s2132 + $0x794] sm:$0xff]
        %3107 = vst [vmem:[%s2133 + $0x798] sm:$0xff] %v3106
        %v3108 = vld [vmem:[%s2132 + $0x79c] sm:$0xff]
        %3109 = vst [vmem:[%s2133 + $0x79c] sm:$0xff] %v3108
        %v3110 = vld [vmem:[%s2132 + $0x7a0] sm:$0xff]
        %3111 = vst [vmem:[%s2133 + $0x7a0] sm:$0xff] %v3110
        %v3112 = vld [vmem:[%s2132 + $0x7a8] sm:$0xff]
        %3113 = vst [vmem:[%s2133 + $0x7a4] sm:$0xff] %v3112
        %v3114 = vld [vmem:[%s2132 + $0x7a4] sm:$0xff]
        %3115 = vst [vmem:[%s2133 + $0x7a8] sm:$0xff] %v3114
        %v3116 = vld [vmem:[%s2132 + $0x7ac] sm:$0xff]
        %3117 = vst [vmem:[%s2133 + $0x7ac] sm:$0xff] %v3116
        %v3118 = vld [vmem:[%s2132 + $0x7b0] sm:$0xff]
        %3119 = vst [vmem:[%s2133 + $0x7b0] sm:$0xff] %v3118
        %v3120 = vld [vmem:[%s2132 + $0x7b8] sm:$0xff]
        %3121 = vst [vmem:[%s2133 + $0x7b4] sm:$0xff] %v3120
        %v3122 = vld [vmem:[%s2132 + $0x7b4] sm:$0xff]
        %3123 = vst [vmem:[%s2133 + $0x7b8] sm:$0xff] %v3122
        %v3124 = vld [vmem:[%s2132 + $0x7bc] sm:$0xff]
        %3125 = vst [vmem:[%s2133 + $0x7bc] sm:$0xff] %v3124
        %v3126 = vld [vmem:[%s2132 + $0x7c0] sm:$0xff]
        %3127 = vst [vmem:[%s2133 + $0x7c0] sm:$0xff] %v3126
        %v3128 = vld [vmem:[%s2132 + $0x7c8] sm:$0xff]
        %3129 = vst [vmem:[%s2133 + $0x7c4] sm:$0xff] %v3128
        %v3130 = vld [vmem:[%s2132 + $0x7c4] sm:$0xff]
        %3131 = vst [vmem:[%s2133 + $0x7c8] sm:$0xff] %v3130
        %v3132 = vld [vmem:[%s2132 + $0x7cc] sm:$0xff]
        %3133 = vst [vmem:[%s2133 + $0x7cc] sm:$0xff] %v3132
        %v3134 = vld [vmem:[%s2132 + $0x7d0] sm:$0xff]
        %3135 = vst [vmem:[%s2133 + $0x7d0] sm:$0xff] %v3134
        %v3136 = vld [vmem:[%s2132 + $0x7d8] sm:$0xff]
        %3137 = vst [vmem:[%s2133 + $0x7d4] sm:$0xff] %v3136
        %v3138 = vld [vmem:[%s2132 + $0x7d4] sm:$0xff]
        %3139 = vst [vmem:[%s2133 + $0x7d8] sm:$0xff] %v3138
        %v3140 = vld [vmem:[%s2132 + $0x7dc] sm:$0xff]
        %3141 = vst [vmem:[%s2133 + $0x7dc] sm:$0xff] %v3140
        %v3142 = vld [vmem:[%s2132 + $0x7e0] sm:$0xff]
        %3143 = vst [vmem:[%s2133 + $0x7e0] sm:$0xff] %v3142
        %v3144 = vld [vmem:[%s2132 + $0x7e8] sm:$0xff]
        %3145 = vst [vmem:[%s2133 + $0x7e4] sm:$0xff] %v3144
        %v3146 = vld [vmem:[%s2132 + $0x7e4] sm:$0xff]
        %3147 = vst [vmem:[%s2133 + $0x7e8] sm:$0xff] %v3146
        %v3148 = vld [vmem:[%s2132 + $0x7ec] sm:$0xff]
        %3149 = vst [vmem:[%s2133 + $0x7ec] sm:$0xff] %v3148
        %v3150 = vld [vmem:[%s2132 + $0x7f0] sm:$0xff]
        %3151 = vst [vmem:[%s2133 + $0x7f0] sm:$0xff] %v3150
        %v3152 = vld [vmem:[%s2132 + $0x7f8] sm:$0xff]
        %3153 = vst [vmem:[%s2133 + $0x7f4] sm:$0xff] %v3152
        %v3154 = vld [vmem:[%s2132 + $0x7f4] sm:$0xff]
        %3155 = vst [vmem:[%s2133 + $0x7f8] sm:$0xff] %v3154
        %v3156 = vld [vmem:[%s2132 + $0x7fc] sm:$0xff]
        %3157 = vst [vmem:[%s2133 + $0x7fc] sm:$0xff] %v3156
        %s3158 = sadd.s32 1, %s2131
        %p3159 = scmp.ge.s32.totalorder %s3158, %s2122
        %s3160 = scalar_select %p3159, 0, %s3158
        %s3161 = smul.u32 %s3160, 8
        %s3162 = smul.u32 %s3160, 8
        %s3163 = scalar_lea.vmem %s6, %s3161
        %s3164 = scalar_lea.vmem [#allocation2], %s3162
      $region60: #{breakout_a2c_forward.1} parent=54 // loop_footer
        %s2128 = sadd.s32 %s2126, 1
      $region61: #{breakout_a2c_forward.1} parent=54 // loop_footer_branch
        %2125 = sbr.rel target = $region57
      $region62: #{breakout_a2c_forward.1} parent=54 // loop_exit
        _
      %s3165 = sshllo.u32 0, %s2117
      loop: start=0, step=1, limit=1
      $region63: #{breakout_a2c_forward.1} parent=54 // loop_pre_header
        _
      $region64: #{breakout_a2c_forward.1} parent=54 // loop_header
        %s3167 = sphi 0, %s3171
        %p3168 = scmp.ge.s32.totalorder %s3167, 1
        %s3172 = sphi %s2119, %s2119
        %s3173 = sphi %s2121, %s2121
      $region65: #{breakout_a2c_forward.1} parent=54 // loop_header_branch
        %3170 = sbr.rel (%p3168) target = $region69
      $region66: #{breakout_a2c_forward.1} parent=54 // loop_body
        %v3174 = vld [vmem:[%s3172] sm:%s3165]
        %3175 = vst [vmem:[%s3173] sm:%s3165] %v3174
        %v3176 = vld [vmem:[%s3172 + $0x8] sm:%s3165]
        %3177 = vst [vmem:[%s3173 + $0x4] sm:%s3165] %v3176
        %v3178 = vld [vmem:[%s3172 + $0x4] sm:%s3165]
        %3179 = vst [vmem:[%s3173 + $0x8] sm:%s3165] %v3178
        %v3180 = vld [vmem:[%s3172 + $0xc] sm:%s3165]
        %3181 = vst [vmem:[%s3173 + $0xc] sm:%s3165] %v3180
        %v3182 = vld [vmem:[%s3172 + $0x10] sm:%s3165]
        %3183 = vst [vmem:[%s3173 + $0x10] sm:%s3165] %v3182
        %v3184 = vld [vmem:[%s3172 + $0x18] sm:%s3165]
        %3185 = vst [vmem:[%s3173 + $0x14] sm:%s3165] %v3184
        %v3186 = vld [vmem:[%s3172 + $0x14] sm:%s3165]
        %3187 = vst [vmem:[%s3173 + $0x18] sm:%s3165] %v3186
        %v3188 = vld [vmem:[%s3172 + $0x1c] sm:%s3165]
        %3189 = vst [vmem:[%s3173 + $0x1c] sm:%s3165] %v3188
        %v3190 = vld [vmem:[%s3172 + $0x20] sm:%s3165]
        %3191 = vst [vmem:[%s3173 + $0x20] sm:%s3165] %v3190
        %v3192 = vld [vmem:[%s3172 + $0x28] sm:%s3165]
        %3193 = vst [vmem:[%s3173 + $0x24] sm:%s3165] %v3192
        %v3194 = vld [vmem:[%s3172 + $0x24] sm:%s3165]
        %3195 = vst [vmem:[%s3173 + $0x28] sm:%s3165] %v3194
        %v3196 = vld [vmem:[%s3172 + $0x2c] sm:%s3165]
        %3197 = vst [vmem:[%s3173 + $0x2c] sm:%s3165] %v3196
        %v3198 = vld [vmem:[%s3172 + $0x30] sm:%s3165]
        %3199 = vst [vmem:[%s3173 + $0x30] sm:%s3165] %v3198
        %v3200 = vld [vmem:[%s3172 + $0x38] sm:%s3165]
        %3201 = vst [vmem:[%s3173 + $0x34] sm:%s3165] %v3200
        %v3202 = vld [vmem:[%s3172 + $0x34] sm:%s3165]
        %3203 = vst [vmem:[%s3173 + $0x38] sm:%s3165] %v3202
        %v3204 = vld [vmem:[%s3172 + $0x3c] sm:%s3165]
        %3205 = vst [vmem:[%s3173 + $0x3c] sm:%s3165] %v3204
        %v3206 = vld [vmem:[%s3172 + $0x40] sm:%s3165]
        %3207 = vst [vmem:[%s3173 + $0x40] sm:%s3165] %v3206
        %v3208 = vld [vmem:[%s3172 + $0x48] sm:%s3165]
        %3209 = vst [vmem:[%s3173 + $0x44] sm:%s3165] %v3208
        %v3210 = vld [vmem:[%s3172 + $0x44] sm:%s3165]
        %3211 = vst [vmem:[%s3173 + $0x48] sm:%s3165] %v3210
        %v3212 = vld [vmem:[%s3172 + $0x4c] sm:%s3165]
        %3213 = vst [vmem:[%s3173 + $0x4c] sm:%s3165] %v3212
        %v3214 = vld [vmem:[%s3172 + $0x50] sm:%s3165]
        %3215 = vst [vmem:[%s3173 + $0x50] sm:%s3165] %v3214
        %v3216 = vld [vmem:[%s3172 + $0x58] sm:%s3165]
        %3217 = vst [vmem:[%s3173 + $0x54] sm:%s3165] %v3216
        %v3218 = vld [vmem:[%s3172 + $0x54] sm:%s3165]
        %3219 = vst [vmem:[%s3173 + $0x58] sm:%s3165] %v3218
        %v3220 = vld [vmem:[%s3172 + $0x5c] sm:%s3165]
        %3221 = vst [vmem:[%s3173 + $0x5c] sm:%s3165] %v3220
        %v3222 = vld [vmem:[%s3172 + $0x60] sm:%s3165]
        %3223 = vst [vmem:[%s3173 + $0x60] sm:%s3165] %v3222
        %v3224 = vld [vmem:[%s3172 + $0x68] sm:%s3165]
        %3225 = vst [vmem:[%s3173 + $0x64] sm:%s3165] %v3224
        %v3226 = vld [vmem:[%s3172 + $0x64] sm:%s3165]
        %3227 = vst [vmem:[%s3173 + $0x68] sm:%s3165] %v3226
        %v3228 = vld [vmem:[%s3172 + $0x6c] sm:%s3165]
        %3229 = vst [vmem:[%s3173 + $0x6c] sm:%s3165] %v3228
        %v3230 = vld [vmem:[%s3172 + $0x70] sm:%s3165]
        %3231 = vst [vmem:[%s3173 + $0x70] sm:%s3165] %v3230
        %v3232 = vld [vmem:[%s3172 + $0x78] sm:%s3165]
        %3233 = vst [vmem:[%s3173 + $0x74] sm:%s3165] %v3232
        %v3234 = vld [vmem:[%s3172 + $0x74] sm:%s3165]
        %3235 = vst [vmem:[%s3173 + $0x78] sm:%s3165] %v3234
        %v3236 = vld [vmem:[%s3172 + $0x7c] sm:%s3165]
        %3237 = vst [vmem:[%s3173 + $0x7c] sm:%s3165] %v3236
        %v3238 = vld [vmem:[%s3172 + $0x80] sm:%s3165]
        %3239 = vst [vmem:[%s3173 + $0x80] sm:%s3165] %v3238
        %v3240 = vld [vmem:[%s3172 + $0x88] sm:%s3165]
        %3241 = vst [vmem:[%s3173 + $0x84] sm:%s3165] %v3240
        %v3242 = vld [vmem:[%s3172 + $0x84] sm:%s3165]
        %3243 = vst [vmem:[%s3173 + $0x88] sm:%s3165] %v3242
        %v3244 = vld [vmem:[%s3172 + $0x8c] sm:%s3165]
        %3245 = vst [vmem:[%s3173 + $0x8c] sm:%s3165] %v3244
        %v3246 = vld [vmem:[%s3172 + $0x90] sm:%s3165]
        %3247 = vst [vmem:[%s3173 + $0x90] sm:%s3165] %v3246
        %v3248 = vld [vmem:[%s3172 + $0x98] sm:%s3165]
        %3249 = vst [vmem:[%s3173 + $0x94] sm:%s3165] %v3248
        %v3250 = vld [vmem:[%s3172 + $0x94] sm:%s3165]
        %3251 = vst [vmem:[%s3173 + $0x98] sm:%s3165] %v3250
        %v3252 = vld [vmem:[%s3172 + $0x9c] sm:%s3165]
        %3253 = vst [vmem:[%s3173 + $0x9c] sm:%s3165] %v3252
        %v3254 = vld [vmem:[%s3172 + $0xa0] sm:%s3165]
        %3255 = vst [vmem:[%s3173 + $0xa0] sm:%s3165] %v3254
        %v3256 = vld [vmem:[%s3172 + $0xa8] sm:%s3165]
        %3257 = vst [vmem:[%s3173 + $0xa4] sm:%s3165] %v3256
        %v3258 = vld [vmem:[%s3172 + $0xa4] sm:%s3165]
        %3259 = vst [vmem:[%s3173 + $0xa8] sm:%s3165] %v3258
        %v3260 = vld [vmem:[%s3172 + $0xac] sm:%s3165]
        %3261 = vst [vmem:[%s3173 + $0xac] sm:%s3165] %v3260
        %v3262 = vld [vmem:[%s3172 + $0xb0] sm:%s3165]
        %3263 = vst [vmem:[%s3173 + $0xb0] sm:%s3165] %v3262
        %v3264 = vld [vmem:[%s3172 + $0xb8] sm:%s3165]
        %3265 = vst [vmem:[%s3173 + $0xb4] sm:%s3165] %v3264
        %v3266 = vld [vmem:[%s3172 + $0xb4] sm:%s3165]
        %3267 = vst [vmem:[%s3173 + $0xb8] sm:%s3165] %v3266
        %v3268 = vld [vmem:[%s3172 + $0xbc] sm:%s3165]
        %3269 = vst [vmem:[%s3173 + $0xbc] sm:%s3165] %v3268
        %v3270 = vld [vmem:[%s3172 + $0xc0] sm:%s3165]
        %3271 = vst [vmem:[%s3173 + $0xc0] sm:%s3165] %v3270
        %v3272 = vld [vmem:[%s3172 + $0xc8] sm:%s3165]
        %3273 = vst [vmem:[%s3173 + $0xc4] sm:%s3165] %v3272
        %v3274 = vld [vmem:[%s3172 + $0xc4] sm:%s3165]
        %3275 = vst [vmem:[%s3173 + $0xc8] sm:%s3165] %v3274
        %v3276 = vld [vmem:[%s3172 + $0xcc] sm:%s3165]
        %3277 = vst [vmem:[%s3173 + $0xcc] sm:%s3165] %v3276
        %v3278 = vld [vmem:[%s3172 + $0xd0] sm:%s3165]
        %3279 = vst [vmem:[%s3173 + $0xd0] sm:%s3165] %v3278
        %v3280 = vld [vmem:[%s3172 + $0xd8] sm:%s3165]
        %3281 = vst [vmem:[%s3173 + $0xd4] sm:%s3165] %v3280
        %v3282 = vld [vmem:[%s3172 + $0xd4] sm:%s3165]
        %3283 = vst [vmem:[%s3173 + $0xd8] sm:%s3165] %v3282
        %v3284 = vld [vmem:[%s3172 + $0xdc] sm:%s3165]
        %3285 = vst [vmem:[%s3173 + $0xdc] sm:%s3165] %v3284
        %v3286 = vld [vmem:[%s3172 + $0xe0] sm:%s3165]
        %3287 = vst [vmem:[%s3173 + $0xe0] sm:%s3165] %v3286
        %v3288 = vld [vmem:[%s3172 + $0xe8] sm:%s3165]
        %3289 = vst [vmem:[%s3173 + $0xe4] sm:%s3165] %v3288
        %v3290 = vld [vmem:[%s3172 + $0xe4] sm:%s3165]
        %3291 = vst [vmem:[%s3173 + $0xe8] sm:%s3165] %v3290
        %v3292 = vld [vmem:[%s3172 + $0xec] sm:%s3165]
        %3293 = vst [vmem:[%s3173 + $0xec] sm:%s3165] %v3292
        %v3294 = vld [vmem:[%s3172 + $0xf0] sm:%s3165]
        %3295 = vst [vmem:[%s3173 + $0xf0] sm:%s3165] %v3294
        %v3296 = vld [vmem:[%s3172 + $0xf8] sm:%s3165]
        %3297 = vst [vmem:[%s3173 + $0xf4] sm:%s3165] %v3296
        %v3298 = vld [vmem:[%s3172 + $0xf4] sm:%s3165]
        %3299 = vst [vmem:[%s3173 + $0xf8] sm:%s3165] %v3298
        %v3300 = vld [vmem:[%s3172 + $0xfc] sm:%s3165]
        %3301 = vst [vmem:[%s3173 + $0xfc] sm:%s3165] %v3300
        %v3302 = vld [vmem:[%s3172 + $0x100] sm:%s3165]
        %3303 = vst [vmem:[%s3173 + $0x100] sm:%s3165] %v3302
        %v3304 = vld [vmem:[%s3172 + $0x108] sm:%s3165]
        %3305 = vst [vmem:[%s3173 + $0x104] sm:%s3165] %v3304
        %v3306 = vld [vmem:[%s3172 + $0x104] sm:%s3165]
        %3307 = vst [vmem:[%s3173 + $0x108] sm:%s3165] %v3306
        %v3308 = vld [vmem:[%s3172 + $0x10c] sm:%s3165]
        %3309 = vst [vmem:[%s3173 + $0x10c] sm:%s3165] %v3308
        %v3310 = vld [vmem:[%s3172 + $0x110] sm:%s3165]
        %3311 = vst [vmem:[%s3173 + $0x110] sm:%s3165] %v3310
        %v3312 = vld [vmem:[%s3172 + $0x118] sm:%s3165]
        %3313 = vst [vmem:[%s3173 + $0x114] sm:%s3165] %v3312
        %v3314 = vld [vmem:[%s3172 + $0x114] sm:%s3165]
        %3315 = vst [vmem:[%s3173 + $0x118] sm:%s3165] %v3314
        %v3316 = vld [vmem:[%s3172 + $0x11c] sm:%s3165]
        %3317 = vst [vmem:[%s3173 + $0x11c] sm:%s3165] %v3316
        %v3318 = vld [vmem:[%s3172 + $0x120] sm:%s3165]
        %3319 = vst [vmem:[%s3173 + $0x120] sm:%s3165] %v3318
        %v3320 = vld [vmem:[%s3172 + $0x128] sm:%s3165]
        %3321 = vst [vmem:[%s3173 + $0x124] sm:%s3165] %v3320
        %v3322 = vld [vmem:[%s3172 + $0x124] sm:%s3165]
        %3323 = vst [vmem:[%s3173 + $0x128] sm:%s3165] %v3322
        %v3324 = vld [vmem:[%s3172 + $0x12c] sm:%s3165]
        %3325 = vst [vmem:[%s3173 + $0x12c] sm:%s3165] %v3324
        %v3326 = vld [vmem:[%s3172 + $0x130] sm:%s3165]
        %3327 = vst [vmem:[%s3173 + $0x130] sm:%s3165] %v3326
        %v3328 = vld [vmem:[%s3172 + $0x138] sm:%s3165]
        %3329 = vst [vmem:[%s3173 + $0x134] sm:%s3165] %v3328
        %v3330 = vld [vmem:[%s3172 + $0x134] sm:%s3165]
        %3331 = vst [vmem:[%s3173 + $0x138] sm:%s3165] %v3330
        %v3332 = vld [vmem:[%s3172 + $0x13c] sm:%s3165]
        %3333 = vst [vmem:[%s3173 + $0x13c] sm:%s3165] %v3332
        %v3334 = vld [vmem:[%s3172 + $0x140] sm:%s3165]
        %3335 = vst [vmem:[%s3173 + $0x140] sm:%s3165] %v3334
        %v3336 = vld [vmem:[%s3172 + $0x148] sm:%s3165]
        %3337 = vst [vmem:[%s3173 + $0x144] sm:%s3165] %v3336
        %v3338 = vld [vmem:[%s3172 + $0x144] sm:%s3165]
        %3339 = vst [vmem:[%s3173 + $0x148] sm:%s3165] %v3338
        %v3340 = vld [vmem:[%s3172 + $0x14c] sm:%s3165]
        %3341 = vst [vmem:[%s3173 + $0x14c] sm:%s3165] %v3340
        %v3342 = vld [vmem:[%s3172 + $0x150] sm:%s3165]
        %3343 = vst [vmem:[%s3173 + $0x150] sm:%s3165] %v3342
        %v3344 = vld [vmem:[%s3172 + $0x158] sm:%s3165]
        %3345 = vst [vmem:[%s3173 + $0x154] sm:%s3165] %v3344
        %v3346 = vld [vmem:[%s3172 + $0x154] sm:%s3165]
        %3347 = vst [vmem:[%s3173 + $0x158] sm:%s3165] %v3346
        %v3348 = vld [vmem:[%s3172 + $0x15c] sm:%s3165]
        %3349 = vst [vmem:[%s3173 + $0x15c] sm:%s3165] %v3348
        %v3350 = vld [vmem:[%s3172 + $0x160] sm:%s3165]
        %3351 = vst [vmem:[%s3173 + $0x160] sm:%s3165] %v3350
        %v3352 = vld [vmem:[%s3172 + $0x168] sm:%s3165]
        %3353 = vst [vmem:[%s3173 + $0x164] sm:%s3165] %v3352
        %v3354 = vld [vmem:[%s3172 + $0x164] sm:%s3165]
        %3355 = vst [vmem:[%s3173 + $0x168] sm:%s3165] %v3354
        %v3356 = vld [vmem:[%s3172 + $0x16c] sm:%s3165]
        %3357 = vst [vmem:[%s3173 + $0x16c] sm:%s3165] %v3356
        %v3358 = vld [vmem:[%s3172 + $0x170] sm:%s3165]
        %3359 = vst [vmem:[%s3173 + $0x170] sm:%s3165] %v3358
        %v3360 = vld [vmem:[%s3172 + $0x178] sm:%s3165]
        %3361 = vst [vmem:[%s3173 + $0x174] sm:%s3165] %v3360
        %v3362 = vld [vmem:[%s3172 + $0x174] sm:%s3165]
        %3363 = vst [vmem:[%s3173 + $0x178] sm:%s3165] %v3362
        %v3364 = vld [vmem:[%s3172 + $0x17c] sm:%s3165]
        %3365 = vst [vmem:[%s3173 + $0x17c] sm:%s3165] %v3364
        %v3366 = vld [vmem:[%s3172 + $0x180] sm:%s3165]
        %3367 = vst [vmem:[%s3173 + $0x180] sm:%s3165] %v3366
        %v3368 = vld [vmem:[%s3172 + $0x188] sm:%s3165]
        %3369 = vst [vmem:[%s3173 + $0x184] sm:%s3165] %v3368
        %v3370 = vld [vmem:[%s3172 + $0x184] sm:%s3165]
        %3371 = vst [vmem:[%s3173 + $0x188] sm:%s3165] %v3370
        %v3372 = vld [vmem:[%s3172 + $0x18c] sm:%s3165]
        %3373 = vst [vmem:[%s3173 + $0x18c] sm:%s3165] %v3372
        %v3374 = vld [vmem:[%s3172 + $0x190] sm:%s3165]
        %3375 = vst [vmem:[%s3173 + $0x190] sm:%s3165] %v3374
        %v3376 = vld [vmem:[%s3172 + $0x198] sm:%s3165]
        %3377 = vst [vmem:[%s3173 + $0x194] sm:%s3165] %v3376
        %v3378 = vld [vmem:[%s3172 + $0x194] sm:%s3165]
        %3379 = vst [vmem:[%s3173 + $0x198] sm:%s3165] %v3378
        %v3380 = vld [vmem:[%s3172 + $0x19c] sm:%s3165]
        %3381 = vst [vmem:[%s3173 + $0x19c] sm:%s3165] %v3380
        %v3382 = vld [vmem:[%s3172 + $0x1a0] sm:%s3165]
        %3383 = vst [vmem:[%s3173 + $0x1a0] sm:%s3165] %v3382
        %v3384 = vld [vmem:[%s3172 + $0x1a8] sm:%s3165]
        %3385 = vst [vmem:[%s3173 + $0x1a4] sm:%s3165] %v3384
        %v3386 = vld [vmem:[%s3172 + $0x1a4] sm:%s3165]
        %3387 = vst [vmem:[%s3173 + $0x1a8] sm:%s3165] %v3386
        %v3388 = vld [vmem:[%s3172 + $0x1ac] sm:%s3165]
        %3389 = vst [vmem:[%s3173 + $0x1ac] sm:%s3165] %v3388
        %v3390 = vld [vmem:[%s3172 + $0x1b0] sm:%s3165]
        %3391 = vst [vmem:[%s3173 + $0x1b0] sm:%s3165] %v3390
        %v3392 = vld [vmem:[%s3172 + $0x1b8] sm:%s3165]
        %3393 = vst [vmem:[%s3173 + $0x1b4] sm:%s3165] %v3392
        %v3394 = vld [vmem:[%s3172 + $0x1b4] sm:%s3165]
        %3395 = vst [vmem:[%s3173 + $0x1b8] sm:%s3165] %v3394
        %v3396 = vld [vmem:[%s3172 + $0x1bc] sm:%s3165]
        %3397 = vst [vmem:[%s3173 + $0x1bc] sm:%s3165] %v3396
        %v3398 = vld [vmem:[%s3172 + $0x1c0] sm:%s3165]
        %3399 = vst [vmem:[%s3173 + $0x1c0] sm:%s3165] %v3398
        %v3400 = vld [vmem:[%s3172 + $0x1c8] sm:%s3165]
        %3401 = vst [vmem:[%s3173 + $0x1c4] sm:%s3165] %v3400
        %v3402 = vld [vmem:[%s3172 + $0x1c4] sm:%s3165]
        %3403 = vst [vmem:[%s3173 + $0x1c8] sm:%s3165] %v3402
        %v3404 = vld [vmem:[%s3172 + $0x1cc] sm:%s3165]
        %3405 = vst [vmem:[%s3173 + $0x1cc] sm:%s3165] %v3404
        %v3406 = vld [vmem:[%s3172 + $0x1d0] sm:%s3165]
        %3407 = vst [vmem:[%s3173 + $0x1d0] sm:%s3165] %v3406
        %v3408 = vld [vmem:[%s3172 + $0x1d8] sm:%s3165]
        %3409 = vst [vmem:[%s3173 + $0x1d4] sm:%s3165] %v3408
        %v3410 = vld [vmem:[%s3172 + $0x1d4] sm:%s3165]
        %3411 = vst [vmem:[%s3173 + $0x1d8] sm:%s3165] %v3410
        %v3412 = vld [vmem:[%s3172 + $0x1dc] sm:%s3165]
        %3413 = vst [vmem:[%s3173 + $0x1dc] sm:%s3165] %v3412
        %v3414 = vld [vmem:[%s3172 + $0x1e0] sm:%s3165]
        %3415 = vst [vmem:[%s3173 + $0x1e0] sm:%s3165] %v3414
        %v3416 = vld [vmem:[%s3172 + $0x1e8] sm:%s3165]
        %3417 = vst [vmem:[%s3173 + $0x1e4] sm:%s3165] %v3416
        %v3418 = vld [vmem:[%s3172 + $0x1e4] sm:%s3165]
        %3419 = vst [vmem:[%s3173 + $0x1e8] sm:%s3165] %v3418
        %v3420 = vld [vmem:[%s3172 + $0x1ec] sm:%s3165]
        %3421 = vst [vmem:[%s3173 + $0x1ec] sm:%s3165] %v3420
        %v3422 = vld [vmem:[%s3172 + $0x1f0] sm:%s3165]
        %3423 = vst [vmem:[%s3173 + $0x1f0] sm:%s3165] %v3422
        %v3424 = vld [vmem:[%s3172 + $0x1f8] sm:%s3165]
        %3425 = vst [vmem:[%s3173 + $0x1f4] sm:%s3165] %v3424
        %v3426 = vld [vmem:[%s3172 + $0x1f4] sm:%s3165]
        %3427 = vst [vmem:[%s3173 + $0x1f8] sm:%s3165] %v3426
        %v3428 = vld [vmem:[%s3172 + $0x1fc] sm:%s3165]
        %3429 = vst [vmem:[%s3173 + $0x1fc] sm:%s3165] %v3428
        %v3430 = vld [vmem:[%s3172 + $0x200] sm:%s3165]
        %3431 = vst [vmem:[%s3173 + $0x200] sm:%s3165] %v3430
        %v3432 = vld [vmem:[%s3172 + $0x208] sm:%s3165]
        %3433 = vst [vmem:[%s3173 + $0x204] sm:%s3165] %v3432
        %v3434 = vld [vmem:[%s3172 + $0x204] sm:%s3165]
        %3435 = vst [vmem:[%s3173 + $0x208] sm:%s3165] %v3434
        %v3436 = vld [vmem:[%s3172 + $0x20c] sm:%s3165]
        %3437 = vst [vmem:[%s3173 + $0x20c] sm:%s3165] %v3436
        %v3438 = vld [vmem:[%s3172 + $0x210] sm:%s3165]
        %3439 = vst [vmem:[%s3173 + $0x210] sm:%s3165] %v3438
        %v3440 = vld [vmem:[%s3172 + $0x218] sm:%s3165]
        %3441 = vst [vmem:[%s3173 + $0x214] sm:%s3165] %v3440
        %v3442 = vld [vmem:[%s3172 + $0x214] sm:%s3165]
        %3443 = vst [vmem:[%s3173 + $0x218] sm:%s3165] %v3442
        %v3444 = vld [vmem:[%s3172 + $0x21c] sm:%s3165]
        %3445 = vst [vmem:[%s3173 + $0x21c] sm:%s3165] %v3444
        %v3446 = vld [vmem:[%s3172 + $0x220] sm:%s3165]
        %3447 = vst [vmem:[%s3173 + $0x220] sm:%s3165] %v3446
        %v3448 = vld [vmem:[%s3172 + $0x228] sm:%s3165]
        %3449 = vst [vmem:[%s3173 + $0x224] sm:%s3165] %v3448
        %v3450 = vld [vmem:[%s3172 + $0x224] sm:%s3165]
        %3451 = vst [vmem:[%s3173 + $0x228] sm:%s3165] %v3450
        %v3452 = vld [vmem:[%s3172 + $0x22c] sm:%s3165]
        %3453 = vst [vmem:[%s3173 + $0x22c] sm:%s3165] %v3452
        %v3454 = vld [vmem:[%s3172 + $0x230] sm:%s3165]
        %3455 = vst [vmem:[%s3173 + $0x230] sm:%s3165] %v3454
        %v3456 = vld [vmem:[%s3172 + $0x238] sm:%s3165]
        %3457 = vst [vmem:[%s3173 + $0x234] sm:%s3165] %v3456
        %v3458 = vld [vmem:[%s3172 + $0x234] sm:%s3165]
        %3459 = vst [vmem:[%s3173 + $0x238] sm:%s3165] %v3458
        %v3460 = vld [vmem:[%s3172 + $0x23c] sm:%s3165]
        %3461 = vst [vmem:[%s3173 + $0x23c] sm:%s3165] %v3460
        %v3462 = vld [vmem:[%s3172 + $0x240] sm:%s3165]
        %3463 = vst [vmem:[%s3173 + $0x240] sm:%s3165] %v3462
        %v3464 = vld [vmem:[%s3172 + $0x248] sm:%s3165]
        %3465 = vst [vmem:[%s3173 + $0x244] sm:%s3165] %v3464
        %v3466 = vld [vmem:[%s3172 + $0x244] sm:%s3165]
        %3467 = vst [vmem:[%s3173 + $0x248] sm:%s3165] %v3466
        %v3468 = vld [vmem:[%s3172 + $0x24c] sm:%s3165]
        %3469 = vst [vmem:[%s3173 + $0x24c] sm:%s3165] %v3468
        %v3470 = vld [vmem:[%s3172 + $0x250] sm:%s3165]
        %3471 = vst [vmem:[%s3173 + $0x250] sm:%s3165] %v3470
        %v3472 = vld [vmem:[%s3172 + $0x258] sm:%s3165]
        %3473 = vst [vmem:[%s3173 + $0x254] sm:%s3165] %v3472
        %v3474 = vld [vmem:[%s3172 + $0x254] sm:%s3165]
        %3475 = vst [vmem:[%s3173 + $0x258] sm:%s3165] %v3474
        %v3476 = vld [vmem:[%s3172 + $0x25c] sm:%s3165]
        %3477 = vst [vmem:[%s3173 + $0x25c] sm:%s3165] %v3476
        %v3478 = vld [vmem:[%s3172 + $0x260] sm:%s3165]
        %3479 = vst [vmem:[%s3173 + $0x260] sm:%s3165] %v3478
        %v3480 = vld [vmem:[%s3172 + $0x268] sm:%s3165]
        %3481 = vst [vmem:[%s3173 + $0x264] sm:%s3165] %v3480
        %v3482 = vld [vmem:[%s3172 + $0x264] sm:%s3165]
        %3483 = vst [vmem:[%s3173 + $0x268] sm:%s3165] %v3482
        %v3484 = vld [vmem:[%s3172 + $0x26c] sm:%s3165]
        %3485 = vst [vmem:[%s3173 + $0x26c] sm:%s3165] %v3484
        %v3486 = vld [vmem:[%s3172 + $0x270] sm:%s3165]
        %3487 = vst [vmem:[%s3173 + $0x270] sm:%s3165] %v3486
        %v3488 = vld [vmem:[%s3172 + $0x278] sm:%s3165]
        %3489 = vst [vmem:[%s3173 + $0x274] sm:%s3165] %v3488
        %v3490 = vld [vmem:[%s3172 + $0x274] sm:%s3165]
        %3491 = vst [vmem:[%s3173 + $0x278] sm:%s3165] %v3490
        %v3492 = vld [vmem:[%s3172 + $0x27c] sm:%s3165]
        %3493 = vst [vmem:[%s3173 + $0x27c] sm:%s3165] %v3492
        %v3494 = vld [vmem:[%s3172 + $0x280] sm:%s3165]
        %3495 = vst [vmem:[%s3173 + $0x280] sm:%s3165] %v3494
        %v3496 = vld [vmem:[%s3172 + $0x288] sm:%s3165]
        %3497 = vst [vmem:[%s3173 + $0x284] sm:%s3165] %v3496
        %v3498 = vld [vmem:[%s3172 + $0x284] sm:%s3165]
        %3499 = vst [vmem:[%s3173 + $0x288] sm:%s3165] %v3498
        %v3500 = vld [vmem:[%s3172 + $0x28c] sm:%s3165]
        %3501 = vst [vmem:[%s3173 + $0x28c] sm:%s3165] %v3500
        %v3502 = vld [vmem:[%s3172 + $0x290] sm:%s3165]
        %3503 = vst [vmem:[%s3173 + $0x290] sm:%s3165] %v3502
        %v3504 = vld [vmem:[%s3172 + $0x298] sm:%s3165]
        %3505 = vst [vmem:[%s3173 + $0x294] sm:%s3165] %v3504
        %v3506 = vld [vmem:[%s3172 + $0x294] sm:%s3165]
        %3507 = vst [vmem:[%s3173 + $0x298] sm:%s3165] %v3506
        %v3508 = vld [vmem:[%s3172 + $0x29c] sm:%s3165]
        %3509 = vst [vmem:[%s3173 + $0x29c] sm:%s3165] %v3508
        %v3510 = vld [vmem:[%s3172 + $0x2a0] sm:%s3165]
        %3511 = vst [vmem:[%s3173 + $0x2a0] sm:%s3165] %v3510
        %v3512 = vld [vmem:[%s3172 + $0x2a8] sm:%s3165]
        %3513 = vst [vmem:[%s3173 + $0x2a4] sm:%s3165] %v3512
        %v3514 = vld [vmem:[%s3172 + $0x2a4] sm:%s3165]
        %3515 = vst [vmem:[%s3173 + $0x2a8] sm:%s3165] %v3514
        %v3516 = vld [vmem:[%s3172 + $0x2ac] sm:%s3165]
        %3517 = vst [vmem:[%s3173 + $0x2ac] sm:%s3165] %v3516
        %v3518 = vld [vmem:[%s3172 + $0x2b0] sm:%s3165]
        %3519 = vst [vmem:[%s3173 + $0x2b0] sm:%s3165] %v3518
        %v3520 = vld [vmem:[%s3172 + $0x2b8] sm:%s3165]
        %3521 = vst [vmem:[%s3173 + $0x2b4] sm:%s3165] %v3520
        %v3522 = vld [vmem:[%s3172 + $0x2b4] sm:%s3165]
        %3523 = vst [vmem:[%s3173 + $0x2b8] sm:%s3165] %v3522
        %v3524 = vld [vmem:[%s3172 + $0x2bc] sm:%s3165]
        %3525 = vst [vmem:[%s3173 + $0x2bc] sm:%s3165] %v3524
        %v3526 = vld [vmem:[%s3172 + $0x2c0] sm:%s3165]
        %3527 = vst [vmem:[%s3173 + $0x2c0] sm:%s3165] %v3526
        %v3528 = vld [vmem:[%s3172 + $0x2c8] sm:%s3165]
        %3529 = vst [vmem:[%s3173 + $0x2c4] sm:%s3165] %v3528
        %v3530 = vld [vmem:[%s3172 + $0x2c4] sm:%s3165]
        %3531 = vst [vmem:[%s3173 + $0x2c8] sm:%s3165] %v3530
        %v3532 = vld [vmem:[%s3172 + $0x2cc] sm:%s3165]
        %3533 = vst [vmem:[%s3173 + $0x2cc] sm:%s3165] %v3532
        %v3534 = vld [vmem:[%s3172 + $0x2d0] sm:%s3165]
        %3535 = vst [vmem:[%s3173 + $0x2d0] sm:%s3165] %v3534
        %v3536 = vld [vmem:[%s3172 + $0x2d8] sm:%s3165]
        %3537 = vst [vmem:[%s3173 + $0x2d4] sm:%s3165] %v3536
        %v3538 = vld [vmem:[%s3172 + $0x2d4] sm:%s3165]
        %3539 = vst [vmem:[%s3173 + $0x2d8] sm:%s3165] %v3538
        %v3540 = vld [vmem:[%s3172 + $0x2dc] sm:%s3165]
        %3541 = vst [vmem:[%s3173 + $0x2dc] sm:%s3165] %v3540
        %v3542 = vld [vmem:[%s3172 + $0x2e0] sm:%s3165]
        %3543 = vst [vmem:[%s3173 + $0x2e0] sm:%s3165] %v3542
        %v3544 = vld [vmem:[%s3172 + $0x2e8] sm:%s3165]
        %3545 = vst [vmem:[%s3173 + $0x2e4] sm:%s3165] %v3544
        %v3546 = vld [vmem:[%s3172 + $0x2e4] sm:%s3165]
        %3547 = vst [vmem:[%s3173 + $0x2e8] sm:%s3165] %v3546
        %v3548 = vld [vmem:[%s3172 + $0x2ec] sm:%s3165]
        %3549 = vst [vmem:[%s3173 + $0x2ec] sm:%s3165] %v3548
        %v3550 = vld [vmem:[%s3172 + $0x2f0] sm:%s3165]
        %3551 = vst [vmem:[%s3173 + $0x2f0] sm:%s3165] %v3550
        %v3552 = vld [vmem:[%s3172 + $0x2f8] sm:%s3165]
        %3553 = vst [vmem:[%s3173 + $0x2f4] sm:%s3165] %v3552
        %v3554 = vld [vmem:[%s3172 + $0x2f4] sm:%s3165]
        %3555 = vst [vmem:[%s3173 + $0x2f8] sm:%s3165] %v3554
        %v3556 = vld [vmem:[%s3172 + $0x2fc] sm:%s3165]
        %3557 = vst [vmem:[%s3173 + $0x2fc] sm:%s3165] %v3556
        %v3558 = vld [vmem:[%s3172 + $0x300] sm:%s3165]
        %3559 = vst [vmem:[%s3173 + $0x300] sm:%s3165] %v3558
        %v3560 = vld [vmem:[%s3172 + $0x308] sm:%s3165]
        %3561 = vst [vmem:[%s3173 + $0x304] sm:%s3165] %v3560
        %v3562 = vld [vmem:[%s3172 + $0x304] sm:%s3165]
        %3563 = vst [vmem:[%s3173 + $0x308] sm:%s3165] %v3562
        %v3564 = vld [vmem:[%s3172 + $0x30c] sm:%s3165]
        %3565 = vst [vmem:[%s3173 + $0x30c] sm:%s3165] %v3564
        %v3566 = vld [vmem:[%s3172 + $0x310] sm:%s3165]
        %3567 = vst [vmem:[%s3173 + $0x310] sm:%s3165] %v3566
        %v3568 = vld [vmem:[%s3172 + $0x318] sm:%s3165]
        %3569 = vst [vmem:[%s3173 + $0x314] sm:%s3165] %v3568
        %v3570 = vld [vmem:[%s3172 + $0x314] sm:%s3165]
        %3571 = vst [vmem:[%s3173 + $0x318] sm:%s3165] %v3570
        %v3572 = vld [vmem:[%s3172 + $0x31c] sm:%s3165]
        %3573 = vst [vmem:[%s3173 + $0x31c] sm:%s3165] %v3572
        %v3574 = vld [vmem:[%s3172 + $0x320] sm:%s3165]
        %3575 = vst [vmem:[%s3173 + $0x320] sm:%s3165] %v3574
        %v3576 = vld [vmem:[%s3172 + $0x328] sm:%s3165]
        %3577 = vst [vmem:[%s3173 + $0x324] sm:%s3165] %v3576
        %v3578 = vld [vmem:[%s3172 + $0x324] sm:%s3165]
        %3579 = vst [vmem:[%s3173 + $0x328] sm:%s3165] %v3578
        %v3580 = vld [vmem:[%s3172 + $0x32c] sm:%s3165]
        %3581 = vst [vmem:[%s3173 + $0x32c] sm:%s3165] %v3580
        %v3582 = vld [vmem:[%s3172 + $0x330] sm:%s3165]
        %3583 = vst [vmem:[%s3173 + $0x330] sm:%s3165] %v3582
        %v3584 = vld [vmem:[%s3172 + $0x338] sm:%s3165]
        %3585 = vst [vmem:[%s3173 + $0x334] sm:%s3165] %v3584
        %v3586 = vld [vmem:[%s3172 + $0x334] sm:%s3165]
        %3587 = vst [vmem:[%s3173 + $0x338] sm:%s3165] %v3586
        %v3588 = vld [vmem:[%s3172 + $0x33c] sm:%s3165]
        %3589 = vst [vmem:[%s3173 + $0x33c] sm:%s3165] %v3588
        %v3590 = vld [vmem:[%s3172 + $0x340] sm:%s3165]
        %3591 = vst [vmem:[%s3173 + $0x340] sm:%s3165] %v3590
        %v3592 = vld [vmem:[%s3172 + $0x348] sm:%s3165]
        %3593 = vst [vmem:[%s3173 + $0x344] sm:%s3165] %v3592
        %v3594 = vld [vmem:[%s3172 + $0x344] sm:%s3165]
        %3595 = vst [vmem:[%s3173 + $0x348] sm:%s3165] %v3594
        %v3596 = vld [vmem:[%s3172 + $0x34c] sm:%s3165]
        %3597 = vst [vmem:[%s3173 + $0x34c] sm:%s3165] %v3596
        %v3598 = vld [vmem:[%s3172 + $0x350] sm:%s3165]
        %3599 = vst [vmem:[%s3173 + $0x350] sm:%s3165] %v3598
        %v3600 = vld [vmem:[%s3172 + $0x358] sm:%s3165]
        %3601 = vst [vmem:[%s3173 + $0x354] sm:%s3165] %v3600
        %v3602 = vld [vmem:[%s3172 + $0x354] sm:%s3165]
        %3603 = vst [vmem:[%s3173 + $0x358] sm:%s3165] %v3602
        %v3604 = vld [vmem:[%s3172 + $0x35c] sm:%s3165]
        %3605 = vst [vmem:[%s3173 + $0x35c] sm:%s3165] %v3604
        %v3606 = vld [vmem:[%s3172 + $0x360] sm:%s3165]
        %3607 = vst [vmem:[%s3173 + $0x360] sm:%s3165] %v3606
        %v3608 = vld [vmem:[%s3172 + $0x368] sm:%s3165]
        %3609 = vst [vmem:[%s3173 + $0x364] sm:%s3165] %v3608
        %v3610 = vld [vmem:[%s3172 + $0x364] sm:%s3165]
        %3611 = vst [vmem:[%s3173 + $0x368] sm:%s3165] %v3610
        %v3612 = vld [vmem:[%s3172 + $0x36c] sm:%s3165]
        %3613 = vst [vmem:[%s3173 + $0x36c] sm:%s3165] %v3612
        %v3614 = vld [vmem:[%s3172 + $0x370] sm:%s3165]
        %3615 = vst [vmem:[%s3173 + $0x370] sm:%s3165] %v3614
        %v3616 = vld [vmem:[%s3172 + $0x378] sm:%s3165]
        %3617 = vst [vmem:[%s3173 + $0x374] sm:%s3165] %v3616
        %v3618 = vld [vmem:[%s3172 + $0x374] sm:%s3165]
        %3619 = vst [vmem:[%s3173 + $0x378] sm:%s3165] %v3618
        %v3620 = vld [vmem:[%s3172 + $0x37c] sm:%s3165]
        %3621 = vst [vmem:[%s3173 + $0x37c] sm:%s3165] %v3620
        %v3622 = vld [vmem:[%s3172 + $0x380] sm:%s3165]
        %3623 = vst [vmem:[%s3173 + $0x380] sm:%s3165] %v3622
        %v3624 = vld [vmem:[%s3172 + $0x388] sm:%s3165]
        %3625 = vst [vmem:[%s3173 + $0x384] sm:%s3165] %v3624
        %v3626 = vld [vmem:[%s3172 + $0x384] sm:%s3165]
        %3627 = vst [vmem:[%s3173 + $0x388] sm:%s3165] %v3626
        %v3628 = vld [vmem:[%s3172 + $0x38c] sm:%s3165]
        %3629 = vst [vmem:[%s3173 + $0x38c] sm:%s3165] %v3628
        %v3630 = vld [vmem:[%s3172 + $0x390] sm:%s3165]
        %3631 = vst [vmem:[%s3173 + $0x390] sm:%s3165] %v3630
        %v3632 = vld [vmem:[%s3172 + $0x398] sm:%s3165]
        %3633 = vst [vmem:[%s3173 + $0x394] sm:%s3165] %v3632
        %v3634 = vld [vmem:[%s3172 + $0x394] sm:%s3165]
        %3635 = vst [vmem:[%s3173 + $0x398] sm:%s3165] %v3634
        %v3636 = vld [vmem:[%s3172 + $0x39c] sm:%s3165]
        %3637 = vst [vmem:[%s3173 + $0x39c] sm:%s3165] %v3636
        %v3638 = vld [vmem:[%s3172 + $0x3a0] sm:%s3165]
        %3639 = vst [vmem:[%s3173 + $0x3a0] sm:%s3165] %v3638
        %v3640 = vld [vmem:[%s3172 + $0x3a8] sm:%s3165]
        %3641 = vst [vmem:[%s3173 + $0x3a4] sm:%s3165] %v3640
        %v3642 = vld [vmem:[%s3172 + $0x3a4] sm:%s3165]
        %3643 = vst [vmem:[%s3173 + $0x3a8] sm:%s3165] %v3642
        %v3644 = vld [vmem:[%s3172 + $0x3ac] sm:%s3165]
        %3645 = vst [vmem:[%s3173 + $0x3ac] sm:%s3165] %v3644
        %v3646 = vld [vmem:[%s3172 + $0x3b0] sm:%s3165]
        %3647 = vst [vmem:[%s3173 + $0x3b0] sm:%s3165] %v3646
        %v3648 = vld [vmem:[%s3172 + $0x3b8] sm:%s3165]
        %3649 = vst [vmem:[%s3173 + $0x3b4] sm:%s3165] %v3648
        %v3650 = vld [vmem:[%s3172 + $0x3b4] sm:%s3165]
        %3651 = vst [vmem:[%s3173 + $0x3b8] sm:%s3165] %v3650
        %v3652 = vld [vmem:[%s3172 + $0x3bc] sm:%s3165]
        %3653 = vst [vmem:[%s3173 + $0x3bc] sm:%s3165] %v3652
        %v3654 = vld [vmem:[%s3172 + $0x3c0] sm:%s3165]
        %3655 = vst [vmem:[%s3173 + $0x3c0] sm:%s3165] %v3654
        %v3656 = vld [vmem:[%s3172 + $0x3c8] sm:%s3165]
        %3657 = vst [vmem:[%s3173 + $0x3c4] sm:%s3165] %v3656
        %v3658 = vld [vmem:[%s3172 + $0x3c4] sm:%s3165]
        %3659 = vst [vmem:[%s3173 + $0x3c8] sm:%s3165] %v3658
        %v3660 = vld [vmem:[%s3172 + $0x3cc] sm:%s3165]
        %3661 = vst [vmem:[%s3173 + $0x3cc] sm:%s3165] %v3660
        %v3662 = vld [vmem:[%s3172 + $0x3d0] sm:%s3165]
        %3663 = vst [vmem:[%s3173 + $0x3d0] sm:%s3165] %v3662
        %v3664 = vld [vmem:[%s3172 + $0x3d8] sm:%s3165]
        %3665 = vst [vmem:[%s3173 + $0x3d4] sm:%s3165] %v3664
        %v3666 = vld [vmem:[%s3172 + $0x3d4] sm:%s3165]
        %3667 = vst [vmem:[%s3173 + $0x3d8] sm:%s3165] %v3666
        %v3668 = vld [vmem:[%s3172 + $0x3dc] sm:%s3165]
        %3669 = vst [vmem:[%s3173 + $0x3dc] sm:%s3165] %v3668
        %v3670 = vld [vmem:[%s3172 + $0x3e0] sm:%s3165]
        %3671 = vst [vmem:[%s3173 + $0x3e0] sm:%s3165] %v3670
        %v3672 = vld [vmem:[%s3172 + $0x3e8] sm:%s3165]
        %3673 = vst [vmem:[%s3173 + $0x3e4] sm:%s3165] %v3672
        %v3674 = vld [vmem:[%s3172 + $0x3e4] sm:%s3165]
        %3675 = vst [vmem:[%s3173 + $0x3e8] sm:%s3165] %v3674
        %v3676 = vld [vmem:[%s3172 + $0x3ec] sm:%s3165]
        %3677 = vst [vmem:[%s3173 + $0x3ec] sm:%s3165] %v3676
        %v3678 = vld [vmem:[%s3172 + $0x3f0] sm:%s3165]
        %3679 = vst [vmem:[%s3173 + $0x3f0] sm:%s3165] %v3678
        %v3680 = vld [vmem:[%s3172 + $0x3f8] sm:%s3165]
        %3681 = vst [vmem:[%s3173 + $0x3f4] sm:%s3165] %v3680
        %v3682 = vld [vmem:[%s3172 + $0x3f4] sm:%s3165]
        %3683 = vst [vmem:[%s3173 + $0x3f8] sm:%s3165] %v3682
        %v3684 = vld [vmem:[%s3172 + $0x3fc] sm:%s3165]
        %3685 = vst [vmem:[%s3173 + $0x3fc] sm:%s3165] %v3684
        %v3686 = vld [vmem:[%s3172 + $0x400] sm:%s3165]
        %3687 = vst [vmem:[%s3173 + $0x400] sm:%s3165] %v3686
        %v3688 = vld [vmem:[%s3172 + $0x408] sm:%s3165]
        %3689 = vst [vmem:[%s3173 + $0x404] sm:%s3165] %v3688
        %v3690 = vld [vmem:[%s3172 + $0x404] sm:%s3165]
        %3691 = vst [vmem:[%s3173 + $0x408] sm:%s3165] %v3690
        %v3692 = vld [vmem:[%s3172 + $0x40c] sm:%s3165]
        %3693 = vst [vmem:[%s3173 + $0x40c] sm:%s3165] %v3692
        %v3694 = vld [vmem:[%s3172 + $0x410] sm:%s3165]
        %3695 = vst [vmem:[%s3173 + $0x410] sm:%s3165] %v3694
        %v3696 = vld [vmem:[%s3172 + $0x418] sm:%s3165]
        %3697 = vst [vmem:[%s3173 + $0x414] sm:%s3165] %v3696
        %v3698 = vld [vmem:[%s3172 + $0x414] sm:%s3165]
        %3699 = vst [vmem:[%s3173 + $0x418] sm:%s3165] %v3698
        %v3700 = vld [vmem:[%s3172 + $0x41c] sm:%s3165]
        %3701 = vst [vmem:[%s3173 + $0x41c] sm:%s3165] %v3700
        %v3702 = vld [vmem:[%s3172 + $0x420] sm:%s3165]
        %3703 = vst [vmem:[%s3173 + $0x420] sm:%s3165] %v3702
        %v3704 = vld [vmem:[%s3172 + $0x428] sm:%s3165]
        %3705 = vst [vmem:[%s3173 + $0x424] sm:%s3165] %v3704
        %v3706 = vld [vmem:[%s3172 + $0x424] sm:%s3165]
        %3707 = vst [vmem:[%s3173 + $0x428] sm:%s3165] %v3706
        %v3708 = vld [vmem:[%s3172 + $0x42c] sm:%s3165]
        %3709 = vst [vmem:[%s3173 + $0x42c] sm:%s3165] %v3708
        %v3710 = vld [vmem:[%s3172 + $0x430] sm:%s3165]
        %3711 = vst [vmem:[%s3173 + $0x430] sm:%s3165] %v3710
        %v3712 = vld [vmem:[%s3172 + $0x438] sm:%s3165]
        %3713 = vst [vmem:[%s3173 + $0x434] sm:%s3165] %v3712
        %v3714 = vld [vmem:[%s3172 + $0x434] sm:%s3165]
        %3715 = vst [vmem:[%s3173 + $0x438] sm:%s3165] %v3714
        %v3716 = vld [vmem:[%s3172 + $0x43c] sm:%s3165]
        %3717 = vst [vmem:[%s3173 + $0x43c] sm:%s3165] %v3716
        %v3718 = vld [vmem:[%s3172 + $0x440] sm:%s3165]
        %3719 = vst [vmem:[%s3173 + $0x440] sm:%s3165] %v3718
        %v3720 = vld [vmem:[%s3172 + $0x448] sm:%s3165]
        %3721 = vst [vmem:[%s3173 + $0x444] sm:%s3165] %v3720
        %v3722 = vld [vmem:[%s3172 + $0x444] sm:%s3165]
        %3723 = vst [vmem:[%s3173 + $0x448] sm:%s3165] %v3722
        %v3724 = vld [vmem:[%s3172 + $0x44c] sm:%s3165]
        %3725 = vst [vmem:[%s3173 + $0x44c] sm:%s3165] %v3724
        %v3726 = vld [vmem:[%s3172 + $0x450] sm:%s3165]
        %3727 = vst [vmem:[%s3173 + $0x450] sm:%s3165] %v3726
        %v3728 = vld [vmem:[%s3172 + $0x458] sm:%s3165]
        %3729 = vst [vmem:[%s3173 + $0x454] sm:%s3165] %v3728
        %v3730 = vld [vmem:[%s3172 + $0x454] sm:%s3165]
        %3731 = vst [vmem:[%s3173 + $0x458] sm:%s3165] %v3730
        %v3732 = vld [vmem:[%s3172 + $0x45c] sm:%s3165]
        %3733 = vst [vmem:[%s3173 + $0x45c] sm:%s3165] %v3732
        %v3734 = vld [vmem:[%s3172 + $0x460] sm:%s3165]
        %3735 = vst [vmem:[%s3173 + $0x460] sm:%s3165] %v3734
        %v3736 = vld [vmem:[%s3172 + $0x468] sm:%s3165]
        %3737 = vst [vmem:[%s3173 + $0x464] sm:%s3165] %v3736
        %v3738 = vld [vmem:[%s3172 + $0x464] sm:%s3165]
        %3739 = vst [vmem:[%s3173 + $0x468] sm:%s3165] %v3738
        %v3740 = vld [vmem:[%s3172 + $0x46c] sm:%s3165]
        %3741 = vst [vmem:[%s3173 + $0x46c] sm:%s3165] %v3740
        %v3742 = vld [vmem:[%s3172 + $0x470] sm:%s3165]
        %3743 = vst [vmem:[%s3173 + $0x470] sm:%s3165] %v3742
        %v3744 = vld [vmem:[%s3172 + $0x478] sm:%s3165]
        %3745 = vst [vmem:[%s3173 + $0x474] sm:%s3165] %v3744
        %v3746 = vld [vmem:[%s3172 + $0x474] sm:%s3165]
        %3747 = vst [vmem:[%s3173 + $0x478] sm:%s3165] %v3746
        %v3748 = vld [vmem:[%s3172 + $0x47c] sm:%s3165]
        %3749 = vst [vmem:[%s3173 + $0x47c] sm:%s3165] %v3748
        %v3750 = vld [vmem:[%s3172 + $0x480] sm:%s3165]
        %3751 = vst [vmem:[%s3173 + $0x480] sm:%s3165] %v3750
        %v3752 = vld [vmem:[%s3172 + $0x488] sm:%s3165]
        %3753 = vst [vmem:[%s3173 + $0x484] sm:%s3165] %v3752
        %v3754 = vld [vmem:[%s3172 + $0x484] sm:%s3165]
        %3755 = vst [vmem:[%s3173 + $0x488] sm:%s3165] %v3754
        %v3756 = vld [vmem:[%s3172 + $0x48c] sm:%s3165]
        %3757 = vst [vmem:[%s3173 + $0x48c] sm:%s3165] %v3756
        %v3758 = vld [vmem:[%s3172 + $0x490] sm:%s3165]
        %3759 = vst [vmem:[%s3173 + $0x490] sm:%s3165] %v3758
        %v3760 = vld [vmem:[%s3172 + $0x498] sm:%s3165]
        %3761 = vst [vmem:[%s3173 + $0x494] sm:%s3165] %v3760
        %v3762 = vld [vmem:[%s3172 + $0x494] sm:%s3165]
        %3763 = vst [vmem:[%s3173 + $0x498] sm:%s3165] %v3762
        %v3764 = vld [vmem:[%s3172 + $0x49c] sm:%s3165]
        %3765 = vst [vmem:[%s3173 + $0x49c] sm:%s3165] %v3764
        %v3766 = vld [vmem:[%s3172 + $0x4a0] sm:%s3165]
        %3767 = vst [vmem:[%s3173 + $0x4a0] sm:%s3165] %v3766
        %v3768 = vld [vmem:[%s3172 + $0x4a8] sm:%s3165]
        %3769 = vst [vmem:[%s3173 + $0x4a4] sm:%s3165] %v3768
        %v3770 = vld [vmem:[%s3172 + $0x4a4] sm:%s3165]
        %3771 = vst [vmem:[%s3173 + $0x4a8] sm:%s3165] %v3770
        %v3772 = vld [vmem:[%s3172 + $0x4ac] sm:%s3165]
        %3773 = vst [vmem:[%s3173 + $0x4ac] sm:%s3165] %v3772
        %v3774 = vld [vmem:[%s3172 + $0x4b0] sm:%s3165]
        %3775 = vst [vmem:[%s3173 + $0x4b0] sm:%s3165] %v3774
        %v3776 = vld [vmem:[%s3172 + $0x4b8] sm:%s3165]
        %3777 = vst [vmem:[%s3173 + $0x4b4] sm:%s3165] %v3776
        %v3778 = vld [vmem:[%s3172 + $0x4b4] sm:%s3165]
        %3779 = vst [vmem:[%s3173 + $0x4b8] sm:%s3165] %v3778
        %v3780 = vld [vmem:[%s3172 + $0x4bc] sm:%s3165]
        %3781 = vst [vmem:[%s3173 + $0x4bc] sm:%s3165] %v3780
        %v3782 = vld [vmem:[%s3172 + $0x4c0] sm:%s3165]
        %3783 = vst [vmem:[%s3173 + $0x4c0] sm:%s3165] %v3782
        %v3784 = vld [vmem:[%s3172 + $0x4c8] sm:%s3165]
        %3785 = vst [vmem:[%s3173 + $0x4c4] sm:%s3165] %v3784
        %v3786 = vld [vmem:[%s3172 + $0x4c4] sm:%s3165]
        %3787 = vst [vmem:[%s3173 + $0x4c8] sm:%s3165] %v3786
        %v3788 = vld [vmem:[%s3172 + $0x4cc] sm:%s3165]
        %3789 = vst [vmem:[%s3173 + $0x4cc] sm:%s3165] %v3788
        %v3790 = vld [vmem:[%s3172 + $0x4d0] sm:%s3165]
        %3791 = vst [vmem:[%s3173 + $0x4d0] sm:%s3165] %v3790
        %v3792 = vld [vmem:[%s3172 + $0x4d8] sm:%s3165]
        %3793 = vst [vmem:[%s3173 + $0x4d4] sm:%s3165] %v3792
        %v3794 = vld [vmem:[%s3172 + $0x4d4] sm:%s3165]
        %3795 = vst [vmem:[%s3173 + $0x4d8] sm:%s3165] %v3794
        %v3796 = vld [vmem:[%s3172 + $0x4dc] sm:%s3165]
        %3797 = vst [vmem:[%s3173 + $0x4dc] sm:%s3165] %v3796
        %v3798 = vld [vmem:[%s3172 + $0x4e0] sm:%s3165]
        %3799 = vst [vmem:[%s3173 + $0x4e0] sm:%s3165] %v3798
        %v3800 = vld [vmem:[%s3172 + $0x4e8] sm:%s3165]
        %3801 = vst [vmem:[%s3173 + $0x4e4] sm:%s3165] %v3800
        %v3802 = vld [vmem:[%s3172 + $0x4e4] sm:%s3165]
        %3803 = vst [vmem:[%s3173 + $0x4e8] sm:%s3165] %v3802
        %v3804 = vld [vmem:[%s3172 + $0x4ec] sm:%s3165]
        %3805 = vst [vmem:[%s3173 + $0x4ec] sm:%s3165] %v3804
        %v3806 = vld [vmem:[%s3172 + $0x4f0] sm:%s3165]
        %3807 = vst [vmem:[%s3173 + $0x4f0] sm:%s3165] %v3806
        %v3808 = vld [vmem:[%s3172 + $0x4f8] sm:%s3165]
        %3809 = vst [vmem:[%s3173 + $0x4f4] sm:%s3165] %v3808
        %v3810 = vld [vmem:[%s3172 + $0x4f4] sm:%s3165]
        %3811 = vst [vmem:[%s3173 + $0x4f8] sm:%s3165] %v3810
        %v3812 = vld [vmem:[%s3172 + $0x4fc] sm:%s3165]
        %3813 = vst [vmem:[%s3173 + $0x4fc] sm:%s3165] %v3812
        %v3814 = vld [vmem:[%s3172 + $0x500] sm:%s3165]
        %3815 = vst [vmem:[%s3173 + $0x500] sm:%s3165] %v3814
        %v3816 = vld [vmem:[%s3172 + $0x508] sm:%s3165]
        %3817 = vst [vmem:[%s3173 + $0x504] sm:%s3165] %v3816
        %v3818 = vld [vmem:[%s3172 + $0x504] sm:%s3165]
        %3819 = vst [vmem:[%s3173 + $0x508] sm:%s3165] %v3818
        %v3820 = vld [vmem:[%s3172 + $0x50c] sm:%s3165]
        %3821 = vst [vmem:[%s3173 + $0x50c] sm:%s3165] %v3820
        %v3822 = vld [vmem:[%s3172 + $0x510] sm:%s3165]
        %3823 = vst [vmem:[%s3173 + $0x510] sm:%s3165] %v3822
        %v3824 = vld [vmem:[%s3172 + $0x518] sm:%s3165]
        %3825 = vst [vmem:[%s3173 + $0x514] sm:%s3165] %v3824
        %v3826 = vld [vmem:[%s3172 + $0x514] sm:%s3165]
        %3827 = vst [vmem:[%s3173 + $0x518] sm:%s3165] %v3826
        %v3828 = vld [vmem:[%s3172 + $0x51c] sm:%s3165]
        %3829 = vst [vmem:[%s3173 + $0x51c] sm:%s3165] %v3828
        %v3830 = vld [vmem:[%s3172 + $0x520] sm:%s3165]
        %3831 = vst [vmem:[%s3173 + $0x520] sm:%s3165] %v3830
        %v3832 = vld [vmem:[%s3172 + $0x528] sm:%s3165]
        %3833 = vst [vmem:[%s3173 + $0x524] sm:%s3165] %v3832
        %v3834 = vld [vmem:[%s3172 + $0x524] sm:%s3165]
        %3835 = vst [vmem:[%s3173 + $0x528] sm:%s3165] %v3834
        %v3836 = vld [vmem:[%s3172 + $0x52c] sm:%s3165]
        %3837 = vst [vmem:[%s3173 + $0x52c] sm:%s3165] %v3836
        %v3838 = vld [vmem:[%s3172 + $0x530] sm:%s3165]
        %3839 = vst [vmem:[%s3173 + $0x530] sm:%s3165] %v3838
        %v3840 = vld [vmem:[%s3172 + $0x538] sm:%s3165]
        %3841 = vst [vmem:[%s3173 + $0x534] sm:%s3165] %v3840
        %v3842 = vld [vmem:[%s3172 + $0x534] sm:%s3165]
        %3843 = vst [vmem:[%s3173 + $0x538] sm:%s3165] %v3842
        %v3844 = vld [vmem:[%s3172 + $0x53c] sm:%s3165]
        %3845 = vst [vmem:[%s3173 + $0x53c] sm:%s3165] %v3844
        %v3846 = vld [vmem:[%s3172 + $0x540] sm:%s3165]
        %3847 = vst [vmem:[%s3173 + $0x540] sm:%s3165] %v3846
        %v3848 = vld [vmem:[%s3172 + $0x548] sm:%s3165]
        %3849 = vst [vmem:[%s3173 + $0x544] sm:%s3165] %v3848
        %v3850 = vld [vmem:[%s3172 + $0x544] sm:%s3165]
        %3851 = vst [vmem:[%s3173 + $0x548] sm:%s3165] %v3850
        %v3852 = vld [vmem:[%s3172 + $0x54c] sm:%s3165]
        %3853 = vst [vmem:[%s3173 + $0x54c] sm:%s3165] %v3852
        %v3854 = vld [vmem:[%s3172 + $0x550] sm:%s3165]
        %3855 = vst [vmem:[%s3173 + $0x550] sm:%s3165] %v3854
        %v3856 = vld [vmem:[%s3172 + $0x558] sm:%s3165]
        %3857 = vst [vmem:[%s3173 + $0x554] sm:%s3165] %v3856
        %v3858 = vld [vmem:[%s3172 + $0x554] sm:%s3165]
        %3859 = vst [vmem:[%s3173 + $0x558] sm:%s3165] %v3858
        %v3860 = vld [vmem:[%s3172 + $0x55c] sm:%s3165]
        %3861 = vst [vmem:[%s3173 + $0x55c] sm:%s3165] %v3860
        %v3862 = vld [vmem:[%s3172 + $0x560] sm:%s3165]
        %3863 = vst [vmem:[%s3173 + $0x560] sm:%s3165] %v3862
        %v3864 = vld [vmem:[%s3172 + $0x568] sm:%s3165]
        %3865 = vst [vmem:[%s3173 + $0x564] sm:%s3165] %v3864
        %v3866 = vld [vmem:[%s3172 + $0x564] sm:%s3165]
        %3867 = vst [vmem:[%s3173 + $0x568] sm:%s3165] %v3866
        %v3868 = vld [vmem:[%s3172 + $0x56c] sm:%s3165]
        %3869 = vst [vmem:[%s3173 + $0x56c] sm:%s3165] %v3868
        %v3870 = vld [vmem:[%s3172 + $0x570] sm:%s3165]
        %3871 = vst [vmem:[%s3173 + $0x570] sm:%s3165] %v3870
        %v3872 = vld [vmem:[%s3172 + $0x578] sm:%s3165]
        %3873 = vst [vmem:[%s3173 + $0x574] sm:%s3165] %v3872
        %v3874 = vld [vmem:[%s3172 + $0x574] sm:%s3165]
        %3875 = vst [vmem:[%s3173 + $0x578] sm:%s3165] %v3874
        %v3876 = vld [vmem:[%s3172 + $0x57c] sm:%s3165]
        %3877 = vst [vmem:[%s3173 + $0x57c] sm:%s3165] %v3876
        %v3878 = vld [vmem:[%s3172 + $0x580] sm:%s3165]
        %3879 = vst [vmem:[%s3173 + $0x580] sm:%s3165] %v3878
        %v3880 = vld [vmem:[%s3172 + $0x588] sm:%s3165]
        %3881 = vst [vmem:[%s3173 + $0x584] sm:%s3165] %v3880
        %v3882 = vld [vmem:[%s3172 + $0x584] sm:%s3165]
        %3883 = vst [vmem:[%s3173 + $0x588] sm:%s3165] %v3882
        %v3884 = vld [vmem:[%s3172 + $0x58c] sm:%s3165]
        %3885 = vst [vmem:[%s3173 + $0x58c] sm:%s3165] %v3884
        %v3886 = vld [vmem:[%s3172 + $0x590] sm:%s3165]
        %3887 = vst [vmem:[%s3173 + $0x590] sm:%s3165] %v3886
        %v3888 = vld [vmem:[%s3172 + $0x598] sm:%s3165]
        %3889 = vst [vmem:[%s3173 + $0x594] sm:%s3165] %v3888
        %v3890 = vld [vmem:[%s3172 + $0x594] sm:%s3165]
        %3891 = vst [vmem:[%s3173 + $0x598] sm:%s3165] %v3890
        %v3892 = vld [vmem:[%s3172 + $0x59c] sm:%s3165]
        %3893 = vst [vmem:[%s3173 + $0x59c] sm:%s3165] %v3892
        %v3894 = vld [vmem:[%s3172 + $0x5a0] sm:%s3165]
        %3895 = vst [vmem:[%s3173 + $0x5a0] sm:%s3165] %v3894
        %v3896 = vld [vmem:[%s3172 + $0x5a8] sm:%s3165]
        %3897 = vst [vmem:[%s3173 + $0x5a4] sm:%s3165] %v3896
        %v3898 = vld [vmem:[%s3172 + $0x5a4] sm:%s3165]
        %3899 = vst [vmem:[%s3173 + $0x5a8] sm:%s3165] %v3898
        %v3900 = vld [vmem:[%s3172 + $0x5ac] sm:%s3165]
        %3901 = vst [vmem:[%s3173 + $0x5ac] sm:%s3165] %v3900
        %v3902 = vld [vmem:[%s3172 + $0x5b0] sm:%s3165]
        %3903 = vst [vmem:[%s3173 + $0x5b0] sm:%s3165] %v3902
        %v3904 = vld [vmem:[%s3172 + $0x5b8] sm:%s3165]
        %3905 = vst [vmem:[%s3173 + $0x5b4] sm:%s3165] %v3904
        %v3906 = vld [vmem:[%s3172 + $0x5b4] sm:%s3165]
        %3907 = vst [vmem:[%s3173 + $0x5b8] sm:%s3165] %v3906
        %v3908 = vld [vmem:[%s3172 + $0x5bc] sm:%s3165]
        %3909 = vst [vmem:[%s3173 + $0x5bc] sm:%s3165] %v3908
        %v3910 = vld [vmem:[%s3172 + $0x5c0] sm:%s3165]
        %3911 = vst [vmem:[%s3173 + $0x5c0] sm:%s3165] %v3910
        %v3912 = vld [vmem:[%s3172 + $0x5c8] sm:%s3165]
        %3913 = vst [vmem:[%s3173 + $0x5c4] sm:%s3165] %v3912
        %v3914 = vld [vmem:[%s3172 + $0x5c4] sm:%s3165]
        %3915 = vst [vmem:[%s3173 + $0x5c8] sm:%s3165] %v3914
        %v3916 = vld [vmem:[%s3172 + $0x5cc] sm:%s3165]
        %3917 = vst [vmem:[%s3173 + $0x5cc] sm:%s3165] %v3916
        %v3918 = vld [vmem:[%s3172 + $0x5d0] sm:%s3165]
        %3919 = vst [vmem:[%s3173 + $0x5d0] sm:%s3165] %v3918
        %v3920 = vld [vmem:[%s3172 + $0x5d8] sm:%s3165]
        %3921 = vst [vmem:[%s3173 + $0x5d4] sm:%s3165] %v3920
        %v3922 = vld [vmem:[%s3172 + $0x5d4] sm:%s3165]
        %3923 = vst [vmem:[%s3173 + $0x5d8] sm:%s3165] %v3922
        %v3924 = vld [vmem:[%s3172 + $0x5dc] sm:%s3165]
        %3925 = vst [vmem:[%s3173 + $0x5dc] sm:%s3165] %v3924
        %v3926 = vld [vmem:[%s3172 + $0x5e0] sm:%s3165]
        %3927 = vst [vmem:[%s3173 + $0x5e0] sm:%s3165] %v3926
        %v3928 = vld [vmem:[%s3172 + $0x5e8] sm:%s3165]
        %3929 = vst [vmem:[%s3173 + $0x5e4] sm:%s3165] %v3928
        %v3930 = vld [vmem:[%s3172 + $0x5e4] sm:%s3165]
        %3931 = vst [vmem:[%s3173 + $0x5e8] sm:%s3165] %v3930
        %v3932 = vld [vmem:[%s3172 + $0x5ec] sm:%s3165]
        %3933 = vst [vmem:[%s3173 + $0x5ec] sm:%s3165] %v3932
        %v3934 = vld [vmem:[%s3172 + $0x5f0] sm:%s3165]
        %3935 = vst [vmem:[%s3173 + $0x5f0] sm:%s3165] %v3934
        %v3936 = vld [vmem:[%s3172 + $0x5f8] sm:%s3165]
        %3937 = vst [vmem:[%s3173 + $0x5f4] sm:%s3165] %v3936
        %v3938 = vld [vmem:[%s3172 + $0x5f4] sm:%s3165]
        %3939 = vst [vmem:[%s3173 + $0x5f8] sm:%s3165] %v3938
        %v3940 = vld [vmem:[%s3172 + $0x5fc] sm:%s3165]
        %3941 = vst [vmem:[%s3173 + $0x5fc] sm:%s3165] %v3940
        %v3942 = vld [vmem:[%s3172 + $0x600] sm:%s3165]
        %3943 = vst [vmem:[%s3173 + $0x600] sm:%s3165] %v3942
        %v3944 = vld [vmem:[%s3172 + $0x608] sm:%s3165]
        %3945 = vst [vmem:[%s3173 + $0x604] sm:%s3165] %v3944
        %v3946 = vld [vmem:[%s3172 + $0x604] sm:%s3165]
        %3947 = vst [vmem:[%s3173 + $0x608] sm:%s3165] %v3946
        %v3948 = vld [vmem:[%s3172 + $0x60c] sm:%s3165]
        %3949 = vst [vmem:[%s3173 + $0x60c] sm:%s3165] %v3948
        %v3950 = vld [vmem:[%s3172 + $0x610] sm:%s3165]
        %3951 = vst [vmem:[%s3173 + $0x610] sm:%s3165] %v3950
        %v3952 = vld [vmem:[%s3172 + $0x618] sm:%s3165]
        %3953 = vst [vmem:[%s3173 + $0x614] sm:%s3165] %v3952
        %v3954 = vld [vmem:[%s3172 + $0x614] sm:%s3165]
        %3955 = vst [vmem:[%s3173 + $0x618] sm:%s3165] %v3954
        %v3956 = vld [vmem:[%s3172 + $0x61c] sm:%s3165]
        %3957 = vst [vmem:[%s3173 + $0x61c] sm:%s3165] %v3956
        %v3958 = vld [vmem:[%s3172 + $0x620] sm:%s3165]
        %3959 = vst [vmem:[%s3173 + $0x620] sm:%s3165] %v3958
        %v3960 = vld [vmem:[%s3172 + $0x628] sm:%s3165]
        %3961 = vst [vmem:[%s3173 + $0x624] sm:%s3165] %v3960
        %v3962 = vld [vmem:[%s3172 + $0x624] sm:%s3165]
        %3963 = vst [vmem:[%s3173 + $0x628] sm:%s3165] %v3962
        %v3964 = vld [vmem:[%s3172 + $0x62c] sm:%s3165]
        %3965 = vst [vmem:[%s3173 + $0x62c] sm:%s3165] %v3964
        %v3966 = vld [vmem:[%s3172 + $0x630] sm:%s3165]
        %3967 = vst [vmem:[%s3173 + $0x630] sm:%s3165] %v3966
        %v3968 = vld [vmem:[%s3172 + $0x638] sm:%s3165]
        %3969 = vst [vmem:[%s3173 + $0x634] sm:%s3165] %v3968
        %v3970 = vld [vmem:[%s3172 + $0x634] sm:%s3165]
        %3971 = vst [vmem:[%s3173 + $0x638] sm:%s3165] %v3970
        %v3972 = vld [vmem:[%s3172 + $0x63c] sm:%s3165]
        %3973 = vst [vmem:[%s3173 + $0x63c] sm:%s3165] %v3972
        %v3974 = vld [vmem:[%s3172 + $0x640] sm:%s3165]
        %3975 = vst [vmem:[%s3173 + $0x640] sm:%s3165] %v3974
        %v3976 = vld [vmem:[%s3172 + $0x648] sm:%s3165]
        %3977 = vst [vmem:[%s3173 + $0x644] sm:%s3165] %v3976
        %v3978 = vld [vmem:[%s3172 + $0x644] sm:%s3165]
        %3979 = vst [vmem:[%s3173 + $0x648] sm:%s3165] %v3978
        %v3980 = vld [vmem:[%s3172 + $0x64c] sm:%s3165]
        %3981 = vst [vmem:[%s3173 + $0x64c] sm:%s3165] %v3980
        %v3982 = vld [vmem:[%s3172 + $0x650] sm:%s3165]
        %3983 = vst [vmem:[%s3173 + $0x650] sm:%s3165] %v3982
        %v3984 = vld [vmem:[%s3172 + $0x658] sm:%s3165]
        %3985 = vst [vmem:[%s3173 + $0x654] sm:%s3165] %v3984
        %v3986 = vld [vmem:[%s3172 + $0x654] sm:%s3165]
        %3987 = vst [vmem:[%s3173 + $0x658] sm:%s3165] %v3986
        %v3988 = vld [vmem:[%s3172 + $0x65c] sm:%s3165]
        %3989 = vst [vmem:[%s3173 + $0x65c] sm:%s3165] %v3988
        %v3990 = vld [vmem:[%s3172 + $0x660] sm:%s3165]
        %3991 = vst [vmem:[%s3173 + $0x660] sm:%s3165] %v3990
        %v3992 = vld [vmem:[%s3172 + $0x668] sm:%s3165]
        %3993 = vst [vmem:[%s3173 + $0x664] sm:%s3165] %v3992
        %v3994 = vld [vmem:[%s3172 + $0x664] sm:%s3165]
        %3995 = vst [vmem:[%s3173 + $0x668] sm:%s3165] %v3994
        %v3996 = vld [vmem:[%s3172 + $0x66c] sm:%s3165]
        %3997 = vst [vmem:[%s3173 + $0x66c] sm:%s3165] %v3996
        %v3998 = vld [vmem:[%s3172 + $0x670] sm:%s3165]
        %3999 = vst [vmem:[%s3173 + $0x670] sm:%s3165] %v3998
        %v4000 = vld [vmem:[%s3172 + $0x678] sm:%s3165]
        %4001 = vst [vmem:[%s3173 + $0x674] sm:%s3165] %v4000
        %v4002 = vld [vmem:[%s3172 + $0x674] sm:%s3165]
        %4003 = vst [vmem:[%s3173 + $0x678] sm:%s3165] %v4002
        %v4004 = vld [vmem:[%s3172 + $0x67c] sm:%s3165]
        %4005 = vst [vmem:[%s3173 + $0x67c] sm:%s3165] %v4004
        %v4006 = vld [vmem:[%s3172 + $0x680] sm:%s3165]
        %4007 = vst [vmem:[%s3173 + $0x680] sm:%s3165] %v4006
        %v4008 = vld [vmem:[%s3172 + $0x688] sm:%s3165]
        %4009 = vst [vmem:[%s3173 + $0x684] sm:%s3165] %v4008
        %v4010 = vld [vmem:[%s3172 + $0x684] sm:%s3165]
        %4011 = vst [vmem:[%s3173 + $0x688] sm:%s3165] %v4010
        %v4012 = vld [vmem:[%s3172 + $0x68c] sm:%s3165]
        %4013 = vst [vmem:[%s3173 + $0x68c] sm:%s3165] %v4012
        %v4014 = vld [vmem:[%s3172 + $0x690] sm:%s3165]
        %4015 = vst [vmem:[%s3173 + $0x690] sm:%s3165] %v4014
        %v4016 = vld [vmem:[%s3172 + $0x698] sm:%s3165]
        %4017 = vst [vmem:[%s3173 + $0x694] sm:%s3165] %v4016
        %v4018 = vld [vmem:[%s3172 + $0x694] sm:%s3165]
        %4019 = vst [vmem:[%s3173 + $0x698] sm:%s3165] %v4018
        %v4020 = vld [vmem:[%s3172 + $0x69c] sm:%s3165]
        %4021 = vst [vmem:[%s3173 + $0x69c] sm:%s3165] %v4020
        %v4022 = vld [vmem:[%s3172 + $0x6a0] sm:%s3165]
        %4023 = vst [vmem:[%s3173 + $0x6a0] sm:%s3165] %v4022
        %v4024 = vld [vmem:[%s3172 + $0x6a8] sm:%s3165]
        %4025 = vst [vmem:[%s3173 + $0x6a4] sm:%s3165] %v4024
        %v4026 = vld [vmem:[%s3172 + $0x6a4] sm:%s3165]
        %4027 = vst [vmem:[%s3173 + $0x6a8] sm:%s3165] %v4026
        %v4028 = vld [vmem:[%s3172 + $0x6ac] sm:%s3165]
        %4029 = vst [vmem:[%s3173 + $0x6ac] sm:%s3165] %v4028
        %v4030 = vld [vmem:[%s3172 + $0x6b0] sm:%s3165]
        %4031 = vst [vmem:[%s3173 + $0x6b0] sm:%s3165] %v4030
        %v4032 = vld [vmem:[%s3172 + $0x6b8] sm:%s3165]
        %4033 = vst [vmem:[%s3173 + $0x6b4] sm:%s3165] %v4032
        %v4034 = vld [vmem:[%s3172 + $0x6b4] sm:%s3165]
        %4035 = vst [vmem:[%s3173 + $0x6b8] sm:%s3165] %v4034
        %v4036 = vld [vmem:[%s3172 + $0x6bc] sm:%s3165]
        %4037 = vst [vmem:[%s3173 + $0x6bc] sm:%s3165] %v4036
        %v4038 = vld [vmem:[%s3172 + $0x6c0] sm:%s3165]
        %4039 = vst [vmem:[%s3173 + $0x6c0] sm:%s3165] %v4038
        %v4040 = vld [vmem:[%s3172 + $0x6c8] sm:%s3165]
        %4041 = vst [vmem:[%s3173 + $0x6c4] sm:%s3165] %v4040
        %v4042 = vld [vmem:[%s3172 + $0x6c4] sm:%s3165]
        %4043 = vst [vmem:[%s3173 + $0x6c8] sm:%s3165] %v4042
        %v4044 = vld [vmem:[%s3172 + $0x6cc] sm:%s3165]
        %4045 = vst [vmem:[%s3173 + $0x6cc] sm:%s3165] %v4044
        %v4046 = vld [vmem:[%s3172 + $0x6d0] sm:%s3165]
        %4047 = vst [vmem:[%s3173 + $0x6d0] sm:%s3165] %v4046
        %v4048 = vld [vmem:[%s3172 + $0x6d8] sm:%s3165]
        %4049 = vst [vmem:[%s3173 + $0x6d4] sm:%s3165] %v4048
        %v4050 = vld [vmem:[%s3172 + $0x6d4] sm:%s3165]
        %4051 = vst [vmem:[%s3173 + $0x6d8] sm:%s3165] %v4050
        %v4052 = vld [vmem:[%s3172 + $0x6dc] sm:%s3165]
        %4053 = vst [vmem:[%s3173 + $0x6dc] sm:%s3165] %v4052
        %v4054 = vld [vmem:[%s3172 + $0x6e0] sm:%s3165]
        %4055 = vst [vmem:[%s3173 + $0x6e0] sm:%s3165] %v4054
        %v4056 = vld [vmem:[%s3172 + $0x6e8] sm:%s3165]
        %4057 = vst [vmem:[%s3173 + $0x6e4] sm:%s3165] %v4056
        %v4058 = vld [vmem:[%s3172 + $0x6e4] sm:%s3165]
        %4059 = vst [vmem:[%s3173 + $0x6e8] sm:%s3165] %v4058
        %v4060 = vld [vmem:[%s3172 + $0x6ec] sm:%s3165]
        %4061 = vst [vmem:[%s3173 + $0x6ec] sm:%s3165] %v4060
        %v4062 = vld [vmem:[%s3172 + $0x6f0] sm:%s3165]
        %4063 = vst [vmem:[%s3173 + $0x6f0] sm:%s3165] %v4062
        %v4064 = vld [vmem:[%s3172 + $0x6f8] sm:%s3165]
        %4065 = vst [vmem:[%s3173 + $0x6f4] sm:%s3165] %v4064
        %v4066 = vld [vmem:[%s3172 + $0x6f4] sm:%s3165]
        %4067 = vst [vmem:[%s3173 + $0x6f8] sm:%s3165] %v4066
        %v4068 = vld [vmem:[%s3172 + $0x6fc] sm:%s3165]
        %4069 = vst [vmem:[%s3173 + $0x6fc] sm:%s3165] %v4068
        %v4070 = vld [vmem:[%s3172 + $0x700] sm:%s3165]
        %4071 = vst [vmem:[%s3173 + $0x700] sm:%s3165] %v4070
        %v4072 = vld [vmem:[%s3172 + $0x708] sm:%s3165]
        %4073 = vst [vmem:[%s3173 + $0x704] sm:%s3165] %v4072
        %v4074 = vld [vmem:[%s3172 + $0x704] sm:%s3165]
        %4075 = vst [vmem:[%s3173 + $0x708] sm:%s3165] %v4074
        %v4076 = vld [vmem:[%s3172 + $0x70c] sm:%s3165]
        %4077 = vst [vmem:[%s3173 + $0x70c] sm:%s3165] %v4076
        %v4078 = vld [vmem:[%s3172 + $0x710] sm:%s3165]
        %4079 = vst [vmem:[%s3173 + $0x710] sm:%s3165] %v4078
        %v4080 = vld [vmem:[%s3172 + $0x718] sm:%s3165]
        %4081 = vst [vmem:[%s3173 + $0x714] sm:%s3165] %v4080
        %v4082 = vld [vmem:[%s3172 + $0x714] sm:%s3165]
        %4083 = vst [vmem:[%s3173 + $0x718] sm:%s3165] %v4082
        %v4084 = vld [vmem:[%s3172 + $0x71c] sm:%s3165]
        %4085 = vst [vmem:[%s3173 + $0x71c] sm:%s3165] %v4084
        %v4086 = vld [vmem:[%s3172 + $0x720] sm:%s3165]
        %4087 = vst [vmem:[%s3173 + $0x720] sm:%s3165] %v4086
        %v4088 = vld [vmem:[%s3172 + $0x728] sm:%s3165]
        %4089 = vst [vmem:[%s3173 + $0x724] sm:%s3165] %v4088
        %v4090 = vld [vmem:[%s3172 + $0x724] sm:%s3165]
        %4091 = vst [vmem:[%s3173 + $0x728] sm:%s3165] %v4090
        %v4092 = vld [vmem:[%s3172 + $0x72c] sm:%s3165]
        %4093 = vst [vmem:[%s3173 + $0x72c] sm:%s3165] %v4092
        %v4094 = vld [vmem:[%s3172 + $0x730] sm:%s3165]
        %4095 = vst [vmem:[%s3173 + $0x730] sm:%s3165] %v4094
        %v4096 = vld [vmem:[%s3172 + $0x738] sm:%s3165]
        %4097 = vst [vmem:[%s3173 + $0x734] sm:%s3165] %v4096
        %v4098 = vld [vmem:[%s3172 + $0x734] sm:%s3165]
        %4099 = vst [vmem:[%s3173 + $0x738] sm:%s3165] %v4098
        %v4100 = vld [vmem:[%s3172 + $0x73c] sm:%s3165]
        %4101 = vst [vmem:[%s3173 + $0x73c] sm:%s3165] %v4100
        %v4102 = vld [vmem:[%s3172 + $0x740] sm:%s3165]
        %4103 = vst [vmem:[%s3173 + $0x740] sm:%s3165] %v4102
        %v4104 = vld [vmem:[%s3172 + $0x748] sm:%s3165]
        %4105 = vst [vmem:[%s3173 + $0x744] sm:%s3165] %v4104
        %v4106 = vld [vmem:[%s3172 + $0x744] sm:%s3165]
        %4107 = vst [vmem:[%s3173 + $0x748] sm:%s3165] %v4106
        %v4108 = vld [vmem:[%s3172 + $0x74c] sm:%s3165]
        %4109 = vst [vmem:[%s3173 + $0x74c] sm:%s3165] %v4108
        %v4110 = vld [vmem:[%s3172 + $0x750] sm:%s3165]
        %4111 = vst [vmem:[%s3173 + $0x750] sm:%s3165] %v4110
        %v4112 = vld [vmem:[%s3172 + $0x758] sm:%s3165]
        %4113 = vst [vmem:[%s3173 + $0x754] sm:%s3165] %v4112
        %v4114 = vld [vmem:[%s3172 + $0x754] sm:%s3165]
        %4115 = vst [vmem:[%s3173 + $0x758] sm:%s3165] %v4114
        %v4116 = vld [vmem:[%s3172 + $0x75c] sm:%s3165]
        %4117 = vst [vmem:[%s3173 + $0x75c] sm:%s3165] %v4116
        %v4118 = vld [vmem:[%s3172 + $0x760] sm:%s3165]
        %4119 = vst [vmem:[%s3173 + $0x760] sm:%s3165] %v4118
        %v4120 = vld [vmem:[%s3172 + $0x768] sm:%s3165]
        %4121 = vst [vmem:[%s3173 + $0x764] sm:%s3165] %v4120
        %v4122 = vld [vmem:[%s3172 + $0x764] sm:%s3165]
        %4123 = vst [vmem:[%s3173 + $0x768] sm:%s3165] %v4122
        %v4124 = vld [vmem:[%s3172 + $0x76c] sm:%s3165]
        %4125 = vst [vmem:[%s3173 + $0x76c] sm:%s3165] %v4124
        %v4126 = vld [vmem:[%s3172 + $0x770] sm:%s3165]
        %4127 = vst [vmem:[%s3173 + $0x770] sm:%s3165] %v4126
        %v4128 = vld [vmem:[%s3172 + $0x778] sm:%s3165]
        %4129 = vst [vmem:[%s3173 + $0x774] sm:%s3165] %v4128
        %v4130 = vld [vmem:[%s3172 + $0x774] sm:%s3165]
        %4131 = vst [vmem:[%s3173 + $0x778] sm:%s3165] %v4130
        %v4132 = vld [vmem:[%s3172 + $0x77c] sm:%s3165]
        %4133 = vst [vmem:[%s3173 + $0x77c] sm:%s3165] %v4132
        %v4134 = vld [vmem:[%s3172 + $0x780] sm:%s3165]
        %4135 = vst [vmem:[%s3173 + $0x780] sm:%s3165] %v4134
        %v4136 = vld [vmem:[%s3172 + $0x788] sm:%s3165]
        %4137 = vst [vmem:[%s3173 + $0x784] sm:%s3165] %v4136
        %v4138 = vld [vmem:[%s3172 + $0x784] sm:%s3165]
        %4139 = vst [vmem:[%s3173 + $0x788] sm:%s3165] %v4138
        %v4140 = vld [vmem:[%s3172 + $0x78c] sm:%s3165]
        %4141 = vst [vmem:[%s3173 + $0x78c] sm:%s3165] %v4140
        %v4142 = vld [vmem:[%s3172 + $0x790] sm:%s3165]
        %4143 = vst [vmem:[%s3173 + $0x790] sm:%s3165] %v4142
        %v4144 = vld [vmem:[%s3172 + $0x798] sm:%s3165]
        %4145 = vst [vmem:[%s3173 + $0x794] sm:%s3165] %v4144
        %v4146 = vld [vmem:[%s3172 + $0x794] sm:%s3165]
        %4147 = vst [vmem:[%s3173 + $0x798] sm:%s3165] %v4146
        %v4148 = vld [vmem:[%s3172 + $0x79c] sm:%s3165]
        %4149 = vst [vmem:[%s3173 + $0x79c] sm:%s3165] %v4148
        %v4150 = vld [vmem:[%s3172 + $0x7a0] sm:%s3165]
        %4151 = vst [vmem:[%s3173 + $0x7a0] sm:%s3165] %v4150
        %v4152 = vld [vmem:[%s3172 + $0x7a8] sm:%s3165]
        %4153 = vst [vmem:[%s3173 + $0x7a4] sm:%s3165] %v4152
        %v4154 = vld [vmem:[%s3172 + $0x7a4] sm:%s3165]
        %4155 = vst [vmem:[%s3173 + $0x7a8] sm:%s3165] %v4154
        %v4156 = vld [vmem:[%s3172 + $0x7ac] sm:%s3165]
        %4157 = vst [vmem:[%s3173 + $0x7ac] sm:%s3165] %v4156
        %v4158 = vld [vmem:[%s3172 + $0x7b0] sm:%s3165]
        %4159 = vst [vmem:[%s3173 + $0x7b0] sm:%s3165] %v4158
        %v4160 = vld [vmem:[%s3172 + $0x7b8] sm:%s3165]
        %4161 = vst [vmem:[%s3173 + $0x7b4] sm:%s3165] %v4160
        %v4162 = vld [vmem:[%s3172 + $0x7b4] sm:%s3165]
        %4163 = vst [vmem:[%s3173 + $0x7b8] sm:%s3165] %v4162
        %v4164 = vld [vmem:[%s3172 + $0x7bc] sm:%s3165]
        %4165 = vst [vmem:[%s3173 + $0x7bc] sm:%s3165] %v4164
        %v4166 = vld [vmem:[%s3172 + $0x7c0] sm:%s3165]
        %4167 = vst [vmem:[%s3173 + $0x7c0] sm:%s3165] %v4166
        %v4168 = vld [vmem:[%s3172 + $0x7c8] sm:%s3165]
        %4169 = vst [vmem:[%s3173 + $0x7c4] sm:%s3165] %v4168
        %v4170 = vld [vmem:[%s3172 + $0x7c4] sm:%s3165]
        %4171 = vst [vmem:[%s3173 + $0x7c8] sm:%s3165] %v4170
        %v4172 = vld [vmem:[%s3172 + $0x7cc] sm:%s3165]
        %4173 = vst [vmem:[%s3173 + $0x7cc] sm:%s3165] %v4172
        %v4174 = vld [vmem:[%s3172 + $0x7d0] sm:%s3165]
        %4175 = vst [vmem:[%s3173 + $0x7d0] sm:%s3165] %v4174
        %v4176 = vld [vmem:[%s3172 + $0x7d8] sm:%s3165]
        %4177 = vst [vmem:[%s3173 + $0x7d4] sm:%s3165] %v4176
        %v4178 = vld [vmem:[%s3172 + $0x7d4] sm:%s3165]
        %4179 = vst [vmem:[%s3173 + $0x7d8] sm:%s3165] %v4178
        %v4180 = vld [vmem:[%s3172 + $0x7dc] sm:%s3165]
        %4181 = vst [vmem:[%s3173 + $0x7dc] sm:%s3165] %v4180
        %v4182 = vld [vmem:[%s3172 + $0x7e0] sm:%s3165]
        %4183 = vst [vmem:[%s3173 + $0x7e0] sm:%s3165] %v4182
        %v4184 = vld [vmem:[%s3172 + $0x7e8] sm:%s3165]
        %4185 = vst [vmem:[%s3173 + $0x7e4] sm:%s3165] %v4184
        %v4186 = vld [vmem:[%s3172 + $0x7e4] sm:%s3165]
        %4187 = vst [vmem:[%s3173 + $0x7e8] sm:%s3165] %v4186
        %v4188 = vld [vmem:[%s3172 + $0x7ec] sm:%s3165]
        %4189 = vst [vmem:[%s3173 + $0x7ec] sm:%s3165] %v4188
        %v4190 = vld [vmem:[%s3172 + $0x7f0] sm:%s3165]
        %4191 = vst [vmem:[%s3173 + $0x7f0] sm:%s3165] %v4190
        %v4192 = vld [vmem:[%s3172 + $0x7f8] sm:%s3165]
        %4193 = vst [vmem:[%s3173 + $0x7f4] sm:%s3165] %v4192
        %v4194 = vld [vmem:[%s3172 + $0x7f4] sm:%s3165]
        %4195 = vst [vmem:[%s3173 + $0x7f8] sm:%s3165] %v4194
        %v4196 = vld [vmem:[%s3172 + $0x7fc] sm:%s3165]
        %4197 = vst [vmem:[%s3173 + $0x7fc] sm:%s3165] %v4196
      $region67: #{breakout_a2c_forward.1} parent=54 // loop_footer
        %s3171 = sadd.s32 1, %s3167
      $region68: #{breakout_a2c_forward.1} parent=54 // loop_footer_branch
        %3166 = sbr.rel target = $region64
      $region69: #{breakout_a2c_forward.1} parent=54 // loop_exit
        _
    $region55: #{breakout_a2c_forward.1} parent=28 // pred_fallthru
      _
  $region29: #{breakout_a2c_forward.1} parent=0 // pred_fallthru
    _
  // Predicated region
  $region30: #{breakout_a2c_forward.1} parent=0 // pred_check
    %p30 = pneg %p26
  $region31: #{breakout_a2c_forward.1} parent=0 // pred_check_branch
    %32 = sbr.rel (%p30) target = $region33
  $region32: #{breakout_a2c_forward.1} parent=0 // pred_region
    %s33 = sshllo.u32 0, 4
    loop: start=0, step=1, limit=1
    $region34: #{breakout_a2c_forward.1} parent=32 // loop_pre_header
      _
    $region35: #{breakout_a2c_forward.1} parent=32 // loop_header
      %s35 = sphi 0, %s39
      %p36 = scmp.ge.s32.totalorder %s35, 1
      %s40 = sphi %s6, %s6
      %s41 = sphi [#allocation2], [#allocation2]
    $region36: #{breakout_a2c_forward.1} parent=32 // loop_header_branch
      %38 = sbr.rel (%p36) target = $region40
    $region37: #{breakout_a2c_forward.1} parent=32 // loop_body
      %v42 = vld [vmem:[%s40] sm:%s33]
      %43 = vst [vmem:[%s41] sm:%s33] %v42
      %v44 = vld [vmem:[%s40 + $0x8] sm:%s33]
      %45 = vst [vmem:[%s41 + $0x4] sm:%s33] %v44
      %v46 = vld [vmem:[%s40 + $0x4] sm:%s33]
      %47 = vst [vmem:[%s41 + $0x8] sm:%s33] %v46
      %v48 = vld [vmem:[%s40 + $0xc] sm:%s33]
      %49 = vst [vmem:[%s41 + $0xc] sm:%s33] %v48
      %v50 = vld [vmem:[%s40 + $0x10] sm:%s33]
      %51 = vst [vmem:[%s41 + $0x10] sm:%s33] %v50
      %v52 = vld [vmem:[%s40 + $0x18] sm:%s33]
      %53 = vst [vmem:[%s41 + $0x14] sm:%s33] %v52
      %v54 = vld [vmem:[%s40 + $0x14] sm:%s33]
      %55 = vst [vmem:[%s41 + $0x18] sm:%s33] %v54
      %v56 = vld [vmem:[%s40 + $0x1c] sm:%s33]
      %57 = vst [vmem:[%s41 + $0x1c] sm:%s33] %v56
      %v58 = vld [vmem:[%s40 + $0x20] sm:%s33]
      %59 = vst [vmem:[%s41 + $0x20] sm:%s33] %v58
      %v60 = vld [vmem:[%s40 + $0x28] sm:%s33]
      %61 = vst [vmem:[%s41 + $0x24] sm:%s33] %v60
      %v62 = vld [vmem:[%s40 + $0x24] sm:%s33]
      %63 = vst [vmem:[%s41 + $0x28] sm:%s33] %v62
      %v64 = vld [vmem:[%s40 + $0x2c] sm:%s33]
      %65 = vst [vmem:[%s41 + $0x2c] sm:%s33] %v64
      %v66 = vld [vmem:[%s40 + $0x30] sm:%s33]
      %67 = vst [vmem:[%s41 + $0x30] sm:%s33] %v66
      %v68 = vld [vmem:[%s40 + $0x38] sm:%s33]
      %69 = vst [vmem:[%s41 + $0x34] sm:%s33] %v68
      %v70 = vld [vmem:[%s40 + $0x34] sm:%s33]
      %71 = vst [vmem:[%s41 + $0x38] sm:%s33] %v70
      %v72 = vld [vmem:[%s40 + $0x3c] sm:%s33]
      %73 = vst [vmem:[%s41 + $0x3c] sm:%s33] %v72
      %v74 = vld [vmem:[%s40 + $0x40] sm:%s33]
      %75 = vst [vmem:[%s41 + $0x40] sm:%s33] %v74
      %v76 = vld [vmem:[%s40 + $0x48] sm:%s33]
      %77 = vst [vmem:[%s41 + $0x44] sm:%s33] %v76
      %v78 = vld [vmem:[%s40 + $0x44] sm:%s33]
      %79 = vst [vmem:[%s41 + $0x48] sm:%s33] %v78
      %v80 = vld [vmem:[%s40 + $0x4c] sm:%s33]
      %81 = vst [vmem:[%s41 + $0x4c] sm:%s33] %v80
      %v82 = vld [vmem:[%s40 + $0x50] sm:%s33]
      %83 = vst [vmem:[%s41 + $0x50] sm:%s33] %v82
      %v84 = vld [vmem:[%s40 + $0x58] sm:%s33]
      %85 = vst [vmem:[%s41 + $0x54] sm:%s33] %v84
      %v86 = vld [vmem:[%s40 + $0x54] sm:%s33]
      %87 = vst [vmem:[%s41 + $0x58] sm:%s33] %v86
      %v88 = vld [vmem:[%s40 + $0x5c] sm:%s33]
      %89 = vst [vmem:[%s41 + $0x5c] sm:%s33] %v88
      %v90 = vld [vmem:[%s40 + $0x60] sm:%s33]
      %91 = vst [vmem:[%s41 + $0x60] sm:%s33] %v90
      %v92 = vld [vmem:[%s40 + $0x68] sm:%s33]
      %93 = vst [vmem:[%s41 + $0x64] sm:%s33] %v92
      %v94 = vld [vmem:[%s40 + $0x64] sm:%s33]
      %95 = vst [vmem:[%s41 + $0x68] sm:%s33] %v94
      %v96 = vld [vmem:[%s40 + $0x6c] sm:%s33]
      %97 = vst [vmem:[%s41 + $0x6c] sm:%s33] %v96
      %v98 = vld [vmem:[%s40 + $0x70] sm:%s33]
      %99 = vst [vmem:[%s41 + $0x70] sm:%s33] %v98
      %v100 = vld [vmem:[%s40 + $0x78] sm:%s33]
      %101 = vst [vmem:[%s41 + $0x74] sm:%s33] %v100
      %v102 = vld [vmem:[%s40 + $0x74] sm:%s33]
      %103 = vst [vmem:[%s41 + $0x78] sm:%s33] %v102
      %v104 = vld [vmem:[%s40 + $0x7c] sm:%s33]
      %105 = vst [vmem:[%s41 + $0x7c] sm:%s33] %v104
      %v106 = vld [vmem:[%s40 + $0x80] sm:%s33]
      %107 = vst [vmem:[%s41 + $0x80] sm:%s33] %v106
      %v108 = vld [vmem:[%s40 + $0x88] sm:%s33]
      %109 = vst [vmem:[%s41 + $0x84] sm:%s33] %v108
      %v110 = vld [vmem:[%s40 + $0x84] sm:%s33]
      %111 = vst [vmem:[%s41 + $0x88] sm:%s33] %v110
      %v112 = vld [vmem:[%s40 + $0x8c] sm:%s33]
      %113 = vst [vmem:[%s41 + $0x8c] sm:%s33] %v112
      %v114 = vld [vmem:[%s40 + $0x90] sm:%s33]
      %115 = vst [vmem:[%s41 + $0x90] sm:%s33] %v114
      %v116 = vld [vmem:[%s40 + $0x98] sm:%s33]
      %117 = vst [vmem:[%s41 + $0x94] sm:%s33] %v116
      %v118 = vld [vmem:[%s40 + $0x94] sm:%s33]
      %119 = vst [vmem:[%s41 + $0x98] sm:%s33] %v118
      %v120 = vld [vmem:[%s40 + $0x9c] sm:%s33]
      %121 = vst [vmem:[%s41 + $0x9c] sm:%s33] %v120
      %v122 = vld [vmem:[%s40 + $0xa0] sm:%s33]
      %123 = vst [vmem:[%s41 + $0xa0] sm:%s33] %v122
      %v124 = vld [vmem:[%s40 + $0xa8] sm:%s33]
      %125 = vst [vmem:[%s41 + $0xa4] sm:%s33] %v124
      %v126 = vld [vmem:[%s40 + $0xa4] sm:%s33]
      %127 = vst [vmem:[%s41 + $0xa8] sm:%s33] %v126
      %v128 = vld [vmem:[%s40 + $0xac] sm:%s33]
      %129 = vst [vmem:[%s41 + $0xac] sm:%s33] %v128
      %v130 = vld [vmem:[%s40 + $0xb0] sm:%s33]
      %131 = vst [vmem:[%s41 + $0xb0] sm:%s33] %v130
      %v132 = vld [vmem:[%s40 + $0xb8] sm:%s33]
      %133 = vst [vmem:[%s41 + $0xb4] sm:%s33] %v132
      %v134 = vld [vmem:[%s40 + $0xb4] sm:%s33]
      %135 = vst [vmem:[%s41 + $0xb8] sm:%s33] %v134
      %v136 = vld [vmem:[%s40 + $0xbc] sm:%s33]
      %137 = vst [vmem:[%s41 + $0xbc] sm:%s33] %v136
      %v138 = vld [vmem:[%s40 + $0xc0] sm:%s33]
      %139 = vst [vmem:[%s41 + $0xc0] sm:%s33] %v138
      %v140 = vld [vmem:[%s40 + $0xc8] sm:%s33]
      %141 = vst [vmem:[%s41 + $0xc4] sm:%s33] %v140
      %v142 = vld [vmem:[%s40 + $0xc4] sm:%s33]
      %143 = vst [vmem:[%s41 + $0xc8] sm:%s33] %v142
      %v144 = vld [vmem:[%s40 + $0xcc] sm:%s33]
      %145 = vst [vmem:[%s41 + $0xcc] sm:%s33] %v144
      %v146 = vld [vmem:[%s40 + $0xd0] sm:%s33]
      %147 = vst [vmem:[%s41 + $0xd0] sm:%s33] %v146
      %v148 = vld [vmem:[%s40 + $0xd8] sm:%s33]
      %149 = vst [vmem:[%s41 + $0xd4] sm:%s33] %v148
      %v150 = vld [vmem:[%s40 + $0xd4] sm:%s33]
      %151 = vst [vmem:[%s41 + $0xd8] sm:%s33] %v150
      %v152 = vld [vmem:[%s40 + $0xdc] sm:%s33]
      %153 = vst [vmem:[%s41 + $0xdc] sm:%s33] %v152
      %v154 = vld [vmem:[%s40 + $0xe0] sm:%s33]
      %155 = vst [vmem:[%s41 + $0xe0] sm:%s33] %v154
      %v156 = vld [vmem:[%s40 + $0xe8] sm:%s33]
      %157 = vst [vmem:[%s41 + $0xe4] sm:%s33] %v156
      %v158 = vld [vmem:[%s40 + $0xe4] sm:%s33]
      %159 = vst [vmem:[%s41 + $0xe8] sm:%s33] %v158
      %v160 = vld [vmem:[%s40 + $0xec] sm:%s33]
      %161 = vst [vmem:[%s41 + $0xec] sm:%s33] %v160
      %v162 = vld [vmem:[%s40 + $0xf0] sm:%s33]
      %163 = vst [vmem:[%s41 + $0xf0] sm:%s33] %v162
      %v164 = vld [vmem:[%s40 + $0xf8] sm:%s33]
      %165 = vst [vmem:[%s41 + $0xf4] sm:%s33] %v164
      %v166 = vld [vmem:[%s40 + $0xf4] sm:%s33]
      %167 = vst [vmem:[%s41 + $0xf8] sm:%s33] %v166
      %v168 = vld [vmem:[%s40 + $0xfc] sm:%s33]
      %169 = vst [vmem:[%s41 + $0xfc] sm:%s33] %v168
      %v170 = vld [vmem:[%s40 + $0x100] sm:%s33]
      %171 = vst [vmem:[%s41 + $0x100] sm:%s33] %v170
      %v172 = vld [vmem:[%s40 + $0x108] sm:%s33]
      %173 = vst [vmem:[%s41 + $0x104] sm:%s33] %v172
      %v174 = vld [vmem:[%s40 + $0x104] sm:%s33]
      %175 = vst [vmem:[%s41 + $0x108] sm:%s33] %v174
      %v176 = vld [vmem:[%s40 + $0x10c] sm:%s33]
      %177 = vst [vmem:[%s41 + $0x10c] sm:%s33] %v176
      %v178 = vld [vmem:[%s40 + $0x110] sm:%s33]
      %179 = vst [vmem:[%s41 + $0x110] sm:%s33] %v178
      %v180 = vld [vmem:[%s40 + $0x118] sm:%s33]
      %181 = vst [vmem:[%s41 + $0x114] sm:%s33] %v180
      %v182 = vld [vmem:[%s40 + $0x114] sm:%s33]
      %183 = vst [vmem:[%s41 + $0x118] sm:%s33] %v182
      %v184 = vld [vmem:[%s40 + $0x11c] sm:%s33]
      %185 = vst [vmem:[%s41 + $0x11c] sm:%s33] %v184
      %v186 = vld [vmem:[%s40 + $0x120] sm:%s33]
      %187 = vst [vmem:[%s41 + $0x120] sm:%s33] %v186
      %v188 = vld [vmem:[%s40 + $0x128] sm:%s33]
      %189 = vst [vmem:[%s41 + $0x124] sm:%s33] %v188
      %v190 = vld [vmem:[%s40 + $0x124] sm:%s33]
      %191 = vst [vmem:[%s41 + $0x128] sm:%s33] %v190
      %v192 = vld [vmem:[%s40 + $0x12c] sm:%s33]
      %193 = vst [vmem:[%s41 + $0x12c] sm:%s33] %v192
      %v194 = vld [vmem:[%s40 + $0x130] sm:%s33]
      %195 = vst [vmem:[%s41 + $0x130] sm:%s33] %v194
      %v196 = vld [vmem:[%s40 + $0x138] sm:%s33]
      %197 = vst [vmem:[%s41 + $0x134] sm:%s33] %v196
      %v198 = vld [vmem:[%s40 + $0x134] sm:%s33]
      %199 = vst [vmem:[%s41 + $0x138] sm:%s33] %v198
      %v200 = vld [vmem:[%s40 + $0x13c] sm:%s33]
      %201 = vst [vmem:[%s41 + $0x13c] sm:%s33] %v200
      %v202 = vld [vmem:[%s40 + $0x140] sm:%s33]
      %203 = vst [vmem:[%s41 + $0x140] sm:%s33] %v202
      %v204 = vld [vmem:[%s40 + $0x148] sm:%s33]
      %205 = vst [vmem:[%s41 + $0x144] sm:%s33] %v204
      %v206 = vld [vmem:[%s40 + $0x144] sm:%s33]
      %207 = vst [vmem:[%s41 + $0x148] sm:%s33] %v206
      %v208 = vld [vmem:[%s40 + $0x14c] sm:%s33]
      %209 = vst [vmem:[%s41 + $0x14c] sm:%s33] %v208
      %v210 = vld [vmem:[%s40 + $0x150] sm:%s33]
      %211 = vst [vmem:[%s41 + $0x150] sm:%s33] %v210
      %v212 = vld [vmem:[%s40 + $0x158] sm:%s33]
      %213 = vst [vmem:[%s41 + $0x154] sm:%s33] %v212
      %v214 = vld [vmem:[%s40 + $0x154] sm:%s33]
      %215 = vst [vmem:[%s41 + $0x158] sm:%s33] %v214
      %v216 = vld [vmem:[%s40 + $0x15c] sm:%s33]
      %217 = vst [vmem:[%s41 + $0x15c] sm:%s33] %v216
      %v218 = vld [vmem:[%s40 + $0x160] sm:%s33]
      %219 = vst [vmem:[%s41 + $0x160] sm:%s33] %v218
      %v220 = vld [vmem:[%s40 + $0x168] sm:%s33]
      %221 = vst [vmem:[%s41 + $0x164] sm:%s33] %v220
      %v222 = vld [vmem:[%s40 + $0x164] sm:%s33]
      %223 = vst [vmem:[%s41 + $0x168] sm:%s33] %v222
      %v224 = vld [vmem:[%s40 + $0x16c] sm:%s33]
      %225 = vst [vmem:[%s41 + $0x16c] sm:%s33] %v224
      %v226 = vld [vmem:[%s40 + $0x170] sm:%s33]
      %227 = vst [vmem:[%s41 + $0x170] sm:%s33] %v226
      %v228 = vld [vmem:[%s40 + $0x178] sm:%s33]
      %229 = vst [vmem:[%s41 + $0x174] sm:%s33] %v228
      %v230 = vld [vmem:[%s40 + $0x174] sm:%s33]
      %231 = vst [vmem:[%s41 + $0x178] sm:%s33] %v230
      %v232 = vld [vmem:[%s40 + $0x17c] sm:%s33]
      %233 = vst [vmem:[%s41 + $0x17c] sm:%s33] %v232
      %v234 = vld [vmem:[%s40 + $0x180] sm:%s33]
      %235 = vst [vmem:[%s41 + $0x180] sm:%s33] %v234
      %v236 = vld [vmem:[%s40 + $0x188] sm:%s33]
      %237 = vst [vmem:[%s41 + $0x184] sm:%s33] %v236
      %v238 = vld [vmem:[%s40 + $0x184] sm:%s33]
      %239 = vst [vmem:[%s41 + $0x188] sm:%s33] %v238
      %v240 = vld [vmem:[%s40 + $0x18c] sm:%s33]
      %241 = vst [vmem:[%s41 + $0x18c] sm:%s33] %v240
      %v242 = vld [vmem:[%s40 + $0x190] sm:%s33]
      %243 = vst [vmem:[%s41 + $0x190] sm:%s33] %v242
      %v244 = vld [vmem:[%s40 + $0x198] sm:%s33]
      %245 = vst [vmem:[%s41 + $0x194] sm:%s33] %v244
      %v246 = vld [vmem:[%s40 + $0x194] sm:%s33]
      %247 = vst [vmem:[%s41 + $0x198] sm:%s33] %v246
      %v248 = vld [vmem:[%s40 + $0x19c] sm:%s33]
      %249 = vst [vmem:[%s41 + $0x19c] sm:%s33] %v248
      %v250 = vld [vmem:[%s40 + $0x1a0] sm:%s33]
      %251 = vst [vmem:[%s41 + $0x1a0] sm:%s33] %v250
      %v252 = vld [vmem:[%s40 + $0x1a8] sm:%s33]
      %253 = vst [vmem:[%s41 + $0x1a4] sm:%s33] %v252
      %v254 = vld [vmem:[%s40 + $0x1a4] sm:%s33]
      %255 = vst [vmem:[%s41 + $0x1a8] sm:%s33] %v254
      %v256 = vld [vmem:[%s40 + $0x1ac] sm:%s33]
      %257 = vst [vmem:[%s41 + $0x1ac] sm:%s33] %v256
      %v258 = vld [vmem:[%s40 + $0x1b0] sm:%s33]
      %259 = vst [vmem:[%s41 + $0x1b0] sm:%s33] %v258
      %v260 = vld [vmem:[%s40 + $0x1b8] sm:%s33]
      %261 = vst [vmem:[%s41 + $0x1b4] sm:%s33] %v260
      %v262 = vld [vmem:[%s40 + $0x1b4] sm:%s33]
      %263 = vst [vmem:[%s41 + $0x1b8] sm:%s33] %v262
      %v264 = vld [vmem:[%s40 + $0x1bc] sm:%s33]
      %265 = vst [vmem:[%s41 + $0x1bc] sm:%s33] %v264
      %v266 = vld [vmem:[%s40 + $0x1c0] sm:%s33]
      %267 = vst [vmem:[%s41 + $0x1c0] sm:%s33] %v266
      %v268 = vld [vmem:[%s40 + $0x1c8] sm:%s33]
      %269 = vst [vmem:[%s41 + $0x1c4] sm:%s33] %v268
      %v270 = vld [vmem:[%s40 + $0x1c4] sm:%s33]
      %271 = vst [vmem:[%s41 + $0x1c8] sm:%s33] %v270
      %v272 = vld [vmem:[%s40 + $0x1cc] sm:%s33]
      %273 = vst [vmem:[%s41 + $0x1cc] sm:%s33] %v272
      %v274 = vld [vmem:[%s40 + $0x1d0] sm:%s33]
      %275 = vst [vmem:[%s41 + $0x1d0] sm:%s33] %v274
      %v276 = vld [vmem:[%s40 + $0x1d8] sm:%s33]
      %277 = vst [vmem:[%s41 + $0x1d4] sm:%s33] %v276
      %v278 = vld [vmem:[%s40 + $0x1d4] sm:%s33]
      %279 = vst [vmem:[%s41 + $0x1d8] sm:%s33] %v278
      %v280 = vld [vmem:[%s40 + $0x1dc] sm:%s33]
      %281 = vst [vmem:[%s41 + $0x1dc] sm:%s33] %v280
      %v282 = vld [vmem:[%s40 + $0x1e0] sm:%s33]
      %283 = vst [vmem:[%s41 + $0x1e0] sm:%s33] %v282
      %v284 = vld [vmem:[%s40 + $0x1e8] sm:%s33]
      %285 = vst [vmem:[%s41 + $0x1e4] sm:%s33] %v284
      %v286 = vld [vmem:[%s40 + $0x1e4] sm:%s33]
      %287 = vst [vmem:[%s41 + $0x1e8] sm:%s33] %v286
      %v288 = vld [vmem:[%s40 + $0x1ec] sm:%s33]
      %289 = vst [vmem:[%s41 + $0x1ec] sm:%s33] %v288
      %v290 = vld [vmem:[%s40 + $0x1f0] sm:%s33]
      %291 = vst [vmem:[%s41 + $0x1f0] sm:%s33] %v290
      %v292 = vld [vmem:[%s40 + $0x1f8] sm:%s33]
      %293 = vst [vmem:[%s41 + $0x1f4] sm:%s33] %v292
      %v294 = vld [vmem:[%s40 + $0x1f4] sm:%s33]
      %295 = vst [vmem:[%s41 + $0x1f8] sm:%s33] %v294
      %v296 = vld [vmem:[%s40 + $0x1fc] sm:%s33]
      %297 = vst [vmem:[%s41 + $0x1fc] sm:%s33] %v296
      %v298 = vld [vmem:[%s40 + $0x200] sm:%s33]
      %299 = vst [vmem:[%s41 + $0x200] sm:%s33] %v298
      %v300 = vld [vmem:[%s40 + $0x208] sm:%s33]
      %301 = vst [vmem:[%s41 + $0x204] sm:%s33] %v300
      %v302 = vld [vmem:[%s40 + $0x204] sm:%s33]
      %303 = vst [vmem:[%s41 + $0x208] sm:%s33] %v302
      %v304 = vld [vmem:[%s40 + $0x20c] sm:%s33]
      %305 = vst [vmem:[%s41 + $0x20c] sm:%s33] %v304
      %v306 = vld [vmem:[%s40 + $0x210] sm:%s33]
      %307 = vst [vmem:[%s41 + $0x210] sm:%s33] %v306
      %v308 = vld [vmem:[%s40 + $0x218] sm:%s33]
      %309 = vst [vmem:[%s41 + $0x214] sm:%s33] %v308
      %v310 = vld [vmem:[%s40 + $0x214] sm:%s33]
      %311 = vst [vmem:[%s41 + $0x218] sm:%s33] %v310
      %v312 = vld [vmem:[%s40 + $0x21c] sm:%s33]
      %313 = vst [vmem:[%s41 + $0x21c] sm:%s33] %v312
      %v314 = vld [vmem:[%s40 + $0x220] sm:%s33]
      %315 = vst [vmem:[%s41 + $0x220] sm:%s33] %v314
      %v316 = vld [vmem:[%s40 + $0x228] sm:%s33]
      %317 = vst [vmem:[%s41 + $0x224] sm:%s33] %v316
      %v318 = vld [vmem:[%s40 + $0x224] sm:%s33]
      %319 = vst [vmem:[%s41 + $0x228] sm:%s33] %v318
      %v320 = vld [vmem:[%s40 + $0x22c] sm:%s33]
      %321 = vst [vmem:[%s41 + $0x22c] sm:%s33] %v320
      %v322 = vld [vmem:[%s40 + $0x230] sm:%s33]
      %323 = vst [vmem:[%s41 + $0x230] sm:%s33] %v322
      %v324 = vld [vmem:[%s40 + $0x238] sm:%s33]
      %325 = vst [vmem:[%s41 + $0x234] sm:%s33] %v324
      %v326 = vld [vmem:[%s40 + $0x234] sm:%s33]
      %327 = vst [vmem:[%s41 + $0x238] sm:%s33] %v326
      %v328 = vld [vmem:[%s40 + $0x23c] sm:%s33]
      %329 = vst [vmem:[%s41 + $0x23c] sm:%s33] %v328
      %v330 = vld [vmem:[%s40 + $0x240] sm:%s33]
      %331 = vst [vmem:[%s41 + $0x240] sm:%s33] %v330
      %v332 = vld [vmem:[%s40 + $0x248] sm:%s33]
      %333 = vst [vmem:[%s41 + $0x244] sm:%s33] %v332
      %v334 = vld [vmem:[%s40 + $0x244] sm:%s33]
      %335 = vst [vmem:[%s41 + $0x248] sm:%s33] %v334
      %v336 = vld [vmem:[%s40 + $0x24c] sm:%s33]
      %337 = vst [vmem:[%s41 + $0x24c] sm:%s33] %v336
      %v338 = vld [vmem:[%s40 + $0x250] sm:%s33]
      %339 = vst [vmem:[%s41 + $0x250] sm:%s33] %v338
      %v340 = vld [vmem:[%s40 + $0x258] sm:%s33]
      %341 = vst [vmem:[%s41 + $0x254] sm:%s33] %v340
      %v342 = vld [vmem:[%s40 + $0x254] sm:%s33]
      %343 = vst [vmem:[%s41 + $0x258] sm:%s33] %v342
      %v344 = vld [vmem:[%s40 + $0x25c] sm:%s33]
      %345 = vst [vmem:[%s41 + $0x25c] sm:%s33] %v344
      %v346 = vld [vmem:[%s40 + $0x260] sm:%s33]
      %347 = vst [vmem:[%s41 + $0x260] sm:%s33] %v346
      %v348 = vld [vmem:[%s40 + $0x268] sm:%s33]
      %349 = vst [vmem:[%s41 + $0x264] sm:%s33] %v348
      %v350 = vld [vmem:[%s40 + $0x264] sm:%s33]
      %351 = vst [vmem:[%s41 + $0x268] sm:%s33] %v350
      %v352 = vld [vmem:[%s40 + $0x26c] sm:%s33]
      %353 = vst [vmem:[%s41 + $0x26c] sm:%s33] %v352
      %v354 = vld [vmem:[%s40 + $0x270] sm:%s33]
      %355 = vst [vmem:[%s41 + $0x270] sm:%s33] %v354
      %v356 = vld [vmem:[%s40 + $0x278] sm:%s33]
      %357 = vst [vmem:[%s41 + $0x274] sm:%s33] %v356
      %v358 = vld [vmem:[%s40 + $0x274] sm:%s33]
      %359 = vst [vmem:[%s41 + $0x278] sm:%s33] %v358
      %v360 = vld [vmem:[%s40 + $0x27c] sm:%s33]
      %361 = vst [vmem:[%s41 + $0x27c] sm:%s33] %v360
      %v362 = vld [vmem:[%s40 + $0x280] sm:%s33]
      %363 = vst [vmem:[%s41 + $0x280] sm:%s33] %v362
      %v364 = vld [vmem:[%s40 + $0x288] sm:%s33]
      %365 = vst [vmem:[%s41 + $0x284] sm:%s33] %v364
      %v366 = vld [vmem:[%s40 + $0x284] sm:%s33]
      %367 = vst [vmem:[%s41 + $0x288] sm:%s33] %v366
      %v368 = vld [vmem:[%s40 + $0x28c] sm:%s33]
      %369 = vst [vmem:[%s41 + $0x28c] sm:%s33] %v368
      %v370 = vld [vmem:[%s40 + $0x290] sm:%s33]
      %371 = vst [vmem:[%s41 + $0x290] sm:%s33] %v370
      %v372 = vld [vmem:[%s40 + $0x298] sm:%s33]
      %373 = vst [vmem:[%s41 + $0x294] sm:%s33] %v372
      %v374 = vld [vmem:[%s40 + $0x294] sm:%s33]
      %375 = vst [vmem:[%s41 + $0x298] sm:%s33] %v374
      %v376 = vld [vmem:[%s40 + $0x29c] sm:%s33]
      %377 = vst [vmem:[%s41 + $0x29c] sm:%s33] %v376
      %v378 = vld [vmem:[%s40 + $0x2a0] sm:%s33]
      %379 = vst [vmem:[%s41 + $0x2a0] sm:%s33] %v378
      %v380 = vld [vmem:[%s40 + $0x2a8] sm:%s33]
      %381 = vst [vmem:[%s41 + $0x2a4] sm:%s33] %v380
      %v382 = vld [vmem:[%s40 + $0x2a4] sm:%s33]
      %383 = vst [vmem:[%s41 + $0x2a8] sm:%s33] %v382
      %v384 = vld [vmem:[%s40 + $0x2ac] sm:%s33]
      %385 = vst [vmem:[%s41 + $0x2ac] sm:%s33] %v384
      %v386 = vld [vmem:[%s40 + $0x2b0] sm:%s33]
      %387 = vst [vmem:[%s41 + $0x2b0] sm:%s33] %v386
      %v388 = vld [vmem:[%s40 + $0x2b8] sm:%s33]
      %389 = vst [vmem:[%s41 + $0x2b4] sm:%s33] %v388
      %v390 = vld [vmem:[%s40 + $0x2b4] sm:%s33]
      %391 = vst [vmem:[%s41 + $0x2b8] sm:%s33] %v390
      %v392 = vld [vmem:[%s40 + $0x2bc] sm:%s33]
      %393 = vst [vmem:[%s41 + $0x2bc] sm:%s33] %v392
      %v394 = vld [vmem:[%s40 + $0x2c0] sm:%s33]
      %395 = vst [vmem:[%s41 + $0x2c0] sm:%s33] %v394
      %v396 = vld [vmem:[%s40 + $0x2c8] sm:%s33]
      %397 = vst [vmem:[%s41 + $0x2c4] sm:%s33] %v396
      %v398 = vld [vmem:[%s40 + $0x2c4] sm:%s33]
      %399 = vst [vmem:[%s41 + $0x2c8] sm:%s33] %v398
      %v400 = vld [vmem:[%s40 + $0x2cc] sm:%s33]
      %401 = vst [vmem:[%s41 + $0x2cc] sm:%s33] %v400
      %v402 = vld [vmem:[%s40 + $0x2d0] sm:%s33]
      %403 = vst [vmem:[%s41 + $0x2d0] sm:%s33] %v402
      %v404 = vld [vmem:[%s40 + $0x2d8] sm:%s33]
      %405 = vst [vmem:[%s41 + $0x2d4] sm:%s33] %v404
      %v406 = vld [vmem:[%s40 + $0x2d4] sm:%s33]
      %407 = vst [vmem:[%s41 + $0x2d8] sm:%s33] %v406
      %v408 = vld [vmem:[%s40 + $0x2dc] sm:%s33]
      %409 = vst [vmem:[%s41 + $0x2dc] sm:%s33] %v408
      %v410 = vld [vmem:[%s40 + $0x2e0] sm:%s33]
      %411 = vst [vmem:[%s41 + $0x2e0] sm:%s33] %v410
      %v412 = vld [vmem:[%s40 + $0x2e8] sm:%s33]
      %413 = vst [vmem:[%s41 + $0x2e4] sm:%s33] %v412
      %v414 = vld [vmem:[%s40 + $0x2e4] sm:%s33]
      %415 = vst [vmem:[%s41 + $0x2e8] sm:%s33] %v414
      %v416 = vld [vmem:[%s40 + $0x2ec] sm:%s33]
      %417 = vst [vmem:[%s41 + $0x2ec] sm:%s33] %v416
      %v418 = vld [vmem:[%s40 + $0x2f0] sm:%s33]
      %419 = vst [vmem:[%s41 + $0x2f0] sm:%s33] %v418
      %v420 = vld [vmem:[%s40 + $0x2f8] sm:%s33]
      %421 = vst [vmem:[%s41 + $0x2f4] sm:%s33] %v420
      %v422 = vld [vmem:[%s40 + $0x2f4] sm:%s33]
      %423 = vst [vmem:[%s41 + $0x2f8] sm:%s33] %v422
      %v424 = vld [vmem:[%s40 + $0x2fc] sm:%s33]
      %425 = vst [vmem:[%s41 + $0x2fc] sm:%s33] %v424
      %v426 = vld [vmem:[%s40 + $0x300] sm:%s33]
      %427 = vst [vmem:[%s41 + $0x300] sm:%s33] %v426
      %v428 = vld [vmem:[%s40 + $0x308] sm:%s33]
      %429 = vst [vmem:[%s41 + $0x304] sm:%s33] %v428
      %v430 = vld [vmem:[%s40 + $0x304] sm:%s33]
      %431 = vst [vmem:[%s41 + $0x308] sm:%s33] %v430
      %v432 = vld [vmem:[%s40 + $0x30c] sm:%s33]
      %433 = vst [vmem:[%s41 + $0x30c] sm:%s33] %v432
      %v434 = vld [vmem:[%s40 + $0x310] sm:%s33]
      %435 = vst [vmem:[%s41 + $0x310] sm:%s33] %v434
      %v436 = vld [vmem:[%s40 + $0x318] sm:%s33]
      %437 = vst [vmem:[%s41 + $0x314] sm:%s33] %v436
      %v438 = vld [vmem:[%s40 + $0x314] sm:%s33]
      %439 = vst [vmem:[%s41 + $0x318] sm:%s33] %v438
      %v440 = vld [vmem:[%s40 + $0x31c] sm:%s33]
      %441 = vst [vmem:[%s41 + $0x31c] sm:%s33] %v440
      %v442 = vld [vmem:[%s40 + $0x320] sm:%s33]
      %443 = vst [vmem:[%s41 + $0x320] sm:%s33] %v442
      %v444 = vld [vmem:[%s40 + $0x328] sm:%s33]
      %445 = vst [vmem:[%s41 + $0x324] sm:%s33] %v444
      %v446 = vld [vmem:[%s40 + $0x324] sm:%s33]
      %447 = vst [vmem:[%s41 + $0x328] sm:%s33] %v446
      %v448 = vld [vmem:[%s40 + $0x32c] sm:%s33]
      %449 = vst [vmem:[%s41 + $0x32c] sm:%s33] %v448
      %v450 = vld [vmem:[%s40 + $0x330] sm:%s33]
      %451 = vst [vmem:[%s41 + $0x330] sm:%s33] %v450
      %v452 = vld [vmem:[%s40 + $0x338] sm:%s33]
      %453 = vst [vmem:[%s41 + $0x334] sm:%s33] %v452
      %v454 = vld [vmem:[%s40 + $0x334] sm:%s33]
      %455 = vst [vmem:[%s41 + $0x338] sm:%s33] %v454
      %v456 = vld [vmem:[%s40 + $0x33c] sm:%s33]
      %457 = vst [vmem:[%s41 + $0x33c] sm:%s33] %v456
      %v458 = vld [vmem:[%s40 + $0x340] sm:%s33]
      %459 = vst [vmem:[%s41 + $0x340] sm:%s33] %v458
      %v460 = vld [vmem:[%s40 + $0x348] sm:%s33]
      %461 = vst [vmem:[%s41 + $0x344] sm:%s33] %v460
      %v462 = vld [vmem:[%s40 + $0x344] sm:%s33]
      %463 = vst [vmem:[%s41 + $0x348] sm:%s33] %v462
      %v464 = vld [vmem:[%s40 + $0x34c] sm:%s33]
      %465 = vst [vmem:[%s41 + $0x34c] sm:%s33] %v464
      %v466 = vld [vmem:[%s40 + $0x350] sm:%s33]
      %467 = vst [vmem:[%s41 + $0x350] sm:%s33] %v466
      %v468 = vld [vmem:[%s40 + $0x358] sm:%s33]
      %469 = vst [vmem:[%s41 + $0x354] sm:%s33] %v468
      %v470 = vld [vmem:[%s40 + $0x354] sm:%s33]
      %471 = vst [vmem:[%s41 + $0x358] sm:%s33] %v470
      %v472 = vld [vmem:[%s40 + $0x35c] sm:%s33]
      %473 = vst [vmem:[%s41 + $0x35c] sm:%s33] %v472
      %v474 = vld [vmem:[%s40 + $0x360] sm:%s33]
      %475 = vst [vmem:[%s41 + $0x360] sm:%s33] %v474
      %v476 = vld [vmem:[%s40 + $0x368] sm:%s33]
      %477 = vst [vmem:[%s41 + $0x364] sm:%s33] %v476
      %v478 = vld [vmem:[%s40 + $0x364] sm:%s33]
      %479 = vst [vmem:[%s41 + $0x368] sm:%s33] %v478
      %v480 = vld [vmem:[%s40 + $0x36c] sm:%s33]
      %481 = vst [vmem:[%s41 + $0x36c] sm:%s33] %v480
      %v482 = vld [vmem:[%s40 + $0x370] sm:%s33]
      %483 = vst [vmem:[%s41 + $0x370] sm:%s33] %v482
      %v484 = vld [vmem:[%s40 + $0x378] sm:%s33]
      %485 = vst [vmem:[%s41 + $0x374] sm:%s33] %v484
      %v486 = vld [vmem:[%s40 + $0x374] sm:%s33]
      %487 = vst [vmem:[%s41 + $0x378] sm:%s33] %v486
      %v488 = vld [vmem:[%s40 + $0x37c] sm:%s33]
      %489 = vst [vmem:[%s41 + $0x37c] sm:%s33] %v488
      %v490 = vld [vmem:[%s40 + $0x380] sm:%s33]
      %491 = vst [vmem:[%s41 + $0x380] sm:%s33] %v490
      %v492 = vld [vmem:[%s40 + $0x388] sm:%s33]
      %493 = vst [vmem:[%s41 + $0x384] sm:%s33] %v492
      %v494 = vld [vmem:[%s40 + $0x384] sm:%s33]
      %495 = vst [vmem:[%s41 + $0x388] sm:%s33] %v494
      %v496 = vld [vmem:[%s40 + $0x38c] sm:%s33]
      %497 = vst [vmem:[%s41 + $0x38c] sm:%s33] %v496
      %v498 = vld [vmem:[%s40 + $0x390] sm:%s33]
      %499 = vst [vmem:[%s41 + $0x390] sm:%s33] %v498
      %v500 = vld [vmem:[%s40 + $0x398] sm:%s33]
      %501 = vst [vmem:[%s41 + $0x394] sm:%s33] %v500
      %v502 = vld [vmem:[%s40 + $0x394] sm:%s33]
      %503 = vst [vmem:[%s41 + $0x398] sm:%s33] %v502
      %v504 = vld [vmem:[%s40 + $0x39c] sm:%s33]
      %505 = vst [vmem:[%s41 + $0x39c] sm:%s33] %v504
      %v506 = vld [vmem:[%s40 + $0x3a0] sm:%s33]
      %507 = vst [vmem:[%s41 + $0x3a0] sm:%s33] %v506
      %v508 = vld [vmem:[%s40 + $0x3a8] sm:%s33]
      %509 = vst [vmem:[%s41 + $0x3a4] sm:%s33] %v508
      %v510 = vld [vmem:[%s40 + $0x3a4] sm:%s33]
      %511 = vst [vmem:[%s41 + $0x3a8] sm:%s33] %v510
      %v512 = vld [vmem:[%s40 + $0x3ac] sm:%s33]
      %513 = vst [vmem:[%s41 + $0x3ac] sm:%s33] %v512
      %v514 = vld [vmem:[%s40 + $0x3b0] sm:%s33]
      %515 = vst [vmem:[%s41 + $0x3b0] sm:%s33] %v514
      %v516 = vld [vmem:[%s40 + $0x3b8] sm:%s33]
      %517 = vst [vmem:[%s41 + $0x3b4] sm:%s33] %v516
      %v518 = vld [vmem:[%s40 + $0x3b4] sm:%s33]
      %519 = vst [vmem:[%s41 + $0x3b8] sm:%s33] %v518
      %v520 = vld [vmem:[%s40 + $0x3bc] sm:%s33]
      %521 = vst [vmem:[%s41 + $0x3bc] sm:%s33] %v520
      %v522 = vld [vmem:[%s40 + $0x3c0] sm:%s33]
      %523 = vst [vmem:[%s41 + $0x3c0] sm:%s33] %v522
      %v524 = vld [vmem:[%s40 + $0x3c8] sm:%s33]
      %525 = vst [vmem:[%s41 + $0x3c4] sm:%s33] %v524
      %v526 = vld [vmem:[%s40 + $0x3c4] sm:%s33]
      %527 = vst [vmem:[%s41 + $0x3c8] sm:%s33] %v526
      %v528 = vld [vmem:[%s40 + $0x3cc] sm:%s33]
      %529 = vst [vmem:[%s41 + $0x3cc] sm:%s33] %v528
      %v530 = vld [vmem:[%s40 + $0x3d0] sm:%s33]
      %531 = vst [vmem:[%s41 + $0x3d0] sm:%s33] %v530
      %v532 = vld [vmem:[%s40 + $0x3d8] sm:%s33]
      %533 = vst [vmem:[%s41 + $0x3d4] sm:%s33] %v532
      %v534 = vld [vmem:[%s40 + $0x3d4] sm:%s33]
      %535 = vst [vmem:[%s41 + $0x3d8] sm:%s33] %v534
      %v536 = vld [vmem:[%s40 + $0x3dc] sm:%s33]
      %537 = vst [vmem:[%s41 + $0x3dc] sm:%s33] %v536
      %v538 = vld [vmem:[%s40 + $0x3e0] sm:%s33]
      %539 = vst [vmem:[%s41 + $0x3e0] sm:%s33] %v538
      %v540 = vld [vmem:[%s40 + $0x3e8] sm:%s33]
      %541 = vst [vmem:[%s41 + $0x3e4] sm:%s33] %v540
      %v542 = vld [vmem:[%s40 + $0x3e4] sm:%s33]
      %543 = vst [vmem:[%s41 + $0x3e8] sm:%s33] %v542
      %v544 = vld [vmem:[%s40 + $0x3ec] sm:%s33]
      %545 = vst [vmem:[%s41 + $0x3ec] sm:%s33] %v544
      %v546 = vld [vmem:[%s40 + $0x3f0] sm:%s33]
      %547 = vst [vmem:[%s41 + $0x3f0] sm:%s33] %v546
      %v548 = vld [vmem:[%s40 + $0x3f8] sm:%s33]
      %549 = vst [vmem:[%s41 + $0x3f4] sm:%s33] %v548
      %v550 = vld [vmem:[%s40 + $0x3f4] sm:%s33]
      %551 = vst [vmem:[%s41 + $0x3f8] sm:%s33] %v550
      %v552 = vld [vmem:[%s40 + $0x3fc] sm:%s33]
      %553 = vst [vmem:[%s41 + $0x3fc] sm:%s33] %v552
      %v554 = vld [vmem:[%s40 + $0x400] sm:%s33]
      %555 = vst [vmem:[%s41 + $0x400] sm:%s33] %v554
      %v556 = vld [vmem:[%s40 + $0x408] sm:%s33]
      %557 = vst [vmem:[%s41 + $0x404] sm:%s33] %v556
      %v558 = vld [vmem:[%s40 + $0x404] sm:%s33]
      %559 = vst [vmem:[%s41 + $0x408] sm:%s33] %v558
      %v560 = vld [vmem:[%s40 + $0x40c] sm:%s33]
      %561 = vst [vmem:[%s41 + $0x40c] sm:%s33] %v560
      %v562 = vld [vmem:[%s40 + $0x410] sm:%s33]
      %563 = vst [vmem:[%s41 + $0x410] sm:%s33] %v562
      %v564 = vld [vmem:[%s40 + $0x418] sm:%s33]
      %565 = vst [vmem:[%s41 + $0x414] sm:%s33] %v564
      %v566 = vld [vmem:[%s40 + $0x414] sm:%s33]
      %567 = vst [vmem:[%s41 + $0x418] sm:%s33] %v566
      %v568 = vld [vmem:[%s40 + $0x41c] sm:%s33]
      %569 = vst [vmem:[%s41 + $0x41c] sm:%s33] %v568
      %v570 = vld [vmem:[%s40 + $0x420] sm:%s33]
      %571 = vst [vmem:[%s41 + $0x420] sm:%s33] %v570
      %v572 = vld [vmem:[%s40 + $0x428] sm:%s33]
      %573 = vst [vmem:[%s41 + $0x424] sm:%s33] %v572
      %v574 = vld [vmem:[%s40 + $0x424] sm:%s33]
      %575 = vst [vmem:[%s41 + $0x428] sm:%s33] %v574
      %v576 = vld [vmem:[%s40 + $0x42c] sm:%s33]
      %577 = vst [vmem:[%s41 + $0x42c] sm:%s33] %v576
      %v578 = vld [vmem:[%s40 + $0x430] sm:%s33]
      %579 = vst [vmem:[%s41 + $0x430] sm:%s33] %v578
      %v580 = vld [vmem:[%s40 + $0x438] sm:%s33]
      %581 = vst [vmem:[%s41 + $0x434] sm:%s33] %v580
      %v582 = vld [vmem:[%s40 + $0x434] sm:%s33]
      %583 = vst [vmem:[%s41 + $0x438] sm:%s33] %v582
      %v584 = vld [vmem:[%s40 + $0x43c] sm:%s33]
      %585 = vst [vmem:[%s41 + $0x43c] sm:%s33] %v584
      %v586 = vld [vmem:[%s40 + $0x440] sm:%s33]
      %587 = vst [vmem:[%s41 + $0x440] sm:%s33] %v586
      %v588 = vld [vmem:[%s40 + $0x448] sm:%s33]
      %589 = vst [vmem:[%s41 + $0x444] sm:%s33] %v588
      %v590 = vld [vmem:[%s40 + $0x444] sm:%s33]
      %591 = vst [vmem:[%s41 + $0x448] sm:%s33] %v590
      %v592 = vld [vmem:[%s40 + $0x44c] sm:%s33]
      %593 = vst [vmem:[%s41 + $0x44c] sm:%s33] %v592
      %v594 = vld [vmem:[%s40 + $0x450] sm:%s33]
      %595 = vst [vmem:[%s41 + $0x450] sm:%s33] %v594
      %v596 = vld [vmem:[%s40 + $0x458] sm:%s33]
      %597 = vst [vmem:[%s41 + $0x454] sm:%s33] %v596
      %v598 = vld [vmem:[%s40 + $0x454] sm:%s33]
      %599 = vst [vmem:[%s41 + $0x458] sm:%s33] %v598
      %v600 = vld [vmem:[%s40 + $0x45c] sm:%s33]
      %601 = vst [vmem:[%s41 + $0x45c] sm:%s33] %v600
      %v602 = vld [vmem:[%s40 + $0x460] sm:%s33]
      %603 = vst [vmem:[%s41 + $0x460] sm:%s33] %v602
      %v604 = vld [vmem:[%s40 + $0x468] sm:%s33]
      %605 = vst [vmem:[%s41 + $0x464] sm:%s33] %v604
      %v606 = vld [vmem:[%s40 + $0x464] sm:%s33]
      %607 = vst [vmem:[%s41 + $0x468] sm:%s33] %v606
      %v608 = vld [vmem:[%s40 + $0x46c] sm:%s33]
      %609 = vst [vmem:[%s41 + $0x46c] sm:%s33] %v608
      %v610 = vld [vmem:[%s40 + $0x470] sm:%s33]
      %611 = vst [vmem:[%s41 + $0x470] sm:%s33] %v610
      %v612 = vld [vmem:[%s40 + $0x478] sm:%s33]
      %613 = vst [vmem:[%s41 + $0x474] sm:%s33] %v612
      %v614 = vld [vmem:[%s40 + $0x474] sm:%s33]
      %615 = vst [vmem:[%s41 + $0x478] sm:%s33] %v614
      %v616 = vld [vmem:[%s40 + $0x47c] sm:%s33]
      %617 = vst [vmem:[%s41 + $0x47c] sm:%s33] %v616
      %v618 = vld [vmem:[%s40 + $0x480] sm:%s33]
      %619 = vst [vmem:[%s41 + $0x480] sm:%s33] %v618
      %v620 = vld [vmem:[%s40 + $0x488] sm:%s33]
      %621 = vst [vmem:[%s41 + $0x484] sm:%s33] %v620
      %v622 = vld [vmem:[%s40 + $0x484] sm:%s33]
      %623 = vst [vmem:[%s41 + $0x488] sm:%s33] %v622
      %v624 = vld [vmem:[%s40 + $0x48c] sm:%s33]
      %625 = vst [vmem:[%s41 + $0x48c] sm:%s33] %v624
      %v626 = vld [vmem:[%s40 + $0x490] sm:%s33]
      %627 = vst [vmem:[%s41 + $0x490] sm:%s33] %v626
      %v628 = vld [vmem:[%s40 + $0x498] sm:%s33]
      %629 = vst [vmem:[%s41 + $0x494] sm:%s33] %v628
      %v630 = vld [vmem:[%s40 + $0x494] sm:%s33]
      %631 = vst [vmem:[%s41 + $0x498] sm:%s33] %v630
      %v632 = vld [vmem:[%s40 + $0x49c] sm:%s33]
      %633 = vst [vmem:[%s41 + $0x49c] sm:%s33] %v632
      %v634 = vld [vmem:[%s40 + $0x4a0] sm:%s33]
      %635 = vst [vmem:[%s41 + $0x4a0] sm:%s33] %v634
      %v636 = vld [vmem:[%s40 + $0x4a8] sm:%s33]
      %637 = vst [vmem:[%s41 + $0x4a4] sm:%s33] %v636
      %v638 = vld [vmem:[%s40 + $0x4a4] sm:%s33]
      %639 = vst [vmem:[%s41 + $0x4a8] sm:%s33] %v638
      %v640 = vld [vmem:[%s40 + $0x4ac] sm:%s33]
      %641 = vst [vmem:[%s41 + $0x4ac] sm:%s33] %v640
      %v642 = vld [vmem:[%s40 + $0x4b0] sm:%s33]
      %643 = vst [vmem:[%s41 + $0x4b0] sm:%s33] %v642
      %v644 = vld [vmem:[%s40 + $0x4b8] sm:%s33]
      %645 = vst [vmem:[%s41 + $0x4b4] sm:%s33] %v644
      %v646 = vld [vmem:[%s40 + $0x4b4] sm:%s33]
      %647 = vst [vmem:[%s41 + $0x4b8] sm:%s33] %v646
      %v648 = vld [vmem:[%s40 + $0x4bc] sm:%s33]
      %649 = vst [vmem:[%s41 + $0x4bc] sm:%s33] %v648
      %v650 = vld [vmem:[%s40 + $0x4c0] sm:%s33]
      %651 = vst [vmem:[%s41 + $0x4c0] sm:%s33] %v650
      %v652 = vld [vmem:[%s40 + $0x4c8] sm:%s33]
      %653 = vst [vmem:[%s41 + $0x4c4] sm:%s33] %v652
      %v654 = vld [vmem:[%s40 + $0x4c4] sm:%s33]
      %655 = vst [vmem:[%s41 + $0x4c8] sm:%s33] %v654
      %v656 = vld [vmem:[%s40 + $0x4cc] sm:%s33]
      %657 = vst [vmem:[%s41 + $0x4cc] sm:%s33] %v656
      %v658 = vld [vmem:[%s40 + $0x4d0] sm:%s33]
      %659 = vst [vmem:[%s41 + $0x4d0] sm:%s33] %v658
      %v660 = vld [vmem:[%s40 + $0x4d8] sm:%s33]
      %661 = vst [vmem:[%s41 + $0x4d4] sm:%s33] %v660
      %v662 = vld [vmem:[%s40 + $0x4d4] sm:%s33]
      %663 = vst [vmem:[%s41 + $0x4d8] sm:%s33] %v662
      %v664 = vld [vmem:[%s40 + $0x4dc] sm:%s33]
      %665 = vst [vmem:[%s41 + $0x4dc] sm:%s33] %v664
      %v666 = vld [vmem:[%s40 + $0x4e0] sm:%s33]
      %667 = vst [vmem:[%s41 + $0x4e0] sm:%s33] %v666
      %v668 = vld [vmem:[%s40 + $0x4e8] sm:%s33]
      %669 = vst [vmem:[%s41 + $0x4e4] sm:%s33] %v668
      %v670 = vld [vmem:[%s40 + $0x4e4] sm:%s33]
      %671 = vst [vmem:[%s41 + $0x4e8] sm:%s33] %v670
      %v672 = vld [vmem:[%s40 + $0x4ec] sm:%s33]
      %673 = vst [vmem:[%s41 + $0x4ec] sm:%s33] %v672
      %v674 = vld [vmem:[%s40 + $0x4f0] sm:%s33]
      %675 = vst [vmem:[%s41 + $0x4f0] sm:%s33] %v674
      %v676 = vld [vmem:[%s40 + $0x4f8] sm:%s33]
      %677 = vst [vmem:[%s41 + $0x4f4] sm:%s33] %v676
      %v678 = vld [vmem:[%s40 + $0x4f4] sm:%s33]
      %679 = vst [vmem:[%s41 + $0x4f8] sm:%s33] %v678
      %v680 = vld [vmem:[%s40 + $0x4fc] sm:%s33]
      %681 = vst [vmem:[%s41 + $0x4fc] sm:%s33] %v680
      %v682 = vld [vmem:[%s40 + $0x500] sm:%s33]
      %683 = vst [vmem:[%s41 + $0x500] sm:%s33] %v682
      %v684 = vld [vmem:[%s40 + $0x508] sm:%s33]
      %685 = vst [vmem:[%s41 + $0x504] sm:%s33] %v684
      %v686 = vld [vmem:[%s40 + $0x504] sm:%s33]
      %687 = vst [vmem:[%s41 + $0x508] sm:%s33] %v686
      %v688 = vld [vmem:[%s40 + $0x50c] sm:%s33]
      %689 = vst [vmem:[%s41 + $0x50c] sm:%s33] %v688
      %v690 = vld [vmem:[%s40 + $0x510] sm:%s33]
      %691 = vst [vmem:[%s41 + $0x510] sm:%s33] %v690
      %v692 = vld [vmem:[%s40 + $0x518] sm:%s33]
      %693 = vst [vmem:[%s41 + $0x514] sm:%s33] %v692
      %v694 = vld [vmem:[%s40 + $0x514] sm:%s33]
      %695 = vst [vmem:[%s41 + $0x518] sm:%s33] %v694
      %v696 = vld [vmem:[%s40 + $0x51c] sm:%s33]
      %697 = vst [vmem:[%s41 + $0x51c] sm:%s33] %v696
      %v698 = vld [vmem:[%s40 + $0x520] sm:%s33]
      %699 = vst [vmem:[%s41 + $0x520] sm:%s33] %v698
      %v700 = vld [vmem:[%s40 + $0x528] sm:%s33]
      %701 = vst [vmem:[%s41 + $0x524] sm:%s33] %v700
      %v702 = vld [vmem:[%s40 + $0x524] sm:%s33]
      %703 = vst [vmem:[%s41 + $0x528] sm:%s33] %v702
      %v704 = vld [vmem:[%s40 + $0x52c] sm:%s33]
      %705 = vst [vmem:[%s41 + $0x52c] sm:%s33] %v704
      %v706 = vld [vmem:[%s40 + $0x530] sm:%s33]
      %707 = vst [vmem:[%s41 + $0x530] sm:%s33] %v706
      %v708 = vld [vmem:[%s40 + $0x538] sm:%s33]
      %709 = vst [vmem:[%s41 + $0x534] sm:%s33] %v708
      %v710 = vld [vmem:[%s40 + $0x534] sm:%s33]
      %711 = vst [vmem:[%s41 + $0x538] sm:%s33] %v710
      %v712 = vld [vmem:[%s40 + $0x53c] sm:%s33]
      %713 = vst [vmem:[%s41 + $0x53c] sm:%s33] %v712
      %v714 = vld [vmem:[%s40 + $0x540] sm:%s33]
      %715 = vst [vmem:[%s41 + $0x540] sm:%s33] %v714
      %v716 = vld [vmem:[%s40 + $0x548] sm:%s33]
      %717 = vst [vmem:[%s41 + $0x544] sm:%s33] %v716
      %v718 = vld [vmem:[%s40 + $0x544] sm:%s33]
      %719 = vst [vmem:[%s41 + $0x548] sm:%s33] %v718
      %v720 = vld [vmem:[%s40 + $0x54c] sm:%s33]
      %721 = vst [vmem:[%s41 + $0x54c] sm:%s33] %v720
      %v722 = vld [vmem:[%s40 + $0x550] sm:%s33]
      %723 = vst [vmem:[%s41 + $0x550] sm:%s33] %v722
      %v724 = vld [vmem:[%s40 + $0x558] sm:%s33]
      %725 = vst [vmem:[%s41 + $0x554] sm:%s33] %v724
      %v726 = vld [vmem:[%s40 + $0x554] sm:%s33]
      %727 = vst [vmem:[%s41 + $0x558] sm:%s33] %v726
      %v728 = vld [vmem:[%s40 + $0x55c] sm:%s33]
      %729 = vst [vmem:[%s41 + $0x55c] sm:%s33] %v728
      %v730 = vld [vmem:[%s40 + $0x560] sm:%s33]
      %731 = vst [vmem:[%s41 + $0x560] sm:%s33] %v730
      %v732 = vld [vmem:[%s40 + $0x568] sm:%s33]
      %733 = vst [vmem:[%s41 + $0x564] sm:%s33] %v732
      %v734 = vld [vmem:[%s40 + $0x564] sm:%s33]
      %735 = vst [vmem:[%s41 + $0x568] sm:%s33] %v734
      %v736 = vld [vmem:[%s40 + $0x56c] sm:%s33]
      %737 = vst [vmem:[%s41 + $0x56c] sm:%s33] %v736
      %v738 = vld [vmem:[%s40 + $0x570] sm:%s33]
      %739 = vst [vmem:[%s41 + $0x570] sm:%s33] %v738
      %v740 = vld [vmem:[%s40 + $0x578] sm:%s33]
      %741 = vst [vmem:[%s41 + $0x574] sm:%s33] %v740
      %v742 = vld [vmem:[%s40 + $0x574] sm:%s33]
      %743 = vst [vmem:[%s41 + $0x578] sm:%s33] %v742
      %v744 = vld [vmem:[%s40 + $0x57c] sm:%s33]
      %745 = vst [vmem:[%s41 + $0x57c] sm:%s33] %v744
      %v746 = vld [vmem:[%s40 + $0x580] sm:%s33]
      %747 = vst [vmem:[%s41 + $0x580] sm:%s33] %v746
      %v748 = vld [vmem:[%s40 + $0x588] sm:%s33]
      %749 = vst [vmem:[%s41 + $0x584] sm:%s33] %v748
      %v750 = vld [vmem:[%s40 + $0x584] sm:%s33]
      %751 = vst [vmem:[%s41 + $0x588] sm:%s33] %v750
      %v752 = vld [vmem:[%s40 + $0x58c] sm:%s33]
      %753 = vst [vmem:[%s41 + $0x58c] sm:%s33] %v752
      %v754 = vld [vmem:[%s40 + $0x590] sm:%s33]
      %755 = vst [vmem:[%s41 + $0x590] sm:%s33] %v754
      %v756 = vld [vmem:[%s40 + $0x598] sm:%s33]
      %757 = vst [vmem:[%s41 + $0x594] sm:%s33] %v756
      %v758 = vld [vmem:[%s40 + $0x594] sm:%s33]
      %759 = vst [vmem:[%s41 + $0x598] sm:%s33] %v758
      %v760 = vld [vmem:[%s40 + $0x59c] sm:%s33]
      %761 = vst [vmem:[%s41 + $0x59c] sm:%s33] %v760
      %v762 = vld [vmem:[%s40 + $0x5a0] sm:%s33]
      %763 = vst [vmem:[%s41 + $0x5a0] sm:%s33] %v762
      %v764 = vld [vmem:[%s40 + $0x5a8] sm:%s33]
      %765 = vst [vmem:[%s41 + $0x5a4] sm:%s33] %v764
      %v766 = vld [vmem:[%s40 + $0x5a4] sm:%s33]
      %767 = vst [vmem:[%s41 + $0x5a8] sm:%s33] %v766
      %v768 = vld [vmem:[%s40 + $0x5ac] sm:%s33]
      %769 = vst [vmem:[%s41 + $0x5ac] sm:%s33] %v768
      %v770 = vld [vmem:[%s40 + $0x5b0] sm:%s33]
      %771 = vst [vmem:[%s41 + $0x5b0] sm:%s33] %v770
      %v772 = vld [vmem:[%s40 + $0x5b8] sm:%s33]
      %773 = vst [vmem:[%s41 + $0x5b4] sm:%s33] %v772
      %v774 = vld [vmem:[%s40 + $0x5b4] sm:%s33]
      %775 = vst [vmem:[%s41 + $0x5b8] sm:%s33] %v774
      %v776 = vld [vmem:[%s40 + $0x5bc] sm:%s33]
      %777 = vst [vmem:[%s41 + $0x5bc] sm:%s33] %v776
      %v778 = vld [vmem:[%s40 + $0x5c0] sm:%s33]
      %779 = vst [vmem:[%s41 + $0x5c0] sm:%s33] %v778
      %v780 = vld [vmem:[%s40 + $0x5c8] sm:%s33]
      %781 = vst [vmem:[%s41 + $0x5c4] sm:%s33] %v780
      %v782 = vld [vmem:[%s40 + $0x5c4] sm:%s33]
      %783 = vst [vmem:[%s41 + $0x5c8] sm:%s33] %v782
      %v784 = vld [vmem:[%s40 + $0x5cc] sm:%s33]
      %785 = vst [vmem:[%s41 + $0x5cc] sm:%s33] %v784
      %v786 = vld [vmem:[%s40 + $0x5d0] sm:%s33]
      %787 = vst [vmem:[%s41 + $0x5d0] sm:%s33] %v786
      %v788 = vld [vmem:[%s40 + $0x5d8] sm:%s33]
      %789 = vst [vmem:[%s41 + $0x5d4] sm:%s33] %v788
      %v790 = vld [vmem:[%s40 + $0x5d4] sm:%s33]
      %791 = vst [vmem:[%s41 + $0x5d8] sm:%s33] %v790
      %v792 = vld [vmem:[%s40 + $0x5dc] sm:%s33]
      %793 = vst [vmem:[%s41 + $0x5dc] sm:%s33] %v792
      %v794 = vld [vmem:[%s40 + $0x5e0] sm:%s33]
      %795 = vst [vmem:[%s41 + $0x5e0] sm:%s33] %v794
      %v796 = vld [vmem:[%s40 + $0x5e8] sm:%s33]
      %797 = vst [vmem:[%s41 + $0x5e4] sm:%s33] %v796
      %v798 = vld [vmem:[%s40 + $0x5e4] sm:%s33]
      %799 = vst [vmem:[%s41 + $0x5e8] sm:%s33] %v798
      %v800 = vld [vmem:[%s40 + $0x5ec] sm:%s33]
      %801 = vst [vmem:[%s41 + $0x5ec] sm:%s33] %v800
      %v802 = vld [vmem:[%s40 + $0x5f0] sm:%s33]
      %803 = vst [vmem:[%s41 + $0x5f0] sm:%s33] %v802
      %v804 = vld [vmem:[%s40 + $0x5f8] sm:%s33]
      %805 = vst [vmem:[%s41 + $0x5f4] sm:%s33] %v804
      %v806 = vld [vmem:[%s40 + $0x5f4] sm:%s33]
      %807 = vst [vmem:[%s41 + $0x5f8] sm:%s33] %v806
      %v808 = vld [vmem:[%s40 + $0x5fc] sm:%s33]
      %809 = vst [vmem:[%s41 + $0x5fc] sm:%s33] %v808
      %v810 = vld [vmem:[%s40 + $0x600] sm:%s33]
      %811 = vst [vmem:[%s41 + $0x600] sm:%s33] %v810
      %v812 = vld [vmem:[%s40 + $0x608] sm:%s33]
      %813 = vst [vmem:[%s41 + $0x604] sm:%s33] %v812
      %v814 = vld [vmem:[%s40 + $0x604] sm:%s33]
      %815 = vst [vmem:[%s41 + $0x608] sm:%s33] %v814
      %v816 = vld [vmem:[%s40 + $0x60c] sm:%s33]
      %817 = vst [vmem:[%s41 + $0x60c] sm:%s33] %v816
      %v818 = vld [vmem:[%s40 + $0x610] sm:%s33]
      %819 = vst [vmem:[%s41 + $0x610] sm:%s33] %v818
      %v820 = vld [vmem:[%s40 + $0x618] sm:%s33]
      %821 = vst [vmem:[%s41 + $0x614] sm:%s33] %v820
      %v822 = vld [vmem:[%s40 + $0x614] sm:%s33]
      %823 = vst [vmem:[%s41 + $0x618] sm:%s33] %v822
      %v824 = vld [vmem:[%s40 + $0x61c] sm:%s33]
      %825 = vst [vmem:[%s41 + $0x61c] sm:%s33] %v824
      %v826 = vld [vmem:[%s40 + $0x620] sm:%s33]
      %827 = vst [vmem:[%s41 + $0x620] sm:%s33] %v826
      %v828 = vld [vmem:[%s40 + $0x628] sm:%s33]
      %829 = vst [vmem:[%s41 + $0x624] sm:%s33] %v828
      %v830 = vld [vmem:[%s40 + $0x624] sm:%s33]
      %831 = vst [vmem:[%s41 + $0x628] sm:%s33] %v830
      %v832 = vld [vmem:[%s40 + $0x62c] sm:%s33]
      %833 = vst [vmem:[%s41 + $0x62c] sm:%s33] %v832
      %v834 = vld [vmem:[%s40 + $0x630] sm:%s33]
      %835 = vst [vmem:[%s41 + $0x630] sm:%s33] %v834
      %v836 = vld [vmem:[%s40 + $0x638] sm:%s33]
      %837 = vst [vmem:[%s41 + $0x634] sm:%s33] %v836
      %v838 = vld [vmem:[%s40 + $0x634] sm:%s33]
      %839 = vst [vmem:[%s41 + $0x638] sm:%s33] %v838
      %v840 = vld [vmem:[%s40 + $0x63c] sm:%s33]
      %841 = vst [vmem:[%s41 + $0x63c] sm:%s33] %v840
      %v842 = vld [vmem:[%s40 + $0x640] sm:%s33]
      %843 = vst [vmem:[%s41 + $0x640] sm:%s33] %v842
      %v844 = vld [vmem:[%s40 + $0x648] sm:%s33]
      %845 = vst [vmem:[%s41 + $0x644] sm:%s33] %v844
      %v846 = vld [vmem:[%s40 + $0x644] sm:%s33]
      %847 = vst [vmem:[%s41 + $0x648] sm:%s33] %v846
      %v848 = vld [vmem:[%s40 + $0x64c] sm:%s33]
      %849 = vst [vmem:[%s41 + $0x64c] sm:%s33] %v848
      %v850 = vld [vmem:[%s40 + $0x650] sm:%s33]
      %851 = vst [vmem:[%s41 + $0x650] sm:%s33] %v850
      %v852 = vld [vmem:[%s40 + $0x658] sm:%s33]
      %853 = vst [vmem:[%s41 + $0x654] sm:%s33] %v852
      %v854 = vld [vmem:[%s40 + $0x654] sm:%s33]
      %855 = vst [vmem:[%s41 + $0x658] sm:%s33] %v854
      %v856 = vld [vmem:[%s40 + $0x65c] sm:%s33]
      %857 = vst [vmem:[%s41 + $0x65c] sm:%s33] %v856
      %v858 = vld [vmem:[%s40 + $0x660] sm:%s33]
      %859 = vst [vmem:[%s41 + $0x660] sm:%s33] %v858
      %v860 = vld [vmem:[%s40 + $0x668] sm:%s33]
      %861 = vst [vmem:[%s41 + $0x664] sm:%s33] %v860
      %v862 = vld [vmem:[%s40 + $0x664] sm:%s33]
      %863 = vst [vmem:[%s41 + $0x668] sm:%s33] %v862
      %v864 = vld [vmem:[%s40 + $0x66c] sm:%s33]
      %865 = vst [vmem:[%s41 + $0x66c] sm:%s33] %v864
      %v866 = vld [vmem:[%s40 + $0x670] sm:%s33]
      %867 = vst [vmem:[%s41 + $0x670] sm:%s33] %v866
      %v868 = vld [vmem:[%s40 + $0x678] sm:%s33]
      %869 = vst [vmem:[%s41 + $0x674] sm:%s33] %v868
      %v870 = vld [vmem:[%s40 + $0x674] sm:%s33]
      %871 = vst [vmem:[%s41 + $0x678] sm:%s33] %v870
      %v872 = vld [vmem:[%s40 + $0x67c] sm:%s33]
      %873 = vst [vmem:[%s41 + $0x67c] sm:%s33] %v872
      %v874 = vld [vmem:[%s40 + $0x680] sm:%s33]
      %875 = vst [vmem:[%s41 + $0x680] sm:%s33] %v874
      %v876 = vld [vmem:[%s40 + $0x688] sm:%s33]
      %877 = vst [vmem:[%s41 + $0x684] sm:%s33] %v876
      %v878 = vld [vmem:[%s40 + $0x684] sm:%s33]
      %879 = vst [vmem:[%s41 + $0x688] sm:%s33] %v878
      %v880 = vld [vmem:[%s40 + $0x68c] sm:%s33]
      %881 = vst [vmem:[%s41 + $0x68c] sm:%s33] %v880
      %v882 = vld [vmem:[%s40 + $0x690] sm:%s33]
      %883 = vst [vmem:[%s41 + $0x690] sm:%s33] %v882
      %v884 = vld [vmem:[%s40 + $0x698] sm:%s33]
      %885 = vst [vmem:[%s41 + $0x694] sm:%s33] %v884
      %v886 = vld [vmem:[%s40 + $0x694] sm:%s33]
      %887 = vst [vmem:[%s41 + $0x698] sm:%s33] %v886
      %v888 = vld [vmem:[%s40 + $0x69c] sm:%s33]
      %889 = vst [vmem:[%s41 + $0x69c] sm:%s33] %v888
      %v890 = vld [vmem:[%s40 + $0x6a0] sm:%s33]
      %891 = vst [vmem:[%s41 + $0x6a0] sm:%s33] %v890
      %v892 = vld [vmem:[%s40 + $0x6a8] sm:%s33]
      %893 = vst [vmem:[%s41 + $0x6a4] sm:%s33] %v892
      %v894 = vld [vmem:[%s40 + $0x6a4] sm:%s33]
      %895 = vst [vmem:[%s41 + $0x6a8] sm:%s33] %v894
      %v896 = vld [vmem:[%s40 + $0x6ac] sm:%s33]
      %897 = vst [vmem:[%s41 + $0x6ac] sm:%s33] %v896
      %v898 = vld [vmem:[%s40 + $0x6b0] sm:%s33]
      %899 = vst [vmem:[%s41 + $0x6b0] sm:%s33] %v898
      %v900 = vld [vmem:[%s40 + $0x6b8] sm:%s33]
      %901 = vst [vmem:[%s41 + $0x6b4] sm:%s33] %v900
      %v902 = vld [vmem:[%s40 + $0x6b4] sm:%s33]
      %903 = vst [vmem:[%s41 + $0x6b8] sm:%s33] %v902
      %v904 = vld [vmem:[%s40 + $0x6bc] sm:%s33]
      %905 = vst [vmem:[%s41 + $0x6bc] sm:%s33] %v904
      %v906 = vld [vmem:[%s40 + $0x6c0] sm:%s33]
      %907 = vst [vmem:[%s41 + $0x6c0] sm:%s33] %v906
      %v908 = vld [vmem:[%s40 + $0x6c8] sm:%s33]
      %909 = vst [vmem:[%s41 + $0x6c4] sm:%s33] %v908
      %v910 = vld [vmem:[%s40 + $0x6c4] sm:%s33]
      %911 = vst [vmem:[%s41 + $0x6c8] sm:%s33] %v910
      %v912 = vld [vmem:[%s40 + $0x6cc] sm:%s33]
      %913 = vst [vmem:[%s41 + $0x6cc] sm:%s33] %v912
      %v914 = vld [vmem:[%s40 + $0x6d0] sm:%s33]
      %915 = vst [vmem:[%s41 + $0x6d0] sm:%s33] %v914
      %v916 = vld [vmem:[%s40 + $0x6d8] sm:%s33]
      %917 = vst [vmem:[%s41 + $0x6d4] sm:%s33] %v916
      %v918 = vld [vmem:[%s40 + $0x6d4] sm:%s33]
      %919 = vst [vmem:[%s41 + $0x6d8] sm:%s33] %v918
      %v920 = vld [vmem:[%s40 + $0x6dc] sm:%s33]
      %921 = vst [vmem:[%s41 + $0x6dc] sm:%s33] %v920
      %v922 = vld [vmem:[%s40 + $0x6e0] sm:%s33]
      %923 = vst [vmem:[%s41 + $0x6e0] sm:%s33] %v922
      %v924 = vld [vmem:[%s40 + $0x6e8] sm:%s33]
      %925 = vst [vmem:[%s41 + $0x6e4] sm:%s33] %v924
      %v926 = vld [vmem:[%s40 + $0x6e4] sm:%s33]
      %927 = vst [vmem:[%s41 + $0x6e8] sm:%s33] %v926
      %v928 = vld [vmem:[%s40 + $0x6ec] sm:%s33]
      %929 = vst [vmem:[%s41 + $0x6ec] sm:%s33] %v928
      %v930 = vld [vmem:[%s40 + $0x6f0] sm:%s33]
      %931 = vst [vmem:[%s41 + $0x6f0] sm:%s33] %v930
      %v932 = vld [vmem:[%s40 + $0x6f8] sm:%s33]
      %933 = vst [vmem:[%s41 + $0x6f4] sm:%s33] %v932
      %v934 = vld [vmem:[%s40 + $0x6f4] sm:%s33]
      %935 = vst [vmem:[%s41 + $0x6f8] sm:%s33] %v934
      %v936 = vld [vmem:[%s40 + $0x6fc] sm:%s33]
      %937 = vst [vmem:[%s41 + $0x6fc] sm:%s33] %v936
      %v938 = vld [vmem:[%s40 + $0x700] sm:%s33]
      %939 = vst [vmem:[%s41 + $0x700] sm:%s33] %v938
      %v940 = vld [vmem:[%s40 + $0x708] sm:%s33]
      %941 = vst [vmem:[%s41 + $0x704] sm:%s33] %v940
      %v942 = vld [vmem:[%s40 + $0x704] sm:%s33]
      %943 = vst [vmem:[%s41 + $0x708] sm:%s33] %v942
      %v944 = vld [vmem:[%s40 + $0x70c] sm:%s33]
      %945 = vst [vmem:[%s41 + $0x70c] sm:%s33] %v944
      %v946 = vld [vmem:[%s40 + $0x710] sm:%s33]
      %947 = vst [vmem:[%s41 + $0x710] sm:%s33] %v946
      %v948 = vld [vmem:[%s40 + $0x718] sm:%s33]
      %949 = vst [vmem:[%s41 + $0x714] sm:%s33] %v948
      %v950 = vld [vmem:[%s40 + $0x714] sm:%s33]
      %951 = vst [vmem:[%s41 + $0x718] sm:%s33] %v950
      %v952 = vld [vmem:[%s40 + $0x71c] sm:%s33]
      %953 = vst [vmem:[%s41 + $0x71c] sm:%s33] %v952
      %v954 = vld [vmem:[%s40 + $0x720] sm:%s33]
      %955 = vst [vmem:[%s41 + $0x720] sm:%s33] %v954
      %v956 = vld [vmem:[%s40 + $0x728] sm:%s33]
      %957 = vst [vmem:[%s41 + $0x724] sm:%s33] %v956
      %v958 = vld [vmem:[%s40 + $0x724] sm:%s33]
      %959 = vst [vmem:[%s41 + $0x728] sm:%s33] %v958
      %v960 = vld [vmem:[%s40 + $0x72c] sm:%s33]
      %961 = vst [vmem:[%s41 + $0x72c] sm:%s33] %v960
      %v962 = vld [vmem:[%s40 + $0x730] sm:%s33]
      %963 = vst [vmem:[%s41 + $0x730] sm:%s33] %v962
      %v964 = vld [vmem:[%s40 + $0x738] sm:%s33]
      %965 = vst [vmem:[%s41 + $0x734] sm:%s33] %v964
      %v966 = vld [vmem:[%s40 + $0x734] sm:%s33]
      %967 = vst [vmem:[%s41 + $0x738] sm:%s33] %v966
      %v968 = vld [vmem:[%s40 + $0x73c] sm:%s33]
      %969 = vst [vmem:[%s41 + $0x73c] sm:%s33] %v968
      %v970 = vld [vmem:[%s40 + $0x740] sm:%s33]
      %971 = vst [vmem:[%s41 + $0x740] sm:%s33] %v970
      %v972 = vld [vmem:[%s40 + $0x748] sm:%s33]
      %973 = vst [vmem:[%s41 + $0x744] sm:%s33] %v972
      %v974 = vld [vmem:[%s40 + $0x744] sm:%s33]
      %975 = vst [vmem:[%s41 + $0x748] sm:%s33] %v974
      %v976 = vld [vmem:[%s40 + $0x74c] sm:%s33]
      %977 = vst [vmem:[%s41 + $0x74c] sm:%s33] %v976
      %v978 = vld [vmem:[%s40 + $0x750] sm:%s33]
      %979 = vst [vmem:[%s41 + $0x750] sm:%s33] %v978
      %v980 = vld [vmem:[%s40 + $0x758] sm:%s33]
      %981 = vst [vmem:[%s41 + $0x754] sm:%s33] %v980
      %v982 = vld [vmem:[%s40 + $0x754] sm:%s33]
      %983 = vst [vmem:[%s41 + $0x758] sm:%s33] %v982
      %v984 = vld [vmem:[%s40 + $0x75c] sm:%s33]
      %985 = vst [vmem:[%s41 + $0x75c] sm:%s33] %v984
      %v986 = vld [vmem:[%s40 + $0x760] sm:%s33]
      %987 = vst [vmem:[%s41 + $0x760] sm:%s33] %v986
      %v988 = vld [vmem:[%s40 + $0x768] sm:%s33]
      %989 = vst [vmem:[%s41 + $0x764] sm:%s33] %v988
      %v990 = vld [vmem:[%s40 + $0x764] sm:%s33]
      %991 = vst [vmem:[%s41 + $0x768] sm:%s33] %v990
      %v992 = vld [vmem:[%s40 + $0x76c] sm:%s33]
      %993 = vst [vmem:[%s41 + $0x76c] sm:%s33] %v992
      %v994 = vld [vmem:[%s40 + $0x770] sm:%s33]
      %995 = vst [vmem:[%s41 + $0x770] sm:%s33] %v994
      %v996 = vld [vmem:[%s40 + $0x778] sm:%s33]
      %997 = vst [vmem:[%s41 + $0x774] sm:%s33] %v996
      %v998 = vld [vmem:[%s40 + $0x774] sm:%s33]
      %999 = vst [vmem:[%s41 + $0x778] sm:%s33] %v998
      %v1000 = vld [vmem:[%s40 + $0x77c] sm:%s33]
      %1001 = vst [vmem:[%s41 + $0x77c] sm:%s33] %v1000
      %v1002 = vld [vmem:[%s40 + $0x780] sm:%s33]
      %1003 = vst [vmem:[%s41 + $0x780] sm:%s33] %v1002
      %v1004 = vld [vmem:[%s40 + $0x788] sm:%s33]
      %1005 = vst [vmem:[%s41 + $0x784] sm:%s33] %v1004
      %v1006 = vld [vmem:[%s40 + $0x784] sm:%s33]
      %1007 = vst [vmem:[%s41 + $0x788] sm:%s33] %v1006
      %v1008 = vld [vmem:[%s40 + $0x78c] sm:%s33]
      %1009 = vst [vmem:[%s41 + $0x78c] sm:%s33] %v1008
      %v1010 = vld [vmem:[%s40 + $0x790] sm:%s33]
      %1011 = vst [vmem:[%s41 + $0x790] sm:%s33] %v1010
      %v1012 = vld [vmem:[%s40 + $0x798] sm:%s33]
      %1013 = vst [vmem:[%s41 + $0x794] sm:%s33] %v1012
      %v1014 = vld [vmem:[%s40 + $0x794] sm:%s33]
      %1015 = vst [vmem:[%s41 + $0x798] sm:%s33] %v1014
      %v1016 = vld [vmem:[%s40 + $0x79c] sm:%s33]
      %1017 = vst [vmem:[%s41 + $0x79c] sm:%s33] %v1016
      %v1018 = vld [vmem:[%s40 + $0x7a0] sm:%s33]
      %1019 = vst [vmem:[%s41 + $0x7a0] sm:%s33] %v1018
      %v1020 = vld [vmem:[%s40 + $0x7a8] sm:%s33]
      %1021 = vst [vmem:[%s41 + $0x7a4] sm:%s33] %v1020
      %v1022 = vld [vmem:[%s40 + $0x7a4] sm:%s33]
      %1023 = vst [vmem:[%s41 + $0x7a8] sm:%s33] %v1022
      %v1024 = vld [vmem:[%s40 + $0x7ac] sm:%s33]
      %1025 = vst [vmem:[%s41 + $0x7ac] sm:%s33] %v1024
      %v1026 = vld [vmem:[%s40 + $0x7b0] sm:%s33]
      %1027 = vst [vmem:[%s41 + $0x7b0] sm:%s33] %v1026
      %v1028 = vld [vmem:[%s40 + $0x7b8] sm:%s33]
      %1029 = vst [vmem:[%s41 + $0x7b4] sm:%s33] %v1028
      %v1030 = vld [vmem:[%s40 + $0x7b4] sm:%s33]
      %1031 = vst [vmem:[%s41 + $0x7b8] sm:%s33] %v1030
      %v1032 = vld [vmem:[%s40 + $0x7bc] sm:%s33]
      %1033 = vst [vmem:[%s41 + $0x7bc] sm:%s33] %v1032
      %v1034 = vld [vmem:[%s40 + $0x7c0] sm:%s33]
      %1035 = vst [vmem:[%s41 + $0x7c0] sm:%s33] %v1034
      %v1036 = vld [vmem:[%s40 + $0x7c8] sm:%s33]
      %1037 = vst [vmem:[%s41 + $0x7c4] sm:%s33] %v1036
      %v1038 = vld [vmem:[%s40 + $0x7c4] sm:%s33]
      %1039 = vst [vmem:[%s41 + $0x7c8] sm:%s33] %v1038
      %v1040 = vld [vmem:[%s40 + $0x7cc] sm:%s33]
      %1041 = vst [vmem:[%s41 + $0x7cc] sm:%s33] %v1040
      %v1042 = vld [vmem:[%s40 + $0x7d0] sm:%s33]
      %1043 = vst [vmem:[%s41 + $0x7d0] sm:%s33] %v1042
      %v1044 = vld [vmem:[%s40 + $0x7d8] sm:%s33]
      %1045 = vst [vmem:[%s41 + $0x7d4] sm:%s33] %v1044
      %v1046 = vld [vmem:[%s40 + $0x7d4] sm:%s33]
      %1047 = vst [vmem:[%s41 + $0x7d8] sm:%s33] %v1046
      %v1048 = vld [vmem:[%s40 + $0x7dc] sm:%s33]
      %1049 = vst [vmem:[%s41 + $0x7dc] sm:%s33] %v1048
      %v1050 = vld [vmem:[%s40 + $0x7e0] sm:%s33]
      %1051 = vst [vmem:[%s41 + $0x7e0] sm:%s33] %v1050
      %v1052 = vld [vmem:[%s40 + $0x7e8] sm:%s33]
      %1053 = vst [vmem:[%s41 + $0x7e4] sm:%s33] %v1052
      %v1054 = vld [vmem:[%s40 + $0x7e4] sm:%s33]
      %1055 = vst [vmem:[%s41 + $0x7e8] sm:%s33] %v1054
      %v1056 = vld [vmem:[%s40 + $0x7ec] sm:%s33]
      %1057 = vst [vmem:[%s41 + $0x7ec] sm:%s33] %v1056
      %v1058 = vld [vmem:[%s40 + $0x7f0] sm:%s33]
      %1059 = vst [vmem:[%s41 + $0x7f0] sm:%s33] %v1058
      %v1060 = vld [vmem:[%s40 + $0x7f8] sm:%s33]
      %1061 = vst [vmem:[%s41 + $0x7f4] sm:%s33] %v1060
      %v1062 = vld [vmem:[%s40 + $0x7f4] sm:%s33]
      %1063 = vst [vmem:[%s41 + $0x7f8] sm:%s33] %v1062
      %v1064 = vld [vmem:[%s40 + $0x7fc] sm:%s33]
      %1065 = vst [vmem:[%s41 + $0x7fc] sm:%s33] %v1064
    $region38: #{breakout_a2c_forward.1} parent=32 // loop_footer
      %s39 = sadd.s32 1, %s35
    $region39: #{breakout_a2c_forward.1} parent=32 // loop_footer_branch
      %34 = sbr.rel target = $region35
    $region40: #{breakout_a2c_forward.1} parent=32 // loop_exit
      _
  $region33: #{breakout_a2c_forward.1} parent=0 // pred_fallthru
    _
  // Predicated region
  $region70: #{breakout_a2c_forward.1} parent=0 // pred_check
    _
  $region71: #{breakout_a2c_forward.1} parent=0 // pred_check_branch
    %4200 = sbr.rel (0) target = $region73
  $region72: #{breakout_a2c_forward.1} parent=0 // pred_region
    %4201 = vsyncadd [#allocation6], 32768
  $region73: #{breakout_a2c_forward.1} parent=0 // pred_fallthru
    _
  %v4202 = vld [vmem:[%s1] sm:$0xff]
  %v4203 = vld [vmem:[%s1 + $0x8] sm:$0xff]
  %v4204 = vld [vmem:[%s0] sm:$0xff]
  %v4205 = vld [vmem:[%s0 + $0x8] sm:$0xff]
  %v4206 = vld [vmem:[%s0 + $0x10] sm:$0xff]
  %v4207 = vld [vmem:[%s0 + $0x18] sm:$0xff]
  %v4208 = vld [vmem:[%s0 + $0x20] sm:$0xff]
  %v4209 = vld [vmem:[%s0 + $0x28] sm:$0xff]
  %v4210 = vld [vmem:[%s0 + $0x30] sm:$0xff]
  %v4211 = vld [vmem:[%s0 + $0x38] sm:$0xff]
  %v4212 = vld [vmem:[%s0 + $0x40] sm:$0xff]
  %v4213 = vld [vmem:[%s0 + $0x48] sm:$0xff]
  %v4214 = vld [vmem:[%s0 + $0x50] sm:$0xff]
  %v4215 = vld [vmem:[%s0 + $0x58] sm:$0xff]
  %v4216 = vld [vmem:[%s0 + $0x60] sm:$0xff]
  %v4217 = vld [vmem:[%s0 + $0x68] sm:$0xff]
  %v4218 = vld [vmem:[%s0 + $0x70] sm:$0xff]
  %v4219 = vld [vmem:[%s0 + $0x78] sm:$0xff]
  %v4220 = vld [vmem:[%s0 + $0x80] sm:$0xff]
  %v4221 = vld [vmem:[%s0 + $0x88] sm:$0xff]
  %v4222 = vld [vmem:[%s0 + $0x90] sm:$0xff]
  %v4223 = vld [vmem:[%s0 + $0x98] sm:$0xff]
  %v4224 = vld [vmem:[%s0 + $0xa0] sm:$0xff]
  %v4225 = vld [vmem:[%s0 + $0xa8] sm:$0xff]
  %v4226 = vld [vmem:[%s0 + $0xb0] sm:$0xff]
  %v4227 = vld [vmem:[%s0 + $0xb8] sm:$0xff]
  %v4228 = vld [vmem:[%s0 + $0xc0] sm:$0xff]
  %v4229 = vld [vmem:[%s0 + $0xc8] sm:$0xff]
  %v4230 = vld [vmem:[%s0 + $0xd0] sm:$0xff]
  %v4231 = vld [vmem:[%s0 + $0xd8] sm:$0xff]
  %v4232 = vld [vmem:[%s0 + $0xe0] sm:$0xff]
  %v4233 = vld [vmem:[%s0 + $0xe8] sm:$0xff]
  %v4234 = vld [vmem:[%s0 + $0xf0] sm:$0xff]
  %v4235 = vld [vmem:[%s0 + $0xf8] sm:$0xff]
  %v4236 = vld [vmem:[%s0 + $0x100] sm:$0xff]
  %v4237 = vld [vmem:[%s0 + $0x108] sm:$0xff]
  %v4238 = vld [vmem:[%s0 + $0x110] sm:$0xff]
  %v4239 = vld [vmem:[%s0 + $0x118] sm:$0xff]
  %v4240 = vld [vmem:[%s0 + $0x120] sm:$0xff]
  %v4241 = vld [vmem:[%s0 + $0x128] sm:$0xff]
  %v4242 = vld [vmem:[%s0 + $0x130] sm:$0xff]
  %v4243 = vld [vmem:[%s0 + $0x138] sm:$0xff]
  %v4244 = vld [vmem:[%s0 + $0x140] sm:$0x11]
  %v4245 = vld [vmem:[%s0 + $0x148] sm:$0x11]
  %v4246 = vld [vmem:[%s4] sm:$0xff]
  %v4247 = vld [vmem:[%s4 + $0x8] sm:$0xff]
  %4249 = vset.pattern.permute.xlu0 0
  %4250 = vperm.xlu0 %4249, %v4246
  %v4251 = vpop.permute.xlu0 %4250
  %4254 = vset.pattern.permute.xlu0 0
  %4255 = vperm.xlu0 %4254, %v4247
  %v4256 = vpop.permute.xlu0 %4255
  %v4260 = vunpack.c.l.b16 %v4202
  %v4261 = vunpack.c.h.b16 %v4202
  %v4262 = vunpack.c.l.b16 %v4203
  %v4263 = vunpack.c.h.b16 %v4203
  %v4264 = vpack.c.b16 %v4262, %v4260
  %v4265 = vpack.c.b16 %v4263, %v4261
  %v4309 = vunpack.c.l.b16 %v4204
  %v4310 = vunpack.c.h.b16 %v4204
  %v4311 = vunpack.c.l.b16 %v4205
  %v4312 = vunpack.c.h.b16 %v4205
  %v4313 = vunpack.c.l.b16 %v4206
  %v4314 = vunpack.c.h.b16 %v4206
  %v4315 = vunpack.c.l.b16 %v4207
  %v4316 = vunpack.c.h.b16 %v4207
  %v4317 = vunpack.c.l.b16 %v4208
  %v4318 = vunpack.c.h.b16 %v4208
  %v4319 = vunpack.c.l.b16 %v4209
  %v4320 = vunpack.c.h.b16 %v4209
  %v4321 = vunpack.c.l.b16 %v4210
  %v4322 = vunpack.c.h.b16 %v4210
  %v4323 = vunpack.c.l.b16 %v4211
  %v4324 = vunpack.c.h.b16 %v4211
  %v4325 = vunpack.c.l.b16 %v4212
  %v4326 = vunpack.c.h.b16 %v4212
  %v4327 = vunpack.c.l.b16 %v4213
  %v4328 = vunpack.c.h.b16 %v4213
  %v4329 = vunpack.c.l.b16 %v4214
  %v4330 = vunpack.c.h.b16 %v4214
  %v4331 = vunpack.c.l.b16 %v4215
  %v4332 = vunpack.c.h.b16 %v4215
  %v4333 = vunpack.c.l.b16 %v4216
  %v4334 = vunpack.c.h.b16 %v4216
  %v4335 = vunpack.c.l.b16 %v4217
  %v4336 = vunpack.c.h.b16 %v4217
  %v4337 = vunpack.c.l.b16 %v4218
  %v4338 = vunpack.c.h.b16 %v4218
  %v4339 = vunpack.c.l.b16 %v4219
  %v4340 = vunpack.c.h.b16 %v4219
  %v4341 = vunpack.c.l.b16 %v4220
  %v4342 = vunpack.c.h.b16 %v4220
  %v4343 = vunpack.c.l.b16 %v4221
  %v4344 = vunpack.c.h.b16 %v4221
  %v4345 = vunpack.c.l.b16 %v4222
  %v4346 = vunpack.c.h.b16 %v4222
  %v4347 = vunpack.c.l.b16 %v4223
  %v4348 = vunpack.c.h.b16 %v4223
  %v4349 = vunpack.c.l.b16 %v4224
  %v4350 = vunpack.c.h.b16 %v4224
  %v4351 = vunpack.c.l.b16 %v4225
  %v4352 = vunpack.c.h.b16 %v4225
  %v4353 = vunpack.c.l.b16 %v4226
  %v4354 = vunpack.c.h.b16 %v4226
  %v4355 = vunpack.c.l.b16 %v4227
  %v4356 = vunpack.c.h.b16 %v4227
  %v4357 = vunpack.c.l.b16 %v4228
  %v4358 = vunpack.c.h.b16 %v4228
  %v4359 = vunpack.c.l.b16 %v4229
  %v4360 = vunpack.c.h.b16 %v4229
  %v4361 = vunpack.c.l.b16 %v4230
  %v4362 = vunpack.c.h.b16 %v4230
  %v4363 = vunpack.c.l.b16 %v4231
  %v4364 = vunpack.c.h.b16 %v4231
  %v4365 = vunpack.c.l.b16 %v4232
  %v4366 = vunpack.c.h.b16 %v4232
  %v4367 = vunpack.c.l.b16 %v4233
  %v4368 = vunpack.c.h.b16 %v4233
  %v4369 = vunpack.c.l.b16 %v4234
  %v4370 = vunpack.c.h.b16 %v4234
  %v4371 = vunpack.c.l.b16 %v4235
  %v4372 = vunpack.c.h.b16 %v4235
  %v4373 = vunpack.c.l.b16 %v4236
  %v4374 = vunpack.c.h.b16 %v4236
  %v4375 = vunpack.c.l.b16 %v4237
  %v4376 = vunpack.c.h.b16 %v4237
  %v4377 = vunpack.c.l.b16 %v4238
  %v4378 = vunpack.c.h.b16 %v4238
  %v4379 = vunpack.c.l.b16 %v4239
  %v4380 = vunpack.c.h.b16 %v4239
  %v4381 = vunpack.c.l.b16 %v4240
  %v4382 = vunpack.c.h.b16 %v4240
  %v4383 = vunpack.c.l.b16 %v4241
  %v4384 = vunpack.c.h.b16 %v4241
  %v4385 = vunpack.c.l.b16 %v4242
  %v4386 = vunpack.c.h.b16 %v4242
  %v4387 = vunpack.c.l.b16 %v4243
  %v4388 = vunpack.c.h.b16 %v4243
  %v4389 = vunpack.c.l.b16 %v4244
  %v4390 = vunpack.c.h.b16 %v4244
  %v4391 = vunpack.c.l.b16 %v4245
  %v4392 = vunpack.c.h.b16 %v4245
  %v4393 = vpack.c.b16 %v4313, %v4309
  %v4394 = vpack.c.b16 %v4314, %v4310
  %v4395 = vpack.c.b16 %v4315, %v4311
  %v4396 = vpack.c.b16 %v4316, %v4312
  %v4397 = vpack.c.b16 %v4321, %v4317
  %v4398 = vpack.c.b16 %v4322, %v4318
  %v4399 = vpack.c.b16 %v4323, %v4319
  %v4400 = vpack.c.b16 %v4324, %v4320
  %v4401 = vpack.c.b16 %v4329, %v4325
  %v4402 = vpack.c.b16 %v4330, %v4326
  %v4403 = vpack.c.b16 %v4331, %v4327
  %v4404 = vpack.c.b16 %v4332, %v4328
  %v4405 = vpack.c.b16 %v4337, %v4333
  %v4406 = vpack.c.b16 %v4338, %v4334
  %v4407 = vpack.c.b16 %v4339, %v4335
  %v4408 = vpack.c.b16 %v4340, %v4336
  %v4409 = vpack.c.b16 %v4345, %v4341
  %v4410 = vpack.c.b16 %v4346, %v4342
  %v4411 = vpack.c.b16 %v4347, %v4343
  %v4412 = vpack.c.b16 %v4348, %v4344
  %v4413 = vpack.c.b16 %v4353, %v4349
  %v4414 = vpack.c.b16 %v4354, %v4350
  %v4415 = vpack.c.b16 %v4355, %v4351
  %v4416 = vpack.c.b16 %v4356, %v4352
  %v4417 = vpack.c.b16 %v4361, %v4357
  %v4418 = vpack.c.b16 %v4362, %v4358
  %v4419 = vpack.c.b16 %v4363, %v4359
  %v4420 = vpack.c.b16 %v4364, %v4360
  %v4421 = vpack.c.b16 %v4369, %v4365
  %v4422 = vpack.c.b16 %v4370, %v4366
  %v4423 = vpack.c.b16 %v4371, %v4367
  %v4424 = vpack.c.b16 %v4372, %v4368
  %v4425 = vpack.c.b16 %v4377, %v4373
  %v4426 = vpack.c.b16 %v4378, %v4374
  %v4427 = vpack.c.b16 %v4379, %v4375
  %v4428 = vpack.c.b16 %v4380, %v4376
  %v4429 = vpack.c.b16 %v4385, %v4381
  %v4430 = vpack.c.b16 %v4386, %v4382
  %v4431 = vpack.c.b16 %v4387, %v4383
  %v4432 = vpack.c.b16 %v4388, %v4384
  %v4433 = vpack.c.b16 %v4389, %v4389
  %v4434 = vpack.c.b16 %v4390, %v4390
  %v4435 = vpack.c.b16 %v4391, %v4391
  %v4436 = vpack.c.b16 %v4392, %v4392
  %vm4477 = vcmask 277504
  %v4479 = vsel %vm4477, %v4265, 0
  %vm4481 = vcmask 1040384
  %v4483 = vsel %vm4481, %v4433, 0
  %v4486 = vsel %vm4481, %v4434, 0
  %v4489 = vsel %vm4481, %v4435, 0
  %v4492 = vsel %vm4481, %v4436, 0
  %4494 = vmatprep.subr.bf16.mxu0 %v4394
  %4495 = vmatpush1.bf16.msra.mxu0 %v4393
  %4496 = vmatprep.subr.bf16.mxu0 %v4398
  %4497 = vmatpush1.bf16.msra.mxu0 %v4397
  %4498 = vmatprep.subr.bf16.mxu0 %v4402
  %4499 = vmatpush1.bf16.msra.mxu0 %v4401
  %4500 = vmatprep.subr.bf16.mxu0 %v4406
  %4501 = vmatpush1.bf16.msra.mxu0 %v4405
  %4502 = vmatprep.subr.bf16.mxu0 %v4410
  %4503 = vmatpush1.bf16.msra.mxu0 %v4409
  %4504 = vmatprep.subr.bf16.mxu0 %v4414
  %4505 = vmatpush1.bf16.msra.mxu0 %v4413
  %4506 = vmatprep.subr.bf16.mxu0 %v4418
  %4507 = vmatpush1.bf16.msra.mxu0 %v4417
  %4508 = vmatprep.subr.bf16.mxu0 %v4422
  %4509 = vmatpush1.bf16.msra.mxu0 %v4421
  %4510 = vmatprep.subr.bf16.mxu0 %v4426
  %4511 = vmatpush1.bf16.msra.mxu0 %v4425
  %4512 = vmatprep.subr.bf16.mxu0 %v4430
  %4513 = vmatpush1.bf16.msra.mxu0 %v4429
  %4514 = vmatprep.subr.bf16.mxu0 %v4486
  %4515 = vmatpush1.bf16.msra.mxu0 %v4483
  %4516 = vmatprep.subr.bf16.mxu0 0
  %4517 = vmatpush1.bf16.msra.mxu0 0
  %4518 = vmatprep.subr.bf16.mxu0 0
  %4519 = vmatpush1.bf16.msra.mxu0 0
  %4520 = vmatprep.subr.bf16.mxu0 0
  %4521 = vmatpush1.bf16.msra.mxu0 0
  %4522 = vmatprep.subr.bf16.mxu0 0
  %4523 = vmatpush1.bf16.msra.mxu0 0
  %4524 = vmatprep.subr.bf16.mxu0 0
  %4525 = vmatpush1.bf16.msra.mxu0 0
  %4526 = vmatprep.mubr.bf16.mxu0 %v4479
  %4527 = vmatmul.mubr.bf16.gmra.mrb[0].mxu0 %v4264
  %v4528 = vpop.f32.mrb[0].mxu0
  %v4529 = vadd.f32 %v4251, %v4528
  %v4530 = vpop.f32.mrb[0].mxu0
  %v4531 = vadd.f32 %v4251, %v4530
  %v4532 = vpop.f32.mrb[0].mxu0
  %v4533 = vadd.f32 %v4256, %v4532
  %v4534 = vpop.f32.mrb[0].mxu0
  %v4535 = vadd.f32 %v4256, %v4534
  %4536 = vdwg.mxu0
  %4537 = vmatprep.subr.bf16.mxu0 %v4396
  %4538 = vmatpush1.bf16.msra.mxu0 %v4395
  %4539 = vmatprep.subr.bf16.mxu0 %v4400
  %4540 = vmatpush1.bf16.msra.mxu0 %v4399
  %4541 = vmatprep.subr.bf16.mxu0 %v4404
  %4542 = vmatpush1.bf16.msra.mxu0 %v4403
  %4543 = vmatprep.subr.bf16.mxu0 %v4408
  %4544 = vmatpush1.bf16.msra.mxu0 %v4407
  %4545 = vmatprep.subr.bf16.mxu0 %v4412
  %4546 = vmatpush1.bf16.msra.mxu0 %v4411
  %4547 = vmatprep.subr.bf16.mxu0 %v4416
  %4548 = vmatpush1.bf16.msra.mxu0 %v4415
  %4549 = vmatprep.subr.bf16.mxu0 %v4420
  %4550 = vmatpush1.bf16.msra.mxu0 %v4419
  %4551 = vmatprep.subr.bf16.mxu0 %v4424
  %4552 = vmatpush1.bf16.msra.mxu0 %v4423
  %4553 = vmatprep.subr.bf16.mxu0 %v4428
  %4554 = vmatpush1.bf16.msra.mxu0 %v4427
  %4555 = vmatprep.subr.bf16.mxu0 %v4432
  %4556 = vmatpush1.bf16.msra.mxu0 %v4431
  %4557 = vmatprep.subr.bf16.mxu0 %v4492
  %4558 = vmatpush1.bf16.msra.mxu0 %v4489
  %4559 = vmatprep.subr.bf16.mxu0 0
  %4560 = vmatpush1.bf16.msra.mxu0 0
  %4561 = vmatprep.subr.bf16.mxu0 0
  %4562 = vmatpush1.bf16.msra.mxu0 0
  %4563 = vmatprep.subr.bf16.mxu0 0
  %4564 = vmatpush1.bf16.msra.mxu0 0
  %4565 = vmatprep.subr.bf16.mxu0 0
  %4566 = vmatpush1.bf16.msra.mxu0 0
  %4567 = vmatprep.subr.bf16.mxu0 0
  %4568 = vmatpush1.bf16.msra.mxu0 0
  %4569 = vmatprep.mubr.bf16.mxu0 %v4479
  %4570 = vmatmul.mubr.bf16.gmra.mrb[0].mxu0 %v4264
  %v4571 = vpop.f32.mrb[0].mxu0
  %v4572 = vadd.f32 %v4251, %v4571
  %v4573 = vpop.f32.mrb[0].mxu0
  %v4574 = vadd.f32 %v4251, %v4573
  %v4575 = vpop.f32.mrb[0].mxu0
  %v4576 = vadd.f32 %v4256, %v4575
  %v4577 = vpop.f32.mrb[0].mxu0
  %v4578 = vadd.f32 %v4256, %v4577
  %4579 = vdwg.mxu0
  %v4580 = vmax.f32 %v4529, 0.0
  %v4581 = vmax.f32 %v4531, 0.0
  %v4582 = vmax.f32 %v4572, 0.0
  %v4583 = vmax.f32 %v4574, 0.0
  %v4584 = vmax.f32 %v4533, 0.0
  %v4585 = vmax.f32 %v4535, 0.0
  %v4586 = vmax.f32 %v4576, 0.0
  %v4587 = vmax.f32 %v4578, 0.0
  %v4588 = vpack.c.bf16 %v4584, %v4580
  %v4589 = vpack.c.bf16 %v4585, %v4581
  %v4590 = vpack.c.bf16 %v4586, %v4582
  %v4591 = vpack.c.bf16 %v4587, %v4583
  %4592 = vst [vmem:[#allocation3] sm:$0xff] %v4588
  %4593 = vst [vmem:[#allocation3 + $0x8] sm:$0xff] %v4589
  %4594 = vst [vmem:[#allocation3 + $0x10] sm:$0xff] %v4590
  %4595 = vst [vmem:[#allocation3 + $0x18] sm:$0xff] %v4591
  %v4596 = vld [vmem:[#allocation3] sm:$0xff]
  %v4597 = vld [vmem:[#allocation3 + $0x8] sm:$0xff]
  %v4598 = vld [vmem:[#allocation3 + $0x10] sm:$0xff]
  %v4599 = vld [vmem:[#allocation3 + $0x18] sm:$0xff]
  %v4600 = vld [vmem:[%s2] sm:$0xf]
  %v4601 = vld [vmem:[%s2 + $0x4] sm:$0xf]
  %v4602 = vld [vmem:[%s2 + $0x8] sm:$0xf]
  %v4603 = vld [vmem:[%s2 + $0xc] sm:$0xf]
  %s4604 = scalar_lea.vmem %s2, 16
  %v4605 = vld [vmem:[%s4604] sm:$0xf]
  %v4606 = vld [vmem:[%s4604 + $0x4] sm:$0xf]
  %v4607 = vld [vmem:[%s4604 + $0x8] sm:$0xf]
  %v4608 = vld [vmem:[%s4604 + $0xc] sm:$0xf]
  %v4613 = vunpack.c.l.b16 %v4605
  %v4614 = vunpack.c.l.b16 %v4606
  %v4615 = vunpack.c.l.b16 %v4607
  %v4616 = vunpack.c.l.b16 %v4608
  %v4617 = vpack.c.b16 %v4614, %v4613
  %v4618 = vpack.c.b16 %v4616, %v4615
  %4623 = vrot.lane.b32.xlu0 %v4596, 127
  %v4624 = vpop.permute.xlu0 %4623
  %4625 = vrot.lane.b32.xlu0 %v4597, 127
  %v4626 = vpop.permute.xlu0 %4625
  %4627 = vrot.lane.b32.xlu0 %v4598, 127
  %v4628 = vpop.permute.xlu0 %4627
  %4629 = vrot.lane.b32.xlu0 %v4599, 127
  %v4630 = vpop.permute.xlu0 %4629
  %vm4635 = vcmask 523264
  %v4637 = vsel %vm4635, %v4617, 0
  %v4640 = vsel %vm4635, %v4618, 0
  %4642 = vmatprep.subr.bf16.mxu0 0
  %4643 = vmatpush1.bf16.msra.mxu0 %v4624
  %4644 = vmatprep.subr.bf16.mxu0 0
  %4645 = vmatpush1.bf16.msra.mxu0 %v4626
  %4646 = vmatprep.subr.bf16.mxu0 0
  %4647 = vmatpush1.bf16.msra.mxu0 %v4628
  %4648 = vmatprep.subr.bf16.mxu0 0
  %4649 = vmatpush1.bf16.msra.mxu0 %v4630
  %4650 = vmatprep.subr.bf16.mxu0 0
  %4651 = vmatpush1.bf16.msra.mxu0 0
  %4652 = vmatprep.subr.bf16.mxu0 0
  %4653 = vmatpush1.bf16.msra.mxu0 0
  %4654 = vmatprep.subr.bf16.mxu0 0
  %4655 = vmatpush1.bf16.msra.mxu0 0
  %4656 = vmatprep.subr.bf16.mxu0 0
  %4657 = vmatpush1.bf16.msra.mxu0 0
  %4658 = vmatprep.subr.bf16.mxu0 0
  %4659 = vmatpush1.bf16.msra.mxu0 0
  %4660 = vmatprep.subr.bf16.mxu0 0
  %4661 = vmatpush1.bf16.msra.mxu0 0
  %4662 = vmatprep.subr.bf16.mxu0 0
  %4663 = vmatpush1.bf16.msra.mxu0 0
  %4664 = vmatprep.subr.bf16.mxu0 0
  %4665 = vmatpush1.bf16.msra.mxu0 0
  %4666 = vmatprep.subr.bf16.mxu0 0
  %4667 = vmatpush1.bf16.msra.mxu0 0
  %4668 = vmatprep.subr.bf16.mxu0 0
  %4669 = vmatpush1.bf16.msra.mxu0 0
  %4670 = vmatprep.subr.bf16.mxu0 0
  %4671 = vmatpush1.bf16.msra.mxu0 0
  %4672 = vmatprep.subr.bf16.mxu0 0
  %4673 = vmatpush1.bf16.msra.mxu0 0
  %4674 = vmatprep.mubr.bf16.mxu0 0
  %4675 = vmatmul.mubr.bf16.gmra.mrb[0].mxu0 %v4637
  %v4676 = vpop.f32.mrb[0].mxu0
  %v4677 = vadd.f32 0.0, %v4676
  %v4678 = vpop.f32.mrb[0].mxu0
  %v4679 = vpop.f32.mrb[0].mxu0
  %v4680 = vadd.f32 0.0, %v4679
  %v4681 = vpop.f32.mrb[0].mxu0
  %4682 = vmatprep.mubr.bf16.mxu0 0
  %4683 = vmatmul.mubr.bf16.gmra.mrb[0].mxu0 %v4640
  %v4684 = vpop.f32.mrb[0].mxu0
  %v4685 = vadd.f32 0.0, %v4684
  %v4686 = vpop.f32.mrb[0].mxu0
  %v4687 = vpop.f32.mrb[0].mxu0
  %v4688 = vadd.f32 0.0, %v4687
  %v4689 = vpop.f32.mrb[0].mxu0
  %4690 = vdwg.mxu0
  %v4695 = vunpack.c.l.b16 %v4600
  %v4696 = vunpack.c.l.b16 %v4601
  %v4697 = vunpack.c.l.b16 %v4602
  %v4698 = vunpack.c.l.b16 %v4603
  %v4699 = vpack.c.b16 %v4696, %v4695
  %v4700 = vpack.c.b16 %v4698, %v4697
  %v4702 = vsel %vm4635, %v4699, 0
  %v4705 = vsel %vm4635, %v4700, 0
  %4707 = vmatprep.subr.bf16.mxu0 0
  %4708 = vmatpush1.bf16.msra.mxu0 %v4596
  %4709 = vmatprep.subr.bf16.mxu0 0
  %4710 = vmatpush1.bf16.msra.mxu0 %v4597
  %4711 = vmatprep.subr.bf16.mxu0 0
  %4712 = vmatpush1.bf16.msra.mxu0 %v4598
  %4713 = vmatprep.subr.bf16.mxu0 0
  %4714 = vmatpush1.bf16.msra.mxu0 %v4599
  %4715 = vmatprep.subr.bf16.mxu0 0
  %4716 = vmatpush1.bf16.msra.mxu0 0
  %4717 = vmatprep.subr.bf16.mxu0 0
  %4718 = vmatpush1.bf16.msra.mxu0 0
  %4719 = vmatprep.subr.bf16.mxu0 0
  %4720 = vmatpush1.bf16.msra.mxu0 0
  %4721 = vmatprep.subr.bf16.mxu0 0
  %4722 = vmatpush1.bf16.msra.mxu0 0
  %4723 = vmatprep.subr.bf16.mxu0 0
  %4724 = vmatpush1.bf16.msra.mxu0 0
  %4725 = vmatprep.subr.bf16.mxu0 0
  %4726 = vmatpush1.bf16.msra.mxu0 0
  %4727 = vmatprep.subr.bf16.mxu0 0
  %4728 = vmatpush1.bf16.msra.mxu0 0
  %4729 = vmatprep.subr.bf16.mxu0 0
  %4730 = vmatpush1.bf16.msra.mxu0 0
  %4731 = vmatprep.subr.bf16.mxu0 0
  %4732 = vmatpush1.bf16.msra.mxu0 0
  %4733 = vmatprep.subr.bf16.mxu0 0
  %4734 = vmatpush1.bf16.msra.mxu0 0
  %4735 = vmatprep.subr.bf16.mxu0 0
  %4736 = vmatpush1.bf16.msra.mxu0 0
  %4737 = vmatprep.subr.bf16.mxu0 0
  %4738 = vmatpush1.bf16.msra.mxu0 0
  %4739 = vmatprep.mubr.bf16.mxu0 0
  %4740 = vmatmul.mubr.bf16.gmra.mrb[0].mxu0 %v4702
  %v4741 = vpop.f32.mrb[0].mxu0
  %v4742 = vadd.f32 %v4677, %v4741
  %v4743 = vpop.f32.mrb[0].mxu0
  %v4744 = vpop.f32.mrb[0].mxu0
  %v4745 = vadd.f32 %v4680, %v4744
  %v4746 = vpop.f32.mrb[0].mxu0
  %4747 = vmatprep.mubr.bf16.mxu0 0
  %4748 = vmatmul.mubr.bf16.gmra.mrb[0].mxu0 %v4705
  %v4749 = vpop.f32.mrb[0].mxu0
  %v4750 = vadd.f32 %v4685, %v4749
  %v4751 = vpop.f32.mrb[0].mxu0
  %v4752 = vpop.f32.mrb[0].mxu0
  %v4753 = vadd.f32 %v4688, %v4752
  %v4754 = vpop.f32.mrb[0].mxu0
  %4755 = vdwg.mxu0
  %s4756 = scalar_lea.vmem %s2, 32
  %v4757 = vld [vmem:[%s4756] sm:$0xf]
  %v4758 = vld [vmem:[%s4756 + $0x4] sm:$0xf]
  %v4759 = vld [vmem:[%s4756 + $0x8] sm:$0xf]
  %v4760 = vld [vmem:[%s4756 + $0xc] sm:$0xf]
  %v4765 = vunpack.c.l.b16 %v4757
  %v4766 = vunpack.c.l.b16 %v4758
  %v4767 = vunpack.c.l.b16 %v4759
  %v4768 = vunpack.c.l.b16 %v4760
  %v4769 = vpack.c.b16 %v4766, %v4765
  %v4770 = vpack.c.b16 %v4768, %v4767
  %4771 = vrot.lane.b32.xlu0 %v4596, 126
  %v4772 = vpop.permute.xlu0 %4771
  %4773 = vrot.lane.b32.xlu0 %v4597, 126
  %v4774 = vpop.permute.xlu0 %4773
  %4775 = vrot.lane.b32.xlu0 %v4598, 126
  %v4776 = vpop.permute.xlu0 %4775
  %4777 = vrot.lane.b32.xlu0 %v4599, 126
  %v4778 = vpop.permute.xlu0 %4777
  %v4784 = vsel %vm4635, %v4769, 0
  %v4787 = vsel %vm4635, %v4770, 0
  %4789 = vmatprep.subr.bf16.mxu0 0
  %4790 = vmatpush1.bf16.msra.mxu0 %v4772
  %4791 = vmatprep.subr.bf16.mxu0 0
  %4792 = vmatpush1.bf16.msra.mxu0 %v4774
  %4793 = vmatprep.subr.bf16.mxu0 0
  %4794 = vmatpush1.bf16.msra.mxu0 %v4776
  %4795 = vmatprep.subr.bf16.mxu0 0
  %4796 = vmatpush1.bf16.msra.mxu0 %v4778
  %4797 = vmatprep.subr.bf16.mxu0 0
  %4798 = vmatpush1.bf16.msra.mxu0 0
  %4799 = vmatprep.subr.bf16.mxu0 0
  %4800 = vmatpush1.bf16.msra.mxu0 0
  %4801 = vmatprep.subr.bf16.mxu0 0
  %4802 = vmatpush1.bf16.msra.mxu0 0
  %4803 = vmatprep.subr.bf16.mxu0 0
  %4804 = vmatpush1.bf16.msra.mxu0 0
  %4805 = vmatprep.subr.bf16.mxu0 0
  %4806 = vmatpush1.bf16.msra.mxu0 0
  %4807 = vmatprep.subr.bf16.mxu0 0
  %4808 = vmatpush1.bf16.msra.mxu0 0
  %4809 = vmatprep.subr.bf16.mxu0 0
  %4810 = vmatpush1.bf16.msra.mxu0 0
  %4811 = vmatprep.subr.bf16.mxu0 0
  %4812 = vmatpush1.bf16.msra.mxu0 0
  %4813 = vmatprep.subr.bf16.mxu0 0
  %4814 = vmatpush1.bf16.msra.mxu0 0
  %4815 = vmatprep.subr.bf16.mxu0 0
  %4816 = vmatpush1.bf16.msra.mxu0 0
  %4817 = vmatprep.subr.bf16.mxu0 0
  %4818 = vmatpush1.bf16.msra.mxu0 0
  %4819 = vmatprep.subr.bf16.mxu0 0
  %4820 = vmatpush1.bf16.msra.mxu0 0
  %4821 = vmatprep.mubr.bf16.mxu0 0
  %4822 = vmatmul.mubr.bf16.gmra.mrb[0].mxu0 %v4784
  %v4823 = vpop.f32.mrb[0].mxu0
  %v4824 = vadd.f32 0.0, %v4823
  %v4825 = vpop.f32.mrb[0].mxu0
  %v4826 = vpop.f32.mrb[0].mxu0
  %v4827 = vadd.f32 0.0, %v4826
  %v4828 = vpop.f32.mrb[0].mxu0
  %4829 = vmatprep.mubr.bf16.mxu0 0
  %4830 = vmatmul.mubr.bf16.gmra.mrb[0].mxu0 %v4787
  %v4831 = vpop.f32.mrb[0].mxu0
  %v4832 = vadd.f32 0.0, %v4831
  %v4833 = vpop.f32.mrb[0].mxu0
  %v4834 = vpop.f32.mrb[0].mxu0
  %v4835 = vadd.f32 0.0, %v4834
  %v4836 = vpop.f32.mrb[0].mxu0
  %4837 = vdwg.mxu0
  %v4838 = vadd.f32 %v4742, %v4824
  %v4839 = vadd.f32 %v4745, %v4827
  %v4840 = vadd.f32 %v4750, %v4832
  %v4841 = vadd.f32 %v4753, %v4835
  %s4842 = scalar_lea.vmem %s2, 48
  %v4843 = vld [vmem:[%s4842] sm:$0xf]
  %v4844 = vld [vmem:[%s4842 + $0x4] sm:$0xf]
  %v4845 = vld [vmem:[%s4842 + $0x8] sm:$0xf]
  %v4846 = vld [vmem:[%s4842 + $0xc] sm:$0xf]
  %v4851 = vunpack.c.l.b16 %v4843
  %v4852 = vunpack.c.l.b16 %v4844
  %v4853 = vunpack.c.l.b16 %v4845
  %v4854 = vunpack.c.l.b16 %v4846
  %v4855 = vpack.c.b16 %v4852, %v4851
  %v4856 = vpack.c.b16 %v4854, %v4853
  %4857 = vrot.lane.b32.xlu0 %v4596, 125
  %v4858 = vpop.permute.xlu0 %4857
  %4859 = vrot.lane.b32.xlu0 %v4597, 125
  %v4860 = vpop.permute.xlu0 %4859
  %4861 = vrot.lane.b32.xlu0 %v4598, 125
  %v4862 = vpop.permute.xlu0 %4861
  %4863 = vrot.lane.b32.xlu0 %v4599, 125
  %v4864 = vpop.permute.xlu0 %4863
  %v4870 = vsel %vm4635, %v4855, 0
  %v4873 = vsel %vm4635, %v4856, 0
  %4875 = vmatprep.subr.bf16.mxu0 0
  %4876 = vmatpush1.bf16.msra.mxu0 %v4858
  %4877 = vmatprep.subr.bf16.mxu0 0
  %4878 = vmatpush1.bf16.msra.mxu0 %v4860
  %4879 = vmatprep.subr.bf16.mxu0 0
  %4880 = vmatpush1.bf16.msra.mxu0 %v4862
  %4881 = vmatprep.subr.bf16.mxu0 0
  %4882 = vmatpush1.bf16.msra.mxu0 %v4864
  %4883 = vmatprep.subr.bf16.mxu0 0
  %4884 = vmatpush1.bf16.msra.mxu0 0
  %4885 = vmatprep.subr.bf16.mxu0 0
  %4886 = vmatpush1.bf16.msra.mxu0 0
  %4887 = vmatprep.subr.bf16.mxu0 0
  %4888 = vmatpush1.bf16.msra.mxu0 0
  %4889 = vmatprep.subr.bf16.mxu0 0
  %4890 = vmatpush1.bf16.msra.mxu0 0
  %4891 = vmatprep.subr.bf16.mxu0 0
  %4892 = vmatpush1.bf16.msra.mxu0 0
  %4893 = vmatprep.subr.bf16.mxu0 0
  %4894 = vmatpush1.bf16.msra.mxu0 0
  %4895 = vmatprep.subr.bf16.mxu0 0
  %4896 = vmatpush1.bf16.msra.mxu0 0
  %4897 = vmatprep.subr.bf16.mxu0 0
  %4898 = vmatpush1.bf16.msra.mxu0 0
  %4899 = vmatprep.subr.bf16.mxu0 0
  %4900 = vmatpush1.bf16.msra.mxu0 0
  %4901 = vmatprep.subr.bf16.mxu0 0
  %4902 = vmatpush1.bf16.msra.mxu0 0
  %4903 = vmatprep.subr.bf16.mxu0 0
  %4904 = vmatpush1.bf16.msra.mxu0 0
  %4905 = vmatprep.subr.bf16.mxu0 0
  %4906 = vmatpush1.bf16.msra.mxu0 0
  %4907 = vmatprep.mubr.bf16.mxu0 0
  %4908 = vmatmul.mubr.bf16.gmra.mrb[0].mxu0 %v4870
  %v4909 = vpop.f32.mrb[0].mxu0
  %v4910 = vadd.f32 0.0, %v4909
  %v4911 = vpop.f32.mrb[0].mxu0
  %v4912 = vpop.f32.mrb[0].mxu0
  %v4913 = vadd.f32 0.0, %v4912
  %v4914 = vpop.f32.mrb[0].mxu0
  %4915 = vmatprep.mubr.bf16.mxu0 0
  %4916 = vmatmul.mubr.bf16.gmra.mrb[0].mxu0 %v4873
  %v4917 = vpop.f32.mrb[0].mxu0
  %v4918 = vadd.f32 0.0, %v4917
  %v4919 = vpop.f32.mrb[0].mxu0
  %v4920 = vpop.f32.mrb[0].mxu0
  %v4921 = vadd.f32 0.0, %v4920
  %v4922 = vpop.f32.mrb[0].mxu0
  %4923 = vdwg.mxu0
  %v4924 = vadd.f32 %v4838, %v4910
  %v4925 = vadd.f32 %v4839, %v4913
  %v4926 = vadd.f32 %v4840, %v4918
  %v4927 = vadd.f32 %v4841, %v4921
  %s4928 = scalar_lea.vmem %s2, 64
  %v4929 = vld [vmem:[%s4928] sm:$0xf]
  %v4930 = vld [vmem:[%s4928 + $0x4] sm:$0xf]
  %v4931 = vld [vmem:[%s4928 + $0x8] sm:$0xf]
  %v4932 = vld [vmem:[%s4928 + $0xc] sm:$0xf]
  %v4937 = vunpack.c.l.b16 %v4929
  %v4938 = vunpack.c.l.b16 %v4930
  %v4939 = vunpack.c.l.b16 %v4931
  %v4940 = vunpack.c.l.b16 %v4932
  %v4941 = vpack.c.b16 %v4938, %v4937
  %v4942 = vpack.c.b16 %v4940, %v4939
  %4943 = vrot.lane.b32.xlu0 %v4596, 124
  %v4944 = vpop.permute.xlu0 %4943
  %4945 = vrot.lane.b32.xlu0 %v4597, 124
  %v4946 = vpop.permute.xlu0 %4945
  %4947 = vrot.lane.b32.xlu0 %v4598, 124
  %v4948 = vpop.permute.xlu0 %4947
  %4949 = vrot.lane.b32.xlu0 %v4599, 124
  %v4950 = vpop.permute.xlu0 %4949
  %v4956 = vsel %vm4635, %v4941, 0
  %v4959 = vsel %vm4635, %v4942, 0
  %4961 = vmatprep.subr.bf16.mxu0 0
  %4962 = vmatpush1.bf16.msra.mxu0 %v4944
  %4963 = vmatprep.subr.bf16.mxu0 0
  %4964 = vmatpush1.bf16.msra.mxu0 %v4946
  %4965 = vmatprep.subr.bf16.mxu0 0
  %4966 = vmatpush1.bf16.msra.mxu0 %v4948
  %4967 = vmatprep.subr.bf16.mxu0 0
  %4968 = vmatpush1.bf16.msra.mxu0 %v4950
  %4969 = vmatprep.subr.bf16.mxu0 0
  %4970 = vmatpush1.bf16.msra.mxu0 0
  %4971 = vmatprep.subr.bf16.mxu0 0
  %4972 = vmatpush1.bf16.msra.mxu0 0
  %4973 = vmatprep.subr.bf16.mxu0 0
  %4974 = vmatpush1.bf16.msra.mxu0 0
  %4975 = vmatprep.subr.bf16.mxu0 0
  %4976 = vmatpush1.bf16.msra.mxu0 0
  %4977 = vmatprep.subr.bf16.mxu0 0
  %4978 = vmatpush1.bf16.msra.mxu0 0
  %4979 = vmatprep.subr.bf16.mxu0 0
  %4980 = vmatpush1.bf16.msra.mxu0 0
  %4981 = vmatprep.subr.bf16.mxu0 0
  %4982 = vmatpush1.bf16.msra.mxu0 0
  %4983 = vmatprep.subr.bf16.mxu0 0
  %4984 = vmatpush1.bf16.msra.mxu0 0
  %4985 = vmatprep.subr.bf16.mxu0 0
  %4986 = vmatpush1.bf16.msra.mxu0 0
  %4987 = vmatprep.subr.bf16.mxu0 0
  %4988 = vmatpush1.bf16.msra.mxu0 0
  %4989 = vmatprep.subr.bf16.mxu0 0
  %4990 = vmatpush1.bf16.msra.mxu0 0
  %4991 = vmatprep.subr.bf16.mxu0 0
  %4992 = vmatpush1.bf16.msra.mxu0 0
  %4993 = vmatprep.mubr.bf16.mxu0 0
  %4994 = vmatmul.mubr.bf16.gmra.mrb[0].mxu0 %v4956
  %v4995 = vpop.f32.mrb[0].mxu0
  %v4996 = vadd.f32 0.0, %v4995
  %v4997 = vpop.f32.mrb[0].mxu0
  %v4998 = vpop.f32.mrb[0].mxu0
  %v4999 = vadd.f32 0.0, %v4998
  %v5000 = vpop.f32.mrb[0].mxu0
  %5001 = vmatprep.mubr.bf16.mxu0 0
  %5002 = vmatmul.mubr.bf16.gmra.mrb[0].mxu0 %v4959
  %v5003 = vpop.f32.mrb[0].mxu0
  %v5004 = vadd.f32 0.0, %v5003
  %v5005 = vpop.f32.mrb[0].mxu0
  %v5006 = vpop.f32.mrb[0].mxu0
  %v5007 = vadd.f32 0.0, %v5006
  %v5008 = vpop.f32.mrb[0].mxu0
  %5009 = vdwg.mxu0
  %v5010 = vadd.f32 %v4924, %v4996
  %v5011 = vadd.f32 %v4925, %v4999
  %v5012 = vadd.f32 %v4926, %v5004
  %v5013 = vadd.f32 %v4927, %v5007
  %s5014 = scalar_lea.vmem %s2, 80
  %v5015 = vld [vmem:[%s5014] sm:$0xf]
  %v5016 = vld [vmem:[%s5014 + $0x4] sm:$0xf]
  %v5017 = vld [vmem:[%s5014 + $0x8] sm:$0xf]
  %v5018 = vld [vmem:[%s5014 + $0xc] sm:$0xf]
  %v5023 = vunpack.c.l.b16 %v5015
  %v5024 = vunpack.c.l.b16 %v5016
  %v5025 = vunpack.c.l.b16 %v5017
  %v5026 = vunpack.c.l.b16 %v5018
  %v5027 = vpack.c.b16 %v5024, %v5023
  %v5028 = vpack.c.b16 %v5026, %v5025
  %5029 = vrot.lane.b32.xlu0 %v4596, 118
  %v5030 = vpop.permute.xlu0 %5029
  %5031 = vrot.lane.b32.xlu0 %v4597, 118
  %v5032 = vpop.permute.xlu0 %5031
  %5033 = vrot.lane.b32.xlu0 %v4598, 118
  %v5034 = vpop.permute.xlu0 %5033
  %5035 = vrot.lane.b32.xlu0 %v4599, 118
  %v5036 = vpop.permute.xlu0 %5035
  %v5042 = vsel %vm4635, %v5027, 0
  %v5045 = vsel %vm4635, %v5028, 0
  %5047 = vmatprep.subr.bf16.mxu0 0
  %5048 = vmatpush1.bf16.msra.mxu0 %v5030
  %5049 = vmatprep.subr.bf16.mxu0 0
  %5050 = vmatpush1.bf16.msra.mxu0 %v5032
  %5051 = vmatprep.subr.bf16.mxu0 0
  %5052 = vmatpush1.bf16.msra.mxu0 %v5034
  %5053 = vmatprep.subr.bf16.mxu0 0
  %5054 = vmatpush1.bf16.msra.mxu0 %v5036
  %5055 = vmatprep.subr.bf16.mxu0 0
  %5056 = vmatpush1.bf16.msra.mxu0 0
  %5057 = vmatprep.subr.bf16.mxu0 0
  %5058 = vmatpush1.bf16.msra.mxu0 0
  %5059 = vmatprep.subr.bf16.mxu0 0
  %5060 = vmatpush1.bf16.msra.mxu0 0
  %5061 = vmatprep.subr.bf16.mxu0 0
  %5062 = vmatpush1.bf16.msra.mxu0 0
  %5063 = vmatprep.subr.bf16.mxu0 0
  %5064 = vmatpush1.bf16.msra.mxu0 0
  %5065 = vmatprep.subr.bf16.mxu0 0
  %5066 = vmatpush1.bf16.msra.mxu0 0
  %5067 = vmatprep.subr.bf16.mxu0 0
  %5068 = vmatpush1.bf16.msra.mxu0 0
  %5069 = vmatprep.subr.bf16.mxu0 0
  %5070 = vmatpush1.bf16.msra.mxu0 0
  %5071 = vmatprep.subr.bf16.mxu0 0
  %5072 = vmatpush1.bf16.msra.mxu0 0
  %5073 = vmatprep.subr.bf16.mxu0 0
  %5074 = vmatpush1.bf16.msra.mxu0 0
  %5075 = vmatprep.subr.bf16.mxu0 0
  %5076 = vmatpush1.bf16.msra.mxu0 0
  %5077 = vmatprep.subr.bf16.mxu0 0
  %5078 = vmatpush1.bf16.msra.mxu0 0
  %5079 = vmatprep.mubr.bf16.mxu0 0
  %5080 = vmatmul.mubr.bf16.gmra.mrb[0].mxu0 %v5042
  %v5081 = vpop.f32.mrb[0].mxu0
  %v5082 = vadd.f32 0.0, %v5081
  %v5083 = vpop.f32.mrb[0].mxu0
  %v5084 = vpop.f32.mrb[0].mxu0
  %v5085 = vadd.f32 0.0, %v5084
  %v5086 = vpop.f32.mrb[0].mxu0
  %5087 = vmatprep.mubr.bf16.mxu0 0
  %5088 = vmatmul.mubr.bf16.gmra.mrb[0].mxu0 %v5045
  %v5089 = vpop.f32.mrb[0].mxu0
  %v5090 = vadd.f32 0.0, %v5089
  %v5091 = vpop.f32.mrb[0].mxu0
  %v5092 = vpop.f32.mrb[0].mxu0
  %v5093 = vadd.f32 0.0, %v5092
  %v5094 = vpop.f32.mrb[0].mxu0
  %5095 = vdwg.mxu0
  %v5096 = vadd.f32 %v5010, %v5082
  %v5097 = vadd.f32 %v5011, %v5085
  %v5098 = vadd.f32 %v5012, %v5090
  %v5099 = vadd.f32 %v5013, %v5093
  %s5100 = scalar_lea.vmem %s2, 96
  %v5101 = vld [vmem:[%s5100] sm:$0xf]
  %v5102 = vld [vmem:[%s5100 + $0x4] sm:$0xf]
  %v5103 = vld [vmem:[%s5100 + $0x8] sm:$0xf]
  %v5104 = vld [vmem:[%s5100 + $0xc] sm:$0xf]
  %v5109 = vunpack.c.l.b16 %v5101
  %v5110 = vunpack.c.l.b16 %v5102
  %v5111 = vunpack.c.l.b16 %v5103
  %v5112 = vunpack.c.l.b16 %v5104
  %v5113 = vpack.c.b16 %v5110, %v5109
  %v5114 = vpack.c.b16 %v5112, %v5111
  %5115 = vrot.lane.b32.xlu0 %v4596, 117
  %v5116 = vpop.permute.xlu0 %5115
  %5117 = vrot.lane.b32.xlu0 %v4597, 117
  %v5118 = vpop.permute.xlu0 %5117
  %5119 = vrot.lane.b32.xlu0 %v4598, 117
  %v5120 = vpop.permute.xlu0 %5119
  %5121 = vrot.lane.b32.xlu0 %v4599, 117
  %v5122 = vpop.permute.xlu0 %5121
  %v5128 = vsel %vm4635, %v5113, 0
  %v5131 = vsel %vm4635, %v5114, 0
  %5133 = vmatprep.subr.bf16.mxu0 0
  %5134 = vmatpush1.bf16.msra.mxu0 %v5116
  %5135 = vmatprep.subr.bf16.mxu0 0
  %5136 = vmatpush1.bf16.msra.mxu0 %v5118
  %5137 = vmatprep.subr.bf16.mxu0 0
  %5138 = vmatpush1.bf16.msra.mxu0 %v5120
  %5139 = vmatprep.subr.bf16.mxu0 0
  %5140 = vmatpush1.bf16.msra.mxu0 %v5122
  %5141 = vmatprep.subr.bf16.mxu0 0
  %5142 = vmatpush1.bf16.msra.mxu0 0
  %5143 = vmatprep.subr.bf16.mxu0 0
  %5144 = vmatpush1.bf16.msra.mxu0 0
  %5145 = vmatprep.subr.bf16.mxu0 0
  %5146 = vmatpush1.bf16.msra.mxu0 0
  %5147 = vmatprep.subr.bf16.mxu0 0
  %5148 = vmatpush1.bf16.msra.mxu0 0
  %5149 = vmatprep.subr.bf16.mxu0 0
  %5150 = vmatpush1.bf16.msra.mxu0 0
  %5151 = vmatprep.subr.bf16.mxu0 0
  %5152 = vmatpush1.bf16.msra.mxu0 0
  %5153 = vmatprep.subr.bf16.mxu0 0
  %5154 = vmatpush1.bf16.msra.mxu0 0
  %5155 = vmatprep.subr.bf16.mxu0 0
  %5156 = vmatpush1.bf16.msra.mxu0 0
  %5157 = vmatprep.subr.bf16.mxu0 0
  %5158 = vmatpush1.bf16.msra.mxu0 0
  %5159 = vmatprep.subr.bf16.mxu0 0
  %5160 = vmatpush1.bf16.msra.mxu0 0
  %5161 = vmatprep.subr.bf16.mxu0 0
  %5162 = vmatpush1.bf16.msra.mxu0 0
  %5163 = vmatprep.subr.bf16.mxu0 0
  %5164 = vmatpush1.bf16.msra.mxu0 0
  %5165 = vmatprep.mubr.bf16.mxu0 0
  %5166 = vmatmul.mubr.bf16.gmra.mrb[0].mxu0 %v5128
  %v5167 = vpop.f32.mrb[0].mxu0
  %v5168 = vadd.f32 0.0, %v5167
  %v5169 = vpop.f32.mrb[0].mxu0
  %v5170 = vpop.f32.mrb[0].mxu0
  %v5171 = vadd.f32 0.0, %v5170
  %v5172 = vpop.f32.mrb[0].mxu0
  %5173 = vmatprep.mubr.bf16.mxu0 0
  %5174 = vmatmul.mubr.bf16.gmra.mrb[0].mxu0 %v5131
  %v5175 = vpop.f32.mrb[0].mxu0
  %v5176 = vadd.f32 0.0, %v5175
  %v5177 = vpop.f32.mrb[0].mxu0
  %v5178 = vpop.f32.mrb[0].mxu0
  %v5179 = vadd.f32 0.0, %v5178
  %v5180 = vpop.f32.mrb[0].mxu0
  %5181 = vdwg.mxu0
  %v5182 = vadd.f32 %v5096, %v5168
  %v5183 = vadd.f32 %v5097, %v5171
  %v5184 = vadd.f32 %v5098, %v5176
  %v5185 = vadd.f32 %v5099, %v5179
  %s5186 = scalar_lea.vmem %s2, 112
  %v5187 = vld [vmem:[%s5186] sm:$0xf]
  %v5188 = vld [vmem:[%s5186 + $0x4] sm:$0xf]
  %v5189 = vld [vmem:[%s5186 + $0x8] sm:$0xf]
  %v5190 = vld [vmem:[%s5186 + $0xc] sm:$0xf]
  %v5195 = vunpack.c.l.b16 %v5187
  %v5196 = vunpack.c.l.b16 %v5188
  %v5197 = vunpack.c.l.b16 %v5189
  %v5198 = vunpack.c.l.b16 %v5190
  %v5199 = vpack.c.b16 %v5196, %v5195
  %v5200 = vpack.c.b16 %v5198, %v5197
  %5201 = vrot.lane.b32.xlu0 %v4596, 116
  %v5202 = vpop.permute.xlu0 %5201
  %5203 = vrot.lane.b32.xlu0 %v4597, 116
  %v5204 = vpop.permute.xlu0 %5203
  %5205 = vrot.lane.b32.xlu0 %v4598, 116
  %v5206 = vpop.permute.xlu0 %5205
  %5207 = vrot.lane.b32.xlu0 %v4599, 116
  %v5208 = vpop.permute.xlu0 %5207
  %v5214 = vsel %vm4635, %v5199, 0
  %v5217 = vsel %vm4635, %v5200, 0
  %5219 = vmatprep.subr.bf16.mxu0 0
  %5220 = vmatpush1.bf16.msra.mxu0 %v5202
  %5221 = vmatprep.subr.bf16.mxu0 0
  %5222 = vmatpush1.bf16.msra.mxu0 %v5204
  %5223 = vmatprep.subr.bf16.mxu0 0
  %5224 = vmatpush1.bf16.msra.mxu0 %v5206
  %5225 = vmatprep.subr.bf16.mxu0 0
  %5226 = vmatpush1.bf16.msra.mxu0 %v5208
  %5227 = vmatprep.subr.bf16.mxu0 0
  %5228 = vmatpush1.bf16.msra.mxu0 0
  %5229 = vmatprep.subr.bf16.mxu0 0
  %5230 = vmatpush1.bf16.msra.mxu0 0
  %5231 = vmatprep.subr.bf16.mxu0 0
  %5232 = vmatpush1.bf16.msra.mxu0 0
  %5233 = vmatprep.subr.bf16.mxu0 0
  %5234 = vmatpush1.bf16.msra.mxu0 0
  %5235 = vmatprep.subr.bf16.mxu0 0
  %5236 = vmatpush1.bf16.msra.mxu0 0
  %5237 = vmatprep.subr.bf16.mxu0 0
  %5238 = vmatpush1.bf16.msra.mxu0 0
  %5239 = vmatprep.subr.bf16.mxu0 0
  %5240 = vmatpush1.bf16.msra.mxu0 0
  %5241 = vmatprep.subr.bf16.mxu0 0
  %5242 = vmatpush1.bf16.msra.mxu0 0
  %5243 = vmatprep.subr.bf16.mxu0 0
  %5244 = vmatpush1.bf16.msra.mxu0 0
  %5245 = vmatprep.subr.bf16.mxu0 0
  %5246 = vmatpush1.bf16.msra.mxu0 0
  %5247 = vmatprep.subr.bf16.mxu0 0
  %5248 = vmatpush1.bf16.msra.mxu0 0
  %5249 = vmatprep.subr.bf16.mxu0 0
  %5250 = vmatpush1.bf16.msra.mxu0 0
  %5251 = vmatprep.mubr.bf16.mxu0 0
  %5252 = vmatmul.mubr.bf16.gmra.mrb[0].mxu0 %v5214
  %v5253 = vpop.f32.mrb[0].mxu0
  %v5254 = vadd.f32 0.0, %v5253
  %v5255 = vpop.f32.mrb[0].mxu0
  %v5256 = vpop.f32.mrb[0].mxu0
  %v5257 = vadd.f32 0.0, %v5256
  %v5258 = vpop.f32.mrb[0].mxu0
  %5259 = vmatprep.mubr.bf16.mxu0 0
  %5260 = vmatmul.mubr.bf16.gmra.mrb[0].mxu0 %v5217
  %v5261 = vpop.f32.mrb[0].mxu0
  %v5262 = vadd.f32 0.0, %v5261
  %v5263 = vpop.f32.mrb[0].mxu0
  %v5264 = vpop.f32.mrb[0].mxu0
  %v5265 = vadd.f32 0.0, %v5264
  %v5266 = vpop.f32.mrb[0].mxu0
  %5267 = vdwg.mxu0
  %v5268 = vadd.f32 %v5182, %v5254
  %v5269 = vadd.f32 %v5183, %v5257
  %v5270 = vadd.f32 %v5184, %v5262
  %v5271 = vadd.f32 %v5185, %v5265
  %s5272 = scalar_lea.vmem %s2, 128
  %v5273 = vld [vmem:[%s5272] sm:$0xf]
  %v5274 = vld [vmem:[%s5272 + $0x4] sm:$0xf]
  %v5275 = vld [vmem:[%s5272 + $0x8] sm:$0xf]
  %v5276 = vld [vmem:[%s5272 + $0xc] sm:$0xf]
  %v5281 = vunpack.c.l.b16 %v5273
  %v5282 = vunpack.c.l.b16 %v5274
  %v5283 = vunpack.c.l.b16 %v5275
  %v5284 = vunpack.c.l.b16 %v5276
  %v5285 = vpack.c.b16 %v5282, %v5281
  %v5286 = vpack.c.b16 %v5284, %v5283
  %5287 = vrot.lane.b32.xlu0 %v4596, 115
  %v5288 = vpop.permute.xlu0 %5287
  %5289 = vrot.lane.b32.xlu0 %v4597, 115
  %v5290 = vpop.permute.xlu0 %5289
  %5291 = vrot.lane.b32.xlu0 %v4598, 115
  %v5292 = vpop.permute.xlu0 %5291
  %5293 = vrot.lane.b32.xlu0 %v4599, 115
  %v5294 = vpop.permute.xlu0 %5293
  %v5300 = vsel %vm4635, %v5285, 0
  %v5303 = vsel %vm4635, %v5286, 0
  %5305 = vmatprep.subr.bf16.mxu0 0
  %5306 = vmatpush1.bf16.msra.mxu0 %v5288
  %5307 = vmatprep.subr.bf16.mxu0 0
  %5308 = vmatpush1.bf16.msra.mxu0 %v5290
  %5309 = vmatprep.subr.bf16.mxu0 0
  %5310 = vmatpush1.bf16.msra.mxu0 %v5292
  %5311 = vmatprep.subr.bf16.mxu0 0
  %5312 = vmatpush1.bf16.msra.mxu0 %v5294
  %5313 = vmatprep.subr.bf16.mxu0 0
  %5314 = vmatpush1.bf16.msra.mxu0 0
  %5315 = vmatprep.subr.bf16.mxu0 0
  %5316 = vmatpush1.bf16.msra.mxu0 0
  %5317 = vmatprep.subr.bf16.mxu0 0
  %5318 = vmatpush1.bf16.msra.mxu0 0
  %5319 = vmatprep.subr.bf16.mxu0 0
  %5320 = vmatpush1.bf16.msra.mxu0 0
  %5321 = vmatprep.subr.bf16.mxu0 0
  %5322 = vmatpush1.bf16.msra.mxu0 0
  %5323 = vmatprep.subr.bf16.mxu0 0
  %5324 = vmatpush1.bf16.msra.mxu0 0
  %5325 = vmatprep.subr.bf16.mxu0 0
  %5326 = vmatpush1.bf16.msra.mxu0 0
  %5327 = vmatprep.subr.bf16.mxu0 0
  %5328 = vmatpush1.bf16.msra.mxu0 0
  %5329 = vmatprep.subr.bf16.mxu0 0
  %5330 = vmatpush1.bf16.msra.mxu0 0
  %5331 = vmatprep.subr.bf16.mxu0 0
  %5332 = vmatpush1.bf16.msra.mxu0 0
  %5333 = vmatprep.subr.bf16.mxu0 0
  %5334 = vmatpush1.bf16.msra.mxu0 0
  %5335 = vmatprep.subr.bf16.mxu0 0
  %5336 = vmatpush1.bf16.msra.mxu0 0
  %5337 = vmatprep.mubr.bf16.mxu0 0
  %5338 = vmatmul.mubr.bf16.gmra.mrb[0].mxu0 %v5300
  %v5339 = vpop.f32.mrb[0].mxu0
  %v5340 = vadd.f32 0.0, %v5339
  %v5341 = vpop.f32.mrb[0].mxu0
  %v5342 = vpop.f32.mrb[0].mxu0
  %v5343 = vadd.f32 0.0, %v5342
  %v5344 = vpop.f32.mrb[0].mxu0
  %5345 = vmatprep.mubr.bf16.mxu0 0
  %5346 = vmatmul.mubr.bf16.gmra.mrb[0].mxu0 %v5303
  %v5347 = vpop.f32.mrb[0].mxu0
  %v5348 = vadd.f32 0.0, %v5347
  %v5349 = vpop.f32.mrb[0].mxu0
  %v5350 = vpop.f32.mrb[0].mxu0
  %v5351 = vadd.f32 0.0, %v5350
  %v5352 = vpop.f32.mrb[0].mxu0
  %5353 = vdwg.mxu0
  %v5354 = vadd.f32 %v5268, %v5340
  %v5355 = vadd.f32 %v5269, %v5343
  %v5356 = vadd.f32 %v5270, %v5348
  %v5357 = vadd.f32 %v5271, %v5351
  %s5358 = scalar_lea.vmem %s2, 144
  %v5359 = vld [vmem:[%s5358] sm:$0xf]
  %v5360 = vld [vmem:[%s5358 + $0x4] sm:$0xf]
  %v5361 = vld [vmem:[%s5358 + $0x8] sm:$0xf]
  %v5362 = vld [vmem:[%s5358 + $0xc] sm:$0xf]
  %v5367 = vunpack.c.l.b16 %v5359
  %v5368 = vunpack.c.l.b16 %v5360
  %v5369 = vunpack.c.l.b16 %v5361
  %v5370 = vunpack.c.l.b16 %v5362
  %v5371 = vpack.c.b16 %v5368, %v5367
  %v5372 = vpack.c.b16 %v5370, %v5369
  %5373 = vrot.lane.b32.xlu0 %v4596, 114
  %v5374 = vpop.permute.xlu0 %5373
  %5375 = vrot.lane.b32.xlu0 %v4597, 114
  %v5376 = vpop.permute.xlu0 %5375
  %5377 = vrot.lane.b32.xlu0 %v4598, 114
  %v5378 = vpop.permute.xlu0 %5377
  %5379 = vrot.lane.b32.xlu0 %v4599, 114
  %v5380 = vpop.permute.xlu0 %5379
  %v5386 = vsel %vm4635, %v5371, 0
  %v5389 = vsel %vm4635, %v5372, 0
  %5391 = vmatprep.subr.bf16.mxu0 0
  %5392 = vmatpush1.bf16.msra.mxu0 %v5374
  %5393 = vmatprep.subr.bf16.mxu0 0
  %5394 = vmatpush1.bf16.msra.mxu0 %v5376
  %5395 = vmatprep.subr.bf16.mxu0 0
  %5396 = vmatpush1.bf16.msra.mxu0 %v5378
  %5397 = vmatprep.subr.bf16.mxu0 0
  %5398 = vmatpush1.bf16.msra.mxu0 %v5380
  %5399 = vmatprep.subr.bf16.mxu0 0
  %5400 = vmatpush1.bf16.msra.mxu0 0
  %5401 = vmatprep.subr.bf16.mxu0 0
  %5402 = vmatpush1.bf16.msra.mxu0 0
  %5403 = vmatprep.subr.bf16.mxu0 0
  %5404 = vmatpush1.bf16.msra.mxu0 0
  %5405 = vmatprep.subr.bf16.mxu0 0
  %5406 = vmatpush1.bf16.msra.mxu0 0
  %5407 = vmatprep.subr.bf16.mxu0 0
  %5408 = vmatpush1.bf16.msra.mxu0 0
  %5409 = vmatprep.subr.bf16.mxu0 0
  %5410 = vmatpush1.bf16.msra.mxu0 0
  %5411 = vmatprep.subr.bf16.mxu0 0
  %5412 = vmatpush1.bf16.msra.mxu0 0
  %5413 = vmatprep.subr.bf16.mxu0 0
  %5414 = vmatpush1.bf16.msra.mxu0 0
  %5415 = vmatprep.subr.bf16.mxu0 0
  %5416 = vmatpush1.bf16.msra.mxu0 0
  %5417 = vmatprep.subr.bf16.mxu0 0
  %5418 = vmatpush1.bf16.msra.mxu0 0
  %5419 = vmatprep.subr.bf16.mxu0 0
  %5420 = vmatpush1.bf16.msra.mxu0 0
  %5421 = vmatprep.subr.bf16.mxu0 0
  %5422 = vmatpush1.bf16.msra.mxu0 0
  %5423 = vmatprep.mubr.bf16.mxu0 0
  %5424 = vmatmul.mubr.bf16.gmra.mrb[0].mxu0 %v5386
  %v5425 = vpop.f32.mrb[0].mxu0
  %v5426 = vadd.f32 0.0, %v5425
  %v5427 = vpop.f32.mrb[0].mxu0
  %v5428 = vpop.f32.mrb[0].mxu0
  %v5429 = vadd.f32 0.0, %v5428
  %v5430 = vpop.f32.mrb[0].mxu0
  %5431 = vmatprep.mubr.bf16.mxu0 0
  %5432 = vmatmul.mubr.bf16.gmra.mrb[0].mxu0 %v5389
  %v5433 = vpop.f32.mrb[0].mxu0
  %v5434 = vadd.f32 0.0, %v5433
  %v5435 = vpop.f32.mrb[0].mxu0
  %v5436 = vpop.f32.mrb[0].mxu0
  %v5437 = vadd.f32 0.0, %v5436
  %v5438 = vpop.f32.mrb[0].mxu0
  %5439 = vdwg.mxu0
  %v5440 = vadd.f32 %v5354, %v5426
  %v5441 = vadd.f32 %v5355, %v5429
  %v5442 = vadd.f32 %v5356, %v5434
  %v5443 = vadd.f32 %v5357, %v5437
  %s5444 = scalar_lea.vmem %s2, 160
  %v5445 = vld [vmem:[%s5444] sm:$0xf]
  %v5446 = vld [vmem:[%s5444 + $0x4] sm:$0xf]
  %v5447 = vld [vmem:[%s5444 + $0x8] sm:$0xf]
  %v5448 = vld [vmem:[%s5444 + $0xc] sm:$0xf]
  %v5453 = vunpack.c.l.b16 %v5445
  %v5454 = vunpack.c.l.b16 %v5446
  %v5455 = vunpack.c.l.b16 %v5447
  %v5456 = vunpack.c.l.b16 %v5448
  %v5457 = vpack.c.b16 %v5454, %v5453
  %v5458 = vpack.c.b16 %v5456, %v5455
  %5459 = vrot.lane.b32.xlu0 %v4596, 108
  %v5460 = vpop.permute.xlu0 %5459
  %5461 = vrot.lane.b32.xlu0 %v4597, 108
  %v5462 = vpop.permute.xlu0 %5461
  %5463 = vrot.lane.b32.xlu0 %v4598, 108
  %v5464 = vpop.permute.xlu0 %5463
  %5465 = vrot.lane.b32.xlu0 %v4599, 108
  %v5466 = vpop.permute.xlu0 %5465
  %v5472 = vsel %vm4635, %v5457, 0
  %v5475 = vsel %vm4635, %v5458, 0
  %5477 = vmatprep.subr.bf16.mxu0 0
  %5478 = vmatpush1.bf16.msra.mxu0 %v5460
  %5479 = vmatprep.subr.bf16.mxu0 0
  %5480 = vmatpush1.bf16.msra.mxu0 %v5462
  %5481 = vmatprep.subr.bf16.mxu0 0
  %5482 = vmatpush1.bf16.msra.mxu0 %v5464
  %5483 = vmatprep.subr.bf16.mxu0 0
  %5484 = vmatpush1.bf16.msra.mxu0 %v5466
  %5485 = vmatprep.subr.bf16.mxu0 0
  %5486 = vmatpush1.bf16.msra.mxu0 0
  %5487 = vmatprep.subr.bf16.mxu0 0
  %5488 = vmatpush1.bf16.msra.mxu0 0
  %5489 = vmatprep.subr.bf16.mxu0 0
  %5490 = vmatpush1.bf16.msra.mxu0 0
  %5491 = vmatprep.subr.bf16.mxu0 0
  %5492 = vmatpush1.bf16.msra.mxu0 0
  %5493 = vmatprep.subr.bf16.mxu0 0
  %5494 = vmatpush1.bf16.msra.mxu0 0
  %5495 = vmatprep.subr.bf16.mxu0 0
  %5496 = vmatpush1.bf16.msra.mxu0 0
  %5497 = vmatprep.subr.bf16.mxu0 0
  %5498 = vmatpush1.bf16.msra.mxu0 0
  %5499 = vmatprep.subr.bf16.mxu0 0
  %5500 = vmatpush1.bf16.msra.mxu0 0
  %5501 = vmatprep.subr.bf16.mxu0 0
  %5502 = vmatpush1.bf16.msra.mxu0 0
  %5503 = vmatprep.subr.bf16.mxu0 0
  %5504 = vmatpush1.bf16.msra.mxu0 0
  %5505 = vmatprep.subr.bf16.mxu0 0
  %5506 = vmatpush1.bf16.msra.mxu0 0
  %5507 = vmatprep.subr.bf16.mxu0 0
  %5508 = vmatpush1.bf16.msra.mxu0 0
  %5509 = vmatprep.mubr.bf16.mxu0 0
  %5510 = vmatmul.mubr.bf16.gmra.mrb[0].mxu0 %v5472
  %v5511 = vpop.f32.mrb[0].mxu0
  %v5512 = vadd.f32 0.0, %v5511
  %v5513 = vpop.f32.mrb[0].mxu0
  %v5514 = vpop.f32.mrb[0].mxu0
  %v5515 = vadd.f32 0.0, %v5514
  %v5516 = vpop.f32.mrb[0].mxu0
  %5517 = vmatprep.mubr.bf16.mxu0 0
  %5518 = vmatmul.mubr.bf16.gmra.mrb[0].mxu0 %v5475
  %v5519 = vpop.f32.mrb[0].mxu0
  %v5520 = vadd.f32 0.0, %v5519
  %v5521 = vpop.f32.mrb[0].mxu0
  %v5522 = vpop.f32.mrb[0].mxu0
  %v5523 = vadd.f32 0.0, %v5522
  %v5524 = vpop.f32.mrb[0].mxu0
  %5525 = vdwg.mxu0
  %v5526 = vadd.f32 %v5440, %v5512
  %v5527 = vadd.f32 %v5441, %v5515
  %v5528 = vadd.f32 %v5442, %v5520
  %v5529 = vadd.f32 %v5443, %v5523
  %s5530 = scalar_lea.vmem %s2, 176
  %v5531 = vld [vmem:[%s5530] sm:$0xf]
  %v5532 = vld [vmem:[%s5530 + $0x4] sm:$0xf]
  %v5533 = vld [vmem:[%s5530 + $0x8] sm:$0xf]
  %v5534 = vld [vmem:[%s5530 + $0xc] sm:$0xf]
  %v5539 = vunpack.c.l.b16 %v5531
  %v5540 = vunpack.c.l.b16 %v5532
  %v5541 = vunpack.c.l.b16 %v5533
  %v5542 = vunpack.c.l.b16 %v5534
  %v5543 = vpack.c.b16 %v5540, %v5539
  %v5544 = vpack.c.b16 %v5542, %v5541
  %5545 = vrot.lane.b32.xlu0 %v4596, 107
  %v5546 = vpop.permute.xlu0 %5545
  %5547 = vrot.lane.b32.xlu0 %v4597, 107
  %v5548 = vpop.permute.xlu0 %5547
  %5549 = vrot.lane.b32.xlu0 %v4598, 107
  %v5550 = vpop.permute.xlu0 %5549
  %5551 = vrot.lane.b32.xlu0 %v4599, 107
  %v5552 = vpop.permute.xlu0 %5551
  %v5558 = vsel %vm4635, %v5543, 0
  %v5561 = vsel %vm4635, %v5544, 0
  %5563 = vmatprep.subr.bf16.mxu0 0
  %5564 = vmatpush1.bf16.msra.mxu0 %v5546
  %5565 = vmatprep.subr.bf16.mxu0 0
  %5566 = vmatpush1.bf16.msra.mxu0 %v5548
  %5567 = vmatprep.subr.bf16.mxu0 0
  %5568 = vmatpush1.bf16.msra.mxu0 %v5550
  %5569 = vmatprep.subr.bf16.mxu0 0
  %5570 = vmatpush1.bf16.msra.mxu0 %v5552
  %5571 = vmatprep.subr.bf16.mxu0 0
  %5572 = vmatpush1.bf16.msra.mxu0 0
  %5573 = vmatprep.subr.bf16.mxu0 0
  %5574 = vmatpush1.bf16.msra.mxu0 0
  %5575 = vmatprep.subr.bf16.mxu0 0
  %5576 = vmatpush1.bf16.msra.mxu0 0
  %5577 = vmatprep.subr.bf16.mxu0 0
  %5578 = vmatpush1.bf16.msra.mxu0 0
  %5579 = vmatprep.subr.bf16.mxu0 0
  %5580 = vmatpush1.bf16.msra.mxu0 0
  %5581 = vmatprep.subr.bf16.mxu0 0
  %5582 = vmatpush1.bf16.msra.mxu0 0
  %5583 = vmatprep.subr.bf16.mxu0 0
  %5584 = vmatpush1.bf16.msra.mxu0 0
  %5585 = vmatprep.subr.bf16.mxu0 0
  %5586 = vmatpush1.bf16.msra.mxu0 0
  %5587 = vmatprep.subr.bf16.mxu0 0
  %5588 = vmatpush1.bf16.msra.mxu0 0
  %5589 = vmatprep.subr.bf16.mxu0 0
  %5590 = vmatpush1.bf16.msra.mxu0 0
  %5591 = vmatprep.subr.bf16.mxu0 0
  %5592 = vmatpush1.bf16.msra.mxu0 0
  %5593 = vmatprep.subr.bf16.mxu0 0
  %5594 = vmatpush1.bf16.msra.mxu0 0
  %5595 = vmatprep.mubr.bf16.mxu0 0
  %5596 = vmatmul.mubr.bf16.gmra.mrb[0].mxu0 %v5558
  %v5597 = vpop.f32.mrb[0].mxu0
  %v5598 = vadd.f32 0.0, %v5597
  %v5599 = vpop.f32.mrb[0].mxu0
  %v5600 = vpop.f32.mrb[0].mxu0
  %v5601 = vadd.f32 0.0, %v5600
  %v5602 = vpop.f32.mrb[0].mxu0
  %5603 = vmatprep.mubr.bf16.mxu0 0
  %5604 = vmatmul.mubr.bf16.gmra.mrb[0].mxu0 %v5561
  %v5605 = vpop.f32.mrb[0].mxu0
  %v5606 = vadd.f32 0.0, %v5605
  %v5607 = vpop.f32.mrb[0].mxu0
  %v5608 = vpop.f32.mrb[0].mxu0
  %v5609 = vadd.f32 0.0, %v5608
  %v5610 = vpop.f32.mrb[0].mxu0
  %5611 = vdwg.mxu0
  %v5612 = vadd.f32 %v5526, %v5598
  %v5613 = vadd.f32 %v5527, %v5601
  %v5614 = vadd.f32 %v5528, %v5606
  %v5615 = vadd.f32 %v5529, %v5609
  %s5616 = scalar_lea.vmem %s2, 192
  %v5617 = vld [vmem:[%s5616] sm:$0xf]
  %v5618 = vld [vmem:[%s5616 + $0x4] sm:$0xf]
  %v5619 = vld [vmem:[%s5616 + $0x8] sm:$0xf]
  %v5620 = vld [vmem:[%s5616 + $0xc] sm:$0xf]
  %v5625 = vunpack.c.l.b16 %v5617
  %v5626 = vunpack.c.l.b16 %v5618
  %v5627 = vunpack.c.l.b16 %v5619
  %v5628 = vunpack.c.l.b16 %v5620
  %v5629 = vpack.c.b16 %v5626, %v5625
  %v5630 = vpack.c.b16 %v5628, %v5627
  %5631 = vrot.lane.b32.xlu0 %v4596, 106
  %v5632 = vpop.permute.xlu0 %5631
  %5633 = vrot.lane.b32.xlu0 %v4597, 106
  %v5634 = vpop.permute.xlu0 %5633
  %5635 = vrot.lane.b32.xlu0 %v4598, 106
  %v5636 = vpop.permute.xlu0 %5635
  %5637 = vrot.lane.b32.xlu0 %v4599, 106
  %v5638 = vpop.permute.xlu0 %5637
  %v5644 = vsel %vm4635, %v5629, 0
  %v5647 = vsel %vm4635, %v5630, 0
  %5649 = vmatprep.subr.bf16.mxu0 0
  %5650 = vmatpush1.bf16.msra.mxu0 %v5632
  %5651 = vmatprep.subr.bf16.mxu0 0
  %5652 = vmatpush1.bf16.msra.mxu0 %v5634
  %5653 = vmatprep.subr.bf16.mxu0 0
  %5654 = vmatpush1.bf16.msra.mxu0 %v5636
  %5655 = vmatprep.subr.bf16.mxu0 0
  %5656 = vmatpush1.bf16.msra.mxu0 %v5638
  %5657 = vmatprep.subr.bf16.mxu0 0
  %5658 = vmatpush1.bf16.msra.mxu0 0
  %5659 = vmatprep.subr.bf16.mxu0 0
  %5660 = vmatpush1.bf16.msra.mxu0 0
  %5661 = vmatprep.subr.bf16.mxu0 0
  %5662 = vmatpush1.bf16.msra.mxu0 0
  %5663 = vmatprep.subr.bf16.mxu0 0
  %5664 = vmatpush1.bf16.msra.mxu0 0
  %5665 = vmatprep.subr.bf16.mxu0 0
  %5666 = vmatpush1.bf16.msra.mxu0 0
  %5667 = vmatprep.subr.bf16.mxu0 0
  %5668 = vmatpush1.bf16.msra.mxu0 0
  %5669 = vmatprep.subr.bf16.mxu0 0
  %5670 = vmatpush1.bf16.msra.mxu0 0
  %5671 = vmatprep.subr.bf16.mxu0 0
  %5672 = vmatpush1.bf16.msra.mxu0 0
  %5673 = vmatprep.subr.bf16.mxu0 0
  %5674 = vmatpush1.bf16.msra.mxu0 0
  %5675 = vmatprep.subr.bf16.mxu0 0
  %5676 = vmatpush1.bf16.msra.mxu0 0
  %5677 = vmatprep.subr.bf16.mxu0 0
  %5678 = vmatpush1.bf16.msra.mxu0 0
  %5679 = vmatprep.subr.bf16.mxu0 0
  %5680 = vmatpush1.bf16.msra.mxu0 0
  %5681 = vmatprep.mubr.bf16.mxu0 0
  %5682 = vmatmul.mubr.bf16.gmra.mrb[0].mxu0 %v5644
  %v5683 = vpop.f32.mrb[0].mxu0
  %v5684 = vadd.f32 0.0, %v5683
  %v5685 = vpop.f32.mrb[0].mxu0
  %v5686 = vpop.f32.mrb[0].mxu0
  %v5687 = vadd.f32 0.0, %v5686
  %v5688 = vpop.f32.mrb[0].mxu0
  %5689 = vmatprep.mubr.bf16.mxu0 0
  %5690 = vmatmul.mubr.bf16.gmra.mrb[0].mxu0 %v5647
  %v5691 = vpop.f32.mrb[0].mxu0
  %v5692 = vadd.f32 0.0, %v5691
  %v5693 = vpop.f32.mrb[0].mxu0
  %v5694 = vpop.f32.mrb[0].mxu0
  %v5695 = vadd.f32 0.0, %v5694
  %v5696 = vpop.f32.mrb[0].mxu0
  %5697 = vdwg.mxu0
  %v5698 = vadd.f32 %v5612, %v5684
  %v5699 = vadd.f32 %v5613, %v5687
  %v5700 = vadd.f32 %v5614, %v5692
  %v5701 = vadd.f32 %v5615, %v5695
  %s5702 = scalar_lea.vmem %s2, 208
  %v5703 = vld [vmem:[%s5702] sm:$0xf]
  %v5704 = vld [vmem:[%s5702 + $0x4] sm:$0xf]
  %v5705 = vld [vmem:[%s5702 + $0x8] sm:$0xf]
  %v5706 = vld [vmem:[%s5702 + $0xc] sm:$0xf]
  %v5711 = vunpack.c.l.b16 %v5703
  %v5712 = vunpack.c.l.b16 %v5704
  %v5713 = vunpack.c.l.b16 %v5705
  %v5714 = vunpack.c.l.b16 %v5706
  %v5715 = vpack.c.b16 %v5712, %v5711
  %v5716 = vpack.c.b16 %v5714, %v5713
  %5717 = vrot.lane.b32.xlu0 %v4596, 105
  %v5718 = vpop.permute.xlu0 %5717
  %5719 = vrot.lane.b32.xlu0 %v4597, 105
  %v5720 = vpop.permute.xlu0 %5719
  %5721 = vrot.lane.b32.xlu0 %v4598, 105
  %v5722 = vpop.permute.xlu0 %5721
  %5723 = vrot.lane.b32.xlu0 %v4599, 105
  %v5724 = vpop.permute.xlu0 %5723
  %v5730 = vsel %vm4635, %v5715, 0
  %v5733 = vsel %vm4635, %v5716, 0
  %5735 = vmatprep.subr.bf16.mxu0 0
  %5736 = vmatpush1.bf16.msra.mxu0 %v5718
  %5737 = vmatprep.subr.bf16.mxu0 0
  %5738 = vmatpush1.bf16.msra.mxu0 %v5720
  %5739 = vmatprep.subr.bf16.mxu0 0
  %5740 = vmatpush1.bf16.msra.mxu0 %v5722
  %5741 = vmatprep.subr.bf16.mxu0 0
  %5742 = vmatpush1.bf16.msra.mxu0 %v5724
  %5743 = vmatprep.subr.bf16.mxu0 0
  %5744 = vmatpush1.bf16.msra.mxu0 0
  %5745 = vmatprep.subr.bf16.mxu0 0
  %5746 = vmatpush1.bf16.msra.mxu0 0
  %5747 = vmatprep.subr.bf16.mxu0 0
  %5748 = vmatpush1.bf16.msra.mxu0 0
  %5749 = vmatprep.subr.bf16.mxu0 0
  %5750 = vmatpush1.bf16.msra.mxu0 0
  %5751 = vmatprep.subr.bf16.mxu0 0
  %5752 = vmatpush1.bf16.msra.mxu0 0
  %5753 = vmatprep.subr.bf16.mxu0 0
  %5754 = vmatpush1.bf16.msra.mxu0 0
  %5755 = vmatprep.subr.bf16.mxu0 0
  %5756 = vmatpush1.bf16.msra.mxu0 0
  %5757 = vmatprep.subr.bf16.mxu0 0
  %5758 = vmatpush1.bf16.msra.mxu0 0
  %5759 = vmatprep.subr.bf16.mxu0 0
  %5760 = vmatpush1.bf16.msra.mxu0 0
  %5761 = vmatprep.subr.bf16.mxu0 0
  %5762 = vmatpush1.bf16.msra.mxu0 0
  %5763 = vmatprep.subr.bf16.mxu0 0
  %5764 = vmatpush1.bf16.msra.mxu0 0
  %5765 = vmatprep.subr.bf16.mxu0 0
  %5766 = vmatpush1.bf16.msra.mxu0 0
  %5767 = vmatprep.mubr.bf16.mxu0 0
  %5768 = vmatmul.mubr.bf16.gmra.mrb[0].mxu0 %v5730
  %v5769 = vpop.f32.mrb[0].mxu0
  %v5770 = vadd.f32 0.0, %v5769
  %v5771 = vpop.f32.mrb[0].mxu0
  %v5772 = vpop.f32.mrb[0].mxu0
  %v5773 = vadd.f32 0.0, %v5772
  %v5774 = vpop.f32.mrb[0].mxu0
  %5775 = vmatprep.mubr.bf16.mxu0 0
  %5776 = vmatmul.mubr.bf16.gmra.mrb[0].mxu0 %v5733
  %v5777 = vpop.f32.mrb[0].mxu0
  %v5778 = vadd.f32 0.0, %v5777
  %v5779 = vpop.f32.mrb[0].mxu0
  %v5780 = vpop.f32.mrb[0].mxu0
  %v5781 = vadd.f32 0.0, %v5780
  %v5782 = vpop.f32.mrb[0].mxu0
  %5783 = vdwg.mxu0
  %v5784 = vadd.f32 %v5698, %v5770
  %v5785 = vadd.f32 %v5699, %v5773
  %v5786 = vadd.f32 %v5700, %v5778
  %v5787 = vadd.f32 %v5701, %v5781
  %s5788 = scalar_lea.vmem %s2, 224
  %v5789 = vld [vmem:[%s5788] sm:$0xf]
  %v5790 = vld [vmem:[%s5788 + $0x4] sm:$0xf]
  %v5791 = vld [vmem:[%s5788 + $0x8] sm:$0xf]
  %v5792 = vld [vmem:[%s5788 + $0xc] sm:$0xf]
  %v5797 = vunpack.c.l.b16 %v5789
  %v5798 = vunpack.c.l.b16 %v5790
  %v5799 = vunpack.c.l.b16 %v5791
  %v5800 = vunpack.c.l.b16 %v5792
  %v5801 = vpack.c.b16 %v5798, %v5797
  %v5802 = vpack.c.b16 %v5800, %v5799
  %5803 = vrot.lane.b32.xlu0 %v4596, 104
  %v5804 = vpop.permute.xlu0 %5803
  %5805 = vrot.lane.b32.xlu0 %v4597, 104
  %v5806 = vpop.permute.xlu0 %5805
  %5807 = vrot.lane.b32.xlu0 %v4598, 104
  %v5808 = vpop.permute.xlu0 %5807
  %5809 = vrot.lane.b32.xlu0 %v4599, 104
  %v5810 = vpop.permute.xlu0 %5809
  %v5816 = vsel %vm4635, %v5801, 0
  %v5819 = vsel %vm4635, %v5802, 0
  %5821 = vmatprep.subr.bf16.mxu0 0
  %5822 = vmatpush1.bf16.msra.mxu0 %v5804
  %5823 = vmatprep.subr.bf16.mxu0 0
  %5824 = vmatpush1.bf16.msra.mxu0 %v5806
  %5825 = vmatprep.subr.bf16.mxu0 0
  %5826 = vmatpush1.bf16.msra.mxu0 %v5808
  %5827 = vmatprep.subr.bf16.mxu0 0
  %5828 = vmatpush1.bf16.msra.mxu0 %v5810
  %5829 = vmatprep.subr.bf16.mxu0 0
  %5830 = vmatpush1.bf16.msra.mxu0 0
  %5831 = vmatprep.subr.bf16.mxu0 0
  %5832 = vmatpush1.bf16.msra.mxu0 0
  %5833 = vmatprep.subr.bf16.mxu0 0
  %5834 = vmatpush1.bf16.msra.mxu0 0
  %5835 = vmatprep.subr.bf16.mxu0 0
  %5836 = vmatpush1.bf16.msra.mxu0 0
  %5837 = vmatprep.subr.bf16.mxu0 0
  %5838 = vmatpush1.bf16.msra.mxu0 0
  %5839 = vmatprep.subr.bf16.mxu0 0
  %5840 = vmatpush1.bf16.msra.mxu0 0
  %5841 = vmatprep.subr.bf16.mxu0 0
  %5842 = vmatpush1.bf16.msra.mxu0 0
  %5843 = vmatprep.subr.bf16.mxu0 0
  %5844 = vmatpush1.bf16.msra.mxu0 0
  %5845 = vmatprep.subr.bf16.mxu0 0
  %5846 = vmatpush1.bf16.msra.mxu0 0
  %5847 = vmatprep.subr.bf16.mxu0 0
  %5848 = vmatpush1.bf16.msra.mxu0 0
  %5849 = vmatprep.subr.bf16.mxu0 0
  %5850 = vmatpush1.bf16.msra.mxu0 0
  %5851 = vmatprep.subr.bf16.mxu0 0
  %5852 = vmatpush1.bf16.msra.mxu0 0
  %5853 = vmatprep.mubr.bf16.mxu0 0
  %5854 = vmatmul.mubr.bf16.gmra.mrb[0].mxu0 %v5816
  %v5855 = vpop.f32.mrb[0].mxu0
  %v5856 = vadd.f32 0.0, %v5855
  %v5857 = vpop.f32.mrb[0].mxu0
  %v5858 = vpop.f32.mrb[0].mxu0
  %v5859 = vadd.f32 0.0, %v5858
  %v5860 = vpop.f32.mrb[0].mxu0
  %5861 = vmatprep.mubr.bf16.mxu0 0
  %5862 = vmatmul.mubr.bf16.gmra.mrb[0].mxu0 %v5819
  %v5863 = vpop.f32.mrb[0].mxu0
  %v5864 = vadd.f32 0.0, %v5863
  %v5865 = vpop.f32.mrb[0].mxu0
  %v5866 = vpop.f32.mrb[0].mxu0
  %v5867 = vadd.f32 0.0, %v5866
  %v5868 = vpop.f32.mrb[0].mxu0
  %5869 = vdwg.mxu0
  %v5870 = vadd.f32 %v5784, %v5856
  %v5871 = vadd.f32 %v5785, %v5859
  %v5872 = vadd.f32 %v5786, %v5864
  %v5873 = vadd.f32 %v5787, %v5867
  %s5874 = scalar_lea.vmem %s2, 240
  %v5875 = vld [vmem:[%s5874] sm:$0xf]
  %v5876 = vld [vmem:[%s5874 + $0x4] sm:$0xf]
  %v5877 = vld [vmem:[%s5874 + $0x8] sm:$0xf]
  %v5878 = vld [vmem:[%s5874 + $0xc] sm:$0xf]
  %v5883 = vunpack.c.l.b16 %v5875
  %v5884 = vunpack.c.l.b16 %v5876
  %v5885 = vunpack.c.l.b16 %v5877
  %v5886 = vunpack.c.l.b16 %v5878
  %v5887 = vpack.c.b16 %v5884, %v5883
  %v5888 = vpack.c.b16 %v5886, %v5885
  %5889 = vrot.lane.b32.xlu0 %v4596, 98
  %v5890 = vpop.permute.xlu0 %5889
  %5891 = vrot.lane.b32.xlu0 %v4597, 98
  %v5892 = vpop.permute.xlu0 %5891
  %5893 = vrot.lane.b32.xlu0 %v4598, 98
  %v5894 = vpop.permute.xlu0 %5893
  %5895 = vrot.lane.b32.xlu0 %v4599, 98
  %v5896 = vpop.permute.xlu0 %5895
  %v5902 = vsel %vm4635, %v5887, 0
  %v5905 = vsel %vm4635, %v5888, 0
  %5907 = vmatprep.subr.bf16.mxu0 0
  %5908 = vmatpush1.bf16.msra.mxu0 %v5890
  %5909 = vmatprep.subr.bf16.mxu0 0
  %5910 = vmatpush1.bf16.msra.mxu0 %v5892
  %5911 = vmatprep.subr.bf16.mxu0 0
  %5912 = vmatpush1.bf16.msra.mxu0 %v5894
  %5913 = vmatprep.subr.bf16.mxu0 0
  %5914 = vmatpush1.bf16.msra.mxu0 %v5896
  %5915 = vmatprep.subr.bf16.mxu0 0
  %5916 = vmatpush1.bf16.msra.mxu0 0
  %5917 = vmatprep.subr.bf16.mxu0 0
  %5918 = vmatpush1.bf16.msra.mxu0 0
  %5919 = vmatprep.subr.bf16.mxu0 0
  %5920 = vmatpush1.bf16.msra.mxu0 0
  %5921 = vmatprep.subr.bf16.mxu0 0
  %5922 = vmatpush1.bf16.msra.mxu0 0
  %5923 = vmatprep.subr.bf16.mxu0 0
  %5924 = vmatpush1.bf16.msra.mxu0 0
  %5925 = vmatprep.subr.bf16.mxu0 0
  %5926 = vmatpush1.bf16.msra.mxu0 0
  %5927 = vmatprep.subr.bf16.mxu0 0
  %5928 = vmatpush1.bf16.msra.mxu0 0
  %5929 = vmatprep.subr.bf16.mxu0 0
  %5930 = vmatpush1.bf16.msra.mxu0 0
  %5931 = vmatprep.subr.bf16.mxu0 0
  %5932 = vmatpush1.bf16.msra.mxu0 0
  %5933 = vmatprep.subr.bf16.mxu0 0
  %5934 = vmatpush1.bf16.msra.mxu0 0
  %5935 = vmatprep.subr.bf16.mxu0 0
  %5936 = vmatpush1.bf16.msra.mxu0 0
  %5937 = vmatprep.subr.bf16.mxu0 0
  %5938 = vmatpush1.bf16.msra.mxu0 0
  %5939 = vmatprep.mubr.bf16.mxu0 0
  %5940 = vmatmul.mubr.bf16.gmra.mrb[0].mxu0 %v5902
  %v5941 = vpop.f32.mrb[0].mxu0
  %v5942 = vadd.f32 0.0, %v5941
  %v5943 = vpop.f32.mrb[0].mxu0
  %v5944 = vpop.f32.mrb[0].mxu0
  %v5945 = vadd.f32 0.0, %v5944
  %v5946 = vpop.f32.mrb[0].mxu0
  %5947 = vmatprep.mubr.bf16.mxu0 0
  %5948 = vmatmul.mubr.bf16.gmra.mrb[0].mxu0 %v5905
  %v5949 = vpop.f32.mrb[0].mxu0
  %v5950 = vadd.f32 0.0, %v5949
  %v5951 = vpop.f32.mrb[0].mxu0
  %v5952 = vpop.f32.mrb[0].mxu0
  %v5953 = vadd.f32 0.0, %v5952
  %v5954 = vpop.f32.mrb[0].mxu0
  %5955 = vdwg.mxu0
  %v5956 = vadd.f32 %v5870, %v5942
  %v5957 = vadd.f32 %v5871, %v5945
  %v5958 = vadd.f32 %v5872, %v5950
  %v5959 = vadd.f32 %v5873, %v5953
  %s5960 = scalar_lea.vmem %s2, 256
  %v5961 = vld [vmem:[%s5960] sm:$0xf]
  %v5962 = vld [vmem:[%s5960 + $0x4] sm:$0xf]
  %v5963 = vld [vmem:[%s5960 + $0x8] sm:$0xf]
  %v5964 = vld [vmem:[%s5960 + $0xc] sm:$0xf]
  %v5969 = vunpack.c.l.b16 %v5961
  %v5970 = vunpack.c.l.b16 %v5962
  %v5971 = vunpack.c.l.b16 %v5963
  %v5972 = vunpack.c.l.b16 %v5964
  %v5973 = vpack.c.b16 %v5970, %v5969
  %v5974 = vpack.c.b16 %v5972, %v5971
  %5975 = vrot.lane.b32.xlu0 %v4596, 97
  %v5976 = vpop.permute.xlu0 %5975
  %5977 = vrot.lane.b32.xlu0 %v4597, 97
  %v5978 = vpop.permute.xlu0 %5977
  %5979 = vrot.lane.b32.xlu0 %v4598, 97
  %v5980 = vpop.permute.xlu0 %5979
  %5981 = vrot.lane.b32.xlu0 %v4599, 97
  %v5982 = vpop.permute.xlu0 %5981
  %v5988 = vsel %vm4635, %v5973, 0
  %v5991 = vsel %vm4635, %v5974, 0
  %5993 = vmatprep.subr.bf16.mxu0 0
  %5994 = vmatpush1.bf16.msra.mxu0 %v5976
  %5995 = vmatprep.subr.bf16.mxu0 0
  %5996 = vmatpush1.bf16.msra.mxu0 %v5978
  %5997 = vmatprep.subr.bf16.mxu0 0
  %5998 = vmatpush1.bf16.msra.mxu0 %v5980
  %5999 = vmatprep.subr.bf16.mxu0 0
  %6000 = vmatpush1.bf16.msra.mxu0 %v5982
  %6001 = vmatprep.subr.bf16.mxu0 0
  %6002 = vmatpush1.bf16.msra.mxu0 0
  %6003 = vmatprep.subr.bf16.mxu0 0
  %6004 = vmatpush1.bf16.msra.mxu0 0
  %6005 = vmatprep.subr.bf16.mxu0 0
  %6006 = vmatpush1.bf16.msra.mxu0 0
  %6007 = vmatprep.subr.bf16.mxu0 0
  %6008 = vmatpush1.bf16.msra.mxu0 0
  %6009 = vmatprep.subr.bf16.mxu0 0
  %6010 = vmatpush1.bf16.msra.mxu0 0
  %6011 = vmatprep.subr.bf16.mxu0 0
  %6012 = vmatpush1.bf16.msra.mxu0 0
  %6013 = vmatprep.subr.bf16.mxu0 0
  %6014 = vmatpush1.bf16.msra.mxu0 0
  %6015 = vmatprep.subr.bf16.mxu0 0
  %6016 = vmatpush1.bf16.msra.mxu0 0
  %6017 = vmatprep.subr.bf16.mxu0 0
  %6018 = vmatpush1.bf16.msra.mxu0 0
  %6019 = vmatprep.subr.bf16.mxu0 0
  %6020 = vmatpush1.bf16.msra.mxu0 0
  %6021 = vmatprep.subr.bf16.mxu0 0
  %6022 = vmatpush1.bf16.msra.mxu0 0
  %6023 = vmatprep.subr.bf16.mxu0 0
  %6024 = vmatpush1.bf16.msra.mxu0 0
  %6025 = vmatprep.mubr.bf16.mxu0 0
  %6026 = vmatmul.mubr.bf16.gmra.mrb[0].mxu0 %v5988
  %v6027 = vpop.f32.mrb[0].mxu0
  %v6028 = vadd.f32 0.0, %v6027
  %v6029 = vpop.f32.mrb[0].mxu0
  %v6030 = vpop.f32.mrb[0].mxu0
  %v6031 = vadd.f32 0.0, %v6030
  %v6032 = vpop.f32.mrb[0].mxu0
  %6033 = vmatprep.mubr.bf16.mxu0 0
  %6034 = vmatmul.mubr.bf16.gmra.mrb[0].mxu0 %v5991
  %v6035 = vpop.f32.mrb[0].mxu0
  %v6036 = vadd.f32 0.0, %v6035
  %v6037 = vpop.f32.mrb[0].mxu0
  %v6038 = vpop.f32.mrb[0].mxu0
  %v6039 = vadd.f32 0.0, %v6038
  %v6040 = vpop.f32.mrb[0].mxu0
  %6041 = vdwg.mxu0
  %v6042 = vadd.f32 %v5956, %v6028
  %v6043 = vadd.f32 %v5957, %v6031
  %v6044 = vadd.f32 %v5958, %v6036
  %v6045 = vadd.f32 %v5959, %v6039
  %s6046 = scalar_lea.vmem %s2, 272
  %v6047 = vld [vmem:[%s6046] sm:$0xf]
  %v6048 = vld [vmem:[%s6046 + $0x4] sm:$0xf]
  %v6049 = vld [vmem:[%s6046 + $0x8] sm:$0xf]
  %v6050 = vld [vmem:[%s6046 + $0xc] sm:$0xf]
  %v6055 = vunpack.c.l.b16 %v6047
  %v6056 = vunpack.c.l.b16 %v6048
  %v6057 = vunpack.c.l.b16 %v6049
  %v6058 = vunpack.c.l.b16 %v6050
  %v6059 = vpack.c.b16 %v6056, %v6055
  %v6060 = vpack.c.b16 %v6058, %v6057
  %6061 = vrot.lane.b32.xlu0 %v4596, 96
  %v6062 = vpop.permute.xlu0 %6061
  %6063 = vrot.lane.b32.xlu0 %v4597, 96
  %v6064 = vpop.permute.xlu0 %6063
  %6065 = vrot.lane.b32.xlu0 %v4598, 96
  %v6066 = vpop.permute.xlu0 %6065
  %6067 = vrot.lane.b32.xlu0 %v4599, 96
  %v6068 = vpop.permute.xlu0 %6067
  %v6074 = vsel %vm4635, %v6059, 0
  %v6077 = vsel %vm4635, %v6060, 0
  %6079 = vmatprep.subr.bf16.mxu0 0
  %6080 = vmatpush1.bf16.msra.mxu0 %v6062
  %6081 = vmatprep.subr.bf16.mxu0 0
  %6082 = vmatpush1.bf16.msra.mxu0 %v6064
  %6083 = vmatprep.subr.bf16.mxu0 0
  %6084 = vmatpush1.bf16.msra.mxu0 %v6066
  %6085 = vmatprep.subr.bf16.mxu0 0
  %6086 = vmatpush1.bf16.msra.mxu0 %v6068
  %6087 = vmatprep.subr.bf16.mxu0 0
  %6088 = vmatpush1.bf16.msra.mxu0 0
  %6089 = vmatprep.subr.bf16.mxu0 0
  %6090 = vmatpush1.bf16.msra.mxu0 0
  %6091 = vmatprep.subr.bf16.mxu0 0
  %6092 = vmatpush1.bf16.msra.mxu0 0
  %6093 = vmatprep.subr.bf16.mxu0 0
  %6094 = vmatpush1.bf16.msra.mxu0 0
  %6095 = vmatprep.subr.bf16.mxu0 0
  %6096 = vmatpush1.bf16.msra.mxu0 0
  %6097 = vmatprep.subr.bf16.mxu0 0
  %6098 = vmatpush1.bf16.msra.mxu0 0
  %6099 = vmatprep.subr.bf16.mxu0 0
  %6100 = vmatpush1.bf16.msra.mxu0 0
  %6101 = vmatprep.subr.bf16.mxu0 0
  %6102 = vmatpush1.bf16.msra.mxu0 0
  %6103 = vmatprep.subr.bf16.mxu0 0
  %6104 = vmatpush1.bf16.msra.mxu0 0
  %6105 = vmatprep.subr.bf16.mxu0 0
  %6106 = vmatpush1.bf16.msra.mxu0 0
  %6107 = vmatprep.subr.bf16.mxu0 0
  %6108 = vmatpush1.bf16.msra.mxu0 0
  %6109 = vmatprep.subr.bf16.mxu0 0
  %6110 = vmatpush1.bf16.msra.mxu0 0
  %6111 = vmatprep.mubr.bf16.mxu0 0
  %6112 = vmatmul.mubr.bf16.gmra.mrb[0].mxu0 %v6074
  %v6113 = vpop.f32.mrb[0].mxu0
  %v6114 = vadd.f32 0.0, %v6113
  %v6115 = vpop.f32.mrb[0].mxu0
  %v6116 = vpop.f32.mrb[0].mxu0
  %v6117 = vadd.f32 0.0, %v6116
  %v6118 = vpop.f32.mrb[0].mxu0
  %6119 = vmatprep.mubr.bf16.mxu0 0
  %6120 = vmatmul.mubr.bf16.gmra.mrb[0].mxu0 %v6077
  %v6121 = vpop.f32.mrb[0].mxu0
  %v6122 = vadd.f32 0.0, %v6121
  %v6123 = vpop.f32.mrb[0].mxu0
  %v6124 = vpop.f32.mrb[0].mxu0
  %v6125 = vadd.f32 0.0, %v6124
  %v6126 = vpop.f32.mrb[0].mxu0
  %6127 = vdwg.mxu0
  %v6128 = vadd.f32 %v6042, %v6114
  %v6129 = vadd.f32 %v6043, %v6117
  %v6130 = vadd.f32 %v6044, %v6122
  %v6131 = vadd.f32 %v6045, %v6125
  %s6132 = scalar_lea.vmem %s2, 288
  %v6133 = vld [vmem:[%s6132] sm:$0xf]
  %v6134 = vld [vmem:[%s6132 + $0x4] sm:$0xf]
  %v6135 = vld [vmem:[%s6132 + $0x8] sm:$0xf]
  %v6136 = vld [vmem:[%s6132 + $0xc] sm:$0xf]
  %v6141 = vunpack.c.l.b16 %v6133
  %v6142 = vunpack.c.l.b16 %v6134
  %v6143 = vunpack.c.l.b16 %v6135
  %v6144 = vunpack.c.l.b16 %v6136
  %v6145 = vpack.c.b16 %v6142, %v6141
  %v6146 = vpack.c.b16 %v6144, %v6143
  %6147 = vrot.lane.b32.xlu0 %v4596, 95
  %v6148 = vpop.permute.xlu0 %6147
  %6149 = vrot.lane.b32.xlu0 %v4597, 95
  %v6150 = vpop.permute.xlu0 %6149
  %6151 = vrot.lane.b32.xlu0 %v4598, 95
  %v6152 = vpop.permute.xlu0 %6151
  %6153 = vrot.lane.b32.xlu0 %v4599, 95
  %v6154 = vpop.permute.xlu0 %6153
  %v6160 = vsel %vm4635, %v6145, 0
  %v6163 = vsel %vm4635, %v6146, 0
  %6165 = vmatprep.subr.bf16.mxu0 0
  %6166 = vmatpush1.bf16.msra.mxu0 %v6148
  %6167 = vmatprep.subr.bf16.mxu0 0
  %6168 = vmatpush1.bf16.msra.mxu0 %v6150
  %6169 = vmatprep.subr.bf16.mxu0 0
  %6170 = vmatpush1.bf16.msra.mxu0 %v6152
  %6171 = vmatprep.subr.bf16.mxu0 0
  %6172 = vmatpush1.bf16.msra.mxu0 %v6154
  %6173 = vmatprep.subr.bf16.mxu0 0
  %6174 = vmatpush1.bf16.msra.mxu0 0
  %6175 = vmatprep.subr.bf16.mxu0 0
  %6176 = vmatpush1.bf16.msra.mxu0 0
  %6177 = vmatprep.subr.bf16.mxu0 0
  %6178 = vmatpush1.bf16.msra.mxu0 0
  %6179 = vmatprep.subr.bf16.mxu0 0
  %6180 = vmatpush1.bf16.msra.mxu0 0
  %6181 = vmatprep.subr.bf16.mxu0 0
  %6182 = vmatpush1.bf16.msra.mxu0 0
  %6183 = vmatprep.subr.bf16.mxu0 0
  %6184 = vmatpush1.bf16.msra.mxu0 0
  %6185 = vmatprep.subr.bf16.mxu0 0
  %6186 = vmatpush1.bf16.msra.mxu0 0
  %6187 = vmatprep.subr.bf16.mxu0 0
  %6188 = vmatpush1.bf16.msra.mxu0 0
  %6189 = vmatprep.subr.bf16.mxu0 0
  %6190 = vmatpush1.bf16.msra.mxu0 0
  %6191 = vmatprep.subr.bf16.mxu0 0
  %6192 = vmatpush1.bf16.msra.mxu0 0
  %6193 = vmatprep.subr.bf16.mxu0 0
  %6194 = vmatpush1.bf16.msra.mxu0 0
  %6195 = vmatprep.subr.bf16.mxu0 0
  %6196 = vmatpush1.bf16.msra.mxu0 0
  %6197 = vmatprep.mubr.bf16.mxu0 0
  %6198 = vmatmul.mubr.bf16.gmra.mrb[0].mxu0 %v6160
  %v6199 = vpop.f32.mrb[0].mxu0
  %v6200 = vadd.f32 0.0, %v6199
  %v6201 = vpop.f32.mrb[0].mxu0
  %v6202 = vpop.f32.mrb[0].mxu0
  %v6203 = vadd.f32 0.0, %v6202
  %v6204 = vpop.f32.mrb[0].mxu0
  %6205 = vmatprep.mubr.bf16.mxu0 0
  %6206 = vmatmul.mubr.bf16.gmra.mrb[0].mxu0 %v6163
  %v6207 = vpop.f32.mrb[0].mxu0
  %v6208 = vadd.f32 0.0, %v6207
  %v6209 = vpop.f32.mrb[0].mxu0
  %v6210 = vpop.f32.mrb[0].mxu0
  %v6211 = vadd.f32 0.0, %v6210
  %v6212 = vpop.f32.mrb[0].mxu0
  %6213 = vdwg.mxu0
  %v6214 = vadd.f32 %v6128, %v6200
  %v6215 = vadd.f32 %v6129, %v6203
  %v6216 = vadd.f32 %v6130, %v6208
  %v6217 = vadd.f32 %v6131, %v6211
  %s6218 = scalar_lea.vmem %s2, 304
  %v6219 = vld [vmem:[%s6218] sm:$0xf]
  %v6220 = vld [vmem:[%s6218 + $0x4] sm:$0xf]
  %v6221 = vld [vmem:[%s6218 + $0x8] sm:$0xf]
  %v6222 = vld [vmem:[%s6218 + $0xc] sm:$0xf]
  %v6227 = vunpack.c.l.b16 %v6219
  %v6228 = vunpack.c.l.b16 %v6220
  %v6229 = vunpack.c.l.b16 %v6221
  %v6230 = vunpack.c.l.b16 %v6222
  %v6231 = vpack.c.b16 %v6228, %v6227
  %v6232 = vpack.c.b16 %v6230, %v6229
  %6233 = vrot.lane.b32.xlu0 %v4596, 94
  %v6234 = vpop.permute.xlu0 %6233
  %6235 = vrot.lane.b32.xlu0 %v4597, 94
  %v6236 = vpop.permute.xlu0 %6235
  %6237 = vrot.lane.b32.xlu0 %v4598, 94
  %v6238 = vpop.permute.xlu0 %6237
  %6239 = vrot.lane.b32.xlu0 %v4599, 94
  %v6240 = vpop.permute.xlu0 %6239
  %v6246 = vsel %vm4635, %v6231, 0
  %v6249 = vsel %vm4635, %v6232, 0
  %6251 = vmatprep.subr.bf16.mxu0 0
  %6252 = vmatpush1.bf16.msra.mxu0 %v6234
  %6253 = vmatprep.subr.bf16.mxu0 0
  %6254 = vmatpush1.bf16.msra.mxu0 %v6236
  %6255 = vmatprep.subr.bf16.mxu0 0
  %6256 = vmatpush1.bf16.msra.mxu0 %v6238
  %6257 = vmatprep.subr.bf16.mxu0 0
  %6258 = vmatpush1.bf16.msra.mxu0 %v6240
  %6259 = vmatprep.subr.bf16.mxu0 0
  %6260 = vmatpush1.bf16.msra.mxu0 0
  %6261 = vmatprep.subr.bf16.mxu0 0
  %6262 = vmatpush1.bf16.msra.mxu0 0
  %6263 = vmatprep.subr.bf16.mxu0 0
  %6264 = vmatpush1.bf16.msra.mxu0 0
  %6265 = vmatprep.subr.bf16.mxu0 0
  %6266 = vmatpush1.bf16.msra.mxu0 0
  %6267 = vmatprep.subr.bf16.mxu0 0
  %6268 = vmatpush1.bf16.msra.mxu0 0
  %6269 = vmatprep.subr.bf16.mxu0 0
  %6270 = vmatpush1.bf16.msra.mxu0 0
  %6271 = vmatprep.subr.bf16.mxu0 0
  %6272 = vmatpush1.bf16.msra.mxu0 0
  %6273 = vmatprep.subr.bf16.mxu0 0
  %6274 = vmatpush1.bf16.msra.mxu0 0
  %6275 = vmatprep.subr.bf16.mxu0 0
  %6276 = vmatpush1.bf16.msra.mxu0 0
  %6277 = vmatprep.subr.bf16.mxu0 0
  %6278 = vmatpush1.bf16.msra.mxu0 0
  %6279 = vmatprep.subr.bf16.mxu0 0
  %6280 = vmatpush1.bf16.msra.mxu0 0
  %6281 = vmatprep.subr.bf16.mxu0 0
  %6282 = vmatpush1.bf16.msra.mxu0 0
  %6283 = vmatprep.mubr.bf16.mxu0 0
  %6284 = vmatmul.mubr.bf16.gmra.mrb[0].mxu0 %v6246
  %v6285 = vpop.f32.mrb[0].mxu0
  %v6286 = vadd.f32 0.0, %v6285
  %v6287 = vpop.f32.mrb[0].mxu0
  %v6288 = vpop.f32.mrb[0].mxu0
  %v6289 = vadd.f32 0.0, %v6288
  %v6290 = vpop.f32.mrb[0].mxu0
  %6291 = vmatprep.mubr.bf16.mxu0 0
  %6292 = vmatmul.mubr.bf16.gmra.mrb[0].mxu0 %v6249
  %v6293 = vpop.f32.mrb[0].mxu0
  %v6294 = vadd.f32 0.0, %v6293
  %v6295 = vpop.f32.mrb[0].mxu0
  %v6296 = vpop.f32.mrb[0].mxu0
  %v6297 = vadd.f32 0.0, %v6296
  %v6298 = vpop.f32.mrb[0].mxu0
  %6299 = vdwg.mxu0
  %v6300 = vadd.f32 %v6214, %v6286
  %v6301 = vadd.f32 %v6215, %v6289
  %v6302 = vadd.f32 %v6216, %v6294
  %v6303 = vadd.f32 %v6217, %v6297
  %s6304 = scalar_lea.vmem %s2, 320
  %v6305 = vld [vmem:[%s6304] sm:$0xf]
  %v6306 = vld [vmem:[%s6304 + $0x4] sm:$0xf]
  %v6307 = vld [vmem:[%s6304 + $0x8] sm:$0xf]
  %v6308 = vld [vmem:[%s6304 + $0xc] sm:$0xf]
  %v6313 = vunpack.c.l.b16 %v6305
  %v6314 = vunpack.c.l.b16 %v6306
  %v6315 = vunpack.c.l.b16 %v6307
  %v6316 = vunpack.c.l.b16 %v6308
  %v6317 = vpack.c.b16 %v6314, %v6313
  %v6318 = vpack.c.b16 %v6316, %v6315
  %6319 = vrot.lane.b32.xlu0 %v4596, 88
  %v6320 = vpop.permute.xlu0 %6319
  %6321 = vrot.lane.b32.xlu0 %v4597, 88
  %v6322 = vpop.permute.xlu0 %6321
  %6323 = vrot.lane.b32.xlu0 %v4598, 88
  %v6324 = vpop.permute.xlu0 %6323
  %6325 = vrot.lane.b32.xlu0 %v4599, 88
  %v6326 = vpop.permute.xlu0 %6325
  %v6332 = vsel %vm4635, %v6317, 0
  %v6335 = vsel %vm4635, %v6318, 0
  %6337 = vmatprep.subr.bf16.mxu0 0
  %6338 = vmatpush1.bf16.msra.mxu0 %v6320
  %6339 = vmatprep.subr.bf16.mxu0 0
  %6340 = vmatpush1.bf16.msra.mxu0 %v6322
  %6341 = vmatprep.subr.bf16.mxu0 0
  %6342 = vmatpush1.bf16.msra.mxu0 %v6324
  %6343 = vmatprep.subr.bf16.mxu0 0
  %6344 = vmatpush1.bf16.msra.mxu0 %v6326
  %6345 = vmatprep.subr.bf16.mxu0 0
  %6346 = vmatpush1.bf16.msra.mxu0 0
  %6347 = vmatprep.subr.bf16.mxu0 0
  %6348 = vmatpush1.bf16.msra.mxu0 0
  %6349 = vmatprep.subr.bf16.mxu0 0
  %6350 = vmatpush1.bf16.msra.mxu0 0
  %6351 = vmatprep.subr.bf16.mxu0 0
  %6352 = vmatpush1.bf16.msra.mxu0 0
  %6353 = vmatprep.subr.bf16.mxu0 0
  %6354 = vmatpush1.bf16.msra.mxu0 0
  %6355 = vmatprep.subr.bf16.mxu0 0
  %6356 = vmatpush1.bf16.msra.mxu0 0
  %6357 = vmatprep.subr.bf16.mxu0 0
  %6358 = vmatpush1.bf16.msra.mxu0 0
  %6359 = vmatprep.subr.bf16.mxu0 0
  %6360 = vmatpush1.bf16.msra.mxu0 0
  %6361 = vmatprep.subr.bf16.mxu0 0
  %6362 = vmatpush1.bf16.msra.mxu0 0
  %6363 = vmatprep.subr.bf16.mxu0 0
  %6364 = vmatpush1.bf16.msra.mxu0 0
  %6365 = vmatprep.subr.bf16.mxu0 0
  %6366 = vmatpush1.bf16.msra.mxu0 0
  %6367 = vmatprep.subr.bf16.mxu0 0
  %6368 = vmatpush1.bf16.msra.mxu0 0
  %6369 = vmatprep.mubr.bf16.mxu0 0
  %6370 = vmatmul.mubr.bf16.gmra.mrb[0].mxu0 %v6332
  %v6371 = vpop.f32.mrb[0].mxu0
  %v6372 = vadd.f32 0.0, %v6371
  %v6373 = vpop.f32.mrb[0].mxu0
  %v6374 = vpop.f32.mrb[0].mxu0
  %v6375 = vadd.f32 0.0, %v6374
  %v6376 = vpop.f32.mrb[0].mxu0
  %6377 = vmatprep.mubr.bf16.mxu0 0
  %6378 = vmatmul.mubr.bf16.gmra.mrb[0].mxu0 %v6335
  %v6379 = vpop.f32.mrb[0].mxu0
  %v6380 = vadd.f32 0.0, %v6379
  %v6381 = vpop.f32.mrb[0].mxu0
  %v6382 = vpop.f32.mrb[0].mxu0
  %v6383 = vadd.f32 0.0, %v6382
  %v6384 = vpop.f32.mrb[0].mxu0
  %6385 = vdwg.mxu0
  %v6386 = vadd.f32 %v6300, %v6372
  %v6387 = vadd.f32 %v6301, %v6375
  %v6388 = vadd.f32 %v6302, %v6380
  %v6389 = vadd.f32 %v6303, %v6383
  %s6390 = scalar_lea.vmem %s2, 336
  %v6391 = vld [vmem:[%s6390] sm:$0xf]
  %v6392 = vld [vmem:[%s6390 + $0x4] sm:$0xf]
  %v6393 = vld [vmem:[%s6390 + $0x8] sm:$0xf]
  %v6394 = vld [vmem:[%s6390 + $0xc] sm:$0xf]
  %v6399 = vunpack.c.l.b16 %v6391
  %v6400 = vunpack.c.l.b16 %v6392
  %v6401 = vunpack.c.l.b16 %v6393
  %v6402 = vunpack.c.l.b16 %v6394
  %v6403 = vpack.c.b16 %v6400, %v6399
  %v6404 = vpack.c.b16 %v6402, %v6401
  %6405 = vrot.lane.b32.xlu0 %v4596, 87
  %v6406 = vpop.permute.xlu0 %6405
  %6407 = vrot.lane.b32.xlu0 %v4597, 87
  %v6408 = vpop.permute.xlu0 %6407
  %6409 = vrot.lane.b32.xlu0 %v4598, 87
  %v6410 = vpop.permute.xlu0 %6409
  %6411 = vrot.lane.b32.xlu0 %v4599, 87
  %v6412 = vpop.permute.xlu0 %6411
  %v6418 = vsel %vm4635, %v6403, 0
  %v6421 = vsel %vm4635, %v6404, 0
  %6423 = vmatprep.subr.bf16.mxu0 0
  %6424 = vmatpush1.bf16.msra.mxu0 %v6406
  %6425 = vmatprep.subr.bf16.mxu0 0
  %6426 = vmatpush1.bf16.msra.mxu0 %v6408
  %6427 = vmatprep.subr.bf16.mxu0 0
  %6428 = vmatpush1.bf16.msra.mxu0 %v6410
  %6429 = vmatprep.subr.bf16.mxu0 0
  %6430 = vmatpush1.bf16.msra.mxu0 %v6412
  %6431 = vmatprep.subr.bf16.mxu0 0
  %6432 = vmatpush1.bf16.msra.mxu0 0
  %6433 = vmatprep.subr.bf16.mxu0 0
  %6434 = vmatpush1.bf16.msra.mxu0 0
  %6435 = vmatprep.subr.bf16.mxu0 0
  %6436 = vmatpush1.bf16.msra.mxu0 0
  %6437 = vmatprep.subr.bf16.mxu0 0
  %6438 = vmatpush1.bf16.msra.mxu0 0
  %6439 = vmatprep.subr.bf16.mxu0 0
  %6440 = vmatpush1.bf16.msra.mxu0 0
  %6441 = vmatprep.subr.bf16.mxu0 0
  %6442 = vmatpush1.bf16.msra.mxu0 0
  %6443 = vmatprep.subr.bf16.mxu0 0
  %6444 = vmatpush1.bf16.msra.mxu0 0
  %6445 = vmatprep.subr.bf16.mxu0 0
  %6446 = vmatpush1.bf16.msra.mxu0 0
  %6447 = vmatprep.subr.bf16.mxu0 0
  %6448 = vmatpush1.bf16.msra.mxu0 0
  %6449 = vmatprep.subr.bf16.mxu0 0
  %6450 = vmatpush1.bf16.msra.mxu0 0
  %6451 = vmatprep.subr.bf16.mxu0 0
  %6452 = vmatpush1.bf16.msra.mxu0 0
  %6453 = vmatprep.subr.bf16.mxu0 0
  %6454 = vmatpush1.bf16.msra.mxu0 0
  %6455 = vmatprep.mubr.bf16.mxu0 0
  %6456 = vmatmul.mubr.bf16.gmra.mrb[0].mxu0 %v6418
  %v6457 = vpop.f32.mrb[0].mxu0
  %v6458 = vadd.f32 0.0, %v6457
  %v6459 = vpop.f32.mrb[0].mxu0
  %v6460 = vpop.f32.mrb[0].mxu0
  %v6461 = vadd.f32 0.0, %v6460
  %v6462 = vpop.f32.mrb[0].mxu0
  %6463 = vmatprep.mubr.bf16.mxu0 0
  %6464 = vmatmul.mubr.bf16.gmra.mrb[0].mxu0 %v6421
  %v6465 = vpop.f32.mrb[0].mxu0
  %v6466 = vadd.f32 0.0, %v6465
  %v6467 = vpop.f32.mrb[0].mxu0
  %v6468 = vpop.f32.mrb[0].mxu0
  %v6469 = vadd.f32 0.0, %v6468
  %v6470 = vpop.f32.mrb[0].mxu0
  %6471 = vdwg.mxu0
  %v6472 = vadd.f32 %v6386, %v6458
  %v6473 = vadd.f32 %v6387, %v6461
  %v6474 = vadd.f32 %v6388, %v6466
  %v6475 = vadd.f32 %v6389, %v6469
  %s6476 = scalar_lea.vmem %s2, 352
  %v6477 = vld [vmem:[%s6476] sm:$0xf]
  %v6478 = vld [vmem:[%s6476 + $0x4] sm:$0xf]
  %v6479 = vld [vmem:[%s6476 + $0x8] sm:$0xf]
  %v6480 = vld [vmem:[%s6476 + $0xc] sm:$0xf]
  %v6485 = vunpack.c.l.b16 %v6477
  %v6486 = vunpack.c.l.b16 %v6478
  %v6487 = vunpack.c.l.b16 %v6479
  %v6488 = vunpack.c.l.b16 %v6480
  %v6489 = vpack.c.b16 %v6486, %v6485
  %v6490 = vpack.c.b16 %v6488, %v6487
  %6491 = vrot.lane.b32.xlu0 %v4596, 86
  %v6492 = vpop.permute.xlu0 %6491
  %6493 = vrot.lane.b32.xlu0 %v4597, 86
  %v6494 = vpop.permute.xlu0 %6493
  %6495 = vrot.lane.b32.xlu0 %v4598, 86
  %v6496 = vpop.permute.xlu0 %6495
  %6497 = vrot.lane.b32.xlu0 %v4599, 86
  %v6498 = vpop.permute.xlu0 %6497
  %v6504 = vsel %vm4635, %v6489, 0
  %v6507 = vsel %vm4635, %v6490, 0
  %6509 = vmatprep.subr.bf16.mxu0 0
  %6510 = vmatpush1.bf16.msra.mxu0 %v6492
  %6511 = vmatprep.subr.bf16.mxu0 0
  %6512 = vmatpush1.bf16.msra.mxu0 %v6494
  %6513 = vmatprep.subr.bf16.mxu0 0
  %6514 = vmatpush1.bf16.msra.mxu0 %v6496
  %6515 = vmatprep.subr.bf16.mxu0 0
  %6516 = vmatpush1.bf16.msra.mxu0 %v6498
  %6517 = vmatprep.subr.bf16.mxu0 0
  %6518 = vmatpush1.bf16.msra.mxu0 0
  %6519 = vmatprep.subr.bf16.mxu0 0
  %6520 = vmatpush1.bf16.msra.mxu0 0
  %6521 = vmatprep.subr.bf16.mxu0 0
  %6522 = vmatpush1.bf16.msra.mxu0 0
  %6523 = vmatprep.subr.bf16.mxu0 0
  %6524 = vmatpush1.bf16.msra.mxu0 0
  %6525 = vmatprep.subr.bf16.mxu0 0
  %6526 = vmatpush1.bf16.msra.mxu0 0
  %6527 = vmatprep.subr.bf16.mxu0 0
  %6528 = vmatpush1.bf16.msra.mxu0 0
  %6529 = vmatprep.subr.bf16.mxu0 0
  %6530 = vmatpush1.bf16.msra.mxu0 0
  %6531 = vmatprep.subr.bf16.mxu0 0
  %6532 = vmatpush1.bf16.msra.mxu0 0
  %6533 = vmatprep.subr.bf16.mxu0 0
  %6534 = vmatpush1.bf16.msra.mxu0 0
  %6535 = vmatprep.subr.bf16.mxu0 0
  %6536 = vmatpush1.bf16.msra.mxu0 0
  %6537 = vmatprep.subr.bf16.mxu0 0
  %6538 = vmatpush1.bf16.msra.mxu0 0
  %6539 = vmatprep.subr.bf16.mxu0 0
  %6540 = vmatpush1.bf16.msra.mxu0 0
  %6541 = vmatprep.mubr.bf16.mxu0 0
  %6542 = vmatmul.mubr.bf16.gmra.mrb[0].mxu0 %v6504
  %v6543 = vpop.f32.mrb[0].mxu0
  %v6544 = vadd.f32 0.0, %v6543
  %v6545 = vpop.f32.mrb[0].mxu0
  %v6546 = vpop.f32.mrb[0].mxu0
  %v6547 = vadd.f32 0.0, %v6546
  %v6548 = vpop.f32.mrb[0].mxu0
  %6549 = vmatprep.mubr.bf16.mxu0 0
  %6550 = vmatmul.mubr.bf16.gmra.mrb[0].mxu0 %v6507
  %v6551 = vpop.f32.mrb[0].mxu0
  %v6552 = vadd.f32 0.0, %v6551
  %v6553 = vpop.f32.mrb[0].mxu0
  %v6554 = vpop.f32.mrb[0].mxu0
  %v6555 = vadd.f32 0.0, %v6554
  %v6556 = vpop.f32.mrb[0].mxu0
  %6557 = vdwg.mxu0
  %v6558 = vadd.f32 %v6472, %v6544
  %v6559 = vadd.f32 %v6473, %v6547
  %v6560 = vadd.f32 %v6474, %v6552
  %v6561 = vadd.f32 %v6475, %v6555
  %s6562 = scalar_lea.vmem %s2, 368
  %v6563 = vld [vmem:[%s6562] sm:$0xf]
  %v6564 = vld [vmem:[%s6562 + $0x4] sm:$0xf]
  %v6565 = vld [vmem:[%s6562 + $0x8] sm:$0xf]
  %v6566 = vld [vmem:[%s6562 + $0xc] sm:$0xf]
  %v6571 = vunpack.c.l.b16 %v6563
  %v6572 = vunpack.c.l.b16 %v6564
  %v6573 = vunpack.c.l.b16 %v6565
  %v6574 = vunpack.c.l.b16 %v6566
  %v6575 = vpack.c.b16 %v6572, %v6571
  %v6576 = vpack.c.b16 %v6574, %v6573
  %6577 = vrot.lane.b32.xlu0 %v4596, 85
  %v6578 = vpop.permute.xlu0 %6577
  %6579 = vrot.lane.b32.xlu0 %v4597, 85
  %v6580 = vpop.permute.xlu0 %6579
  %6581 = vrot.lane.b32.xlu0 %v4598, 85
  %v6582 = vpop.permute.xlu0 %6581
  %6583 = vrot.lane.b32.xlu0 %v4599, 85
  %v6584 = vpop.permute.xlu0 %6583
  %v6590 = vsel %vm4635, %v6575, 0
  %v6593 = vsel %vm4635, %v6576, 0
  %6595 = vmatprep.subr.bf16.mxu0 0
  %6596 = vmatpush1.bf16.msra.mxu0 %v6578
  %6597 = vmatprep.subr.bf16.mxu0 0
  %6598 = vmatpush1.bf16.msra.mxu0 %v6580
  %6599 = vmatprep.subr.bf16.mxu0 0
  %6600 = vmatpush1.bf16.msra.mxu0 %v6582
  %6601 = vmatprep.subr.bf16.mxu0 0
  %6602 = vmatpush1.bf16.msra.mxu0 %v6584
  %6603 = vmatprep.subr.bf16.mxu0 0
  %6604 = vmatpush1.bf16.msra.mxu0 0
  %6605 = vmatprep.subr.bf16.mxu0 0
  %6606 = vmatpush1.bf16.msra.mxu0 0
  %6607 = vmatprep.subr.bf16.mxu0 0
  %6608 = vmatpush1.bf16.msra.mxu0 0
  %6609 = vmatprep.subr.bf16.mxu0 0
  %6610 = vmatpush1.bf16.msra.mxu0 0
  %6611 = vmatprep.subr.bf16.mxu0 0
  %6612 = vmatpush1.bf16.msra.mxu0 0
  %6613 = vmatprep.subr.bf16.mxu0 0
  %6614 = vmatpush1.bf16.msra.mxu0 0
  %6615 = vmatprep.subr.bf16.mxu0 0
  %6616 = vmatpush1.bf16.msra.mxu0 0
  %6617 = vmatprep.subr.bf16.mxu0 0
  %6618 = vmatpush1.bf16.msra.mxu0 0
  %6619 = vmatprep.subr.bf16.mxu0 0
  %6620 = vmatpush1.bf16.msra.mxu0 0
  %6621 = vmatprep.subr.bf16.mxu0 0
  %6622 = vmatpush1.bf16.msra.mxu0 0
  %6623 = vmatprep.subr.bf16.mxu0 0
  %6624 = vmatpush1.bf16.msra.mxu0 0
  %6625 = vmatprep.subr.bf16.mxu0 0
  %6626 = vmatpush1.bf16.msra.mxu0 0
  %6627 = vmatprep.mubr.bf16.mxu0 0
  %6628 = vmatmul.mubr.bf16.gmra.mrb[0].mxu0 %v6590
  %v6629 = vpop.f32.mrb[0].mxu0
  %v6630 = vadd.f32 0.0, %v6629
  %v6631 = vpop.f32.mrb[0].mxu0
  %v6632 = vpop.f32.mrb[0].mxu0
  %v6633 = vadd.f32 0.0, %v6632
  %v6634 = vpop.f32.mrb[0].mxu0
  %6635 = vmatprep.mubr.bf16.mxu0 0
  %6636 = vmatmul.mubr.bf16.gmra.mrb[0].mxu0 %v6593
  %v6637 = vpop.f32.mrb[0].mxu0
  %v6638 = vadd.f32 0.0, %v6637
  %v6639 = vpop.f32.mrb[0].mxu0
  %v6640 = vpop.f32.mrb[0].mxu0
  %v6641 = vadd.f32 0.0, %v6640
  %v6642 = vpop.f32.mrb[0].mxu0
  %6643 = vdwg.mxu0
  %v6644 = vadd.f32 %v6558, %v6630
  %v6645 = vadd.f32 %v6559, %v6633
  %v6646 = vadd.f32 %v6560, %v6638
  %v6647 = vadd.f32 %v6561, %v6641
  %s6648 = scalar_lea.vmem %s2, 384
  %v6649 = vld [vmem:[%s6648] sm:$0xf]
  %v6650 = vld [vmem:[%s6648 + $0x4] sm:$0xf]
  %v6651 = vld [vmem:[%s6648 + $0x8] sm:$0xf]
  %v6652 = vld [vmem:[%s6648 + $0xc] sm:$0xf]
  %v6657 = vunpack.c.l.b16 %v6649
  %v6658 = vunpack.c.l.b16 %v6650
  %v6659 = vunpack.c.l.b16 %v6651
  %v6660 = vunpack.c.l.b16 %v6652
  %v6661 = vpack.c.b16 %v6658, %v6657
  %v6662 = vpack.c.b16 %v6660, %v6659
  %6663 = vrot.lane.b32.xlu0 %v4596, 84
  %v6664 = vpop.permute.xlu0 %6663
  %6665 = vrot.lane.b32.xlu0 %v4597, 84
  %v6666 = vpop.permute.xlu0 %6665
  %6667 = vrot.lane.b32.xlu0 %v4598, 84
  %v6668 = vpop.permute.xlu0 %6667
  %6669 = vrot.lane.b32.xlu0 %v4599, 84
  %v6670 = vpop.permute.xlu0 %6669
  %v6676 = vsel %vm4635, %v6661, 0
  %v6679 = vsel %vm4635, %v6662, 0
  %6681 = vmatprep.subr.bf16.mxu0 0
  %6682 = vmatpush1.bf16.msra.mxu0 %v6664
  %6683 = vmatprep.subr.bf16.mxu0 0
  %6684 = vmatpush1.bf16.msra.mxu0 %v6666
  %6685 = vmatprep.subr.bf16.mxu0 0
  %6686 = vmatpush1.bf16.msra.mxu0 %v6668
  %6687 = vmatprep.subr.bf16.mxu0 0
  %6688 = vmatpush1.bf16.msra.mxu0 %v6670
  %6689 = vmatprep.subr.bf16.mxu0 0
  %6690 = vmatpush1.bf16.msra.mxu0 0
  %6691 = vmatprep.subr.bf16.mxu0 0
  %6692 = vmatpush1.bf16.msra.mxu0 0
  %6693 = vmatprep.subr.bf16.mxu0 0
  %6694 = vmatpush1.bf16.msra.mxu0 0
  %6695 = vmatprep.subr.bf16.mxu0 0
  %6696 = vmatpush1.bf16.msra.mxu0 0
  %6697 = vmatprep.subr.bf16.mxu0 0
  %6698 = vmatpush1.bf16.msra.mxu0 0
  %6699 = vmatprep.subr.bf16.mxu0 0
  %6700 = vmatpush1.bf16.msra.mxu0 0
  %6701 = vmatprep.subr.bf16.mxu0 0
  %6702 = vmatpush1.bf16.msra.mxu0 0
  %6703 = vmatprep.subr.bf16.mxu0 0
  %6704 = vmatpush1.bf16.msra.mxu0 0
  %6705 = vmatprep.subr.bf16.mxu0 0
  %6706 = vmatpush1.bf16.msra.mxu0 0
  %6707 = vmatprep.subr.bf16.mxu0 0
  %6708 = vmatpush1.bf16.msra.mxu0 0
  %6709 = vmatprep.subr.bf16.mxu0 0
  %6710 = vmatpush1.bf16.msra.mxu0 0
  %6711 = vmatprep.subr.bf16.mxu0 0
  %6712 = vmatpush1.bf16.msra.mxu0 0
  %6713 = vmatprep.mubr.bf16.mxu0 0
  %6714 = vmatmul.mubr.bf16.gmra.mrb[0].mxu0 %v6676
  %v6715 = vpop.f32.mrb[0].mxu0
  %v6716 = vadd.f32 0.0, %v6715
  %v6717 = vpop.f32.mrb[0].mxu0
  %v6718 = vpop.f32.mrb[0].mxu0
  %v6719 = vadd.f32 0.0, %v6718
  %v6720 = vpop.f32.mrb[0].mxu0
  %6721 = vmatprep.mubr.bf16.mxu0 0
  %6722 = vmatmul.mubr.bf16.gmra.mrb[0].mxu0 %v6679
  %v6723 = vpop.f32.mrb[0].mxu0
  %v6724 = vadd.f32 0.0, %v6723
  %v6725 = vpop.f32.mrb[0].mxu0
  %v6726 = vpop.f32.mrb[0].mxu0
  %v6727 = vadd.f32 0.0, %v6726
  %v6728 = vpop.f32.mrb[0].mxu0
  %6729 = vdwg.mxu0
  %v6730 = vadd.f32 %v6644, %v6716
  %v6731 = vadd.f32 %v6645, %v6719
  %v6732 = vadd.f32 %v6646, %v6724
  %v6733 = vadd.f32 %v6647, %v6727
  %v6734 = vld [vmem:[%s4 + $0x10] sm:$0xff]
  %v6735 = vld [vmem:[%s4 + $0x18] sm:$0xff]
  %v6736 = vld [vmem:[%s4 + $0x20] sm:$0xff]
  %v6737 = vld [vmem:[%s4 + $0x28] sm:$0xff]
  %6739 = vset.pattern.permute.xlu0 0
  %6740 = vperm.xlu0 %6739, %v6734
  %v6741 = vpop.permute.xlu0 %6740
  %6744 = vset.pattern.permute.xlu0 0
  %6745 = vperm.xlu0 %6744, %v6735
  %v6746 = vpop.permute.xlu0 %6745
  %6749 = vset.pattern.permute.xlu0 0
  %6750 = vperm.xlu0 %6749, %v6736
  %v6751 = vpop.permute.xlu0 %6750
  %6754 = vset.pattern.permute.xlu0 0
  %6755 = vperm.xlu0 %6754, %v6737
  %v6756 = vpop.permute.xlu0 %6755
  %v6758 = vadd.f32 %v6730, %v6741
  %v6759 = vadd.f32 %v6731, %v6746
  %v6760 = vadd.f32 %v6732, %v6751
  %v6761 = vadd.f32 %v6733, %v6756
  %v6762 = vmax.f32 %v6758, 0.0
  %v6763 = vmax.f32 %v6759, 0.0
  %v6764 = vmax.f32 %v6760, 0.0
  %v6765 = vmax.f32 %v6761, 0.0
  %v6766 = vpack.c.bf16 %v6763, %v6762
  %v6767 = vpack.c.bf16 %v6765, %v6764
  %6768 = vst.msk [vmem:[#allocation4] sm:$0xff] %vm4635, %v6766
  %6770 = vrot.lane.b32.xlu0 %v6767, 64
  %v6771 = vpop.permute.xlu0 %6770
  %vm6773 = vcmask 1048064
  %6774 = vst.msk [vmem:[#allocation4] sm:$0xff] %vm6773, %v6771
  %v6775 = vld [vmem:[#allocation4] sm:$0xff]
  %vm6776 = vcmask 1040384
  %vm6777 = vsmask.f32 256
  %vm6778 = vmand %vm6776, %vm6777
  %v6779 = vld [vmem:[#allocation5] sm:$0x1]
  %v6780 = vsel %vm6778, %v6775, %v6779
  %6781 = vst [vmem:[#allocation5] sm:$0x1] %v6780
  %v6784 = vunpack.c.l.s4 1966171168
  %v6785 = vunpack.c.0.s8 %v6784
  %v6786 = vlaneseq
  %v6787 = vshrl.u32 %v6786, 7
  %v6788 = vsub.s32 %v6785, %v6787
  %v6789 = vrot.slane %v6775, %v6788
  %v6791 = vunpack.c.l.s4 1966171168
  %v6792 = vunpack.c.0.s8 %v6791
  %v6793 = vlaneseq
  %v6794 = vshrl.u32 %v6793, 7
  %v6795 = vsub.s32 %v6792, %v6794
  %v6796 = vrot.slane %v6789, %v6795
  %v6798 = vshrl.u32 %v6796, 16
  %v6800 = vrot.slane %v6798, 7
  %v6801 = vrot.slane %v6800, 1
  %v6803 = vld [vmem:[#allocation5 + $0x1] sm:$0x1]
  %v6804 = vsel %vm6778, %v6801, %v6803
  %6805 = vst [vmem:[#allocation5 + $0x1] sm:$0x1] %v6804
  %v6806 = vcombine.high %v6789, %v6789
  %v6808 = vunpack.c.l.s4 1966171168
  %v6809 = vunpack.c.0.s8 %v6808
  %v6810 = vlaneseq
  %v6811 = vshrl.u32 %v6810, 7
  %v6812 = vsub.s32 %v6809, %v6811
  %v6813 = vrot.slane %v6806, %v6812
  %v6815 = vld [vmem:[#allocation5 + $0x2] sm:$0x1]
  %v6816 = vsel %vm6778, %v6813, %v6815
  %6817 = vst [vmem:[#allocation5 + $0x2] sm:$0x1] %v6816
  %v6819 = vshrl.u32 %v6813, 16
  %v6821 = vrot.slane %v6819, 7
  %v6822 = vrot.slane %v6821, 1
  %v6824 = vld [vmem:[#allocation5 + $0x3] sm:$0x1]
  %v6825 = vsel %vm6778, %v6822, %v6824
  %6826 = vst [vmem:[#allocation5 + $0x3] sm:$0x1] %v6825
  %v6827 = vcombine.high %v6796, %v6796
  %v6829 = vld [vmem:[#allocation5 + $0x4] sm:$0x1]
  %v6830 = vsel %vm6778, %v6827, %v6829
  %6831 = vst [vmem:[#allocation5 + $0x4] sm:$0x1] %v6830
  %v6833 = vshrl.u32 %v6827, 16
  %v6835 = vrot.slane %v6833, 7
  %v6836 = vrot.slane %v6835, 1
  %v6838 = vld [vmem:[#allocation5 + $0x5] sm:$0x1]
  %v6839 = vsel %vm6778, %v6836, %v6838
  %6840 = vst [vmem:[#allocation5 + $0x5] sm:$0x1] %v6839
  %v6841 = vcombine.high %v6813, %v6813
  %v6843 = vld [vmem:[#allocation5 + $0x6] sm:$0x1]
  %v6844 = vsel %vm6778, %v6841, %v6843
  %6845 = vst [vmem:[#allocation5 + $0x6] sm:$0x1] %v6844
  %v6847 = vshrl.u32 %v6841, 16
  %v6849 = vrot.slane %v6847, 7
  %v6850 = vrot.slane %v6849, 1
  %v6852 = vld [vmem:[#allocation5 + $0x7] sm:$0x1]
  %v6853 = vsel %vm6778, %v6850, %v6852
  %6854 = vst [vmem:[#allocation5 + $0x7] sm:$0x1] %v6853
  %v6855 = vcombine.high %v6775, %v6775
  %v6857 = vunpack.c.l.s4 1966171168
  %v6858 = vunpack.c.0.s8 %v6857
  %v6859 = vlaneseq
  %v6860 = vshrl.u32 %v6859, 7
  %v6861 = vsub.s32 %v6858, %v6860
  %v6862 = vrot.slane %v6855, %v6861
  %v6864 = vunpack.c.l.s4 1966171168
  %v6865 = vunpack.c.0.s8 %v6864
  %v6866 = vlaneseq
  %v6867 = vshrl.u32 %v6866, 7
  %v6868 = vsub.s32 %v6865, %v6867
  %v6869 = vrot.slane %v6862, %v6868
  %v6871 = vld [vmem:[#allocation5 + $0x8] sm:$0x1]
  %v6872 = vsel %vm6778, %v6869, %v6871
  %6873 = vst [vmem:[#allocation5 + $0x8] sm:$0x1] %v6872
  %v6875 = vshrl.u32 %v6869, 16
  %v6877 = vrot.slane %v6875, 7
  %v6878 = vrot.slane %v6877, 1
  %v6880 = vld [vmem:[#allocation5 + $0x9] sm:$0x1]
  %v6881 = vsel %vm6778, %v6878, %v6880
  %6882 = vst [vmem:[#allocation5 + $0x9] sm:$0x1] %v6881
  %v6883 = vcombine.high %v6862, %v6862
  %v6885 = vunpack.c.l.s4 1966171168
  %v6886 = vunpack.c.0.s8 %v6885
  %v6887 = vlaneseq
  %v6888 = vshrl.u32 %v6887, 7
  %v6889 = vsub.s32 %v6886, %v6888
  %v6890 = vrot.slane %v6883, %v6889
  %v6892 = vld [vmem:[#allocation5 + $0xa] sm:$0x1]
  %v6893 = vsel %vm6778, %v6890, %v6892
  %6894 = vst [vmem:[#allocation5 + $0xa] sm:$0x1] %v6893
  %v6896 = vshrl.u32 %v6890, 16
  %v6898 = vrot.slane %v6896, 7
  %v6899 = vrot.slane %v6898, 1
  %v6901 = vld [vmem:[#allocation5 + $0xb] sm:$0x1]
  %v6902 = vsel %vm6778, %v6899, %v6901
  %6903 = vst [vmem:[#allocation5 + $0xb] sm:$0x1] %v6902
  %v6904 = vcombine.high %v6869, %v6869
  %v6906 = vld [vmem:[#allocation5 + $0xc] sm:$0x1]
  %v6907 = vsel %vm6778, %v6904, %v6906
  %6908 = vst [vmem:[#allocation5 + $0xc] sm:$0x1] %v6907
  %v6910 = vshrl.u32 %v6904, 16
  %v6912 = vrot.slane %v6910, 7
  %v6913 = vrot.slane %v6912, 1
  %v6915 = vld [vmem:[#allocation5 + $0xd] sm:$0x1]
  %v6916 = vsel %vm6778, %v6913, %v6915
  %6917 = vst [vmem:[#allocation5 + $0xd] sm:$0x1] %v6916
  %v6918 = vcombine.high %v6890, %v6890
  %v6920 = vld [vmem:[#allocation5 + $0xe] sm:$0x1]
  %v6921 = vsel %vm6778, %v6918, %v6920
  %6922 = vst [vmem:[#allocation5 + $0xe] sm:$0x1] %v6921
  %v6924 = vshrl.u32 %v6918, 16
  %v6926 = vrot.slane %v6924, 7
  %v6927 = vrot.slane %v6926, 1
  %v6929 = vld [vmem:[#allocation5 + $0xf] sm:$0x1]
  %v6930 = vsel %vm6778, %v6927, %v6929
  %6931 = vst [vmem:[#allocation5 + $0xf] sm:$0x1] %v6930
  %s6932 = smul.u32 4, 256
  %s6933 = smul.u32 %s6932, 2
  %s6934 = sshll.u32 %s6933, 4
  %6935 = dma.done [#allocation6], %s6934
  %v6936 = vld [vmem:[#allocation5] sm:$0xff]
  %v6937 = vld [vmem:[#allocation5 + $0x8] sm:$0xff]
  %v6938 = vld [vmem:[#allocation2] sm:$0xff]
  %v6939 = vld [vmem:[#allocation2 + $0x8] sm:$0xff]
  %v6940 = vld [vmem:[#allocation2 + $0x10] sm:$0xff]
  %v6941 = vld [vmem:[#allocation2 + $0x18] sm:$0xff]
  %v6942 = vld [vmem:[#allocation2 + $0x20] sm:$0xff]
  %v6943 = vld [vmem:[#allocation2 + $0x28] sm:$0xff]
  %v6944 = vld [vmem:[#allocation2 + $0x30] sm:$0xff]
  %v6945 = vld [vmem:[#allocation2 + $0x38] sm:$0xff]
  %v6946 = vld [vmem:[#allocation2 + $0x40] sm:$0xff]
  %v6947 = vld [vmem:[#allocation2 + $0x48] sm:$0xff]
  %v6948 = vld [vmem:[#allocation2 + $0x50] sm:$0xff]
  %v6949 = vld [vmem:[#allocation2 + $0x58] sm:$0xff]
  %v6950 = vld [vmem:[#allocation2 + $0x60] sm:$0xff]
  %v6951 = vld [vmem:[#allocation2 + $0x68] sm:$0xff]
  %v6952 = vld [vmem:[#allocation2 + $0x70] sm:$0xff]
  %v6953 = vld [vmem:[#allocation2 + $0x78] sm:$0xff]
  %v6954 = vld [vmem:[#allocation2 + $0x80] sm:$0xff]
  %v6955 = vld [vmem:[#allocation2 + $0x88] sm:$0xff]
  %v6956 = vld [vmem:[#allocation2 + $0x90] sm:$0xff]
  %v6957 = vld [vmem:[#allocation2 + $0x98] sm:$0xff]
  %v6958 = vld [vmem:[#allocation2 + $0xa0] sm:$0xff]
  %v6959 = vld [vmem:[#allocation2 + $0xa8] sm:$0xff]
  %v6960 = vld [vmem:[#allocation2 + $0xb0] sm:$0xff]
  %v6961 = vld [vmem:[#allocation2 + $0xb8] sm:$0xff]
  %v6962 = vld [vmem:[#allocation2 + $0xc0] sm:$0xff]
  %v6963 = vld [vmem:[#allocation2 + $0xc8] sm:$0xff]
  %v6964 = vld [vmem:[#allocation2 + $0xd0] sm:$0xff]
  %v6965 = vld [vmem:[#allocation2 + $0xd8] sm:$0xff]
  %v6966 = vld [vmem:[#allocation2 + $0xe0] sm:$0xff]
  %v6967 = vld [vmem:[#allocation2 + $0xe8] sm:$0xff]
  %v6968 = vld [vmem:[#allocation2 + $0xf0] sm:$0xff]
  %v6969 = vld [vmem:[#allocation2 + $0xf8] sm:$0xff]
  %v6970 = vld [vmem:[#allocation2 + $0x100] sm:$0xff]
  %v6971 = vld [vmem:[#allocation2 + $0x108] sm:$0xff]
  %v6972 = vld [vmem:[#allocation2 + $0x110] sm:$0xff]
  %v6973 = vld [vmem:[#allocation2 + $0x118] sm:$0xff]
  %v6974 = vld [vmem:[#allocation2 + $0x120] sm:$0xff]
  %v6975 = vld [vmem:[#allocation2 + $0x128] sm:$0xff]
  %v6976 = vld [vmem:[#allocation2 + $0x130] sm:$0xff]
  %v6977 = vld [vmem:[#allocation2 + $0x138] sm:$0xff]
  %v6978 = vld [vmem:[#allocation2 + $0x140] sm:$0xff]
  %v6979 = vld [vmem:[#allocation2 + $0x148] sm:$0xff]
  %v6980 = vld [vmem:[#allocation2 + $0x150] sm:$0xff]
  %v6981 = vld [vmem:[#allocation2 + $0x158] sm:$0xff]
  %v6982 = vld [vmem:[#allocation2 + $0x160] sm:$0xff]
  %v6983 = vld [vmem:[#allocation2 + $0x168] sm:$0xff]
  %v6984 = vld [vmem:[#allocation2 + $0x170] sm:$0xff]
  %v6985 = vld [vmem:[#allocation2 + $0x178] sm:$0xff]
  %v6986 = vld [vmem:[#allocation2 + $0x180] sm:$0xff]
  %v6987 = vld [vmem:[#allocation2 + $0x188] sm:$0xff]
  %v6988 = vld [vmem:[#allocation2 + $0x190] sm:$0xff]
  %v6989 = vld [vmem:[#allocation2 + $0x198] sm:$0xff]
  %v6990 = vld [vmem:[#allocation2 + $0x1a0] sm:$0xff]
  %v6991 = vld [vmem:[#allocation2 + $0x1a8] sm:$0xff]
  %v6992 = vld [vmem:[#allocation2 + $0x1b0] sm:$0xff]
  %v6993 = vld [vmem:[#allocation2 + $0x1b8] sm:$0xff]
  %v6994 = vld [vmem:[#allocation2 + $0x1c0] sm:$0xff]
  %v6995 = vld [vmem:[#allocation2 + $0x1c8] sm:$0xff]
  %v6996 = vld [vmem:[#allocation2 + $0x1d0] sm:$0xff]
  %v6997 = vld [vmem:[#allocation2 + $0x1d8] sm:$0xff]
  %v6998 = vld [vmem:[#allocation2 + $0x1e0] sm:$0xff]
  %v6999 = vld [vmem:[#allocation2 + $0x1e8] sm:$0xff]
  %v7000 = vld [vmem:[#allocation2 + $0x1f0] sm:$0xff]
  %v7001 = vld [vmem:[#allocation2 + $0x1f8] sm:$0xff]
  %v7002 = vld [vmem:[#allocation2 + $0x200] sm:$0xff]
  %v7003 = vld [vmem:[#allocation2 + $0x208] sm:$0xff]
  %v7004 = vld [vmem:[#allocation2 + $0x210] sm:$0xff]
  %v7005 = vld [vmem:[#allocation2 + $0x218] sm:$0xff]
  %v7006 = vld [vmem:[#allocation2 + $0x220] sm:$0xff]
  %v7007 = vld [vmem:[#allocation2 + $0x228] sm:$0xff]
  %v7008 = vld [vmem:[#allocation2 + $0x230] sm:$0xff]
  %v7009 = vld [vmem:[#allocation2 + $0x238] sm:$0xff]
  %v7010 = vld [vmem:[#allocation2 + $0x240] sm:$0xff]
  %v7011 = vld [vmem:[#allocation2 + $0x248] sm:$0xff]
  %v7012 = vld [vmem:[#allocation2 + $0x250] sm:$0xff]
  %v7013 = vld [vmem:[#allocation2 + $0x258] sm:$0xff]
  %v7014 = vld [vmem:[#allocation2 + $0x260] sm:$0xff]
  %v7015 = vld [vmem:[#allocation2 + $0x268] sm:$0xff]
  %v7016 = vld [vmem:[#allocation2 + $0x270] sm:$0xff]
  %v7017 = vld [vmem:[#allocation2 + $0x278] sm:$0xff]
  %v7018 = vld [vmem:[#allocation2 + $0x280] sm:$0xff]
  %v7019 = vld [vmem:[#allocation2 + $0x288] sm:$0xff]
  %v7020 = vld [vmem:[#allocation2 + $0x290] sm:$0xff]
  %v7021 = vld [vmem:[#allocation2 + $0x298] sm:$0xff]
  %v7022 = vld [vmem:[#allocation2 + $0x2a0] sm:$0xff]
  %v7023 = vld [vmem:[#allocation2 + $0x2a8] sm:$0xff]
  %v7024 = vld [vmem:[#allocation2 + $0x2b0] sm:$0xff]
  %v7025 = vld [vmem:[#allocation2 + $0x2b8] sm:$0xff]
  %v7026 = vld [vmem:[#allocation2 + $0x2c0] sm:$0xff]
  %v7027 = vld [vmem:[#allocation2 + $0x2c8] sm:$0xff]
  %v7028 = vld [vmem:[#allocation2 + $0x2d0] sm:$0xff]
  %v7029 = vld [vmem:[#allocation2 + $0x2d8] sm:$0xff]
  %v7030 = vld [vmem:[#allocation2 + $0x2e0] sm:$0xff]
  %v7031 = vld [vmem:[#allocation2 + $0x2e8] sm:$0xff]
  %v7032 = vld [vmem:[#allocation2 + $0x2f0] sm:$0xff]
  %v7033 = vld [vmem:[#allocation2 + $0x2f8] sm:$0xff]
  %v7034 = vld [vmem:[#allocation2 + $0x300] sm:$0xff]
  %v7035 = vld [vmem:[#allocation2 + $0x308] sm:$0xff]
  %v7036 = vld [vmem:[#allocation2 + $0x310] sm:$0xff]
  %v7037 = vld [vmem:[#allocation2 + $0x318] sm:$0xff]
  %v7038 = vld [vmem:[#allocation2 + $0x320] sm:$0xff]
  %v7039 = vld [vmem:[#allocation2 + $0x328] sm:$0xff]
  %v7040 = vld [vmem:[#allocation2 + $0x330] sm:$0xff]
  %v7041 = vld [vmem:[#allocation2 + $0x338] sm:$0xff]
  %v7042 = vld [vmem:[#allocation2 + $0x340] sm:$0xff]
  %v7043 = vld [vmem:[#allocation2 + $0x348] sm:$0xff]
  %v7044 = vld [vmem:[#allocation2 + $0x350] sm:$0xff]
  %v7045 = vld [vmem:[#allocation2 + $0x358] sm:$0xff]
  %v7046 = vld [vmem:[#allocation2 + $0x360] sm:$0xff]
  %v7047 = vld [vmem:[#allocation2 + $0x368] sm:$0xff]
  %v7048 = vld [vmem:[#allocation2 + $0x370] sm:$0xff]
  %v7049 = vld [vmem:[#allocation2 + $0x378] sm:$0xff]
  %v7050 = vld [vmem:[#allocation2 + $0x380] sm:$0xff]
  %v7051 = vld [vmem:[#allocation2 + $0x388] sm:$0xff]
  %v7052 = vld [vmem:[#allocation2 + $0x390] sm:$0xff]
  %v7053 = vld [vmem:[#allocation2 + $0x398] sm:$0xff]
  %v7054 = vld [vmem:[#allocation2 + $0x3a0] sm:$0xff]
  %v7055 = vld [vmem:[#allocation2 + $0x3a8] sm:$0xff]
  %v7056 = vld [vmem:[#allocation2 + $0x3b0] sm:$0xff]
  %v7057 = vld [vmem:[#allocation2 + $0x3b8] sm:$0xff]
  %v7058 = vld [vmem:[#allocation2 + $0x3c0] sm:$0xff]
  %v7059 = vld [vmem:[#allocation2 + $0x3c8] sm:$0xff]
  %v7060 = vld [vmem:[#allocation2 + $0x3d0] sm:$0xff]
  %v7061 = vld [vmem:[#allocation2 + $0x3d8] sm:$0xff]
  %v7062 = vld [vmem:[#allocation2 + $0x3e0] sm:$0xff]
  %v7063 = vld [vmem:[#allocation2 + $0x3e8] sm:$0xff]
  %v7064 = vld [vmem:[#allocation2 + $0x3f0] sm:$0xff]
  %v7065 = vld [vmem:[#allocation2 + $0x3f8] sm:$0xff]
  %v7066 = vld [vmem:[#allocation2 + $0x400] sm:$0xff]
  %v7067 = vld [vmem:[#allocation2 + $0x408] sm:$0xff]
  %v7068 = vld [vmem:[#allocation2 + $0x410] sm:$0xff]
  %v7069 = vld [vmem:[#allocation2 + $0x418] sm:$0xff]
  %v7070 = vld [vmem:[#allocation2 + $0x420] sm:$0xff]
  %v7071 = vld [vmem:[#allocation2 + $0x428] sm:$0xff]
  %v7072 = vld [vmem:[#allocation2 + $0x430] sm:$0xff]
  %v7073 = vld [vmem:[#allocation2 + $0x438] sm:$0xff]
  %v7074 = vld [vmem:[#allocation2 + $0x440] sm:$0xff]
  %v7075 = vld [vmem:[#allocation2 + $0x448] sm:$0xff]
  %v7076 = vld [vmem:[#allocation2 + $0x450] sm:$0xff]
  %v7077 = vld [vmem:[#allocation2 + $0x458] sm:$0xff]
  %v7078 = vld [vmem:[#allocation2 + $0x460] sm:$0xff]
  %v7079 = vld [vmem:[#allocation2 + $0x468] sm:$0xff]
  %v7080 = vld [vmem:[#allocation2 + $0x470] sm:$0xff]
  %v7081 = vld [vmem:[#allocation2 + $0x478] sm:$0xff]
  %v7082 = vld [vmem:[#allocation2 + $0x480] sm:$0xff]
  %v7083 = vld [vmem:[#allocation2 + $0x488] sm:$0xff]
  %v7084 = vld [vmem:[#allocation2 + $0x490] sm:$0xff]
  %v7085 = vld [vmem:[#allocation2 + $0x498] sm:$0xff]
  %v7086 = vld [vmem:[#allocation2 + $0x4a0] sm:$0xff]
  %v7087 = vld [vmem:[#allocation2 + $0x4a8] sm:$0xff]
  %v7088 = vld [vmem:[#allocation2 + $0x4b0] sm:$0xff]
  %v7089 = vld [vmem:[#allocation2 + $0x4b8] sm:$0xff]
  %v7090 = vld [vmem:[#allocation2 + $0x4c0] sm:$0xff]
  %v7091 = vld [vmem:[#allocation2 + $0x4c8] sm:$0xff]
  %v7092 = vld [vmem:[#allocation2 + $0x4d0] sm:$0xff]
  %v7093 = vld [vmem:[#allocation2 + $0x4d8] sm:$0xff]
  %v7094 = vld [vmem:[#allocation2 + $0x4e0] sm:$0xff]
  %v7095 = vld [vmem:[#allocation2 + $0x4e8] sm:$0xff]
  %v7096 = vld [vmem:[#allocation2 + $0x4f0] sm:$0xff]
  %v7097 = vld [vmem:[#allocation2 + $0x4f8] sm:$0xff]
  %v7098 = vld [vmem:[#allocation2 + $0x500] sm:$0xff]
  %v7099 = vld [vmem:[#allocation2 + $0x508] sm:$0xff]
  %v7100 = vld [vmem:[#allocation2 + $0x510] sm:$0xff]
  %v7101 = vld [vmem:[#allocation2 + $0x518] sm:$0xff]
  %v7102 = vld [vmem:[#allocation2 + $0x520] sm:$0xff]
  %v7103 = vld [vmem:[#allocation2 + $0x528] sm:$0xff]
  %v7104 = vld [vmem:[#allocation2 + $0x530] sm:$0xff]
  %v7105 = vld [vmem:[#allocation2 + $0x538] sm:$0xff]
  %v7106 = vld [vmem:[#allocation2 + $0x540] sm:$0xff]
  %v7107 = vld [vmem:[#allocation2 + $0x548] sm:$0xff]
  %v7108 = vld [vmem:[#allocation2 + $0x550] sm:$0xff]
  %v7109 = vld [vmem:[#allocation2 + $0x558] sm:$0xff]
  %v7110 = vld [vmem:[#allocation2 + $0x560] sm:$0xff]
  %v7111 = vld [vmem:[#allocation2 + $0x568] sm:$0xff]
  %v7112 = vld [vmem:[#allocation2 + $0x570] sm:$0xff]
  %v7113 = vld [vmem:[#allocation2 + $0x578] sm:$0xff]
  %v7114 = vld [vmem:[#allocation2 + $0x580] sm:$0xff]
  %v7115 = vld [vmem:[#allocation2 + $0x588] sm:$0xff]
  %v7116 = vld [vmem:[#allocation2 + $0x590] sm:$0xff]
  %v7117 = vld [vmem:[#allocation2 + $0x598] sm:$0xff]
  %v7118 = vld [vmem:[#allocation2 + $0x5a0] sm:$0xff]
  %v7119 = vld [vmem:[#allocation2 + $0x5a8] sm:$0xff]
  %v7120 = vld [vmem:[#allocation2 + $0x5b0] sm:$0xff]
  %v7121 = vld [vmem:[#allocation2 + $0x5b8] sm:$0xff]
  %v7122 = vld [vmem:[#allocation2 + $0x5c0] sm:$0xff]
  %v7123 = vld [vmem:[#allocation2 + $0x5c8] sm:$0xff]
  %v7124 = vld [vmem:[#allocation2 + $0x5d0] sm:$0xff]
  %v7125 = vld [vmem:[#allocation2 + $0x5d8] sm:$0xff]
  %v7126 = vld [vmem:[#allocation2 + $0x5e0] sm:$0xff]
  %v7127 = vld [vmem:[#allocation2 + $0x5e8] sm:$0xff]
  %v7128 = vld [vmem:[#allocation2 + $0x5f0] sm:$0xff]
  %v7129 = vld [vmem:[#allocation2 + $0x5f8] sm:$0xff]
  %v7130 = vld [vmem:[#allocation2 + $0x600] sm:$0xff]
  %v7131 = vld [vmem:[#allocation2 + $0x608] sm:$0xff]
  %v7132 = vld [vmem:[#allocation2 + $0x610] sm:$0xff]
  %v7133 = vld [vmem:[#allocation2 + $0x618] sm:$0xff]
  %v7134 = vld [vmem:[#allocation2 + $0x620] sm:$0xff]
  %v7135 = vld [vmem:[#allocation2 + $0x628] sm:$0xff]
  %v7136 = vld [vmem:[#allocation2 + $0x630] sm:$0xff]
  %v7137 = vld [vmem:[#allocation2 + $0x638] sm:$0xff]
  %v7138 = vld [vmem:[#allocation2 + $0x640] sm:$0xff]
  %v7139 = vld [vmem:[#allocation2 + $0x648] sm:$0xff]
  %v7140 = vld [vmem:[#allocation2 + $0x650] sm:$0xff]
  %v7141 = vld [vmem:[#allocation2 + $0x658] sm:$0xff]
  %v7142 = vld [vmem:[#allocation2 + $0x660] sm:$0xff]
  %v7143 = vld [vmem:[#allocation2 + $0x668] sm:$0xff]
  %v7144 = vld [vmem:[#allocation2 + $0x670] sm:$0xff]
  %v7145 = vld [vmem:[#allocation2 + $0x678] sm:$0xff]
  %v7146 = vld [vmem:[#allocation2 + $0x680] sm:$0xff]
  %v7147 = vld [vmem:[#allocation2 + $0x688] sm:$0xff]
  %v7148 = vld [vmem:[#allocation2 + $0x690] sm:$0xff]
  %v7149 = vld [vmem:[#allocation2 + $0x698] sm:$0xff]
  %v7150 = vld [vmem:[#allocation2 + $0x6a0] sm:$0xff]
  %v7151 = vld [vmem:[#allocation2 + $0x6a8] sm:$0xff]
  %v7152 = vld [vmem:[#allocation2 + $0x6b0] sm:$0xff]
  %v7153 = vld [vmem:[#allocation2 + $0x6b8] sm:$0xff]
  %v7154 = vld [vmem:[#allocation2 + $0x6c0] sm:$0xff]
  %v7155 = vld [vmem:[#allocation2 + $0x6c8] sm:$0xff]
  %v7156 = vld [vmem:[#allocation2 + $0x6d0] sm:$0xff]
  %v7157 = vld [vmem:[#allocation2 + $0x6d8] sm:$0xff]
  %v7158 = vld [vmem:[#allocation2 + $0x6e0] sm:$0xff]
  %v7159 = vld [vmem:[#allocation2 + $0x6e8] sm:$0xff]
  %v7160 = vld [vmem:[#allocation2 + $0x6f0] sm:$0xff]
  %v7161 = vld [vmem:[#allocation2 + $0x6f8] sm:$0xff]
  %v7162 = vld [vmem:[#allocation2 + $0x700] sm:$0xff]
  %v7163 = vld [vmem:[#allocation2 + $0x708] sm:$0xff]
  %v7164 = vld [vmem:[#allocation2 + $0x710] sm:$0xff]
  %v7165 = vld [vmem:[#allocation2 + $0x718] sm:$0xff]
  %v7166 = vld [vmem:[#allocation2 + $0x720] sm:$0xff]
  %v7167 = vld [vmem:[#allocation2 + $0x728] sm:$0xff]
  %v7168 = vld [vmem:[#allocation2 + $0x730] sm:$0xff]
  %v7169 = vld [vmem:[#allocation2 + $0x738] sm:$0xff]
  %v7170 = vld [vmem:[#allocation2 + $0x740] sm:$0xff]
  %v7171 = vld [vmem:[#allocation2 + $0x748] sm:$0xff]
  %v7172 = vld [vmem:[#allocation2 + $0x750] sm:$0xff]
  %v7173 = vld [vmem:[#allocation2 + $0x758] sm:$0xff]
  %v7174 = vld [vmem:[#allocation2 + $0x760] sm:$0xff]
  %v7175 = vld [vmem:[#allocation2 + $0x768] sm:$0xff]
  %v7176 = vld [vmem:[#allocation2 + $0x770] sm:$0xff]
  %v7177 = vld [vmem:[#allocation2 + $0x778] sm:$0xff]
  %v7178 = vld [vmem:[#allocation2 + $0x780] sm:$0xff]
  %v7179 = vld [vmem:[#allocation2 + $0x788] sm:$0xff]
  %v7180 = vld [vmem:[#allocation2 + $0x790] sm:$0xff]
  %v7181 = vld [vmem:[#allocation2 + $0x798] sm:$0xff]
  %v7182 = vld [vmem:[#allocation2 + $0x7a0] sm:$0xff]
  %v7183 = vld [vmem:[#allocation2 + $0x7a8] sm:$0xff]
  %v7184 = vld [vmem:[#allocation2 + $0x7b0] sm:$0xff]
  %v7185 = vld [vmem:[#allocation2 + $0x7b8] sm:$0xff]
  %v7186 = vld [vmem:[#allocation2 + $0x7c0] sm:$0xff]
  %v7187 = vld [vmem:[#allocation2 + $0x7c8] sm:$0xff]
  %v7188 = vld [vmem:[#allocation2 + $0x7d0] sm:$0xff]
  %v7189 = vld [vmem:[#allocation2 + $0x7d8] sm:$0xff]
  %v7190 = vld [vmem:[#allocation2 + $0x7e0] sm:$0xff]
  %v7191 = vld [vmem:[#allocation2 + $0x7e8] sm:$0xff]
  %v7192 = vld [vmem:[#allocation2 + $0x7f0] sm:$0xff]
  %v7193 = vld [vmem:[#allocation2 + $0x7f8] sm:$0xff]
  %v7194 = vld [vmem:[%s5] sm:$0x3]
  %v7197 = vcombine.high %v6936, %v6936
  %v7199 = vunpack.c.l.s4 1966171168
  %v7200 = vunpack.c.0.s8 %v7199
  %v7201 = vlaneseq
  %v7202 = vshrl.u32 %v7201, 7
  %v7203 = vsub.s32 %v7200, %v7202
  %v7204 = vrot.slane %v6936, %v7203
  %v7206 = vunpack.c.l.s4 1966171168
  %v7207 = vunpack.c.0.s8 %v7206
  %v7208 = vlaneseq
  %v7209 = vshrl.u32 %v7208, 7
  %v7210 = vsub.s32 %v7207, %v7209
  %v7211 = vrot.slane %v7197, %v7210
  %v7212 = vcombine.high %v7204, %v7204
  %v7213 = vcombine.high %v7211, %v7211
  %v7215 = vunpack.c.l.s4 1966171168
  %v7216 = vunpack.c.0.s8 %v7215
  %v7217 = vlaneseq
  %v7218 = vshrl.u32 %v7217, 7
  %v7219 = vsub.s32 %v7216, %v7218
  %v7220 = vrot.slane %v7204, %v7219
  %v7222 = vunpack.c.l.s4 1966171168
  %v7223 = vunpack.c.0.s8 %v7222
  %v7224 = vlaneseq
  %v7225 = vshrl.u32 %v7224, 7
  %v7226 = vsub.s32 %v7223, %v7225
  %v7227 = vrot.slane %v7211, %v7226
  %v7229 = vunpack.c.l.s4 1966171168
  %v7230 = vunpack.c.0.s8 %v7229
  %v7231 = vlaneseq
  %v7232 = vshrl.u32 %v7231, 7
  %v7233 = vsub.s32 %v7230, %v7232
  %v7234 = vrot.slane %v7212, %v7233
  %v7236 = vunpack.c.l.s4 1966171168
  %v7237 = vunpack.c.0.s8 %v7236
  %v7238 = vlaneseq
  %v7239 = vshrl.u32 %v7238, 7
  %v7240 = vsub.s32 %v7237, %v7239
  %v7241 = vrot.slane %v7213, %v7240
  %v7242 = vcombine.high %v7220, %v7220
  %v7243 = vcombine.high %v7227, %v7227
  %v7244 = vcombine.high %v7234, %v7234
  %v7245 = vcombine.high %v7241, %v7241
  %v7246 = vcombine.high %v6937, %v6937
  %v7248 = vunpack.c.l.s4 1966171168
  %v7249 = vunpack.c.0.s8 %v7248
  %v7250 = vlaneseq
  %v7251 = vshrl.u32 %v7250, 7
  %v7252 = vsub.s32 %v7249, %v7251
  %v7253 = vrot.slane %v6937, %v7252
  %v7255 = vunpack.c.l.s4 1966171168
  %v7256 = vunpack.c.0.s8 %v7255
  %v7257 = vlaneseq
  %v7258 = vshrl.u32 %v7257, 7
  %v7259 = vsub.s32 %v7256, %v7258
  %v7260 = vrot.slane %v7246, %v7259
  %v7261 = vcombine.high %v7253, %v7253
  %v7262 = vcombine.high %v7260, %v7260
  %v7264 = vunpack.c.l.s4 1966171168
  %v7265 = vunpack.c.0.s8 %v7264
  %v7266 = vlaneseq
  %v7267 = vshrl.u32 %v7266, 7
  %v7268 = vsub.s32 %v7265, %v7267
  %v7269 = vrot.slane %v7253, %v7268
  %v7271 = vunpack.c.l.s4 1966171168
  %v7272 = vunpack.c.0.s8 %v7271
  %v7273 = vlaneseq
  %v7274 = vshrl.u32 %v7273, 7
  %v7275 = vsub.s32 %v7272, %v7274
  %v7276 = vrot.slane %v7260, %v7275
  %v7278 = vunpack.c.l.s4 1966171168
  %v7279 = vunpack.c.0.s8 %v7278
  %v7280 = vlaneseq
  %v7281 = vshrl.u32 %v7280, 7
  %v7282 = vsub.s32 %v7279, %v7281
  %v7283 = vrot.slane %v7261, %v7282
  %v7285 = vunpack.c.l.s4 1966171168
  %v7286 = vunpack.c.0.s8 %v7285
  %v7287 = vlaneseq
  %v7288 = vshrl.u32 %v7287, 7
  %v7289 = vsub.s32 %v7286, %v7288
  %v7290 = vrot.slane %v7262, %v7289
  %v7291 = vcombine.high %v7269, %v7269
  %v7292 = vcombine.high %v7276, %v7276
  %v7293 = vcombine.high %v7283, %v7283
  %v7294 = vcombine.high %v7290, %v7290
  %v7312 = vlaneseq
  %v7313 = vshrl.u32 %v7312, 7
  %v7314 = vsub.s32 0, %v7313
  %v7315 = vrot.slane %v7194, %v7314
  %v7316 = vlaneseq
  %v7317 = vshrl.u32 %v7316, 7
  %v7318 = vsub.s32 1, %v7317
  %v7319 = vrot.slane %v7194, %v7318
  %7322 = vmatprep.subr.bf16.mxu0 %v6939
  %7323 = vmatpush1.bf16.msra.mxu0 %v6938
  %7324 = vmatprep.subr.bf16.mxu0 %v6941
  %7325 = vmatpush1.bf16.msra.mxu0 %v6940
  %7326 = vmatprep.subr.bf16.mxu0 %v6943
  %7327 = vmatpush1.bf16.msra.mxu0 %v6942
  %7328 = vmatprep.subr.bf16.mxu0 %v6945
  %7329 = vmatpush1.bf16.msra.mxu0 %v6944
  %7330 = vmatprep.subr.bf16.mxu0 %v6947
  %7331 = vmatpush1.bf16.msra.mxu0 %v6946
  %7332 = vmatprep.subr.bf16.mxu0 %v6949
  %7333 = vmatpush1.bf16.msra.mxu0 %v6948
  %7334 = vmatprep.subr.bf16.mxu0 %v6951
  %7335 = vmatpush1.bf16.msra.mxu0 %v6950
  %7336 = vmatprep.subr.bf16.mxu0 %v6953
  %7337 = vmatpush1.bf16.msra.mxu0 %v6952
  %7338 = vmatprep.subr.bf16.mxu0 %v6955
  %7339 = vmatpush1.bf16.msra.mxu0 %v6954
  %7340 = vmatprep.subr.bf16.mxu0 %v6957
  %7341 = vmatpush1.bf16.msra.mxu0 %v6956
  %7342 = vmatprep.subr.bf16.mxu0 %v6959
  %7343 = vmatpush1.bf16.msra.mxu0 %v6958
  %7344 = vmatprep.subr.bf16.mxu0 %v6961
  %7345 = vmatpush1.bf16.msra.mxu0 %v6960
  %7346 = vmatprep.subr.bf16.mxu0 %v6963
  %7347 = vmatpush1.bf16.msra.mxu0 %v6962
  %7348 = vmatprep.subr.bf16.mxu0 %v6965
  %7349 = vmatpush1.bf16.msra.mxu0 %v6964
  %7350 = vmatprep.subr.bf16.mxu0 %v6967
  %7351 = vmatpush1.bf16.msra.mxu0 %v6966
  %7352 = vmatprep.subr.bf16.mxu0 %v6969
  %7353 = vmatpush1.bf16.msra.mxu0 %v6968
  %7354 = vmatprep.mubr.bf16.mxu0 %v7234
  %7355 = vmatmul.mubr.bf16.gmra.mrb[0].mxu0 %v7220
  %v7356 = vpop.f32.mrb[0].mxu0
  %v7357 = vadd.f32 %v7315, %v7356
  %v7358 = vpop.f32.mrb[0].mxu0
  %v7359 = vadd.f32 %v7319, %v7358
  %v7360 = vpop.f32.mrb[0].mxu0
  %v7361 = vpop.f32.mrb[0].mxu0
  %7362 = vdwg.mxu0
  %7363 = vmatprep.subr.bf16.mxu0 %v6971
  %7364 = vmatpush1.bf16.msra.mxu0 %v6970
  %7365 = vmatprep.subr.bf16.mxu0 %v6973
  %7366 = vmatpush1.bf16.msra.mxu0 %v6972
  %7367 = vmatprep.subr.bf16.mxu0 %v6975
  %7368 = vmatpush1.bf16.msra.mxu0 %v6974
  %7369 = vmatprep.subr.bf16.mxu0 %v6977
  %7370 = vmatpush1.bf16.msra.mxu0 %v6976
  %7371 = vmatprep.subr.bf16.mxu0 %v6979
  %7372 = vmatpush1.bf16.msra.mxu0 %v6978
  %7373 = vmatprep.subr.bf16.mxu0 %v6981
  %7374 = vmatpush1.bf16.msra.mxu0 %v6980
  %7375 = vmatprep.subr.bf16.mxu0 %v6983
  %7376 = vmatpush1.bf16.msra.mxu0 %v6982
  %7377 = vmatprep.subr.bf16.mxu0 %v6985
  %7378 = vmatpush1.bf16.msra.mxu0 %v6984
  %7379 = vmatprep.subr.bf16.mxu0 %v6987
  %7380 = vmatpush1.bf16.msra.mxu0 %v6986
  %7381 = vmatprep.subr.bf16.mxu0 %v6989
  %7382 = vmatpush1.bf16.msra.mxu0 %v6988
  %7383 = vmatprep.subr.bf16.mxu0 %v6991
  %7384 = vmatpush1.bf16.msra.mxu0 %v6990
  %7385 = vmatprep.subr.bf16.mxu0 %v6993
  %7386 = vmatpush1.bf16.msra.mxu0 %v6992
  %7387 = vmatprep.subr.bf16.mxu0 %v6995
  %7388 = vmatpush1.bf16.msra.mxu0 %v6994
  %7389 = vmatprep.subr.bf16.mxu0 %v6997
  %7390 = vmatpush1.bf16.msra.mxu0 %v6996
  %7391 = vmatprep.subr.bf16.mxu0 %v6999
  %7392 = vmatpush1.bf16.msra.mxu0 %v6998
  %7393 = vmatprep.subr.bf16.mxu0 %v7001
  %7394 = vmatpush1.bf16.msra.mxu0 %v7000
  %7395 = vmatprep.mubr.bf16.mxu0 %v7244
  %7396 = vmatmul.mubr.bf16.gmra.mrb[0].mxu0 %v7242
  %v7397 = vpop.f32.mrb[0].mxu0
  %v7398 = vadd.f32 %v7357, %v7397
  %v7399 = vpop.f32.mrb[0].mxu0
  %v7400 = vadd.f32 %v7359, %v7399
  %v7401 = vpop.f32.mrb[0].mxu0
  %v7402 = vpop.f32.mrb[0].mxu0
  %7403 = vdwg.mxu0
  %7404 = vmatprep.subr.bf16.mxu0 %v7003
  %7405 = vmatpush1.bf16.msra.mxu0 %v7002
  %7406 = vmatprep.subr.bf16.mxu0 %v7005
  %7407 = vmatpush1.bf16.msra.mxu0 %v7004
  %7408 = vmatprep.subr.bf16.mxu0 %v7007
  %7409 = vmatpush1.bf16.msra.mxu0 %v7006
  %7410 = vmatprep.subr.bf16.mxu0 %v7009
  %7411 = vmatpush1.bf16.msra.mxu0 %v7008
  %7412 = vmatprep.subr.bf16.mxu0 %v7011
  %7413 = vmatpush1.bf16.msra.mxu0 %v7010
  %7414 = vmatprep.subr.bf16.mxu0 %v7013
  %7415 = vmatpush1.bf16.msra.mxu0 %v7012
  %7416 = vmatprep.subr.bf16.mxu0 %v7015
  %7417 = vmatpush1.bf16.msra.mxu0 %v7014
  %7418 = vmatprep.subr.bf16.mxu0 %v7017
  %7419 = vmatpush1.bf16.msra.mxu0 %v7016
  %7420 = vmatprep.subr.bf16.mxu0 %v7019
  %7421 = vmatpush1.bf16.msra.mxu0 %v7018
  %7422 = vmatprep.subr.bf16.mxu0 %v7021
  %7423 = vmatpush1.bf16.msra.mxu0 %v7020
  %7424 = vmatprep.subr.bf16.mxu0 %v7023
  %7425 = vmatpush1.bf16.msra.mxu0 %v7022
  %7426 = vmatprep.subr.bf16.mxu0 %v7025
  %7427 = vmatpush1.bf16.msra.mxu0 %v7024
  %7428 = vmatprep.subr.bf16.mxu0 %v7027
  %7429 = vmatpush1.bf16.msra.mxu0 %v7026
  %7430 = vmatprep.subr.bf16.mxu0 %v7029
  %7431 = vmatpush1.bf16.msra.mxu0 %v7028
  %7432 = vmatprep.subr.bf16.mxu0 %v7031
  %7433 = vmatpush1.bf16.msra.mxu0 %v7030
  %7434 = vmatprep.subr.bf16.mxu0 %v7033
  %7435 = vmatpush1.bf16.msra.mxu0 %v7032
  %7436 = vmatprep.mubr.bf16.mxu0 %v7241
  %7437 = vmatmul.mubr.bf16.gmra.mrb[0].mxu0 %v7227
  %v7438 = vpop.f32.mrb[0].mxu0
  %v7439 = vadd.f32 %v7398, %v7438
  %v7440 = vpop.f32.mrb[0].mxu0
  %v7441 = vadd.f32 %v7400, %v7440
  %v7442 = vpop.f32.mrb[0].mxu0
  %v7443 = vpop.f32.mrb[0].mxu0
  %7444 = vdwg.mxu0
  %7445 = vmatprep.subr.bf16.mxu0 %v7035
  %7446 = vmatpush1.bf16.msra.mxu0 %v7034
  %7447 = vmatprep.subr.bf16.mxu0 %v7037
  %7448 = vmatpush1.bf16.msra.mxu0 %v7036
  %7449 = vmatprep.subr.bf16.mxu0 %v7039
  %7450 = vmatpush1.bf16.msra.mxu0 %v7038
  %7451 = vmatprep.subr.bf16.mxu0 %v7041
  %7452 = vmatpush1.bf16.msra.mxu0 %v7040
  %7453 = vmatprep.subr.bf16.mxu0 %v7043
  %7454 = vmatpush1.bf16.msra.mxu0 %v7042
  %7455 = vmatprep.subr.bf16.mxu0 %v7045
  %7456 = vmatpush1.bf16.msra.mxu0 %v7044
  %7457 = vmatprep.subr.bf16.mxu0 %v7047
  %7458 = vmatpush1.bf16.msra.mxu0 %v7046
  %7459 = vmatprep.subr.bf16.mxu0 %v7049
  %7460 = vmatpush1.bf16.msra.mxu0 %v7048
  %7461 = vmatprep.subr.bf16.mxu0 %v7051
  %7462 = vmatpush1.bf16.msra.mxu0 %v7050
  %7463 = vmatprep.subr.bf16.mxu0 %v7053
  %7464 = vmatpush1.bf16.msra.mxu0 %v7052
  %7465 = vmatprep.subr.bf16.mxu0 %v7055
  %7466 = vmatpush1.bf16.msra.mxu0 %v7054
  %7467 = vmatprep.subr.bf16.mxu0 %v7057
  %7468 = vmatpush1.bf16.msra.mxu0 %v7056
  %7469 = vmatprep.subr.bf16.mxu0 %v7059
  %7470 = vmatpush1.bf16.msra.mxu0 %v7058
  %7471 = vmatprep.subr.bf16.mxu0 %v7061
  %7472 = vmatpush1.bf16.msra.mxu0 %v7060
  %7473 = vmatprep.subr.bf16.mxu0 %v7063
  %7474 = vmatpush1.bf16.msra.mxu0 %v7062
  %7475 = vmatprep.subr.bf16.mxu0 %v7065
  %7476 = vmatpush1.bf16.msra.mxu0 %v7064
  %7477 = vmatprep.mubr.bf16.mxu0 %v7245
  %7478 = vmatmul.mubr.bf16.gmra.mrb[0].mxu0 %v7243
  %v7479 = vpop.f32.mrb[0].mxu0
  %v7480 = vadd.f32 %v7439, %v7479
  %v7481 = vpop.f32.mrb[0].mxu0
  %v7482 = vadd.f32 %v7441, %v7481
  %v7483 = vpop.f32.mrb[0].mxu0
  %v7484 = vpop.f32.mrb[0].mxu0
  %7485 = vdwg.mxu0
  %7486 = vmatprep.subr.bf16.mxu0 %v7067
  %7487 = vmatpush1.bf16.msra.mxu0 %v7066
  %7488 = vmatprep.subr.bf16.mxu0 %v7069
  %7489 = vmatpush1.bf16.msra.mxu0 %v7068
  %7490 = vmatprep.subr.bf16.mxu0 %v7071
  %7491 = vmatpush1.bf16.msra.mxu0 %v7070
  %7492 = vmatprep.subr.bf16.mxu0 %v7073
  %7493 = vmatpush1.bf16.msra.mxu0 %v7072
  %7494 = vmatprep.subr.bf16.mxu0 %v7075
  %7495 = vmatpush1.bf16.msra.mxu0 %v7074
  %7496 = vmatprep.subr.bf16.mxu0 %v7077
  %7497 = vmatpush1.bf16.msra.mxu0 %v7076
  %7498 = vmatprep.subr.bf16.mxu0 %v7079
  %7499 = vmatpush1.bf16.msra.mxu0 %v7078
  %7500 = vmatprep.subr.bf16.mxu0 %v7081
  %7501 = vmatpush1.bf16.msra.mxu0 %v7080
  %7502 = vmatprep.subr.bf16.mxu0 %v7083
  %7503 = vmatpush1.bf16.msra.mxu0 %v7082
  %7504 = vmatprep.subr.bf16.mxu0 %v7085
  %7505 = vmatpush1.bf16.msra.mxu0 %v7084
  %7506 = vmatprep.subr.bf16.mxu0 %v7087
  %7507 = vmatpush1.bf16.msra.mxu0 %v7086
  %7508 = vmatprep.subr.bf16.mxu0 %v7089
  %7509 = vmatpush1.bf16.msra.mxu0 %v7088
  %7510 = vmatprep.subr.bf16.mxu0 %v7091
  %7511 = vmatpush1.bf16.msra.mxu0 %v7090
  %7512 = vmatprep.subr.bf16.mxu0 %v7093
  %7513 = vmatpush1.bf16.msra.mxu0 %v7092
  %7514 = vmatprep.subr.bf16.mxu0 %v7095
  %7515 = vmatpush1.bf16.msra.mxu0 %v7094
  %7516 = vmatprep.subr.bf16.mxu0 %v7097
  %7517 = vmatpush1.bf16.msra.mxu0 %v7096
  %7518 = vmatprep.mubr.bf16.mxu0 %v7283
  %7519 = vmatmul.mubr.bf16.gmra.mrb[0].mxu0 %v7269
  %v7520 = vpop.f32.mrb[0].mxu0
  %v7521 = vadd.f32 %v7480, %v7520
  %v7522 = vpop.f32.mrb[0].mxu0
  %v7523 = vadd.f32 %v7482, %v7522
  %v7524 = vpop.f32.mrb[0].mxu0
  %v7525 = vpop.f32.mrb[0].mxu0
  %7526 = vdwg.mxu0
  %7527 = vmatprep.subr.bf16.mxu0 %v7099
  %7528 = vmatpush1.bf16.msra.mxu0 %v7098
  %7529 = vmatprep.subr.bf16.mxu0 %v7101
  %7530 = vmatpush1.bf16.msra.mxu0 %v7100
  %7531 = vmatprep.subr.bf16.mxu0 %v7103
  %7532 = vmatpush1.bf16.msra.mxu0 %v7102
  %7533 = vmatprep.subr.bf16.mxu0 %v7105
  %7534 = vmatpush1.bf16.msra.mxu0 %v7104
  %7535 = vmatprep.subr.bf16.mxu0 %v7107
  %7536 = vmatpush1.bf16.msra.mxu0 %v7106
  %7537 = vmatprep.subr.bf16.mxu0 %v7109
  %7538 = vmatpush1.bf16.msra.mxu0 %v7108
  %7539 = vmatprep.subr.bf16.mxu0 %v7111
  %7540 = vmatpush1.bf16.msra.mxu0 %v7110
  %7541 = vmatprep.subr.bf16.mxu0 %v7113
  %7542 = vmatpush1.bf16.msra.mxu0 %v7112
  %7543 = vmatprep.subr.bf16.mxu0 %v7115
  %7544 = vmatpush1.bf16.msra.mxu0 %v7114
  %7545 = vmatprep.subr.bf16.mxu0 %v7117
  %7546 = vmatpush1.bf16.msra.mxu0 %v7116
  %7547 = vmatprep.subr.bf16.mxu0 %v7119
  %7548 = vmatpush1.bf16.msra.mxu0 %v7118
  %7549 = vmatprep.subr.bf16.mxu0 %v7121
  %7550 = vmatpush1.bf16.msra.mxu0 %v7120
  %7551 = vmatprep.subr.bf16.mxu0 %v7123
  %7552 = vmatpush1.bf16.msra.mxu0 %v7122
  %7553 = vmatprep.subr.bf16.mxu0 %v7125
  %7554 = vmatpush1.bf16.msra.mxu0 %v7124
  %7555 = vmatprep.subr.bf16.mxu0 %v7127
  %7556 = vmatpush1.bf16.msra.mxu0 %v7126
  %7557 = vmatprep.subr.bf16.mxu0 %v7129
  %7558 = vmatpush1.bf16.msra.mxu0 %v7128
  %7559 = vmatprep.mubr.bf16.mxu0 %v7293
  %7560 = vmatmul.mubr.bf16.gmra.mrb[0].mxu0 %v7291
  %v7561 = vpop.f32.mrb[0].mxu0
  %v7562 = vadd.f32 %v7521, %v7561
  %v7563 = vpop.f32.mrb[0].mxu0
  %v7564 = vadd.f32 %v7523, %v7563
  %v7565 = vpop.f32.mrb[0].mxu0
  %v7566 = vpop.f32.mrb[0].mxu0
  %7567 = vdwg.mxu0
  %7568 = vmatprep.subr.bf16.mxu0 %v7131
  %7569 = vmatpush1.bf16.msra.mxu0 %v7130
  %7570 = vmatprep.subr.bf16.mxu0 %v7133
  %7571 = vmatpush1.bf16.msra.mxu0 %v7132
  %7572 = vmatprep.subr.bf16.mxu0 %v7135
  %7573 = vmatpush1.bf16.msra.mxu0 %v7134
  %7574 = vmatprep.subr.bf16.mxu0 %v7137
  %7575 = vmatpush1.bf16.msra.mxu0 %v7136
  %7576 = vmatprep.subr.bf16.mxu0 %v7139
  %7577 = vmatpush1.bf16.msra.mxu0 %v7138
  %7578 = vmatprep.subr.bf16.mxu0 %v7141
  %7579 = vmatpush1.bf16.msra.mxu0 %v7140
  %7580 = vmatprep.subr.bf16.mxu0 %v7143
  %7581 = vmatpush1.bf16.msra.mxu0 %v7142
  %7582 = vmatprep.subr.bf16.mxu0 %v7145
  %7583 = vmatpush1.bf16.msra.mxu0 %v7144
  %7584 = vmatprep.subr.bf16.mxu0 %v7147
  %7585 = vmatpush1.bf16.msra.mxu0 %v7146
  %7586 = vmatprep.subr.bf16.mxu0 %v7149
  %7587 = vmatpush1.bf16.msra.mxu0 %v7148
  %7588 = vmatprep.subr.bf16.mxu0 %v7151
  %7589 = vmatpush1.bf16.msra.mxu0 %v7150
  %7590 = vmatprep.subr.bf16.mxu0 %v7153
  %7591 = vmatpush1.bf16.msra.mxu0 %v7152
  %7592 = vmatprep.subr.bf16.mxu0 %v7155
  %7593 = vmatpush1.bf16.msra.mxu0 %v7154
  %7594 = vmatprep.subr.bf16.mxu0 %v7157
  %7595 = vmatpush1.bf16.msra.mxu0 %v7156
  %7596 = vmatprep.subr.bf16.mxu0 %v7159
  %7597 = vmatpush1.bf16.msra.mxu0 %v7158
  %7598 = vmatprep.subr.bf16.mxu0 %v7161
  %7599 = vmatpush1.bf16.msra.mxu0 %v7160
  %7600 = vmatprep.mubr.bf16.mxu0 %v7290
  %7601 = vmatmul.mubr.bf16.gmra.mrb[0].mxu0 %v7276
  %v7602 = vpop.f32.mrb[0].mxu0
  %v7603 = vadd.f32 %v7562, %v7602
  %v7604 = vpop.f32.mrb[0].mxu0
  %v7605 = vadd.f32 %v7564, %v7604
  %v7606 = vpop.f32.mrb[0].mxu0
  %v7607 = vpop.f32.mrb[0].mxu0
  %7608 = vdwg.mxu0
  %7609 = vmatprep.subr.bf16.mxu0 %v7163
  %7610 = vmatpush1.bf16.msra.mxu0 %v7162
  %7611 = vmatprep.subr.bf16.mxu0 %v7165
  %7612 = vmatpush1.bf16.msra.mxu0 %v7164
  %7613 = vmatprep.subr.bf16.mxu0 %v7167
  %7614 = vmatpush1.bf16.msra.mxu0 %v7166
  %7615 = vmatprep.subr.bf16.mxu0 %v7169
  %7616 = vmatpush1.bf16.msra.mxu0 %v7168
  %7617 = vmatprep.subr.bf16.mxu0 %v7171
  %7618 = vmatpush1.bf16.msra.mxu0 %v7170
  %7619 = vmatprep.subr.bf16.mxu0 %v7173
  %7620 = vmatpush1.bf16.msra.mxu0 %v7172
  %7621 = vmatprep.subr.bf16.mxu0 %v7175
  %7622 = vmatpush1.bf16.msra.mxu0 %v7174
  %7623 = vmatprep.subr.bf16.mxu0 %v7177
  %7624 = vmatpush1.bf16.msra.mxu0 %v7176
  %7625 = vmatprep.subr.bf16.mxu0 %v7179
  %7626 = vmatpush1.bf16.msra.mxu0 %v7178
  %7627 = vmatprep.subr.bf16.mxu0 %v7181
  %7628 = vmatpush1.bf16.msra.mxu0 %v7180
  %7629 = vmatprep.subr.bf16.mxu0 %v7183
  %7630 = vmatpush1.bf16.msra.mxu0 %v7182
  %7631 = vmatprep.subr.bf16.mxu0 %v7185
  %7632 = vmatpush1.bf16.msra.mxu0 %v7184
  %7633 = vmatprep.subr.bf16.mxu0 %v7187
  %7634 = vmatpush1.bf16.msra.mxu0 %v7186
  %7635 = vmatprep.subr.bf16.mxu0 %v7189
  %7636 = vmatpush1.bf16.msra.mxu0 %v7188
  %7637 = vmatprep.subr.bf16.mxu0 %v7191
  %7638 = vmatpush1.bf16.msra.mxu0 %v7190
  %7639 = vmatprep.subr.bf16.mxu0 %v7193
  %7640 = vmatpush1.bf16.msra.mxu0 %v7192
  %7641 = vmatprep.mubr.bf16.mxu0 %v7294
  %7642 = vmatmul.mubr.bf16.gmra.mrb[0].mxu0 %v7292
  %v7643 = vpop.f32.mrb[0].mxu0
  %v7644 = vadd.f32 %v7603, %v7643
  %v7645 = vpop.f32.mrb[0].mxu0
  %v7646 = vadd.f32 %v7605, %v7645
  %v7647 = vpop.f32.mrb[0].mxu0
  %v7648 = vpop.f32.mrb[0].mxu0
  %7649 = vdwg.mxu0
  %v7650 = vmax.f32 %v7644, 0.0
  %v7651 = vmax.f32 %v7646, 0.0
  %v7652 = vld [vmem:[%s3] sm:$0xff]
  %v7653 = vld [vmem:[%s3 + $0x8] sm:$0xff]
  %v7654 = vld [vmem:[%s3 + $0x10] sm:$0xff]
  %v7655 = vld [vmem:[%s3 + $0x18] sm:$0xff]
  %v7656 = vld [vmem:[%s3 + $0x20] sm:$0xff]
  %v7657 = vld [vmem:[%s3 + $0x28] sm:$0xff]
  %v7658 = vld [vmem:[%s3 + $0x30] sm:$0xff]
  %v7659 = vld [vmem:[%s3 + $0x38] sm:$0xff]
  %v7660 = vld [vmem:[%s3 + $0x40] sm:$0xff]
  %v7661 = vld [vmem:[%s3 + $0x48] sm:$0xff]
  %v7662 = vld [vmem:[%s3 + $0x50] sm:$0xff]
  %v7663 = vld [vmem:[%s3 + $0x58] sm:$0xff]
  %v7664 = vld [vmem:[%s3 + $0x60] sm:$0xff]
  %v7665 = vld [vmem:[%s3 + $0x68] sm:$0xff]
  %v7666 = vld [vmem:[%s3 + $0x70] sm:$0xff]
  %v7667 = vld [vmem:[%s3 + $0x78] sm:$0xff]
  %v7668 = vld [vmem:[%s3 + $0x80] sm:$0xff]
  %v7669 = vld [vmem:[%s3 + $0x88] sm:$0xff]
  %v7670 = vld [vmem:[%s3 + $0x90] sm:$0xff]
  %v7671 = vld [vmem:[%s3 + $0x98] sm:$0xff]
  %v7672 = vld [vmem:[%s3 + $0xa0] sm:$0xff]
  %v7673 = vld [vmem:[%s3 + $0xa8] sm:$0xff]
  %v7674 = vld [vmem:[%s3 + $0xb0] sm:$0xff]
  %v7675 = vld [vmem:[%s3 + $0xb8] sm:$0xff]
  %v7676 = vld [vmem:[%s3 + $0xc0] sm:$0xff]
  %v7677 = vld [vmem:[%s3 + $0xc8] sm:$0xff]
  %v7678 = vld [vmem:[%s3 + $0xd0] sm:$0xff]
  %v7679 = vld [vmem:[%s3 + $0xd8] sm:$0xff]
  %v7680 = vld [vmem:[%s3 + $0xe0] sm:$0xff]
  %v7681 = vld [vmem:[%s3 + $0xe8] sm:$0xff]
  %v7682 = vld [vmem:[%s3 + $0xf0] sm:$0xff]
  %v7683 = vld [vmem:[%s3 + $0xf8] sm:$0xff]
  %v7684 = vld [vmem:[%s5 + $0x2] sm:$0x1]
  %7685 = vmatprep.subr.mxu0 0.0
  %7686 = vmatpush1.msra.mxu0 %v7652
  %7687 = vmatprep.subr.mxu0 0.0
  %7688 = vmatpush1.msra.mxu0 %v7653
  %7689 = vmatprep.subr.mxu0 0.0
  %7690 = vmatpush1.msra.mxu0 %v7654
  %7691 = vmatprep.subr.mxu0 0.0
  %7692 = vmatpush1.msra.mxu0 %v7655
  %7693 = vmatprep.subr.mxu0 0.0
  %7694 = vmatpush1.msra.mxu0 %v7656
  %7695 = vmatprep.subr.mxu0 0.0
  %7696 = vmatpush1.msra.mxu0 %v7657
  %7697 = vmatprep.subr.mxu0 0.0
  %7698 = vmatpush1.msra.mxu0 %v7658
  %7699 = vmatprep.subr.mxu0 0.0
  %7700 = vmatpush1.msra.mxu0 %v7659
  %7701 = vmatprep.subr.mxu0 0.0
  %7702 = vmatpush1.msra.mxu0 %v7660
  %7703 = vmatprep.subr.mxu0 0.0
  %7704 = vmatpush1.msra.mxu0 %v7661
  %7705 = vmatprep.subr.mxu0 0.0
  %7706 = vmatpush1.msra.mxu0 %v7662
  %7707 = vmatprep.subr.mxu0 0.0
  %7708 = vmatpush1.msra.mxu0 %v7663
  %7709 = vmatprep.subr.mxu0 0.0
  %7710 = vmatpush1.msra.mxu0 %v7664
  %7711 = vmatprep.subr.mxu0 0.0
  %7712 = vmatpush1.msra.mxu0 %v7665
  %7713 = vmatprep.subr.mxu0 0.0
  %7714 = vmatpush1.msra.mxu0 %v7666
  %7715 = vmatprep.subr.mxu0 0.0
  %7716 = vmatpush1.msra.mxu0 %v7667
  %7717 = vmatprep.subr.mxu0 0.0
  %7718 = vmatpush1.msra.mxu0 %v7668
  %7719 = vmatprep.subr.mxu0 0.0
  %7720 = vmatpush1.msra.mxu0 %v7669
  %7721 = vmatprep.subr.mxu0 0.0
  %7722 = vmatpush1.msra.mxu0 %v7670
  %7723 = vmatprep.subr.mxu0 0.0
  %7724 = vmatpush1.msra.mxu0 %v7671
  %7725 = vmatprep.subr.mxu0 0.0
  %7726 = vmatpush1.msra.mxu0 %v7672
  %7727 = vmatprep.subr.mxu0 0.0
  %7728 = vmatpush1.msra.mxu0 %v7673
  %7729 = vmatprep.subr.mxu0 0.0
  %7730 = vmatpush1.msra.mxu0 %v7674
  %7731 = vmatprep.subr.mxu0 0.0
  %7732 = vmatpush1.msra.mxu0 %v7675
  %7733 = vmatprep.subr.mxu0 0.0
  %7734 = vmatpush1.msra.mxu0 %v7676
  %7735 = vmatprep.subr.mxu0 0.0
  %7736 = vmatpush1.msra.mxu0 %v7677
  %7737 = vmatprep.subr.mxu0 0.0
  %7738 = vmatpush1.msra.mxu0 %v7678
  %7739 = vmatprep.subr.mxu0 0.0
  %7740 = vmatpush1.msra.mxu0 %v7679
  %7741 = vmatprep.subr.mxu0 0.0
  %7742 = vmatpush1.msra.mxu0 %v7680
  %7743 = vmatprep.subr.mxu0 0.0
  %7744 = vmatpush1.msra.mxu0 %v7681
  %7745 = vmatprep.subr.mxu0 0.0
  %7746 = vmatpush1.msra.mxu0 %v7682
  %7747 = vmatprep.subr.mxu0 0.0
  %7748 = vmatpush1.msra.mxu0 %v7683
  %7749 = vmatprep.mubr.f32.mxu0 %v7651
  %7750 = vmatmul.mubr.f32.gmra.mrb[0].mxu0 %v7650
  %v7751 = vpop.f32.mrb[0].mxu0
  %v7752 = vadd.f32 %v7684, %v7751
  %v7753 = vpop.f32.mrb[0].mxu0
  %7754 = vdwg.mxu0
  %vm7755 = vcmask 40960
  %v7756 = vsel %vm7755, %v7752, -inf
  %7757 = vmax.xlane.f32.xlu0 %v7756
  %v7758 = vpop.xlane.xlu0 %7757
  %v7759 = vsub.f32 %v7752, %v7758
  %v7760 = vmul.f32 %v7759, 1.442695
  %v7761 = vpow.pop %v7760
  %v7762 = vsel %vm7755, %v7761, 0.0
  %7763 = vadd.xlane.f32.xlu0 %v7762
  %v7764 = vpop.xlane.xlu0 %7763
  %v7765 = vlog2.pop %v7764
  %v7766 = vmul.f32 %v7765, 0.6931472
  %v7767 = vadd.f32 %v7758, %v7766
  %v7768 = vlaneseq
  %v7769 = vand.u32 %v7768, 127
  %vm7770 = vcmp.lt.s32.totalorder %v7769, 6
  %v7771 = vsub.f32 %v7752, %v7767
  %v7772 = vsel %vm7770, %v7771, %v7752
  %vm7773 = vcmask 57344
  %7774 = vst.msk [vmem:[%s7] sm:$0x1] %vm7773, %v7772
  // Predicated region
  $region74: #{breakout_a2c_forward.1} parent=0 // pred_check
    _
  $region75: #{breakout_a2c_forward.1} parent=0 // pred_check_branch
    %7776 = sbr.rel (0) target = $region77
  $region76: #{breakout_a2c_forward.1} parent=0 // pred_region
    _
  $region77: #{breakout_a2c_forward.1} parent=0 // pred_fallthru
    _
  // Predicated region
  $region78: #{breakout_a2c_forward.1} parent=0 // pred_check
    _
  $region79: #{breakout_a2c_forward.1} parent=0 // pred_check_branch
    %7778 = sbr.rel (0) target = $region81
  $region80: #{breakout_a2c_forward.1} parent=0 // pred_region
    _
  $region81: #{breakout_a2c_forward.1} parent=0 // pred_fallthru
    _
  %7779 = vsyncmov [#allocation6]
  %s7780 = vpop.sfrf %7779
  %p7781 = scmp.eq.s32.totalorder %s7780, 0
  %p7782 = pneg %p7781
  %7784 = shalt.err (%p7782)

</llo_original>
